<compile_context>
chip_gen: v5e
topology: v5e:2x2
jax: 0.10.0
libtpu: 0.0.40
codegen_flags: <defaults>
</compile_context>

<pallas_src>
import functools

import jax
import jax.numpy as jnp
from jax.experimental import pallas as pl
from jax.experimental.pallas import tpu as pltpu


def _round_up(x, m):
    return (x + m - 1) // m * m


def _default_vmem_limit():
    # Review item: the default scoped VMEM limit (16 MiB v5e / 32 MiB v6e,v7x)
    # is too small for whole-image blocks; use ~3/4 of physical VMEM, capped.
    try:
        cap = pltpu.get_tpu_info().vmem_capacity_bytes
    except Exception:
        cap = 64 * 1024 * 1024
    return int(min(cap * 3 // 4, 96 * 1024 * 1024))


_VMEM_LIMIT = _default_vmem_limit()


# -------------------- stage 1: conv3x3(3->256)+ReLU + fused avg-pool -------- #

def _conv1_relu_pool_kernel(x_ref, w_ref, b_ref, xpad_ref, ppad_ref, *, H, W, C):
    """Conv3x3(3->C) as one im2col matmul + bias + ReLU, with a fused 2x2
    average pool, writing both results into halo-padded buffers.

    x_ref   : (1, H*W, K)         bf16  im2col'd patches (K = 27 padded to 32)
    w_ref   : (K, C)              bf16
    b_ref   : (1, C)              f32
    xpad_ref: (1, H+3, W+2, C)    bf16  halo-padded X    (interior rows 1..H, cols 1..W)
    ppad_ref: (1, Ho+3, Wo+2, C)  bf16  halo-padded AvgPool2x2(X)
    """
    Ho, Wo = H // 2, W // 2
    acc = jnp.dot(x_ref[0], w_ref[...], preferred_element_type=jnp.float32)
    acc = jnp.maximum(acc + b_ref[...], 0.0)                # (H*W, C) f32
    x = acc.astype(jnp.bfloat16)

    # High-frequency branch input: zero halo + interior write (kills the
    # XLA-side jnp.pad HBM pass between stages).
    xpad_ref[...] = jnp.zeros_like(xpad_ref)
    xpad_ref[0, 1:H + 1, 1:W + 1, :] = x.reshape(H, W, C)

    # Fused 2x2 average pool: fold W-pairs into lanes so pooling is two
    # lane-slice adds plus a leading-dim pair add (no strided slices); adds
    # stay in bf16, single 0.25 scale at the end.
    xw = x.reshape(H, Wo, 2 * C)
    sw = xw[:, :, :C] + xw[:, :, C:]                        # pool over W pairs
    sh = sw.reshape(Ho, 2, Wo, C)
    pooled = (sh[:, 0] + sh[:, 1]) * 0.25                   # (Ho, Wo, C) bf16
    ppad_ref[...] = jnp.zeros_like(ppad_ref)
    ppad_ref[0, 1:Ho + 1, 1:Wo + 1, :] = pooled


def conv1_relu_pool(image_nchw, w_hwio, bias):
    """Main_Net1 stage on an NCHW image: Conv3x3(3->256, pad=1) + ReLU.
    Returns (halo-padded X, halo-padded AvgPool2x2(X)), both NHWC bf16."""
    N, Cin, H, W = image_nchw.shape
    assert Cin == 3 and H % 2 == 0 and W % 2 == 0
    Ho, Wo = H // 2, W // 2
    Cout = w_hwio.shape[-1]
    K = 32                                     # 27 patch channels padded to 32

    # Tiny wrapper-side im2col of the 3-channel input (review item): avoids
    # padding Cin to 128 (which made conv1 as expensive as the h2h conv).
    x = jnp.transpose(image_nchw, (0, 2, 3, 1))              # NCHW -> NHWC
    xp = jnp.pad(x, ((0, 0), (1, 1), (1, 1), (0, 0)))
    cols = [xp[:, dy:dy + H, dx:dx + W, :] for dy in range(3) for dx in range(3)]
    xcol = jnp.concatenate(cols, axis=-1)                    # (N, H, W, 27)
    xcol = jnp.pad(xcol, ((0, 0), (0, 0), (0, 0), (0, K - 27)))
    xcol = xcol.astype(jnp.bfloat16).reshape(N, H * W, K)

    w = jnp.pad(w_hwio.reshape(27, Cout), ((0, K - 27), (0, 0))).astype(jnp.bfloat16)
    b = bias.astype(jnp.float32).reshape(1, Cout)

    kernel = functools.partial(_conv1_relu_pool_kernel, H=H, W=W, C=Cout)
    xpad, ppad = pl.pallas_call(
        kernel,
        out_shape=(
            jax.ShapeDtypeStruct((N, H + 3, W + 2, Cout), jnp.bfloat16),
            jax.ShapeDtypeStruct((N, Ho + 3, Wo + 2, Cout), jnp.bfloat16),
        ),
        grid_spec=pltpu.PrefetchScalarGridSpec(
            num_scalar_prefetch=0,
            grid=(N,),
            in_specs=[
                pl.BlockSpec((1, H * W, K), lambda n: (n, 0, 0)),
                pl.BlockSpec((K, Cout), lambda n: (0, 0)),
                pl.BlockSpec((1, Cout), lambda n: (0, 0)),
            ],
            out_specs=(
                pl.BlockSpec((1, H + 3, W + 2, Cout), lambda n: (n, 0, 0, 0)),
                pl.BlockSpec((1, Ho + 3, Wo + 2, Cout), lambda n: (n, 0, 0, 0)),
            ),
        ),
        compiler_params=pltpu.CompilerParams(
            dimension_semantics=("parallel",),
            vmem_limit_bytes=_VMEM_LIMIT),
    )(xcol, w, b)
    return xpad, ppad


# -------------- stage 2: conv3x3 on a halo-padded 256-ch input -------------- #

def _conv3x3_flat_kernel(xf_ref, w_ref, b_ref, o_ref, *, Hout, Wp, Cout):
    """3x3 'same' conv on a halo-padded, row-major-flattened NHWC image.

    xf_ref: (1, (Hout+3)*Wp, Cin)  bf16  (pitch Wp = W+2, zero border)
    w_ref : (9, Cin, Cout)         bf16  taps ordered (dy, dx)
    b_ref : (1, Cout)              f32
    o_ref : (1, Hout*Wp, Cout)           output kept at input pitch; the two
            garbage columns per row are sliced off in the wrapper.

    Pitch-preserving accumulation: every tap is a *contiguous* row-window of
    the flat input starting at dy*Wp + dx, so there are no per-tap
    slice/reshape VMEM copies feeding the MXU.
    """
    L = Hout * Wp
    acc = jnp.zeros((L, Cout), jnp.float32)
    for dy in range(3):
        for dx in range(3):
            off = dy * Wp + dx
            a = xf_ref[0, off:off + L, :]
            acc = acc + jnp.dot(a, w_ref[dy * 3 + dx],
                                preferred_element_type=jnp.float32)
    acc = acc + b_ref[...]
    o_ref[0] = acc.astype(o_ref.dtype)


def conv3x3_on_padded(xpad, w_hwio, bias):
    """nn.Conv2d(3x3, stride=1, pad=1) on a halo-padded NHWC bf16 buffer of
    shape (N, H+3, W+2, Cin) (zero border, interior at [1:H+1, 1:W+1]).
    Returns (N, H, W, Cout) bf16."""
    N, Hp3, Wp, Cin = xpad.shape
    H, W = Hp3 - 3, Wp - 2
    kh, kw, Cin2, Cout = w_hwio.shape
    assert (kh, kw) == (3, 3) and Cin2 == Cin
    Cout_p = _round_up(Cout, 128)          # lane-dense stores (64->128, 192->256)

    w = jnp.pad(w_hwio, ((0, 0), (0, 0), (0, 0), (0, Cout_p - Cout)))
    w = w.reshape(9, Cin, Cout_p).astype(jnp.bfloat16)
    b = jnp.pad(bias, (0, Cout_p - Cout)).astype(jnp.float32).reshape(1, Cout_p)

    xflat = xpad.reshape(N, Hp3 * Wp, Cin)   # free row-major reshape in HBM
    L = H * Wp

    kernel = functools.partial(_conv3x3_flat_kernel, Hout=H, Wp=Wp, Cout=Cout_p)
    # TODO(synk): for large images add row-slab tiling with a 2-row halo
    # (grid=(N, H/Ht) via Element-indexed input or pl.ANY + manual halo DMA),
    # sized <=~48 MiB working set on v7x, and mark both axes "parallel" so the
    # two v7x TensorCores shard the grid.
    out = pl.pallas_call(
        kernel,
        out_shape=jax.ShapeDtypeStruct((N, L, Cout_p), jnp.bfloat16),
        grid_spec=pltpu.PrefetchScalarGridSpec(
            num_scalar_prefetch=0,
            grid=(N,),
            in_specs=[
                pl.BlockSpec((1, Hp3 * Wp, Cin), lambda n: (n, 0, 0)),
                pl.BlockSpec((9, Cin, Cout_p), lambda n: (0, 0, 0)),
                pl.BlockSpec((1, Cout_p), lambda n: (0, 0)),
            ],
            out_specs=pl.BlockSpec((1, L, Cout_p), lambda n: (n, 0, 0)),
        ),
        compiler_params=pltpu.CompilerParams(
            dimension_semantics=("parallel",),
            vmem_limit_bytes=_VMEM_LIMIT),
    )(xflat, w, b)
    # Free reshape; the valid-W / valid-Cout slice fuses with the caller's
    # final NCHW transpose into a single copy pass.
    return out.reshape(N, H, Wp, Cout_p)[:, :, :W, :Cout]


# ----------------------------- frequency_transfer --------------------------- #

def init_params(key):
    k1, k2, k3 = jax.random.split(key, 3)
    scale = 0.05
    return {
        # Main_Net1 (rgb_fre): modeled as Conv3x3(3->256, pad=1) + ReLU.
        "main_w": scale * jax.random.normal(k1, (3, 3, 3, 256), jnp.float32),
        "main_b": jnp.zeros((256,), jnp.float32),
        # OctaveConv2(3x3, 256->256, alpha=0.75): high 256->64, low 256->192.
        # (Reference uses bias=False; zero biases are numerically identical.)
        "h2h_w": scale * jax.random.normal(k2, (3, 3, 256, 64), jnp.float32),
        "h2h_b": jnp.zeros((64,), jnp.float32),
        "h2l_w": scale * jax.random.normal(k3, (3, 3, 256, 192), jnp.float32),
        "h2l_b": jnp.zeros((192,), jnp.float32),
    }


@jax.jit
def frequency_transfer_forward(image, params):
    # TODO(synk): Main_Net1's class definition is not in the provided snippet;
    # it is modeled as a single Conv3x3(3->256, pad=1) + ReLU producing the
    # 256-channel feature map consumed by OctaveConv2(in_channels=256).
    xpad, ppad = conv1_relu_pool(image, params["main_w"], params["main_b"])

    # OctaveConv2 first-octave split (single input -> high / low outputs).
    xh = conv3x3_on_padded(xpad, params["h2h_w"], params["h2h_b"])   # (N, H, W, 64)
    xl = conv3x3_on_padded(ppad, params["h2l_w"], params["h2l_b"])   # (N, H/2, W/2, 192)

    # Back to PyTorch NCHW / f32 only at the module API boundary (bf16 kernel
    # outputs; the cast and channel/width slices fuse into the transpose copy).
    X_h = jnp.transpose(xh, (0, 3, 1, 2)).astype(jnp.float32)
    X_l = jnp.transpose(xl, (0, 3, 1, 2)).astype(jnp.float32)
    return X_h, X_l


if __name__ == "__main__":
    key = jax.random.PRNGKey(0)
    k_img, k_params = jax.random.split(key)
    image = jax.random.normal(k_img, (2, 3, 16, 16), jnp.float32)  # NCHW like PyTorch
    params = init_params(k_params)

    X_h, X_l = frequency_transfer_forward(image, params)
    jax.block_until_ready((X_h, X_l))

    assert X_h.shape == (2, 64, 16, 16), X_h.shape
    assert X_l.shape == (2, 192, 8, 8), X_l.shape
    assert bool(jnp.isfinite(X_h).all()) and bool(jnp.isfinite(X_l).all())
    print("KERNEL_OK")
</pallas_src>

<mosaic_0001>
module attributes {stable_mosaic.version = 11 : i64} {
  func.func @_conv1_relu_pool_kernel(%arg0: i32, %arg1: memref<1x256x32xbf16, #tpu.memory_space<vmem>>, %arg2: memref<32x256xbf16, #tpu.memory_space<vmem>>, %arg3: memref<1x256xf32, #tpu.memory_space<vmem>>, %arg4: memref<1x19x18x256xbf16, #tpu.memory_space<vmem>>, %arg5: memref<1x11x10x256xbf16, #tpu.memory_space<vmem>>) attributes {dimension_semantics = [#tpu.dimension_semantics<parallel>], iteration_bounds = array<i64: 2>, scalar_prefetch = 0 : i64, scratch_operands = 0 : i64, tpu.core_type = #tpu.core_type<tc>, window_params = [{transform_indices = @transform_0, window_bounds = array<i64: 1, 256, 32>}, {pipeline_mode = #tpu.pipeline_mode<synchronous>, transform_indices = @transform_1, window_bounds = array<i64: 32, 256>}, {pipeline_mode = #tpu.pipeline_mode<synchronous>, transform_indices = @transform_2, window_bounds = array<i64: 1, 256>}, {transform_indices = @transform_3, window_bounds = array<i64: 1, 19, 18, 256>}, {transform_indices = @transform_4, window_bounds = array<i64: 1, 11, 10, 256>}]} {
    %c0 = arith.constant 0 : index
    %c0_0 = arith.constant 0 : index
    %c0_1 = arith.constant 0 : index
    %0 = vector.load %arg1[%c0, %c0_0, %c0_1] : memref<1x256x32xbf16, #tpu.memory_space<vmem>>, vector<1x256x32xbf16>
    %1 = vector.shape_cast %0 : vector<1x256x32xbf16> to vector<256x32xbf16>
    %c0_2 = arith.constant 0 : index
    %c0_3 = arith.constant 0 : index
    %2 = vector.load %arg2[%c0_2, %c0_3] : memref<32x256xbf16, #tpu.memory_space<vmem>>, vector<32x256xbf16>
    %cst = arith.constant dense<0.000000e+00> : vector<256x256xf32>
    %3 = tpu.matmul %1, %2, %cst {dimension_numbers = #tpu.dot_dimension_numbers<[1], [0], [0], [1], [0, 0, 1, 1], [], []>} : vector<256x32xbf16>, vector<32x256xbf16>, vector<256x256xf32> -> vector<256x256xf32>
    %c0_4 = arith.constant 0 : index
    %c0_5 = arith.constant 0 : index
    %4 = vector.load %arg3[%c0_4, %c0_5] : memref<1x256xf32, #tpu.memory_space<vmem>>, vector<1x256xf32>
    %5 = vector.broadcast %4 : vector<1x256xf32> to vector<256x256xf32>
    %6 = arith.addf %3, %5 : vector<256x256xf32>
    %cst_6 = arith.constant 0.000000e+00 : f32
    %7 = vector.broadcast %cst_6 : f32 to vector<256x256xf32>
    %8 = arith.maximumf %6, %7 : vector<256x256xf32>
    %9 = arith.truncf %8 : vector<256x256xf32> to vector<256x256xbf16>
    %cst_7 = arith.constant 0.000000e+00 : bf16
    %10 = vector.broadcast %cst_7 : bf16 to vector<1x19x18x256xbf16>
    %c0_8 = arith.constant 0 : index
    %c0_9 = arith.constant 0 : index
    %c0_10 = arith.constant 0 : index
    %c0_11 = arith.constant 0 : index
    %11 = vector.load %arg4[%c0_8, %c0_9, %c0_10, %c0_11] : memref<1x19x18x256xbf16, #tpu.memory_space<vmem>>, vector<1x19x18x256xbf16>
    tpu.vector_store %arg4[%c0_8, %c0_9, %c0_10, %c0_11], %10 {strides = array<i32>} : memref<1x19x18x256xbf16, #tpu.memory_space<vmem>>, vector<1x19x18x256xbf16>,
    %12 = vector.shape_cast %9 : vector<256x256xbf16> to vector<16x16x256xbf16>
    %c0_12 = arith.constant 0 : index
    %c1 = arith.constant 1 : index
    %c1_13 = arith.constant 1 : index
    %c0_14 = arith.constant 0 : index
    %13 = vector.load %arg4[%c0_12, %c1, %c1_13, %c0_14] : memref<1x19x18x256xbf16, #tpu.memory_space<vmem>>, vector<1x16x16x256xbf16>
    %14 = vector.shape_cast %13 : vector<1x16x16x256xbf16> to vector<16x16x256xbf16>
    %15 = vector.shape_cast %12 : vector<16x16x256xbf16> to vector<1x16x16x256xbf16>
    tpu.vector_store %arg4[%c0_12, %c1, %c1_13, %c0_14], %15 {strides = array<i32>} : memref<1x19x18x256xbf16, #tpu.memory_space<vmem>>, vector<1x16x16x256xbf16>,
    %16 = vector.shape_cast %9 : vector<256x256xbf16> to vector<16x8x512xbf16>
    %17 = vector.extract_strided_slice %16 {offsets = [0, 0, 0], sizes = [16, 8, 256], strides = [1, 1, 1]} : vector<16x8x512xbf16> to vector<16x8x256xbf16>
    %18 = vector.extract_strided_slice %16 {offsets = [0, 0, 256], sizes = [16, 8, 256], strides = [1, 1, 1]} : vector<16x8x512xbf16> to vector<16x8x256xbf16>
    %19 = arith.addf %17, %18 : vector<16x8x256xbf16>
    %20 = vector.shape_cast %19 : vector<16x8x256xbf16> to vector<8x2x8x256xbf16>
    %21 = vector.extract_strided_slice %20 {offsets = [0, 0, 0, 0], sizes = [8, 1, 8, 256], strides = [1, 1, 1, 1]} : vector<8x2x8x256xbf16> to vector<8x1x8x256xbf16>
    %22 = vector.shape_cast %21 : vector<8x1x8x256xbf16> to vector<8x8x256xbf16>
    %23 = vector.extract_strided_slice %20 {offsets = [0, 1, 0, 0], sizes = [8, 1, 8, 256], strides = [1, 1, 1, 1]} : vector<8x2x8x256xbf16> to vector<8x1x8x256xbf16>
    %24 = vector.shape_cast %23 : vector<8x1x8x256xbf16> to vector<8x8x256xbf16>
    %25 = arith.addf %22, %24 : vector<8x8x256xbf16>
    %cst_15 = arith.constant 2.500000e-01 : bf16
    %26 = vector.broadcast %cst_15 : bf16 to vector<8x8x256xbf16>
    %27 = arith.mulf %25, %26 : vector<8x8x256xbf16>
    %cst_16 = arith.constant 0.000000e+00 : bf16
    %28 = vector.broadcast %cst_16 : bf16 to vector<1x11x10x256xbf16>
    %c0_17 = arith.constant 0 : index
    %c0_18 = arith.constant 0 : index
    %c0_19 = arith.constant 0 : index
    %c0_20 = arith.constant 0 : index
    %29 = vector.load %arg5[%c0_17, %c0_18, %c0_19, %c0_20] : memref<1x11x10x256xbf16, #tpu.memory_space<vmem>>, vector<1x11x10x256xbf16>
    tpu.vector_store %arg5[%c0_17, %c0_18, %c0_19, %c0_20], %28 {strides = array<i32>} : memref<1x11x10x256xbf16, #tpu.memory_space<vmem>>, vector<1x11x10x256xbf16>,
    %c0_21 = arith.constant 0 : index
    %c1_22 = arith.constant 1 : index
    %c1_23 = arith.constant 1 : index
    %c0_24 = arith.constant 0 : index
    %30 = vector.load %arg5[%c0_21, %c1_22, %c1_23, %c0_24] : memref<1x11x10x256xbf16, #tpu.memory_space<vmem>>, vector<1x8x8x256xbf16>
    %31 = vector.shape_cast %30 : vector<1x8x8x256xbf16> to vector<8x8x256xbf16>
    %32 = vector.shape_cast %27 : vector<8x8x256xbf16> to vector<1x8x8x256xbf16>
    tpu.vector_store %arg5[%c0_21, %c1_22, %c1_23, %c0_24], %32 {strides = array<i32>} : memref<1x11x10x256xbf16, #tpu.memory_space<vmem>>, vector<1x8x8x256xbf16>,
    return
  }
  func.func @transform_0(%arg0: i32) -> (i32, i32, i32) {
    %c0_i32 = arith.constant 0 : i32
    %c0_i32_0 = arith.constant 0 : i32
    %c0_i32_1 = arith.constant 0 : i32
    return %arg0, %c0_i32, %c0_i32_0 : i32, i32, i32
  }
  func.func @transform_1(%arg0: i32) -> (i32, i32) {
    %c0_i32 = arith.constant 0 : i32
    %c0_i32_0 = arith.constant 0 : i32
    %c0_i32_1 = arith.constant 0 : i32
    return %c0_i32, %c0_i32_0 : i32, i32
  }
  func.func @transform_2(%arg0: i32) -> (i32, i32) {
    %c0_i32 = arith.constant 0 : i32
    %c0_i32_0 = arith.constant 0 : i32
    %c0_i32_1 = arith.constant 0 : i32
    return %c0_i32, %c0_i32_0 : i32, i32
  }
  func.func @transform_3(%arg0: i32) -> (i32, i32, i32, i32) {
    %c0_i32 = arith.constant 0 : i32
    %c0_i32_0 = arith.constant 0 : i32
    %c0_i32_1 = arith.constant 0 : i32
    %c0_i32_2 = arith.constant 0 : i32
    return %arg0, %c0_i32, %c0_i32_0, %c0_i32_1 : i32, i32, i32, i32
  }
  func.func @transform_4(%arg0: i32) -> (i32, i32, i32, i32) {
    %c0_i32 = arith.constant 0 : i32
    %c0_i32_0 = arith.constant 0 : i32
    %c0_i32_1 = arith.constant 0 : i32
    %c0_i32_2 = arith.constant 0 : i32
    return %arg0, %c0_i32, %c0_i32_0, %c0_i32_1 : i32, i32, i32, i32
  }
}

module attributes {stable_mosaic.version = 11 : i64} {
  func.func @_conv3x3_flat_kernel(%arg0: i32, %arg1: memref<1x342x256xbf16, #tpu.memory_space<vmem>>, %arg2: memref<9x256x128xbf16, #tpu.memory_space<vmem>>, %arg3: memref<1x128xf32, #tpu.memory_space<vmem>>, %arg4: memref<1x288x128xbf16, #tpu.memory_space<vmem>>) attributes {dimension_semantics = [#tpu.dimension_semantics<parallel>], iteration_bounds = array<i64: 2>, scalar_prefetch = 0 : i64, scratch_operands = 0 : i64, tpu.core_type = #tpu.core_type<tc>, window_params = [{transform_indices = @transform_0, window_bounds = array<i64: 1, 342, 256>}, {pipeline_mode = #tpu.pipeline_mode<synchronous>, transform_indices = @transform_1, window_bounds = array<i64: 9, 256, 128>}, {pipeline_mode = #tpu.pipeline_mode<synchronous>, transform_indices = @transform_2, window_bounds = array<i64: 1, 128>}, {transform_indices = @transform_3, window_bounds = array<i64: 1, 288, 128>}]} {
    %cst = arith.constant 0.000000e+00 : f32
    %0 = vector.broadcast %cst : f32 to vector<288x128xf32>
    %c0 = arith.constant 0 : index
    %c0_0 = arith.constant 0 : index
    %c0_1 = arith.constant 0 : index
    %1 = vector.load %arg1[%c0, %c0_0, %c0_1] : memref<1x342x256xbf16, #tpu.memory_space<vmem>>, vector<1x288x256xbf16>
    %2 = vector.shape_cast %1 : vector<1x288x256xbf16> to vector<288x256xbf16>
    %c0_2 = arith.constant 0 : index
    %c0_3 = arith.constant 0 : index
    %c0_4 = arith.constant 0 : index
    %3 = vector.load %arg2[%c0_2, %c0_3, %c0_4] : memref<9x256x128xbf16, #tpu.memory_space<vmem>>, vector<1x256x128xbf16>
    %4 = vector.shape_cast %3 : vector<1x256x128xbf16> to vector<256x128xbf16>
    %cst_5 = arith.constant dense<0.000000e+00> : vector<288x128xf32>
    %5 = tpu.matmul %2, %4, %cst_5 {dimension_numbers = #tpu.dot_dimension_numbers<[1], [0], [0], [1], [0, 0, 1, 1], [], []>} : vector<288x256xbf16>, vector<256x128xbf16>, vector<288x128xf32> -> vector<288x128xf32>
    %6 = arith.addf %0, %5 : vector<288x128xf32>
    %c0_6 = arith.constant 0 : index
    %c1 = arith.constant 1 : index
    %c0_7 = arith.constant 0 : index
    %7 = vector.load %arg1[%c0_6, %c1, %c0_7] : memref<1x342x256xbf16, #tpu.memory_space<vmem>>, vector<1x288x256xbf16>
    %8 = vector.shape_cast %7 : vector<1x288x256xbf16> to vector<288x256xbf16>
    %c1_8 = arith.constant 1 : index
    %c0_9 = arith.constant 0 : index
    %c0_10 = arith.constant 0 : index
    %9 = vector.load %arg2[%c1_8, %c0_9, %c0_10] : memref<9x256x128xbf16, #tpu.memory_space<vmem>>, vector<1x256x128xbf16>
    %10 = vector.shape_cast %9 : vector<1x256x128xbf16> to vector<256x128xbf16>
    %cst_11 = arith.constant dense<0.000000e+00> : vector<288x128xf32>
    %11 = tpu.matmul %8, %10, %cst_11 {dimension_numbers = #tpu.dot_dimension_numbers<[1], [0], [0], [1], [0, 0, 1, 1], [], []>} : vector<288x256xbf16>, vector<256x128xbf16>, vector<288x128xf32> -> vector<288x128xf32>
    %12 = arith.addf %6, %11 : vector<288x128xf32>
    %c0_12 = arith.constant 0 : index
    %c2 = arith.constant 2 : index
    %c0_13 = arith.constant 0 : index
    %13 = vector.load %arg1[%c0_12, %c2, %c0_13] : memref<1x342x256xbf16, #tpu.memory_space<vmem>>, vector<1x288x256xbf16>
    %14 = vector.shape_cast %13 : vector<1x288x256xbf16> to vector<288x256xbf16>
    %c2_14 = arith.constant 2 : index
    %c0_15 = arith.constant 0 : index
    %c0_16 = arith.constant 0 : index
    %15 = vector.load %arg2[%c2_14, %c0_15, %c0_16] : memref<9x256x128xbf16, #tpu.memory_space<vmem>>, vector<1x256x128xbf16>
    %16 = vector.shape_cast %15 : vector<1x256x128xbf16> to vector<256x128xbf16>
    %cst_17 = arith.constant dense<0.000000e+00> : vector<288x128xf32>
    %17 = tpu.matmul %14, %16, %cst_17 {dimension_numbers = #tpu.dot_dimension_numbers<[1], [0], [0], [1], [0, 0, 1, 1], [], []>} : vector<288x256xbf16>, vector<256x128xbf16>, vector<288x128xf32> -> vector<288x128xf32>
    %18 = arith.addf %12, %17 : vector<288x128xf32>
    %c0_18 = arith.constant 0 : index
    %c18 = arith.constant 18 : index
    %c0_19 = arith.constant 0 : index
    %19 = vector.load %arg1[%c0_18, %c18, %c0_19] : memref<1x342x256xbf16, #tpu.memory_space<vmem>>, vector<1x288x256xbf16>
    %20 = vector.shape_cast %19 : vector<1x288x256xbf16> to vector<288x256xbf16>
    %c3 = arith.constant 3 : index
    %c0_20 = arith.constant 0 : index
    %c0_21 = arith.constant 0 : index
    %21 = vector.load %arg2[%c3, %c0_20, %c0_21] : memref<9x256x128xbf16, #tpu.memory_space<vmem>>, vector<1x256x128xbf16>
    %22 = vector.shape_cast %21 : vector<1x256x128xbf16> to vector<256x128xbf16>
    %cst_22 = arith.constant dense<0.000000e+00> : vector<288x128xf32>
    %23 = tpu.matmul %20, %22, %cst_22 {dimension_numbers = #tpu.dot_dimension_numbers<[1], [0], [0], [1], [0, 0, 1, 1], [], []>} : vector<288x256xbf16>, vector<256x128xbf16>, vector<288x128xf32> -> vector<288x128xf32>
    %24 = arith.addf %18, %23 : vector<288x128xf32>
    %c0_23 = arith.constant 0 : index
    %c19 = arith.constant 19 : index
    %c0_24 = arith.constant 0 : index
    %25 = vector.load %arg1[%c0_23, %c19, %c0_24] : memref<1x342x256xbf16, #tpu.memory_space<vmem>>, vector<1x288x256xbf16>
    %26 = vector.shape_cast %25 : vector<1x288x256xbf16> to vector<288x256xbf16>
    %c4 = arith.constant 4 : index
    %c0_25 = arith.constant 0 : index
    %c0_26 = arith.constant 0 : index
    %27 = vector.load %arg2[%c4, %c0_25, %c0_26] : memref<9x256x128xbf16, #tpu.memory_space<vmem>>, vector<1x256x128xbf16>
    %28 = vector.shape_cast %27 : vector<1x256x128xbf16> to vector<256x128xbf16>
    %cst_27 = arith.constant dense<0.000000e+00> : vector<288x128xf32>
    %29 = tpu.matmul %26, %28, %cst_27 {dimension_numbers = #tpu.dot_dimension_numbers<[1], [0], [0], [1], [0, 0, 1, 1], [], []>} : vector<288x256xbf16>, vector<256x128xbf16>, vector<288x128xf32> -> vector<288x128xf32>
    %30 = arith.addf %24, %29 : vector<288x128xf32>
    %c0_28 = arith.constant 0 : index
    %c20 = arith.constant 20 : index
    %c0_29 = arith.constant 0 : index
    %31 = vector.load %arg1[%c0_28, %c20, %c0_29] : memref<1x342x256xbf16, #tpu.memory_space<vmem>>, vector<1x288x256xbf16>
    %32 = vector.shape_cast %31 : vector<1x288x256xbf16> to vector<288x256xbf16>
    %c5 = arith.constant 5 : index
    %c0_30 = arith.constant 0 : index
    %c0_31 = arith.constant 0 : index
    %33 = vector.load %arg2[%c5, %c0_30, %c0_31] : memref<9x256x128xbf16, #tpu.memory_space<vmem>>, vector<1x256x128xbf16>
    %34 = vector.shape_cast %33 : vector<1x256x128xbf16> to vector<256x128xbf16>
    %cst_32 = arith.constant dense<0.000000e+00> : vector<288x128xf32>
    %35 = tpu.matmul %32, %34, %cst_32 {dimension_numbers = #tpu.dot_dimension_numbers<[1], [0], [0], [1], [0, 0, 1, 1], [], []>} : vector<288x256xbf16>, vector<256x128xbf16>, vector<288x128xf32> -> vector<288x128xf32>
    %36 = arith.addf %30, %35 : vector<288x128xf32>
    %c0_33 = arith.constant 0 : index
    %c36 = arith.constant 36 : index
    %c0_34 = arith.constant 0 : index
    %37 = vector.load %arg1[%c0_33, %c36, %c0_34] : memref<1x342x256xbf16, #tpu.memory_space<vmem>>, vector<1x288x256xbf16>
    %38 = vector.shape_cast %37 : vector<1x288x256xbf16> to vector<288x256xbf16>
    %c6 = arith.constant 6 : index
    %c0_35 = arith.constant 0 : index
    %c0_36 = arith.constant 0 : index
    %39 = vector.load %arg2[%c6, %c0_35, %c0_36] : memref<9x256x128xbf16, #tpu.memory_space<vmem>>, vector<1x256x128xbf16>
    %40 = vector.shape_cast %39 : vector<1x256x128xbf16> to vector<256x128xbf16>
    %cst_37 = arith.constant dense<0.000000e+00> : vector<288x128xf32>
    %41 = tpu.matmul %38, %40, %cst_37 {dimension_numbers = #tpu.dot_dimension_numbers<[1], [0], [0], [1], [0, 0, 1, 1], [], []>} : vector<288x256xbf16>, vector<256x128xbf16>, vector<288x128xf32> -> vector<288x128xf32>
    %42 = arith.addf %36, %41 : vector<288x128xf32>
    %c0_38 = arith.constant 0 : index
    %c37 = arith.constant 37 : index
    %c0_39 = arith.constant 0 : index
    %43 = vector.load %arg1[%c0_38, %c37, %c0_39] : memref<1x342x256xbf16, #tpu.memory_space<vmem>>, vector<1x288x256xbf16>
    %44 = vector.shape_cast %43 : vector<1x288x256xbf16> to vector<288x256xbf16>
    %c7 = arith.constant 7 : index
    %c0_40 = arith.constant 0 : index
    %c0_41 = arith.constant 0 : index
    %45 = vector.load %arg2[%c7, %c0_40, %c0_41] : memref<9x256x128xbf16, #tpu.memory_space<vmem>>, vector<1x256x128xbf16>
    %46 = vector.shape_cast %45 : vector<1x256x128xbf16> to vector<256x128xbf16>
    %cst_42 = arith.constant dense<0.000000e+00> : vector<288x128xf32>
    %47 = tpu.matmul %44, %46, %cst_42 {dimension_numbers = #tpu.dot_dimension_numbers<[1], [0], [0], [1], [0, 0, 1, 1], [], []>} : vector<288x256xbf16>, vector<256x128xbf16>, vector<288x128xf32> -> vector<288x128xf32>
    %48 = arith.addf %42, %47 : vector<288x128xf32>
    %c0_43 = arith.constant 0 : index
    %c38 = arith.constant 38 : index
    %c0_44 = arith.constant 0 : index
    %49 = vector.load %arg1[%c0_43, %c38, %c0_44] : memref<1x342x256xbf16, #tpu.memory_space<vmem>>, vector<1x288x256xbf16>
    %50 = vector.shape_cast %49 : vector<1x288x256xbf16> to vector<288x256xbf16>
    %c8 = arith.constant 8 : index
    %c0_45 = arith.constant 0 : index
    %c0_46 = arith.constant 0 : index
    %51 = vector.load %arg2[%c8, %c0_45, %c0_46] : memref<9x256x128xbf16, #tpu.memory_space<vmem>>, vector<1x256x128xbf16>
    %52 = vector.shape_cast %51 : vector<1x256x128xbf16> to vector<256x128xbf16>
    %cst_47 = arith.constant dense<0.000000e+00> : vector<288x128xf32>
    %53 = tpu.matmul %50, %52, %cst_47 {dimension_numbers = #tpu.dot_dimension_numbers<[1], [0], [0], [1], [0, 0, 1, 1], [], []>} : vector<288x256xbf16>, vector<256x128xbf16>, vector<288x128xf32> -> vector<288x128xf32>
    %54 = arith.addf %48, %53 : vector<288x128xf32>
    %c0_48 = arith.constant 0 : index
    %c0_49 = arith.constant 0 : index
    %55 = vector.load %arg3[%c0_48, %c0_49] : memref<1x128xf32, #tpu.memory_space<vmem>>, vector<1x128xf32>
    %56 = vector.broadcast %55 : vector<1x128xf32> to vector<288x128xf32>
    %57 = arith.addf %54, %56 : vector<288x128xf32>
    %58 = arith.truncf %57 : vector<288x128xf32> to vector<288x128xbf16>
    %c0_50 = arith.constant 0 : index
    %c0_51 = arith.constant 0 : index
    %c0_52 = arith.constant 0 : index
    %59 = vector.load %arg4[%c0_50, %c0_51, %c0_52] : memref<1x288x128xbf16, #tpu.memory_space<vmem>>, vector<1x288x128xbf16>
    %60 = vector.shape_cast %59 : vector<1x288x128xbf16> to vector<288x128xbf16>
    %61 = vector.shape_cast %58 : vector<288x128xbf16> to vector<1x288x128xbf16>
    tpu.vector_store %arg4[%c0_50, %c0_51, %c0_52], %61 {strides = array<i32>} : memref<1x288x128xbf16, #tpu.memory_space<vmem>>, vector<1x288x128xbf16>,
    return
  }
  func.func @transform_0(%arg0: i32) -> (i32, i32, i32) {
    %c0_i32 = arith.constant 0 : i32
    %c0_i32_0 = arith.constant 0 : i32
    %c0_i32_1 = arith.constant 0 : i32
    return %arg0, %c0_i32, %c0_i32_0 : i32, i32, i32
  }
  func.func @transform_1(%arg0: i32) -> (i32, i32, i32) {
    %c0_i32 = arith.constant 0 : i32
    %c0_i32_0 = arith.constant 0 : i32
    %c0_i32_1 = arith.constant 0 : i32
    %c0_i32_2 = arith.constant 0 : i32
    return %c0_i32, %c0_i32_0, %c0_i32_1 : i32, i32, i32
  }
  func.func @transform_2(%arg0: i32) -> (i32, i32) {
    %c0_i32 = arith.constant 0 : i32
    %c0_i32_0 = arith.constant 0 : i32
    %c0_i32_1 = arith.constant 0 : i32
    return %c0_i32, %c0_i32_0 : i32, i32
  }
  func.func @transform_3(%arg0: i32) -> (i32, i32, i32) {
    %c0_i32 = arith.constant 0 : i32
    %c0_i32_0 = arith.constant 0 : i32
    %c0_i32_1 = arith.constant 0 : i32
    return %arg0, %c0_i32, %c0_i32_0 : i32, i32, i32
  }
}

module attributes {stable_mosaic.version = 11 : i64} {
  func.func @_conv3x3_flat_kernel(%arg0: i32, %arg1: memref<1x110x256xbf16, #tpu.memory_space<vmem>>, %arg2: memref<9x256x256xbf16, #tpu.memory_space<vmem>>, %arg3: memref<1x256xf32, #tpu.memory_space<vmem>>, %arg4: memref<1x80x256xbf16, #tpu.memory_space<vmem>>) attributes {dimension_semantics = [#tpu.dimension_semantics<parallel>], iteration_bounds = array<i64: 2>, scalar_prefetch = 0 : i64, scratch_operands = 0 : i64, tpu.core_type = #tpu.core_type<tc>, window_params = [{transform_indices = @transform_0, window_bounds = array<i64: 1, 110, 256>}, {pipeline_mode = #tpu.pipeline_mode<synchronous>, transform_indices = @transform_1, window_bounds = array<i64: 9, 256, 256>}, {pipeline_mode = #tpu.pipeline_mode<synchronous>, transform_indices = @transform_2, window_bounds = array<i64: 1, 256>}, {transform_indices = @transform_3, window_bounds = array<i64: 1, 80, 256>}]} {
    %cst = arith.constant 0.000000e+00 : f32
    %0 = vector.broadcast %cst : f32 to vector<80x256xf32>
    %c0 = arith.constant 0 : index
    %c0_0 = arith.constant 0 : index
    %c0_1 = arith.constant 0 : index
    %1 = vector.load %arg1[%c0, %c0_0, %c0_1] : memref<1x110x256xbf16, #tpu.memory_space<vmem>>, vector<1x80x256xbf16>
    %2 = vector.shape_cast %1 : vector<1x80x256xbf16> to vector<80x256xbf16>
    %c0_2 = arith.constant 0 : index
    %c0_3 = arith.constant 0 : index
    %c0_4 = arith.constant 0 : index
    %3 = vector.load %arg2[%c0_2, %c0_3, %c0_4] : memref<9x256x256xbf16, #tpu.memory_space<vmem>>, vector<1x256x256xbf16>
    %4 = vector.shape_cast %3 : vector<1x256x256xbf16> to vector<256x256xbf16>
    %cst_5 = arith.constant dense<0.000000e+00> : vector<80x256xf32>
    %5 = tpu.matmul %2, %4, %cst_5 {dimension_numbers = #tpu.dot_dimension_numbers<[1], [0], [0], [1], [0, 0, 1, 1], [], []>} : vector<80x256xbf16>, vector<256x256xbf16>, vector<80x256xf32> -> vector<80x256xf32>
    %6 = arith.addf %0, %5 : vector<80x256xf32>
    %c0_6 = arith.constant 0 : index
    %c1 = arith.constant 1 : index
    %c0_7 = arith.constant 0 : index
    %7 = vector.load %arg1[%c0_6, %c1, %c0_7] : memref<1x110x256xbf16, #tpu.memory_space<vmem>>, vector<1x80x256xbf16>
    %8 = vector.shape_cast %7 : vector<1x80x256xbf16> to vector<80x256xbf16>
    %c1_8 = arith.constant 1 : index
    %c0_9 = arith.constant 0 : index
    %c0_10 = arith.constant 0 : index
    %9 = vector.load %arg2[%c1_8, %c0_9, %c0_10] : memref<9x256x256xbf16, #tpu.memory_space<vmem>>, vector<1x256x256xbf16>
    %10 = vector.shape_cast %9 : vector<1x256x256xbf16> to vector<256x256xbf16>
    %cst_11 = arith.constant dense<0.000000e+00> : vector<80x256xf32>
    %11 = tpu.matmul %8, %10, %cst_11 {dimension_numbers = #tpu.dot_dimension_numbers<[1], [0], [0], [1], [0, 0, 1, 1], [], []>} : vector<80x256xbf16>, vector<256x256xbf16>, vector<80x256xf32> -> vector<80x256xf32>
    %12 = arith.addf %6, %11 : vector<80x256xf32>
    %c0_12 = arith.constant 0 : index
    %c2 = arith.constant 2 : index
    %c0_13 = arith.constant 0 : index
    %13 = vector.load %arg1[%c0_12, %c2, %c0_13] : memref<1x110x256xbf16, #tpu.memory_space<vmem>>, vector<1x80x256xbf16>
    %14 = vector.shape_cast %13 : vector<1x80x256xbf16> to vector<80x256xbf16>
    %c2_14 = arith.constant 2 : index
    %c0_15 = arith.constant 0 : index
    %c0_16 = arith.constant 0 : index
    %15 = vector.load %arg2[%c2_14, %c0_15, %c0_16] : memref<9x256x256xbf16, #tpu.memory_space<vmem>>, vector<1x256x256xbf16>
    %16 = vector.shape_cast %15 : vector<1x256x256xbf16> to vector<256x256xbf16>
    %cst_17 = arith.constant dense<0.000000e+00> : vector<80x256xf32>
    %17 = tpu.matmul %14, %16, %cst_17 {dimension_numbers = #tpu.dot_dimension_numbers<[1], [0], [0], [1], [0, 0, 1, 1], [], []>} : vector<80x256xbf16>, vector<256x256xbf16>, vector<80x256xf32> -> vector<80x256xf32>
    %18 = arith.addf %12, %17 : vector<80x256xf32>
    %c0_18 = arith.constant 0 : index
    %c10 = arith.constant 10 : index
    %c0_19 = arith.constant 0 : index
    %19 = vector.load %arg1[%c0_18, %c10, %c0_19] : memref<1x110x256xbf16, #tpu.memory_space<vmem>>, vector<1x80x256xbf16>
    %20 = vector.shape_cast %19 : vector<1x80x256xbf16> to vector<80x256xbf16>
    %c3 = arith.constant 3 : index
    %c0_20 = arith.constant 0 : index
    %c0_21 = arith.constant 0 : index
    %21 = vector.load %arg2[%c3, %c0_20, %c0_21] : memref<9x256x256xbf16, #tpu.memory_space<vmem>>, vector<1x256x256xbf16>
    %22 = vector.shape_cast %21 : vector<1x256x256xbf16> to vector<256x256xbf16>
    %cst_22 = arith.constant dense<0.000000e+00> : vector<80x256xf32>
    %23 = tpu.matmul %20, %22, %cst_22 {dimension_numbers = #tpu.dot_dimension_numbers<[1], [0], [0], [1], [0, 0, 1, 1], [], []>} : vector<80x256xbf16>, vector<256x256xbf16>, vector<80x256xf32> -> vector<80x256xf32>
    %24 = arith.addf %18, %23 : vector<80x256xf32>
    %c0_23 = arith.constant 0 : index
    %c11 = arith.constant 11 : index
    %c0_24 = arith.constant 0 : index
    %25 = vector.load %arg1[%c0_23, %c11, %c0_24] : memref<1x110x256xbf16, #tpu.memory_space<vmem>>, vector<1x80x256xbf16>
    %26 = vector.shape_cast %25 : vector<1x80x256xbf16> to vector<80x256xbf16>
    %c4 = arith.constant 4 : index
    %c0_25 = arith.constant 0 : index
    %c0_26 = arith.constant 0 : index
    %27 = vector.load %arg2[%c4, %c0_25, %c0_26] : memref<9x256x256xbf16, #tpu.memory_space<vmem>>, vector<1x256x256xbf16>
    %28 = vector.shape_cast %27 : vector<1x256x256xbf16> to vector<256x256xbf16>
    %cst_27 = arith.constant dense<0.000000e+00> : vector<80x256xf32>
    %29 = tpu.matmul %26, %28, %cst_27 {dimension_numbers = #tpu.dot_dimension_numbers<[1], [0], [0], [1], [0, 0, 1, 1], [], []>} : vector<80x256xbf16>, vector<256x256xbf16>, vector<80x256xf32> -> vector<80x256xf32>
    %30 = arith.addf %24, %29 : vector<80x256xf32>
    %c0_28 = arith.constant 0 : index
    %c12 = arith.constant 12 : index
    %c0_29 = arith.constant 0 : index
    %31 = vector.load %arg1[%c0_28, %c12, %c0_29] : memref<1x110x256xbf16, #tpu.memory_space<vmem>>, vector<1x80x256xbf16>
    %32 = vector.shape_cast %31 : vector<1x80x256xbf16> to vector<80x256xbf16>
    %c5 = arith.constant 5 : index
    %c0_30 = arith.constant 0 : index
    %c0_31 = arith.constant 0 : index
    %33 = vector.load %arg2[%c5, %c0_30, %c0_31] : memref<9x256x256xbf16, #tpu.memory_space<vmem>>, vector<1x256x256xbf16>
    %34 = vector.shape_cast %33 : vector<1x256x256xbf16> to vector<256x256xbf16>
    %cst_32 = arith.constant dense<0.000000e+00> : vector<80x256xf32>
    %35 = tpu.matmul %32, %34, %cst_32 {dimension_numbers = #tpu.dot_dimension_numbers<[1], [0], [0], [1], [0, 0, 1, 1], [], []>} : vector<80x256xbf16>, vector<256x256xbf16>, vector<80x256xf32> -> vector<80x256xf32>
    %36 = arith.addf %30, %35 : vector<80x256xf32>
    %c0_33 = arith.constant 0 : index
    %c20 = arith.constant 20 : index
    %c0_34 = arith.constant 0 : index
    %37 = vector.load %arg1[%c0_33, %c20, %c0_34] : memref<1x110x256xbf16, #tpu.memory_space<vmem>>, vector<1x80x256xbf16>
    %38 = vector.shape_cast %37 : vector<1x80x256xbf16> to vector<80x256xbf16>
    %c6 = arith.constant 6 : index
    %c0_35 = arith.constant 0 : index
    %c0_36 = arith.constant 0 : index
    %39 = vector.load %arg2[%c6, %c0_35, %c0_36] : memref<9x256x256xbf16, #tpu.memory_space<vmem>>, vector<1x256x256xbf16>
    %40 = vector.shape_cast %39 : vector<1x256x256xbf16> to vector<256x256xbf16>
    %cst_37 = arith.constant dense<0.000000e+00> : vector<80x256xf32>
    %41 = tpu.matmul %38, %40, %cst_37 {dimension_numbers = #tpu.dot_dimension_numbers<[1], [0], [0], [1], [0, 0, 1, 1], [], []>} : vector<80x256xbf16>, vector<256x256xbf16>, vector<80x256xf32> -> vector<80x256xf32>
    %42 = arith.addf %36, %41 : vector<80x256xf32>
    %c0_38 = arith.constant 0 : index
    %c21 = arith.constant 21 : index
    %c0_39 = arith.constant 0 : index
    %43 = vector.load %arg1[%c0_38, %c21, %c0_39] : memref<1x110x256xbf16, #tpu.memory_space<vmem>>, vector<1x80x256xbf16>
    %44 = vector.shape_cast %43 : vector<1x80x256xbf16> to vector<80x256xbf16>
    %c7 = arith.constant 7 : index
    %c0_40 = arith.constant 0 : index
    %c0_41 = arith.constant 0 : index
    %45 = vector.load %arg2[%c7, %c0_40, %c0_41] : memref<9x256x256xbf16, #tpu.memory_space<vmem>>, vector<1x256x256xbf16>
    %46 = vector.shape_cast %45 : vector<1x256x256xbf16> to vector<256x256xbf16>
    %cst_42 = arith.constant dense<0.000000e+00> : vector<80x256xf32>
    %47 = tpu.matmul %44, %46, %cst_42 {dimension_numbers = #tpu.dot_dimension_numbers<[1], [0], [0], [1], [0, 0, 1, 1], [], []>} : vector<80x256xbf16>, vector<256x256xbf16>, vector<80x256xf32> -> vector<80x256xf32>
    %48 = arith.addf %42, %47 : vector<80x256xf32>
    %c0_43 = arith.constant 0 : index
    %c22 = arith.constant 22 : index
    %c0_44 = arith.constant 0 : index
    %49 = vector.load %arg1[%c0_43, %c22, %c0_44] : memref<1x110x256xbf16, #tpu.memory_space<vmem>>, vector<1x80x256xbf16>
    %50 = vector.shape_cast %49 : vector<1x80x256xbf16> to vector<80x256xbf16>
    %c8 = arith.constant 8 : index
    %c0_45 = arith.constant 0 : index
    %c0_46 = arith.constant 0 : index
    %51 = vector.load %arg2[%c8, %c0_45, %c0_46] : memref<9x256x256xbf16, #tpu.memory_space<vmem>>, vector<1x256x256xbf16>
    %52 = vector.shape_cast %51 : vector<1x256x256xbf16> to vector<256x256xbf16>
    %cst_47 = arith.constant dense<0.000000e+00> : vector<80x256xf32>
    %53 = tpu.matmul %50, %52, %cst_47 {dimension_numbers = #tpu.dot_dimension_numbers<[1], [0], [0], [1], [0, 0, 1, 1], [], []>} : vector<80x256xbf16>, vector<256x256xbf16>, vector<80x256xf32> -> vector<80x256xf32>
    %54 = arith.addf %48, %53 : vector<80x256xf32>
    %c0_48 = arith.constant 0 : index
    %c0_49 = arith.constant 0 : index
    %55 = vector.load %arg3[%c0_48, %c0_49] : memref<1x256xf32, #tpu.memory_space<vmem>>, vector<1x256xf32>
    %56 = vector.broadcast %55 : vector<1x256xf32> to vector<80x256xf32>
    %57 = arith.addf %54, %56 : vector<80x256xf32>
    %58 = arith.truncf %57 : vector<80x256xf32> to vector<80x256xbf16>
    %c0_50 = arith.constant 0 : index
    %c0_51 = arith.constant 0 : index
    %c0_52 = arith.constant 0 : index
    %59 = vector.load %arg4[%c0_50, %c0_51, %c0_52] : memref<1x80x256xbf16, #tpu.memory_space<vmem>>, vector<1x80x256xbf16>
    %60 = vector.shape_cast %59 : vector<1x80x256xbf16> to vector<80x256xbf16>
    %61 = vector.shape_cast %58 : vector<80x256xbf16> to vector<1x80x256xbf16>
    tpu.vector_store %arg4[%c0_50, %c0_51, %c0_52], %61 {strides = array<i32>} : memref<1x80x256xbf16, #tpu.memory_space<vmem>>, vector<1x80x256xbf16>,
    return
  }
  func.func @transform_0(%arg0: i32) -> (i32, i32, i32) {
    %c0_i32 = arith.constant 0 : i32
    %c0_i32_0 = arith.constant 0 : i32
    %c0_i32_1 = arith.constant 0 : i32
    return %arg0, %c0_i32, %c0_i32_0 : i32, i32, i32
  }
  func.func @transform_1(%arg0: i32) -> (i32, i32, i32) {
    %c0_i32 = arith.constant 0 : i32
    %c0_i32_0 = arith.constant 0 : i32
    %c0_i32_1 = arith.constant 0 : i32
    %c0_i32_2 = arith.constant 0 : i32
    return %c0_i32, %c0_i32_0, %c0_i32_1 : i32, i32, i32
  }
  func.func @transform_2(%arg0: i32) -> (i32, i32) {
    %c0_i32 = arith.constant 0 : i32
    %c0_i32_0 = arith.constant 0 : i32
    %c0_i32_1 = arith.constant 0 : i32
    return %c0_i32, %c0_i32_0 : i32, i32
  }
  func.func @transform_3(%arg0: i32) -> (i32, i32, i32) {
    %c0_i32 = arith.constant 0 : i32
    %c0_i32_0 = arith.constant 0 : i32
    %c0_i32_1 = arith.constant 0 : i32
    return %arg0, %c0_i32, %c0_i32_0 : i32, i32, i32
  }
}

</mosaic_0001>

<llo_original>
// kernel: frequency_transfer_forward.3
$region0: #{frequency_transfer_forward.3}
  #allocation0 [shape = 'u32[]', space=smem, size = 0x4, offset = 0x4, fixed_abs, tag = 'smem constant byte address 0x4 - core index']
  #allocation1 [shape = 'u32[72,128]{1,0:T(1,128)}', space=vmem, size = 0x9000, scoped, tag = 'internal scratch']
  %s0 = inlined_call_operand.vmem [shape: bf16[2,256,32], index: 0, kind: input, shape index: {}]
  %s1 = inlined_call_operand.vmem [shape: bf16[32,256], index: 1, kind: input, shape index: {}]
  %s2 = inlined_call_operand.vmem [shape: f32[1,256], index: 2, kind: input, shape index: {}]
  %s3 = inlined_call_operand.vmem [shape: bf16[2,19,18,256], index: 3, kind: output, shape index: {0}]
  %s4 = inlined_call_operand.vmem [shape: bf16[2,11,10,256], index: 4, kind: output, shape index: {1}]
  %5 = xla_tuple %s3, %s4
  %s6 = sld [smem:[#allocation0]]
  $region53: #{frequency_transfer_forward.3} parent=0
    _
  %s8 = ssub.s32 1, %s6
  %s9 = scalar_select 0, %s8, %s6
  loop: start=0, step=1, limit=4
  $region2: #{frequency_transfer_forward.3} parent=0 // loop_pre_header
    _
  $region3: #{frequency_transfer_forward.3} parent=0 // loop_header
    %s11 = sphi 0, %s15
    %p12 = scmp.ge.s32.totalorder %s11, 4
    %s21 = sphi 0, %s23
    %s24 = sphi 0, %s21
    %s25 = sphi 0, %s24
    %s41 = sphi 0, %s25
    %s45 = sphi 0, %s45
    %s47 = sphi 0, %s45
    %s48 = sphi 0, %s47
    %s62 = sphi 0, %s48
    %s66 = sphi 0, %s66
    %s68 = sphi 0, %s66
    %s69 = sphi 0, %s68
    %s83 = sphi 0, %s69
    %s89 = sphi 0, %s91
    %s92 = sphi 0, %s89
    %s93 = sphi 0, %s92
    %s109 = sphi 0, %s93
    %s115 = sphi 0, %s117
    %s118 = sphi 0, %s115
    %s119 = sphi 0, %s118
    %s135 = sphi 0, %s119
  $region4: #{frequency_transfer_forward.3} parent=0 // loop_header_branch
    %14 = sbr.rel (%p12) target = $region8
  $region5: #{frequency_transfer_forward.3} parent=0 // loop_body
    %s16 = ssub.s32 %s11, 1
    %s17 = ssub.s32 %s11, 2
    %s18 = sadd.s32 %s11, 1
    %s19 = ssub.s32 %s11, %s18
    %p20 = scmp.eq.s32.totalorder %s19, 0
    %s22 = sadd.s32 %s21, 1
    %s23 = scalar_select %p20, %s21, %s22
    %p26 = pneg %p20
    %p27 = scmp.eq.s32.totalorder %s11, 1
    %p28 = por %p26, %p27
    %p29 = scmp.ne.s32.totalorder %s21, %s24
    %p30 = scmp.eq.s32.totalorder %s11, 0
    %p31 = por %p29, %p30
    %p32 = scmp.ne.s32.totalorder %s21, %s24
    %p33 = scmp.eq.s32.totalorder %s16, 1
    %p34 = por %p32, %p33
    %p35 = scmp.ne.s32.totalorder %s24, %s25
    %p36 = scmp.eq.s32.totalorder %s16, 0
    %p37 = por %p35, %p36
    %p38 = scmp.ne.s32.totalorder %s24, %s25
    %p39 = scmp.eq.s32.totalorder %s17, 1
    %p40 = por %p38, %p39
    %p42 = scmp.ne.s32.totalorder %s25, %s41
    %p43 = scmp.eq.s32.totalorder %s17, 0
    %p44 = por %p42, %p43
    %s46 = sadd.s32 %s45, 1
    %p49 = scmp.eq.s32.totalorder %s11, 1
    %p50 = scmp.ne.s32.totalorder %s45, %s47
    %p51 = scmp.eq.s32.totalorder %s11, 0
    %p52 = por %p50, %p51
    %p53 = scmp.ne.s32.totalorder %s45, %s47
    %p54 = scmp.eq.s32.totalorder %s16, 1
    %p55 = por %p53, %p54
    %p56 = scmp.ne.s32.totalorder %s47, %s48
    %p57 = scmp.eq.s32.totalorder %s16, 0
    %p58 = por %p56, %p57
    %p59 = scmp.ne.s32.totalorder %s47, %s48
    %p60 = scmp.eq.s32.totalorder %s17, 1
    %p61 = por %p59, %p60
    %p63 = scmp.ne.s32.totalorder %s48, %s62
    %p64 = scmp.eq.s32.totalorder %s17, 0
    %p65 = por %p63, %p64
    %s67 = sadd.s32 %s66, 1
    %p70 = scmp.eq.s32.totalorder %s11, 1
    %p71 = scmp.ne.s32.totalorder %s66, %s68
    %p72 = scmp.eq.s32.totalorder %s11, 0
    %p73 = por %p71, %p72
    %p74 = scmp.ne.s32.totalorder %s66, %s68
    %p75 = scmp.eq.s32.totalorder %s16, 1
    %p76 = por %p74, %p75
    %p77 = scmp.ne.s32.totalorder %s68, %s69
    %p78 = scmp.eq.s32.totalorder %s16, 0
    %p79 = por %p77, %p78
    %p80 = scmp.ne.s32.totalorder %s68, %s69
    %p81 = scmp.eq.s32.totalorder %s17, 1
    %p82 = por %p80, %p81
    %p84 = scmp.ne.s32.totalorder %s69, %s83
    %p85 = scmp.eq.s32.totalorder %s17, 0
    %p86 = por %p84, %p85
    %s87 = ssub.s32 %s11, %s18
    %p88 = scmp.eq.s32.totalorder %s87, 0
    %s90 = sadd.s32 %s89, 1
    %s91 = scalar_select %p88, %s89, %s90
    %p94 = pneg %p88
    %p95 = scmp.eq.s32.totalorder %s11, 1
    %p96 = por %p94, %p95
    %p97 = scmp.ne.s32.totalorder %s89, %s92
    %p98 = scmp.eq.s32.totalorder %s11, 0
    %p99 = por %p97, %p98
    %p100 = scmp.ne.s32.totalorder %s89, %s92
    %p101 = scmp.eq.s32.totalorder %s16, 1
    %p102 = por %p100, %p101
    %p103 = scmp.ne.s32.totalorder %s92, %s93
    %p104 = scmp.eq.s32.totalorder %s16, 0
    %p105 = por %p103, %p104
    %p106 = scmp.ne.s32.totalorder %s92, %s93
    %p107 = scmp.eq.s32.totalorder %s17, 1
    %p108 = por %p106, %p107
    %p110 = scmp.ne.s32.totalorder %s93, %s109
    %p111 = scmp.eq.s32.totalorder %s17, 0
    %p112 = por %p110, %p111
    %s113 = ssub.s32 %s11, %s18
    %p114 = scmp.eq.s32.totalorder %s113, 0
    %s116 = sadd.s32 %s115, 1
    %s117 = scalar_select %p114, %s115, %s116
    %p120 = pneg %p114
    %p121 = scmp.eq.s32.totalorder %s11, 1
    %p122 = por %p120, %p121
    %p123 = scmp.ne.s32.totalorder %s115, %s118
    %p124 = scmp.eq.s32.totalorder %s11, 0
    %p125 = por %p123, %p124
    %p126 = scmp.ne.s32.totalorder %s115, %s118
    %p127 = scmp.eq.s32.totalorder %s16, 1
    %p128 = por %p126, %p127
    %p129 = scmp.ne.s32.totalorder %s118, %s119
    %p130 = scmp.eq.s32.totalorder %s16, 0
    %p131 = por %p129, %p130
    %p132 = scmp.ne.s32.totalorder %s118, %s119
    %p133 = scmp.eq.s32.totalorder %s17, 1
    %p134 = por %p132, %p133
    %p136 = scmp.ne.s32.totalorder %s119, %s135
    %p137 = scmp.eq.s32.totalorder %s17, 0
    %p138 = por %p136, %p137
    %p139 = scmp.le.s32.totalorder 1, %s11
    %p140 = scmp.lt.s32.totalorder %s11, 3
    %p141 = pnand %p139, %p140
    %p142 = pneg %p141
    // Predicated region
    $region9: #{frequency_transfer_forward.3} parent=5 // pred_check
      _
    $region10: #{frequency_transfer_forward.3} parent=5 // pred_check_branch
      %144 = sbr.rel (%p141) target = $region12
    $region11: #{frequency_transfer_forward.3} parent=5 // pred_region
      %s145 = ssub.s32 %s11, 1
      // Predicated region
      $region13: #{frequency_transfer_forward.3} parent=11 // pred_check
        %p146 = pneg %p58
      $region14: #{frequency_transfer_forward.3} parent=11 // pred_check_branch
        %148 = sbr.rel (%p146) target = $region16
      $region15: #{frequency_transfer_forward.3} parent=11 // pred_region
        _
      $region16: #{frequency_transfer_forward.3} parent=11 // pred_fallthru
        _
      // Predicated region
      $region17: #{frequency_transfer_forward.3} parent=11 // pred_check
        %p149 = pneg %p79
      $region18: #{frequency_transfer_forward.3} parent=11 // pred_check_branch
        %151 = sbr.rel (%p149) target = $region20
      $region19: #{frequency_transfer_forward.3} parent=11 // pred_region
        _
      $region20: #{frequency_transfer_forward.3} parent=11 // pred_fallthru
        _
    $region12: #{frequency_transfer_forward.3} parent=5 // pred_fallthru
      _
    %p152 = scmp.lt.s32.totalorder %s11, 2
    // Predicated region
    $region21: #{frequency_transfer_forward.3} parent=5 // pred_check
      %p153 = pneg %p152
    $region22: #{frequency_transfer_forward.3} parent=5 // pred_check_branch
      %155 = sbr.rel (%p153) target = $region24
    $region23: #{frequency_transfer_forward.3} parent=5 // pred_region
      // Predicated region
      $region25: #{frequency_transfer_forward.3} parent=23 // pred_check
        %p156 = pneg %p31
      $region26: #{frequency_transfer_forward.3} parent=23 // pred_check_branch
        %158 = sbr.rel (%p156) target = $region28
      $region27: #{frequency_transfer_forward.3} parent=23 // pred_region
        %p159 = scmp.lt.s32.totalorder %s11, 1
        %s160 = scalar_select %p159, %s11, 1
        %s161 = smul.addr %s160, 32
        %s162 = smul.addr %s161, 4
        %s163 = scalar_lea.vmem %s0, %s162
      $region28: #{frequency_transfer_forward.3} parent=23 // pred_fallthru
        _
    $region24: #{frequency_transfer_forward.3} parent=5 // pred_fallthru
      _
    %p164 = scmp.le.s32.totalorder 1, %s11
    %p165 = scmp.lt.s32.totalorder %s11, 3
    %p166 = pnand %p164, %p165
    %p167 = pneg %p166
    // Predicated region
    $region29: #{frequency_transfer_forward.3} parent=5 // pred_check
      _
    $region30: #{frequency_transfer_forward.3} parent=5 // pred_check_branch
      %169 = sbr.rel (%p166) target = $region32
    $region31: #{frequency_transfer_forward.3} parent=5 // pred_region
      %s170 = ssub.s32 %s11, 1
      %p171 = scmp.lt.s32.totalorder %s16, 1
      %s172 = scalar_select %p171, %s16, 1
      %s173 = smul.addr %s172, 32
      %s174 = smul.addr %s173, 4
      %s175 = scalar_lea.vmem %s0, %s174
      %p176 = pneg %p37
      %p177 = pneg %p34
      %p178 = pneg %p58
      %p179 = pneg %p55
      %p180 = pneg %p79
      %p181 = pneg %p76
      %p182 = pneg %p105
      %p183 = pneg %p102
      %p184 = scmp.lt.s32.totalorder %s16, 1
      %s185 = scalar_select %p184, %s16, 1
      %s186 = smul.addr %s185, 114
      %s187 = smul.addr %s186, 4
      %s188 = scalar_lea.vmem %s3, %s187
      %p189 = pneg %p131
      %p190 = pneg %p128
      %p191 = scmp.lt.s32.totalorder %s16, 1
      %s192 = scalar_select %p191, %s16, 1
      %s193 = smul.addr %s192, 44
      %s194 = smul.addr %s193, 4
      %s195 = scalar_lea.vmem %s4, %s194
      %p196 = scmp.lt.s32.totalorder %s16, 1
      %s197 = scalar_select %p196, %s16, 1
      %s198 = smul.addr %s197, 32
      %s199 = smul.addr %s198, 4
      %s200 = scalar_lea.vmem %s0, %s199
      %p201 = scmp.lt.s32.totalorder %s16, 1
      %s202 = scalar_select %p201, %s16, 1
      %s203 = smul.addr %s202, 114
      %s204 = smul.addr %s203, 4
      %s205 = scalar_lea.vmem %s3, %s204
      %p206 = scmp.lt.s32.totalorder %s16, 1
      %s207 = scalar_select %p206, %s16, 1
      %s208 = smul.addr %s207, 44
      %s209 = smul.addr %s208, 4
      %s210 = scalar_lea.vmem %s4, %s209
      %v212 = vld [vmem:[%s200] sm:$0xf]
      %v213 = vld [vmem:[%s200 + $0x4] sm:$0xf]
      %v214 = vld [vmem:[%s200 + $0x8] sm:$0xf]
      %v215 = vld [vmem:[%s200 + $0xc] sm:$0xf]
      %v216 = vld [vmem:[%s200 + $0x10] sm:$0xf]
      %v217 = vld [vmem:[%s200 + $0x14] sm:$0xf]
      %v218 = vld [vmem:[%s200 + $0x18] sm:$0xf]
      %v219 = vld [vmem:[%s200 + $0x1c] sm:$0xf]
      %v220 = vld [vmem:[%s200 + $0x20] sm:$0xf]
      %v221 = vld [vmem:[%s200 + $0x24] sm:$0xf]
      %v222 = vld [vmem:[%s200 + $0x28] sm:$0xf]
      %v223 = vld [vmem:[%s200 + $0x2c] sm:$0xf]
      %v224 = vld [vmem:[%s200 + $0x30] sm:$0xf]
      %v225 = vld [vmem:[%s200 + $0x34] sm:$0xf]
      %v226 = vld [vmem:[%s200 + $0x38] sm:$0xf]
      %v227 = vld [vmem:[%s200 + $0x3c] sm:$0xf]
      %v228 = vld [vmem:[%s200 + $0x40] sm:$0xf]
      %v229 = vld [vmem:[%s200 + $0x44] sm:$0xf]
      %v230 = vld [vmem:[%s200 + $0x48] sm:$0xf]
      %v231 = vld [vmem:[%s200 + $0x4c] sm:$0xf]
      %v232 = vld [vmem:[%s200 + $0x50] sm:$0xf]
      %v233 = vld [vmem:[%s200 + $0x54] sm:$0xf]
      %v234 = vld [vmem:[%s200 + $0x58] sm:$0xf]
      %v235 = vld [vmem:[%s200 + $0x5c] sm:$0xf]
      %v236 = vld [vmem:[%s200 + $0x60] sm:$0xf]
      %v237 = vld [vmem:[%s200 + $0x64] sm:$0xf]
      %v238 = vld [vmem:[%s200 + $0x68] sm:$0xf]
      %v239 = vld [vmem:[%s200 + $0x6c] sm:$0xf]
      %v240 = vld [vmem:[%s200 + $0x70] sm:$0xf]
      %v241 = vld [vmem:[%s200 + $0x74] sm:$0xf]
      %v242 = vld [vmem:[%s200 + $0x78] sm:$0xf]
      %v243 = vld [vmem:[%s200 + $0x7c] sm:$0xf]
      %v244 = vld [vmem:[%s1] sm:$0xff]
      %v245 = vld [vmem:[%s1 + $0x8] sm:$0xff]
      %v246 = vld [vmem:[%s1 + $0x10] sm:$0xff]
      %v247 = vld [vmem:[%s1 + $0x18] sm:$0xff]
      %v248 = vld [vmem:[%s2] sm:$0x3]
      %v250 = vperm.slane %v248, 0
      %v251 = vperm.slane %v248, 1
      %v286 = vunpack.c.l.b16 %v212
      %v287 = vunpack.c.l.b16 %v213
      %v288 = vunpack.c.l.b16 %v214
      %v289 = vunpack.c.l.b16 %v215
      %v290 = vunpack.c.l.b16 %v216
      %v291 = vunpack.c.l.b16 %v217
      %v292 = vunpack.c.l.b16 %v218
      %v293 = vunpack.c.l.b16 %v219
      %v294 = vunpack.c.l.b16 %v220
      %v295 = vunpack.c.l.b16 %v221
      %v296 = vunpack.c.l.b16 %v222
      %v297 = vunpack.c.l.b16 %v223
      %v298 = vunpack.c.l.b16 %v224
      %v299 = vunpack.c.l.b16 %v225
      %v300 = vunpack.c.l.b16 %v226
      %v301 = vunpack.c.l.b16 %v227
      %v302 = vunpack.c.l.b16 %v228
      %v303 = vunpack.c.l.b16 %v229
      %v304 = vunpack.c.l.b16 %v230
      %v305 = vunpack.c.l.b16 %v231
      %v306 = vunpack.c.l.b16 %v232
      %v307 = vunpack.c.l.b16 %v233
      %v308 = vunpack.c.l.b16 %v234
      %v309 = vunpack.c.l.b16 %v235
      %v310 = vunpack.c.l.b16 %v236
      %v311 = vunpack.c.l.b16 %v237
      %v312 = vunpack.c.l.b16 %v238
      %v313 = vunpack.c.l.b16 %v239
      %v314 = vunpack.c.l.b16 %v240
      %v315 = vunpack.c.l.b16 %v241
      %v316 = vunpack.c.l.b16 %v242
      %v317 = vunpack.c.l.b16 %v243
      %v318 = vpack.c.b16 %v287, %v286
      %v319 = vpack.c.b16 %v289, %v288
      %v320 = vpack.c.b16 %v291, %v290
      %v321 = vpack.c.b16 %v293, %v292
      %v322 = vpack.c.b16 %v295, %v294
      %v323 = vpack.c.b16 %v297, %v296
      %v324 = vpack.c.b16 %v299, %v298
      %v325 = vpack.c.b16 %v301, %v300
      %v326 = vpack.c.b16 %v303, %v302
      %v327 = vpack.c.b16 %v305, %v304
      %v328 = vpack.c.b16 %v307, %v306
      %v329 = vpack.c.b16 %v309, %v308
      %v330 = vpack.c.b16 %v311, %v310
      %v331 = vpack.c.b16 %v313, %v312
      %v332 = vpack.c.b16 %v315, %v314
      %v333 = vpack.c.b16 %v317, %v316
      %v338 = vunpack.c.l.b16 %v244
      %v339 = vunpack.c.h.b16 %v244
      %v340 = vunpack.c.l.b16 %v245
      %v341 = vunpack.c.h.b16 %v245
      %v342 = vunpack.c.l.b16 %v246
      %v343 = vunpack.c.h.b16 %v246
      %v344 = vunpack.c.l.b16 %v247
      %v345 = vunpack.c.h.b16 %v247
      %v346 = vpack.c.b16 %v340, %v338
      %v347 = vpack.c.b16 %v341, %v339
      %v348 = vpack.c.b16 %v344, %v342
      %v349 = vpack.c.b16 %v345, %v343
      %vm354 = vcmask 261120
      %v356 = vsel %vm354, %v318, 0
      %v359 = vsel %vm354, %v319, 0
      %v362 = vsel %vm354, %v320, 0
      %v365 = vsel %vm354, %v321, 0
      %v368 = vsel %vm354, %v322, 0
      %v371 = vsel %vm354, %v323, 0
      %v374 = vsel %vm354, %v324, 0
      %v377 = vsel %vm354, %v325, 0
      %v380 = vsel %vm354, %v326, 0
      %v383 = vsel %vm354, %v327, 0
      %v386 = vsel %vm354, %v328, 0
      %v389 = vsel %vm354, %v329, 0
      %v392 = vsel %vm354, %v330, 0
      %v395 = vsel %vm354, %v331, 0
      %v398 = vsel %vm354, %v332, 0
      %v401 = vsel %vm354, %v333, 0
      %403 = vmatpush.bf16.msra.mxu0 0
      %404 = vmatpush.bf16.msra.mxu0 0
      %405 = vmatpush.bf16.msra.mxu0 0
      %406 = vmatpush.bf16.msra.mxu0 0
      %407 = vmatpush.bf16.msra.mxu0 0
      %408 = vmatpush.bf16.msra.mxu0 0
      %409 = vmatpush.bf16.msra.mxu0 %v348
      %410 = vmatpush.bf16.msra.mxu0 %v346
      %411 = vmatmul.bf16.gmra.mxu0 %v356
      %v412 = vpop.f32.mrf.mxu0
      %v413 = vadd.f32 %v250, %v412
      %v414 = vpop.f32.mrf.mxu0
      %v415 = vadd.f32 %v250, %v414
      %416 = vmatmul.bf16.gmra.mxu0 %v359
      %v417 = vpop.f32.mrf.mxu0
      %v418 = vadd.f32 %v250, %v417
      %v419 = vpop.f32.mrf.mxu0
      %v420 = vadd.f32 %v250, %v419
      %421 = vmatmul.bf16.gmra.mxu0 %v362
      %v422 = vpop.f32.mrf.mxu0
      %v423 = vadd.f32 %v250, %v422
      %v424 = vpop.f32.mrf.mxu0
      %v425 = vadd.f32 %v250, %v424
      %426 = vmatmul.bf16.gmra.mxu0 %v365
      %v427 = vpop.f32.mrf.mxu0
      %v428 = vadd.f32 %v250, %v427
      %v429 = vpop.f32.mrf.mxu0
      %v430 = vadd.f32 %v250, %v429
      %431 = vmatmul.bf16.gmra.mxu0 %v368
      %v432 = vpop.f32.mrf.mxu0
      %v433 = vadd.f32 %v250, %v432
      %v434 = vpop.f32.mrf.mxu0
      %v435 = vadd.f32 %v250, %v434
      %436 = vmatmul.bf16.gmra.mxu0 %v371
      %v437 = vpop.f32.mrf.mxu0
      %v438 = vadd.f32 %v250, %v437
      %v439 = vpop.f32.mrf.mxu0
      %v440 = vadd.f32 %v250, %v439
      %441 = vmatmul.bf16.gmra.mxu0 %v374
      %v442 = vpop.f32.mrf.mxu0
      %v443 = vadd.f32 %v250, %v442
      %v444 = vpop.f32.mrf.mxu0
      %v445 = vadd.f32 %v250, %v444
      %446 = vmatmul.bf16.gmra.mxu0 %v377
      %v447 = vpop.f32.mrf.mxu0
      %v448 = vadd.f32 %v250, %v447
      %v449 = vpop.f32.mrf.mxu0
      %v450 = vadd.f32 %v250, %v449
      %451 = vmatmul.bf16.gmra.mxu0 %v380
      %v452 = vpop.f32.mrf.mxu0
      %v453 = vadd.f32 %v250, %v452
      %v454 = vpop.f32.mrf.mxu0
      %v455 = vadd.f32 %v250, %v454
      %456 = vmatmul.bf16.gmra.mxu0 %v383
      %v457 = vpop.f32.mrf.mxu0
      %v458 = vadd.f32 %v250, %v457
      %v459 = vpop.f32.mrf.mxu0
      %v460 = vadd.f32 %v250, %v459
      %461 = vmatmul.bf16.gmra.mxu0 %v386
      %v462 = vpop.f32.mrf.mxu0
      %v463 = vadd.f32 %v250, %v462
      %v464 = vpop.f32.mrf.mxu0
      %v465 = vadd.f32 %v250, %v464
      %466 = vmatmul.bf16.gmra.mxu0 %v389
      %v467 = vpop.f32.mrf.mxu0
      %v468 = vadd.f32 %v250, %v467
      %v469 = vpop.f32.mrf.mxu0
      %v470 = vadd.f32 %v250, %v469
      %471 = vmatmul.bf16.gmra.mxu0 %v392
      %v472 = vpop.f32.mrf.mxu0
      %v473 = vadd.f32 %v250, %v472
      %v474 = vpop.f32.mrf.mxu0
      %v475 = vadd.f32 %v250, %v474
      %476 = vmatmul.bf16.gmra.mxu0 %v395
      %v477 = vpop.f32.mrf.mxu0
      %v478 = vadd.f32 %v250, %v477
      %v479 = vpop.f32.mrf.mxu0
      %v480 = vadd.f32 %v250, %v479
      %481 = vmatmul.bf16.gmra.mxu0 %v398
      %v482 = vpop.f32.mrf.mxu0
      %v483 = vadd.f32 %v250, %v482
      %v484 = vpop.f32.mrf.mxu0
      %v485 = vadd.f32 %v250, %v484
      %486 = vmatmul.bf16.gmra.mxu0 %v401
      %v487 = vpop.f32.mrf.mxu0
      %v488 = vadd.f32 %v250, %v487
      %v489 = vpop.f32.mrf.mxu0
      %v490 = vadd.f32 %v250, %v489
      %491 = vdwg.mxu0
      %492 = vmatpush.bf16.msra.mxu0 0
      %493 = vmatpush.bf16.msra.mxu0 0
      %494 = vmatpush.bf16.msra.mxu0 0
      %495 = vmatpush.bf16.msra.mxu0 0
      %496 = vmatpush.bf16.msra.mxu0 0
      %497 = vmatpush.bf16.msra.mxu0 0
      %498 = vmatpush.bf16.msra.mxu0 %v349
      %499 = vmatpush.bf16.msra.mxu0 %v347
      %500 = vmatmul.bf16.gmra.mxu0 %v356
      %v501 = vpop.f32.mrf.mxu0
      %v502 = vadd.f32 %v251, %v501
      %v503 = vpop.f32.mrf.mxu0
      %v504 = vadd.f32 %v251, %v503
      %505 = vmatmul.bf16.gmra.mxu0 %v359
      %v506 = vpop.f32.mrf.mxu0
      %v507 = vadd.f32 %v251, %v506
      %v508 = vpop.f32.mrf.mxu0
      %v509 = vadd.f32 %v251, %v508
      %510 = vmatmul.bf16.gmra.mxu0 %v362
      %v511 = vpop.f32.mrf.mxu0
      %v512 = vadd.f32 %v251, %v511
      %v513 = vpop.f32.mrf.mxu0
      %v514 = vadd.f32 %v251, %v513
      %515 = vmatmul.bf16.gmra.mxu0 %v365
      %v516 = vpop.f32.mrf.mxu0
      %v517 = vadd.f32 %v251, %v516
      %v518 = vpop.f32.mrf.mxu0
      %v519 = vadd.f32 %v251, %v518
      %520 = vmatmul.bf16.gmra.mxu0 %v368
      %v521 = vpop.f32.mrf.mxu0
      %v522 = vadd.f32 %v251, %v521
      %v523 = vpop.f32.mrf.mxu0
      %v524 = vadd.f32 %v251, %v523
      %525 = vmatmul.bf16.gmra.mxu0 %v371
      %v526 = vpop.f32.mrf.mxu0
      %v527 = vadd.f32 %v251, %v526
      %v528 = vpop.f32.mrf.mxu0
      %v529 = vadd.f32 %v251, %v528
      %530 = vmatmul.bf16.gmra.mxu0 %v374
      %v531 = vpop.f32.mrf.mxu0
      %v532 = vadd.f32 %v251, %v531
      %v533 = vpop.f32.mrf.mxu0
      %v534 = vadd.f32 %v251, %v533
      %535 = vmatmul.bf16.gmra.mxu0 %v377
      %v536 = vpop.f32.mrf.mxu0
      %v537 = vadd.f32 %v251, %v536
      %v538 = vpop.f32.mrf.mxu0
      %v539 = vadd.f32 %v251, %v538
      %540 = vmatmul.bf16.gmra.mxu0 %v380
      %v541 = vpop.f32.mrf.mxu0
      %v542 = vadd.f32 %v251, %v541
      %v543 = vpop.f32.mrf.mxu0
      %v544 = vadd.f32 %v251, %v543
      %545 = vmatmul.bf16.gmra.mxu0 %v383
      %v546 = vpop.f32.mrf.mxu0
      %v547 = vadd.f32 %v251, %v546
      %v548 = vpop.f32.mrf.mxu0
      %v549 = vadd.f32 %v251, %v548
      %550 = vmatmul.bf16.gmra.mxu0 %v386
      %v551 = vpop.f32.mrf.mxu0
      %v552 = vadd.f32 %v251, %v551
      %v553 = vpop.f32.mrf.mxu0
      %v554 = vadd.f32 %v251, %v553
      %555 = vmatmul.bf16.gmra.mxu0 %v389
      %v556 = vpop.f32.mrf.mxu0
      %v557 = vadd.f32 %v251, %v556
      %v558 = vpop.f32.mrf.mxu0
      %v559 = vadd.f32 %v251, %v558
      %560 = vmatmul.bf16.gmra.mxu0 %v392
      %v561 = vpop.f32.mrf.mxu0
      %v562 = vadd.f32 %v251, %v561
      %v563 = vpop.f32.mrf.mxu0
      %v564 = vadd.f32 %v251, %v563
      %565 = vmatmul.bf16.gmra.mxu0 %v395
      %v566 = vpop.f32.mrf.mxu0
      %v567 = vadd.f32 %v251, %v566
      %v568 = vpop.f32.mrf.mxu0
      %v569 = vadd.f32 %v251, %v568
      %570 = vmatmul.bf16.gmra.mxu0 %v398
      %v571 = vpop.f32.mrf.mxu0
      %v572 = vadd.f32 %v251, %v571
      %v573 = vpop.f32.mrf.mxu0
      %v574 = vadd.f32 %v251, %v573
      %575 = vmatmul.bf16.gmra.mxu0 %v401
      %v576 = vpop.f32.mrf.mxu0
      %v577 = vadd.f32 %v251, %v576
      %v578 = vpop.f32.mrf.mxu0
      %v579 = vadd.f32 %v251, %v578
      %580 = vdwg.mxu0
      %v581 = vmax.f32 %v413, 0.0
      %v582 = vmax.f32 %v502, 0.0
      %v583 = vmax.f32 %v415, 0.0
      %v584 = vmax.f32 %v504, 0.0
      %v585 = vmax.f32 %v418, 0.0
      %v586 = vmax.f32 %v507, 0.0
      %v587 = vmax.f32 %v420, 0.0
      %v588 = vmax.f32 %v509, 0.0
      %v589 = vmax.f32 %v423, 0.0
      %v590 = vmax.f32 %v512, 0.0
      %v591 = vmax.f32 %v425, 0.0
      %v592 = vmax.f32 %v514, 0.0
      %v593 = vmax.f32 %v428, 0.0
      %v594 = vmax.f32 %v517, 0.0
      %v595 = vmax.f32 %v430, 0.0
      %v596 = vmax.f32 %v519, 0.0
      %v597 = vmax.f32 %v433, 0.0
      %v598 = vmax.f32 %v522, 0.0
      %v599 = vmax.f32 %v435, 0.0
      %v600 = vmax.f32 %v524, 0.0
      %v601 = vmax.f32 %v438, 0.0
      %v602 = vmax.f32 %v527, 0.0
      %v603 = vmax.f32 %v440, 0.0
      %v604 = vmax.f32 %v529, 0.0
      %v605 = vmax.f32 %v443, 0.0
      %v606 = vmax.f32 %v532, 0.0
      %v607 = vmax.f32 %v445, 0.0
      %v608 = vmax.f32 %v534, 0.0
      %v609 = vmax.f32 %v448, 0.0
      %v610 = vmax.f32 %v537, 0.0
      %v611 = vmax.f32 %v450, 0.0
      %v612 = vmax.f32 %v539, 0.0
      %v613 = vmax.f32 %v453, 0.0
      %v614 = vmax.f32 %v542, 0.0
      %v615 = vmax.f32 %v455, 0.0
      %v616 = vmax.f32 %v544, 0.0
      %v617 = vmax.f32 %v458, 0.0
      %v618 = vmax.f32 %v547, 0.0
      %v619 = vmax.f32 %v460, 0.0
      %v620 = vmax.f32 %v549, 0.0
      %v621 = vmax.f32 %v463, 0.0
      %v622 = vmax.f32 %v552, 0.0
      %v623 = vmax.f32 %v465, 0.0
      %v624 = vmax.f32 %v554, 0.0
      %v625 = vmax.f32 %v468, 0.0
      %v626 = vmax.f32 %v557, 0.0
      %v627 = vmax.f32 %v470, 0.0
      %v628 = vmax.f32 %v559, 0.0
      %v629 = vmax.f32 %v473, 0.0
      %v630 = vmax.f32 %v562, 0.0
      %v631 = vmax.f32 %v475, 0.0
      %v632 = vmax.f32 %v564, 0.0
      %v633 = vmax.f32 %v478, 0.0
      %v634 = vmax.f32 %v567, 0.0
      %v635 = vmax.f32 %v480, 0.0
      %v636 = vmax.f32 %v569, 0.0
      %v637 = vmax.f32 %v483, 0.0
      %v638 = vmax.f32 %v572, 0.0
      %v639 = vmax.f32 %v485, 0.0
      %v640 = vmax.f32 %v574, 0.0
      %v641 = vmax.f32 %v488, 0.0
      %v642 = vmax.f32 %v577, 0.0
      %v643 = vmax.f32 %v490, 0.0
      %v644 = vmax.f32 %v579, 0.0
      %v645 = vpack.c.bf16 %v582, %v581
      %v646 = vpack.c.bf16 %v584, %v583
      %v647 = vpack.c.bf16 %v586, %v585
      %v648 = vpack.c.bf16 %v588, %v587
      %v649 = vpack.c.bf16 %v590, %v589
      %v650 = vpack.c.bf16 %v592, %v591
      %v651 = vpack.c.bf16 %v594, %v593
      %v652 = vpack.c.bf16 %v596, %v595
      %v653 = vpack.c.bf16 %v598, %v597
      %v654 = vpack.c.bf16 %v600, %v599
      %v655 = vpack.c.bf16 %v602, %v601
      %v656 = vpack.c.bf16 %v604, %v603
      %v657 = vpack.c.bf16 %v606, %v605
      %v658 = vpack.c.bf16 %v608, %v607
      %v659 = vpack.c.bf16 %v610, %v609
      %v660 = vpack.c.bf16 %v612, %v611
      %v661 = vpack.c.bf16 %v614, %v613
      %v662 = vpack.c.bf16 %v616, %v615
      %v663 = vpack.c.bf16 %v618, %v617
      %v664 = vpack.c.bf16 %v620, %v619
      %v665 = vpack.c.bf16 %v622, %v621
      %v666 = vpack.c.bf16 %v624, %v623
      %v667 = vpack.c.bf16 %v626, %v625
      %v668 = vpack.c.bf16 %v628, %v627
      %v669 = vpack.c.bf16 %v630, %v629
      %v670 = vpack.c.bf16 %v632, %v631
      %v671 = vpack.c.bf16 %v634, %v633
      %v672 = vpack.c.bf16 %v636, %v635
      %v673 = vpack.c.bf16 %v638, %v637
      %v674 = vpack.c.bf16 %v640, %v639
      %v675 = vpack.c.bf16 %v642, %v641
      %v676 = vpack.c.bf16 %v644, %v643
      %677 = vst [vmem:[%s205] sm:$0xff] 0
      %678 = vst [vmem:[%s205 + $0x8] sm:$0xff] 0
      %679 = vst [vmem:[%s205 + $0x10] sm:$0x11] 0
      %680 = vst [vmem:[%s205 + $0x18] sm:$0xff] 0
      %681 = vst [vmem:[%s205 + $0x20] sm:$0xff] 0
      %682 = vst [vmem:[%s205 + $0x28] sm:$0x11] 0
      %683 = vst [vmem:[%s205 + $0x30] sm:$0xff] 0
      %684 = vst [vmem:[%s205 + $0x38] sm:$0xff] 0
      %685 = vst [vmem:[%s205 + $0x40] sm:$0x11] 0
      %686 = vst [vmem:[%s205 + $0x48] sm:$0xff] 0
      %687 = vst [vmem:[%s205 + $0x50] sm:$0xff] 0
      %688 = vst [vmem:[%s205 + $0x58] sm:$0x11] 0
      %689 = vst [vmem:[%s205 + $0x60] sm:$0xff] 0
      %690 = vst [vmem:[%s205 + $0x68] sm:$0xff] 0
      %691 = vst [vmem:[%s205 + $0x70] sm:$0x11] 0
      %692 = vst [vmem:[%s205 + $0x78] sm:$0xff] 0
      %693 = vst [vmem:[%s205 + $0x80] sm:$0xff] 0
      %694 = vst [vmem:[%s205 + $0x88] sm:$0x11] 0
      %695 = vst [vmem:[%s205 + $0x90] sm:$0xff] 0
      %696 = vst [vmem:[%s205 + $0x98] sm:$0xff] 0
      %697 = vst [vmem:[%s205 + $0xa0] sm:$0x11] 0
      %698 = vst [vmem:[%s205 + $0xa8] sm:$0xff] 0
      %699 = vst [vmem:[%s205 + $0xb0] sm:$0xff] 0
      %700 = vst [vmem:[%s205 + $0xb8] sm:$0x11] 0
      %701 = vst [vmem:[%s205 + $0xc0] sm:$0xff] 0
      %702 = vst [vmem:[%s205 + $0xc8] sm:$0xff] 0
      %703 = vst [vmem:[%s205 + $0xd0] sm:$0x11] 0
      %704 = vst [vmem:[%s205 + $0xd8] sm:$0xff] 0
      %705 = vst [vmem:[%s205 + $0xe0] sm:$0xff] 0
      %706 = vst [vmem:[%s205 + $0xe8] sm:$0x11] 0
      %707 = vst [vmem:[%s205 + $0xf0] sm:$0xff] 0
      %708 = vst [vmem:[%s205 + $0xf8] sm:$0xff] 0
      %709 = vst [vmem:[%s205 + $0x100] sm:$0x11] 0
      %710 = vst [vmem:[%s205 + $0x108] sm:$0xff] 0
      %711 = vst [vmem:[%s205 + $0x110] sm:$0xff] 0
      %712 = vst [vmem:[%s205 + $0x118] sm:$0x11] 0
      %713 = vst [vmem:[%s205 + $0x120] sm:$0xff] 0
      %714 = vst [vmem:[%s205 + $0x128] sm:$0xff] 0
      %715 = vst [vmem:[%s205 + $0x130] sm:$0x11] 0
      %716 = vst [vmem:[%s205 + $0x138] sm:$0xff] 0
      %717 = vst [vmem:[%s205 + $0x140] sm:$0xff] 0
      %718 = vst [vmem:[%s205 + $0x148] sm:$0x11] 0
      %719 = vst [vmem:[%s205 + $0x150] sm:$0xff] 0
      %720 = vst [vmem:[%s205 + $0x158] sm:$0xff] 0
      %721 = vst [vmem:[%s205 + $0x160] sm:$0x11] 0
      %722 = vst [vmem:[%s205 + $0x168] sm:$0xff] 0
      %723 = vst [vmem:[%s205 + $0x170] sm:$0xff] 0
      %724 = vst [vmem:[%s205 + $0x178] sm:$0x11] 0
      %725 = vst [vmem:[%s205 + $0x180] sm:$0xff] 0
      %726 = vst [vmem:[%s205 + $0x188] sm:$0xff] 0
      %727 = vst [vmem:[%s205 + $0x190] sm:$0x11] 0
      %728 = vst [vmem:[%s205 + $0x198] sm:$0xff] 0
      %729 = vst [vmem:[%s205 + $0x1a0] sm:$0xff] 0
      %730 = vst [vmem:[%s205 + $0x1a8] sm:$0x11] 0
      %731 = vst [vmem:[%s205 + $0x1b0] sm:$0xff] 0
      %732 = vst [vmem:[%s205 + $0x1b8] sm:$0xff] 0
      %733 = vst [vmem:[%s205 + $0x1c0] sm:$0x11] 0
      %vm734 = vsmask.f32 256
      %vm735 = vsmask.f32 4368
      %vm736 = vmor %vm734, %vm735
      %v738 = vshrl.u32 %v645, 16
      %v740 = vrot.slane %v738, 7
      %v741 = vshll.u32 %v645, 16
      %v743 = vor.u32 %v740, %v741
      %v744 = vrot.slane %v740, 4
      %v746 = vshrl.u32 %v646, 16
      %v748 = vrot.slane %v746, 7
      %v749 = vshll.u32 %v646, 16
      %v751 = vor.u32 %v748, %v749
      %v752 = vsel %vm736, %v744, %v751
      %v753 = vrot.slane %v748, 4
      %v755 = vshrl.u32 %v647, 16
      %v757 = vrot.slane %v755, 7
      %v758 = vshll.u32 %v647, 16
      %v760 = vor.u32 %v757, %v758
      %v761 = vrot.slane %v757, 4
      %v763 = vshrl.u32 %v648, 16
      %v765 = vrot.slane %v763, 7
      %v766 = vshll.u32 %v648, 16
      %v768 = vor.u32 %v765, %v766
      %v769 = vsel %vm736, %v761, %v768
      %v770 = vrot.slane %v765, 4
      %v772 = vshrl.u32 %v649, 16
      %v774 = vrot.slane %v772, 7
      %v775 = vshll.u32 %v649, 16
      %v777 = vor.u32 %v774, %v775
      %v778 = vrot.slane %v774, 4
      %v780 = vshrl.u32 %v650, 16
      %v782 = vrot.slane %v780, 7
      %v783 = vshll.u32 %v650, 16
      %v785 = vor.u32 %v782, %v783
      %v786 = vsel %vm736, %v778, %v785
      %v787 = vrot.slane %v782, 4
      %v789 = vshrl.u32 %v651, 16
      %v791 = vrot.slane %v789, 7
      %v792 = vshll.u32 %v651, 16
      %v794 = vor.u32 %v791, %v792
      %v795 = vrot.slane %v791, 4
      %v797 = vshrl.u32 %v652, 16
      %v799 = vrot.slane %v797, 7
      %v800 = vshll.u32 %v652, 16
      %v802 = vor.u32 %v799, %v800
      %v803 = vsel %vm736, %v795, %v802
      %v804 = vrot.slane %v799, 4
      %v806 = vshrl.u32 %v653, 16
      %v808 = vrot.slane %v806, 7
      %v809 = vshll.u32 %v653, 16
      %v811 = vor.u32 %v808, %v809
      %v812 = vrot.slane %v808, 4
      %v814 = vshrl.u32 %v654, 16
      %v816 = vrot.slane %v814, 7
      %v817 = vshll.u32 %v654, 16
      %v819 = vor.u32 %v816, %v817
      %v820 = vsel %vm736, %v812, %v819
      %v821 = vrot.slane %v816, 4
      %v823 = vshrl.u32 %v655, 16
      %v825 = vrot.slane %v823, 7
      %v826 = vshll.u32 %v655, 16
      %v828 = vor.u32 %v825, %v826
      %v829 = vrot.slane %v825, 4
      %v831 = vshrl.u32 %v656, 16
      %v833 = vrot.slane %v831, 7
      %v834 = vshll.u32 %v656, 16
      %v836 = vor.u32 %v833, %v834
      %v837 = vsel %vm736, %v829, %v836
      %v838 = vrot.slane %v833, 4
      %v840 = vshrl.u32 %v657, 16
      %v842 = vrot.slane %v840, 7
      %v843 = vshll.u32 %v657, 16
      %v845 = vor.u32 %v842, %v843
      %v846 = vrot.slane %v842, 4
      %v848 = vshrl.u32 %v658, 16
      %v850 = vrot.slane %v848, 7
      %v851 = vshll.u32 %v658, 16
      %v853 = vor.u32 %v850, %v851
      %v854 = vsel %vm736, %v846, %v853
      %v855 = vrot.slane %v850, 4
      %v857 = vshrl.u32 %v659, 16
      %v859 = vrot.slane %v857, 7
      %v860 = vshll.u32 %v659, 16
      %v862 = vor.u32 %v859, %v860
      %v863 = vrot.slane %v859, 4
      %v865 = vshrl.u32 %v660, 16
      %v867 = vrot.slane %v865, 7
      %v868 = vshll.u32 %v660, 16
      %v870 = vor.u32 %v867, %v868
      %v871 = vsel %vm736, %v863, %v870
      %v872 = vrot.slane %v867, 4
      %v874 = vshrl.u32 %v661, 16
      %v876 = vrot.slane %v874, 7
      %v877 = vshll.u32 %v661, 16
      %v879 = vor.u32 %v876, %v877
      %v880 = vrot.slane %v876, 4
      %v882 = vshrl.u32 %v662, 16
      %v884 = vrot.slane %v882, 7
      %v885 = vshll.u32 %v662, 16
      %v887 = vor.u32 %v884, %v885
      %v888 = vsel %vm736, %v880, %v887
      %v889 = vrot.slane %v884, 4
      %v891 = vshrl.u32 %v663, 16
      %v893 = vrot.slane %v891, 7
      %v894 = vshll.u32 %v663, 16
      %v896 = vor.u32 %v893, %v894
      %v897 = vrot.slane %v893, 4
      %v899 = vshrl.u32 %v664, 16
      %v901 = vrot.slane %v899, 7
      %v902 = vshll.u32 %v664, 16
      %v904 = vor.u32 %v901, %v902
      %v905 = vsel %vm736, %v897, %v904
      %v906 = vrot.slane %v901, 4
      %v908 = vshrl.u32 %v665, 16
      %v910 = vrot.slane %v908, 7
      %v911 = vshll.u32 %v665, 16
      %v913 = vor.u32 %v910, %v911
      %v914 = vrot.slane %v910, 4
      %v916 = vshrl.u32 %v666, 16
      %v918 = vrot.slane %v916, 7
      %v919 = vshll.u32 %v666, 16
      %v921 = vor.u32 %v918, %v919
      %v922 = vsel %vm736, %v914, %v921
      %v923 = vrot.slane %v918, 4
      %v925 = vshrl.u32 %v667, 16
      %v927 = vrot.slane %v925, 7
      %v928 = vshll.u32 %v667, 16
      %v930 = vor.u32 %v927, %v928
      %v931 = vrot.slane %v927, 4
      %v933 = vshrl.u32 %v668, 16
      %v935 = vrot.slane %v933, 7
      %v936 = vshll.u32 %v668, 16
      %v938 = vor.u32 %v935, %v936
      %v939 = vsel %vm736, %v931, %v938
      %v940 = vrot.slane %v935, 4
      %v942 = vshrl.u32 %v669, 16
      %v944 = vrot.slane %v942, 7
      %v945 = vshll.u32 %v669, 16
      %v947 = vor.u32 %v944, %v945
      %v948 = vrot.slane %v944, 4
      %v950 = vshrl.u32 %v670, 16
      %v952 = vrot.slane %v950, 7
      %v953 = vshll.u32 %v670, 16
      %v955 = vor.u32 %v952, %v953
      %v956 = vsel %vm736, %v948, %v955
      %v957 = vrot.slane %v952, 4
      %v959 = vshrl.u32 %v671, 16
      %v961 = vrot.slane %v959, 7
      %v962 = vshll.u32 %v671, 16
      %v964 = vor.u32 %v961, %v962
      %v965 = vrot.slane %v961, 4
      %v967 = vshrl.u32 %v672, 16
      %v969 = vrot.slane %v967, 7
      %v970 = vshll.u32 %v672, 16
      %v972 = vor.u32 %v969, %v970
      %v973 = vsel %vm736, %v965, %v972
      %v974 = vrot.slane %v969, 4
      %v976 = vshrl.u32 %v673, 16
      %v978 = vrot.slane %v976, 7
      %v979 = vshll.u32 %v673, 16
      %v981 = vor.u32 %v978, %v979
      %v982 = vrot.slane %v978, 4
      %v984 = vshrl.u32 %v674, 16
      %v986 = vrot.slane %v984, 7
      %v987 = vshll.u32 %v674, 16
      %v989 = vor.u32 %v986, %v987
      %v990 = vsel %vm736, %v982, %v989
      %v991 = vrot.slane %v986, 4
      %v993 = vshrl.u32 %v675, 16
      %v995 = vrot.slane %v993, 7
      %v996 = vshll.u32 %v675, 16
      %v998 = vor.u32 %v995, %v996
      %v999 = vrot.slane %v995, 4
      %v1001 = vshrl.u32 %v676, 16
      %v1003 = vrot.slane %v1001, 7
      %v1004 = vshll.u32 %v676, 16
      %v1006 = vor.u32 %v1003, %v1004
      %v1007 = vsel %vm736, %v999, %v1006
      %v1008 = vrot.slane %v1003, 4
      %s1057 = scalar_lea.vmem %s205, 24
      %vm1058 = vcmask 1043456
      %vm1059 = vsmask.f32 7938
      %vm1060 = vmand %vm1058, %vm1059
      %vm1061 = vcmask 1047556
      %vm1062 = vsmask.f32 7954
      %vm1063 = vmand %vm1061, %vm1062
      %vm1064 = vmor %vm1063, %vm1060
      %v1065 = vld [vmem:[%s1057] sm:$0xff]
      %v1066 = vsel %vm1064, %v743, %v1065
      %1067 = vst [vmem:[%s1057] sm:$0xff] %v1066
      %1068 = vst [vmem:[%s1057 + $0x8] sm:$0xff] %v752
      %vm1069 = vcmask 1040384
      %vm1070 = vmand %vm1069, %vm734
      %vm1071 = vcmask 1044484
      %vm1072 = vsmask.f32 4352
      %vm1073 = vmand %vm1071, %vm1072
      %vm1074 = vmor %vm1073, %vm1070
      %v1075 = vld [vmem:[%s1057 + $0x10] sm:$0x11]
      %v1076 = vsel %vm1074, %v753, %v1075
      %1077 = vst [vmem:[%s1057 + $0x10] sm:$0x11] %v1076
      %v1078 = vld [vmem:[%s1057 + $0x18] sm:$0xff]
      %v1079 = vsel %vm1064, %v760, %v1078
      %1080 = vst [vmem:[%s1057 + $0x18] sm:$0xff] %v1079
      %1081 = vst [vmem:[%s1057 + $0x20] sm:$0xff] %v769
      %v1082 = vld [vmem:[%s1057 + $0x28] sm:$0x11]
      %v1083 = vsel %vm1074, %v770, %v1082
      %1084 = vst [vmem:[%s1057 + $0x28] sm:$0x11] %v1083
      %v1085 = vld [vmem:[%s1057 + $0x30] sm:$0xff]
      %v1086 = vsel %vm1064, %v777, %v1085
      %1087 = vst [vmem:[%s1057 + $0x30] sm:$0xff] %v1086
      %1088 = vst [vmem:[%s1057 + $0x38] sm:$0xff] %v786
      %v1089 = vld [vmem:[%s1057 + $0x40] sm:$0x11]
      %v1090 = vsel %vm1074, %v787, %v1089
      %1091 = vst [vmem:[%s1057 + $0x40] sm:$0x11] %v1090
      %v1092 = vld [vmem:[%s1057 + $0x48] sm:$0xff]
      %v1093 = vsel %vm1064, %v794, %v1092
      %1094 = vst [vmem:[%s1057 + $0x48] sm:$0xff] %v1093
      %1095 = vst [vmem:[%s1057 + $0x50] sm:$0xff] %v803
      %v1096 = vld [vmem:[%s1057 + $0x58] sm:$0x11]
      %v1097 = vsel %vm1074, %v804, %v1096
      %1098 = vst [vmem:[%s1057 + $0x58] sm:$0x11] %v1097
      %v1099 = vld [vmem:[%s1057 + $0x60] sm:$0xff]
      %v1100 = vsel %vm1064, %v811, %v1099
      %1101 = vst [vmem:[%s1057 + $0x60] sm:$0xff] %v1100
      %1102 = vst [vmem:[%s1057 + $0x68] sm:$0xff] %v820
      %v1103 = vld [vmem:[%s1057 + $0x70] sm:$0x11]
      %v1104 = vsel %vm1074, %v821, %v1103
      %1105 = vst [vmem:[%s1057 + $0x70] sm:$0x11] %v1104
      %v1106 = vld [vmem:[%s1057 + $0x78] sm:$0xff]
      %v1107 = vsel %vm1064, %v828, %v1106
      %1108 = vst [vmem:[%s1057 + $0x78] sm:$0xff] %v1107
      %1109 = vst [vmem:[%s1057 + $0x80] sm:$0xff] %v837
      %v1110 = vld [vmem:[%s1057 + $0x88] sm:$0x11]
      %v1111 = vsel %vm1074, %v838, %v1110
      %1112 = vst [vmem:[%s1057 + $0x88] sm:$0x11] %v1111
      %v1113 = vld [vmem:[%s1057 + $0x90] sm:$0xff]
      %v1114 = vsel %vm1064, %v845, %v1113
      %1115 = vst [vmem:[%s1057 + $0x90] sm:$0xff] %v1114
      %1116 = vst [vmem:[%s1057 + $0x98] sm:$0xff] %v854
      %v1117 = vld [vmem:[%s1057 + $0xa0] sm:$0x11]
      %v1118 = vsel %vm1074, %v855, %v1117
      %1119 = vst [vmem:[%s1057 + $0xa0] sm:$0x11] %v1118
      %v1120 = vld [vmem:[%s1057 + $0xa8] sm:$0xff]
      %v1121 = vsel %vm1064, %v862, %v1120
      %1122 = vst [vmem:[%s1057 + $0xa8] sm:$0xff] %v1121
      %1123 = vst [vmem:[%s1057 + $0xb0] sm:$0xff] %v871
      %v1124 = vld [vmem:[%s1057 + $0xb8] sm:$0x11]
      %v1125 = vsel %vm1074, %v872, %v1124
      %1126 = vst [vmem:[%s1057 + $0xb8] sm:$0x11] %v1125
      %v1127 = vld [vmem:[%s1057 + $0xc0] sm:$0xff]
      %v1128 = vsel %vm1064, %v879, %v1127
      %1129 = vst [vmem:[%s1057 + $0xc0] sm:$0xff] %v1128
      %1130 = vst [vmem:[%s1057 + $0xc8] sm:$0xff] %v888
      %v1131 = vld [vmem:[%s1057 + $0xd0] sm:$0x11]
      %v1132 = vsel %vm1074, %v889, %v1131
      %1133 = vst [vmem:[%s1057 + $0xd0] sm:$0x11] %v1132
      %v1134 = vld [vmem:[%s1057 + $0xd8] sm:$0xff]
      %v1135 = vsel %vm1064, %v896, %v1134
      %1136 = vst [vmem:[%s1057 + $0xd8] sm:$0xff] %v1135
      %1137 = vst [vmem:[%s1057 + $0xe0] sm:$0xff] %v905
      %v1138 = vld [vmem:[%s1057 + $0xe8] sm:$0x11]
      %v1139 = vsel %vm1074, %v906, %v1138
      %1140 = vst [vmem:[%s1057 + $0xe8] sm:$0x11] %v1139
      %v1141 = vld [vmem:[%s1057 + $0xf0] sm:$0xff]
      %v1142 = vsel %vm1064, %v913, %v1141
      %1143 = vst [vmem:[%s1057 + $0xf0] sm:$0xff] %v1142
      %1144 = vst [vmem:[%s1057 + $0xf8] sm:$0xff] %v922
      %v1145 = vld [vmem:[%s1057 + $0x100] sm:$0x11]
      %v1146 = vsel %vm1074, %v923, %v1145
      %1147 = vst [vmem:[%s1057 + $0x100] sm:$0x11] %v1146
      %v1148 = vld [vmem:[%s1057 + $0x108] sm:$0xff]
      %v1149 = vsel %vm1064, %v930, %v1148
      %1150 = vst [vmem:[%s1057 + $0x108] sm:$0xff] %v1149
      %1151 = vst [vmem:[%s1057 + $0x110] sm:$0xff] %v939
      %v1152 = vld [vmem:[%s1057 + $0x118] sm:$0x11]
      %v1153 = vsel %vm1074, %v940, %v1152
      %1154 = vst [vmem:[%s1057 + $0x118] sm:$0x11] %v1153
      %v1155 = vld [vmem:[%s1057 + $0x120] sm:$0xff]
      %v1156 = vsel %vm1064, %v947, %v1155
      %1157 = vst [vmem:[%s1057 + $0x120] sm:$0xff] %v1156
      %1158 = vst [vmem:[%s1057 + $0x128] sm:$0xff] %v956
      %v1159 = vld [vmem:[%s1057 + $0x130] sm:$0x11]
      %v1160 = vsel %vm1074, %v957, %v1159
      %1161 = vst [vmem:[%s1057 + $0x130] sm:$0x11] %v1160
      %v1162 = vld [vmem:[%s1057 + $0x138] sm:$0xff]
      %v1163 = vsel %vm1064, %v964, %v1162
      %1164 = vst [vmem:[%s1057 + $0x138] sm:$0xff] %v1163
      %1165 = vst [vmem:[%s1057 + $0x140] sm:$0xff] %v973
      %v1166 = vld [vmem:[%s1057 + $0x148] sm:$0x11]
      %v1167 = vsel %vm1074, %v974, %v1166
      %1168 = vst [vmem:[%s1057 + $0x148] sm:$0x11] %v1167
      %v1169 = vld [vmem:[%s1057 + $0x150] sm:$0xff]
      %v1170 = vsel %vm1064, %v981, %v1169
      %1171 = vst [vmem:[%s1057 + $0x150] sm:$0xff] %v1170
      %1172 = vst [vmem:[%s1057 + $0x158] sm:$0xff] %v990
      %v1173 = vld [vmem:[%s1057 + $0x160] sm:$0x11]
      %v1174 = vsel %vm1074, %v991, %v1173
      %1175 = vst [vmem:[%s1057 + $0x160] sm:$0x11] %v1174
      %v1176 = vld [vmem:[%s1057 + $0x168] sm:$0xff]
      %v1177 = vsel %vm1064, %v998, %v1176
      %1178 = vst [vmem:[%s1057 + $0x168] sm:$0xff] %v1177
      %1179 = vst [vmem:[%s1057 + $0x170] sm:$0xff] %v1007
      %v1180 = vld [vmem:[%s1057 + $0x178] sm:$0x11]
      %v1181 = vsel %vm1074, %v1008, %v1180
      %1182 = vst [vmem:[%s1057 + $0x178] sm:$0x11] %v1181
      %v1184 = vunpack.i.l.s16 %v645
      %v1185 = vunpack.i.h.s16 %v645
      %v1186 = vpack.c.b16 %v1185, %v1184
      %v1189 = vunpack.i.l.s16 %v646
      %v1190 = vunpack.i.h.s16 %v646
      %v1191 = vpack.c.b16 %v1190, %v1189
      %v1194 = vunpack.i.l.s16 %v647
      %v1195 = vunpack.i.h.s16 %v647
      %v1196 = vpack.c.b16 %v1195, %v1194
      %v1199 = vunpack.i.l.s16 %v648
      %v1200 = vunpack.i.h.s16 %v648
      %v1201 = vpack.c.b16 %v1200, %v1199
      %v1204 = vunpack.i.l.s16 %v649
      %v1205 = vunpack.i.h.s16 %v649
      %v1206 = vpack.c.b16 %v1205, %v1204
      %v1209 = vunpack.i.l.s16 %v650
      %v1210 = vunpack.i.h.s16 %v650
      %v1211 = vpack.c.b16 %v1210, %v1209
      %v1214 = vunpack.i.l.s16 %v651
      %v1215 = vunpack.i.h.s16 %v651
      %v1216 = vpack.c.b16 %v1215, %v1214
      %v1219 = vunpack.i.l.s16 %v652
      %v1220 = vunpack.i.h.s16 %v652
      %v1221 = vpack.c.b16 %v1220, %v1219
      %v1224 = vunpack.i.l.s16 %v653
      %v1225 = vunpack.i.h.s16 %v653
      %v1226 = vpack.c.b16 %v1225, %v1224
      %v1229 = vunpack.i.l.s16 %v654
      %v1230 = vunpack.i.h.s16 %v654
      %v1231 = vpack.c.b16 %v1230, %v1229
      %v1234 = vunpack.i.l.s16 %v655
      %v1235 = vunpack.i.h.s16 %v655
      %v1236 = vpack.c.b16 %v1235, %v1234
      %v1239 = vunpack.i.l.s16 %v656
      %v1240 = vunpack.i.h.s16 %v656
      %v1241 = vpack.c.b16 %v1240, %v1239
      %v1244 = vunpack.i.l.s16 %v657
      %v1245 = vunpack.i.h.s16 %v657
      %v1246 = vpack.c.b16 %v1245, %v1244
      %v1249 = vunpack.i.l.s16 %v658
      %v1250 = vunpack.i.h.s16 %v658
      %v1251 = vpack.c.b16 %v1250, %v1249
      %v1254 = vunpack.i.l.s16 %v659
      %v1255 = vunpack.i.h.s16 %v659
      %v1256 = vpack.c.b16 %v1255, %v1254
      %v1259 = vunpack.i.l.s16 %v660
      %v1260 = vunpack.i.h.s16 %v660
      %v1261 = vpack.c.b16 %v1260, %v1259
      %v1264 = vunpack.i.l.s16 %v661
      %v1265 = vunpack.i.h.s16 %v661
      %v1266 = vpack.c.b16 %v1265, %v1264
      %v1269 = vunpack.i.l.s16 %v662
      %v1270 = vunpack.i.h.s16 %v662
      %v1271 = vpack.c.b16 %v1270, %v1269
      %v1274 = vunpack.i.l.s16 %v663
      %v1275 = vunpack.i.h.s16 %v663
      %v1276 = vpack.c.b16 %v1275, %v1274
      %v1279 = vunpack.i.l.s16 %v664
      %v1280 = vunpack.i.h.s16 %v664
      %v1281 = vpack.c.b16 %v1280, %v1279
      %v1284 = vunpack.i.l.s16 %v665
      %v1285 = vunpack.i.h.s16 %v665
      %v1286 = vpack.c.b16 %v1285, %v1284
      %v1289 = vunpack.i.l.s16 %v666
      %v1290 = vunpack.i.h.s16 %v666
      %v1291 = vpack.c.b16 %v1290, %v1289
      %v1294 = vunpack.i.l.s16 %v667
      %v1295 = vunpack.i.h.s16 %v667
      %v1296 = vpack.c.b16 %v1295, %v1294
      %v1299 = vunpack.i.l.s16 %v668
      %v1300 = vunpack.i.h.s16 %v668
      %v1301 = vpack.c.b16 %v1300, %v1299
      %v1304 = vunpack.i.l.s16 %v669
      %v1305 = vunpack.i.h.s16 %v669
      %v1306 = vpack.c.b16 %v1305, %v1304
      %v1309 = vunpack.i.l.s16 %v670
      %v1310 = vunpack.i.h.s16 %v670
      %v1311 = vpack.c.b16 %v1310, %v1309
      %v1314 = vunpack.i.l.s16 %v671
      %v1315 = vunpack.i.h.s16 %v671
      %v1316 = vpack.c.b16 %v1315, %v1314
      %v1319 = vunpack.i.l.s16 %v672
      %v1320 = vunpack.i.h.s16 %v672
      %v1321 = vpack.c.b16 %v1320, %v1319
      %v1324 = vunpack.i.l.s16 %v673
      %v1325 = vunpack.i.h.s16 %v673
      %v1326 = vpack.c.b16 %v1325, %v1324
      %v1329 = vunpack.i.l.s16 %v674
      %v1330 = vunpack.i.h.s16 %v674
      %v1331 = vpack.c.b16 %v1330, %v1329
      %v1334 = vunpack.i.l.s16 %v675
      %v1335 = vunpack.i.h.s16 %v675
      %v1336 = vpack.c.b16 %v1335, %v1334
      %v1339 = vunpack.i.l.s16 %v676
      %v1340 = vunpack.i.h.s16 %v676
      %v1341 = vpack.c.b16 %v1340, %v1339
      %v1343 = vunpack.c.l.bf16 %v1186
      %v1344 = vunpack.c.l.bf16 %v1191
      %v1345 = vunpack.c.l.bf16 %v1196
      %v1346 = vunpack.c.l.bf16 %v1201
      %v1347 = vunpack.c.l.bf16 %v1206
      %v1348 = vunpack.c.l.bf16 %v1211
      %v1349 = vunpack.c.l.bf16 %v1216
      %v1350 = vunpack.c.l.bf16 %v1221
      %v1351 = vunpack.c.l.bf16 %v1226
      %v1352 = vunpack.c.l.bf16 %v1231
      %v1353 = vunpack.c.l.bf16 %v1236
      %v1354 = vunpack.c.l.bf16 %v1241
      %v1355 = vunpack.c.l.bf16 %v1246
      %v1356 = vunpack.c.l.bf16 %v1251
      %v1357 = vunpack.c.l.bf16 %v1256
      %v1358 = vunpack.c.l.bf16 %v1261
      %v1359 = vunpack.c.l.bf16 %v1266
      %v1360 = vunpack.c.l.bf16 %v1271
      %v1361 = vunpack.c.l.bf16 %v1276
      %v1362 = vunpack.c.l.bf16 %v1281
      %v1363 = vunpack.c.l.bf16 %v1286
      %v1364 = vunpack.c.l.bf16 %v1291
      %v1365 = vunpack.c.l.bf16 %v1296
      %v1366 = vunpack.c.l.bf16 %v1301
      %v1367 = vunpack.c.l.bf16 %v1306
      %v1368 = vunpack.c.l.bf16 %v1311
      %v1369 = vunpack.c.l.bf16 %v1316
      %v1370 = vunpack.c.l.bf16 %v1321
      %v1371 = vunpack.c.l.bf16 %v1326
      %v1372 = vunpack.c.l.bf16 %v1331
      %v1373 = vunpack.c.l.bf16 %v1336
      %v1374 = vunpack.c.l.bf16 %v1341
      %v1375 = vrot.slane %v1186, 4
      %v1376 = vrot.slane %v1191, 4
      %v1377 = vrot.slane %v1196, 4
      %v1378 = vrot.slane %v1201, 4
      %v1379 = vrot.slane %v1206, 4
      %v1380 = vrot.slane %v1211, 4
      %v1381 = vrot.slane %v1216, 4
      %v1382 = vrot.slane %v1221, 4
      %v1383 = vrot.slane %v1226, 4
      %v1384 = vrot.slane %v1231, 4
      %v1385 = vrot.slane %v1236, 4
      %v1386 = vrot.slane %v1241, 4
      %v1387 = vrot.slane %v1246, 4
      %v1388 = vrot.slane %v1251, 4
      %v1389 = vrot.slane %v1256, 4
      %v1390 = vrot.slane %v1261, 4
      %v1391 = vrot.slane %v1266, 4
      %v1392 = vrot.slane %v1271, 4
      %v1393 = vrot.slane %v1276, 4
      %v1394 = vrot.slane %v1281, 4
      %v1395 = vrot.slane %v1286, 4
      %v1396 = vrot.slane %v1291, 4
      %v1397 = vrot.slane %v1296, 4
      %v1398 = vrot.slane %v1301, 4
      %v1399 = vrot.slane %v1306, 4
      %v1400 = vrot.slane %v1311, 4
      %v1401 = vrot.slane %v1316, 4
      %v1402 = vrot.slane %v1321, 4
      %v1403 = vrot.slane %v1326, 4
      %v1404 = vrot.slane %v1331, 4
      %v1405 = vrot.slane %v1336, 4
      %v1406 = vrot.slane %v1341, 4
      %v1439 = vunpack.c.l.bf16 %v1375
      %v1440 = vunpack.c.l.bf16 %v1376
      %v1441 = vunpack.c.l.bf16 %v1377
      %v1442 = vunpack.c.l.bf16 %v1378
      %v1443 = vunpack.c.l.bf16 %v1379
      %v1444 = vunpack.c.l.bf16 %v1380
      %v1445 = vunpack.c.l.bf16 %v1381
      %v1446 = vunpack.c.l.bf16 %v1382
      %v1447 = vunpack.c.l.bf16 %v1383
      %v1448 = vunpack.c.l.bf16 %v1384
      %v1449 = vunpack.c.l.bf16 %v1385
      %v1450 = vunpack.c.l.bf16 %v1386
      %v1451 = vunpack.c.l.bf16 %v1387
      %v1452 = vunpack.c.l.bf16 %v1388
      %v1453 = vunpack.c.l.bf16 %v1389
      %v1454 = vunpack.c.l.bf16 %v1390
      %v1455 = vunpack.c.l.bf16 %v1391
      %v1456 = vunpack.c.l.bf16 %v1392
      %v1457 = vunpack.c.l.bf16 %v1393
      %v1458 = vunpack.c.l.bf16 %v1394
      %v1459 = vunpack.c.l.bf16 %v1395
      %v1460 = vunpack.c.l.bf16 %v1396
      %v1461 = vunpack.c.l.bf16 %v1397
      %v1462 = vunpack.c.l.bf16 %v1398
      %v1463 = vunpack.c.l.bf16 %v1399
      %v1464 = vunpack.c.l.bf16 %v1400
      %v1465 = vunpack.c.l.bf16 %v1401
      %v1466 = vunpack.c.l.bf16 %v1402
      %v1467 = vunpack.c.l.bf16 %v1403
      %v1468 = vunpack.c.l.bf16 %v1404
      %v1469 = vunpack.c.l.bf16 %v1405
      %v1470 = vunpack.c.l.bf16 %v1406
      %v1471 = vadd.f32 %v1343, %v1439
      %v1472 = vadd.f32 %v1344, %v1440
      %v1473 = vadd.f32 %v1345, %v1441
      %v1474 = vadd.f32 %v1346, %v1442
      %v1475 = vadd.f32 %v1347, %v1443
      %v1476 = vadd.f32 %v1348, %v1444
      %v1477 = vadd.f32 %v1349, %v1445
      %v1478 = vadd.f32 %v1350, %v1446
      %v1479 = vadd.f32 %v1351, %v1447
      %v1480 = vadd.f32 %v1352, %v1448
      %v1481 = vadd.f32 %v1353, %v1449
      %v1482 = vadd.f32 %v1354, %v1450
      %v1483 = vadd.f32 %v1355, %v1451
      %v1484 = vadd.f32 %v1356, %v1452
      %v1485 = vadd.f32 %v1357, %v1453
      %v1486 = vadd.f32 %v1358, %v1454
      %v1487 = vadd.f32 %v1359, %v1455
      %v1488 = vadd.f32 %v1360, %v1456
      %v1489 = vadd.f32 %v1361, %v1457
      %v1490 = vadd.f32 %v1362, %v1458
      %v1491 = vadd.f32 %v1363, %v1459
      %v1492 = vadd.f32 %v1364, %v1460
      %v1493 = vadd.f32 %v1365, %v1461
      %v1494 = vadd.f32 %v1366, %v1462
      %v1495 = vadd.f32 %v1367, %v1463
      %v1496 = vadd.f32 %v1368, %v1464
      %v1497 = vadd.f32 %v1369, %v1465
      %v1498 = vadd.f32 %v1370, %v1466
      %v1499 = vadd.f32 %v1371, %v1467
      %v1500 = vadd.f32 %v1372, %v1468
      %v1501 = vadd.f32 %v1373, %v1469
      %v1502 = vadd.f32 %v1374, %v1470
      %1535 = vst [vmem:[#allocation1] ss:$2 sm:$0xff] %v1471
      %s1536 = scalar_lea.vmem [#allocation1], 1
      %1537 = vst [vmem:[%s1536] ss:$2 sm:$0xff] %v1472
      %v1538 = vld.sshfl [vmem:[#allocation1] sm:$0xff pattern:$0x75316420]
      %v1539 = vld.sshfl [vmem:[#allocation1 + $0x8] sm:$0xff pattern:$0x75316420]
      %s1540 = scalar_lea.vmem [#allocation1], 16
      %1541 = vst [vmem:[%s1540] ss:$2 sm:$0xff] %v1473
      %s1542 = scalar_lea.vmem [#allocation1], 17
      %1543 = vst [vmem:[%s1542] ss:$2 sm:$0xff] %v1474
      %v1544 = vld.sshfl [vmem:[#allocation1 + $0x10] sm:$0xff pattern:$0x75316420]
      %v1545 = vld.sshfl [vmem:[#allocation1 + $0x18] sm:$0xff pattern:$0x75316420]
      %s1546 = scalar_lea.vmem [#allocation1], 32
      %1547 = vst [vmem:[%s1546] ss:$2 sm:$0xff] %v1475
      %s1548 = scalar_lea.vmem [#allocation1], 33
      %1549 = vst [vmem:[%s1548] ss:$2 sm:$0xff] %v1476
      %v1550 = vld.sshfl [vmem:[#allocation1 + $0x20] sm:$0xff pattern:$0x75316420]
      %v1551 = vld.sshfl [vmem:[#allocation1 + $0x28] sm:$0xff pattern:$0x75316420]
      %s1552 = scalar_lea.vmem [#allocation1], 48
      %1553 = vst [vmem:[%s1552] ss:$2 sm:$0xff] %v1477
      %s1554 = scalar_lea.vmem [#allocation1], 49
      %1555 = vst [vmem:[%s1554] ss:$2 sm:$0xff] %v1478
      %v1556 = vld.sshfl [vmem:[#allocation1 + $0x30] sm:$0xff pattern:$0x75316420]
      %v1557 = vld.sshfl [vmem:[#allocation1 + $0x38] sm:$0xff pattern:$0x75316420]
      %1558 = vst [vmem:[#allocation1] ss:$2 sm:$0xff] %v1479
      %1559 = vst [vmem:[%s1536] ss:$2 sm:$0xff] %v1480
      %v1560 = vld.sshfl [vmem:[#allocation1] sm:$0xff pattern:$0x75316420]
      %v1561 = vld.sshfl [vmem:[#allocation1 + $0x8] sm:$0xff pattern:$0x75316420]
      %1562 = vst [vmem:[%s1540] ss:$2 sm:$0xff] %v1481
      %1563 = vst [vmem:[%s1542] ss:$2 sm:$0xff] %v1482
      %v1564 = vld.sshfl [vmem:[#allocation1 + $0x10] sm:$0xff pattern:$0x75316420]
      %v1565 = vld.sshfl [vmem:[#allocation1 + $0x18] sm:$0xff pattern:$0x75316420]
      %1566 = vst [vmem:[%s1546] ss:$2 sm:$0xff] %v1483
      %1567 = vst [vmem:[%s1548] ss:$2 sm:$0xff] %v1484
      %v1568 = vld.sshfl [vmem:[#allocation1 + $0x20] sm:$0xff pattern:$0x75316420]
      %v1569 = vld.sshfl [vmem:[#allocation1 + $0x28] sm:$0xff pattern:$0x75316420]
      %1570 = vst [vmem:[%s1552] ss:$2 sm:$0xff] %v1485
      %1571 = vst [vmem:[%s1554] ss:$2 sm:$0xff] %v1486
      %v1572 = vld.sshfl [vmem:[#allocation1 + $0x30] sm:$0xff pattern:$0x75316420]
      %v1573 = vld.sshfl [vmem:[#allocation1 + $0x38] sm:$0xff pattern:$0x75316420]
      %1574 = vst [vmem:[#allocation1] ss:$2 sm:$0xff] %v1487
      %1575 = vst [vmem:[%s1536] ss:$2 sm:$0xff] %v1488
      %v1576 = vld.sshfl [vmem:[#allocation1] sm:$0xff pattern:$0x75316420]
      %v1577 = vld.sshfl [vmem:[#allocation1 + $0x8] sm:$0xff pattern:$0x75316420]
      %1578 = vst [vmem:[%s1540] ss:$2 sm:$0xff] %v1489
      %1579 = vst [vmem:[%s1542] ss:$2 sm:$0xff] %v1490
      %v1580 = vld.sshfl [vmem:[#allocation1 + $0x10] sm:$0xff pattern:$0x75316420]
      %v1581 = vld.sshfl [vmem:[#allocation1 + $0x18] sm:$0xff pattern:$0x75316420]
      %1582 = vst [vmem:[%s1546] ss:$2 sm:$0xff] %v1491
      %1583 = vst [vmem:[%s1548] ss:$2 sm:$0xff] %v1492
      %v1584 = vld.sshfl [vmem:[#allocation1 + $0x20] sm:$0xff pattern:$0x75316420]
      %v1585 = vld.sshfl [vmem:[#allocation1 + $0x28] sm:$0xff pattern:$0x75316420]
      %1586 = vst [vmem:[%s1552] ss:$2 sm:$0xff] %v1493
      %1587 = vst [vmem:[%s1554] ss:$2 sm:$0xff] %v1494
      %v1588 = vld.sshfl [vmem:[#allocation1 + $0x30] sm:$0xff pattern:$0x75316420]
      %v1589 = vld.sshfl [vmem:[#allocation1 + $0x38] sm:$0xff pattern:$0x75316420]
      %1590 = vst [vmem:[#allocation1] ss:$2 sm:$0xff] %v1495
      %1591 = vst [vmem:[%s1536] ss:$2 sm:$0xff] %v1496
      %v1592 = vld.sshfl [vmem:[#allocation1] sm:$0xff pattern:$0x75316420]
      %v1593 = vld.sshfl [vmem:[#allocation1 + $0x8] sm:$0xff pattern:$0x75316420]
      %1594 = vst [vmem:[%s1540] ss:$2 sm:$0xff] %v1497
      %1595 = vst [vmem:[%s1542] ss:$2 sm:$0xff] %v1498
      %v1596 = vld.sshfl [vmem:[#allocation1 + $0x10] sm:$0xff pattern:$0x75316420]
      %v1597 = vld.sshfl [vmem:[#allocation1 + $0x18] sm:$0xff pattern:$0x75316420]
      %1598 = vst [vmem:[%s1546] ss:$2 sm:$0xff] %v1499
      %1599 = vst [vmem:[%s1548] ss:$2 sm:$0xff] %v1500
      %v1600 = vld.sshfl [vmem:[#allocation1 + $0x20] sm:$0xff pattern:$0x75316420]
      %v1601 = vld.sshfl [vmem:[#allocation1 + $0x28] sm:$0xff pattern:$0x75316420]
      %1602 = vst [vmem:[%s1552] ss:$2 sm:$0xff] %v1501
      %1603 = vst [vmem:[%s1554] ss:$2 sm:$0xff] %v1502
      %v1604 = vld.sshfl [vmem:[#allocation1 + $0x30] sm:$0xff pattern:$0x75316420]
      %v1605 = vld.sshfl [vmem:[#allocation1 + $0x38] sm:$0xff pattern:$0x75316420]
      %v1638 = vpack.c.bf16 %v1539, %v1538
      %v1639 = vpack.c.bf16 %v1545, %v1544
      %v1640 = vpack.c.bf16 %v1551, %v1550
      %v1641 = vpack.c.bf16 %v1557, %v1556
      %v1642 = vpack.c.bf16 %v1561, %v1560
      %v1643 = vpack.c.bf16 %v1565, %v1564
      %v1644 = vpack.c.bf16 %v1569, %v1568
      %v1645 = vpack.c.bf16 %v1573, %v1572
      %v1646 = vpack.c.bf16 %v1577, %v1576
      %v1647 = vpack.c.bf16 %v1581, %v1580
      %v1648 = vpack.c.bf16 %v1585, %v1584
      %v1649 = vpack.c.bf16 %v1589, %v1588
      %v1650 = vpack.c.bf16 %v1593, %v1592
      %v1651 = vpack.c.bf16 %v1597, %v1596
      %v1652 = vpack.c.bf16 %v1601, %v1600
      %v1653 = vpack.c.bf16 %v1605, %v1604
      %v1654 = vunpack.c.l.bf16 %v1638
      %v1655 = vunpack.c.h.bf16 %v1638
      %v1656 = vunpack.c.l.bf16 %v1640
      %v1657 = vunpack.c.h.bf16 %v1640
      %v1658 = vunpack.c.l.bf16 %v1642
      %v1659 = vunpack.c.h.bf16 %v1642
      %v1660 = vunpack.c.l.bf16 %v1644
      %v1661 = vunpack.c.h.bf16 %v1644
      %v1662 = vunpack.c.l.bf16 %v1646
      %v1663 = vunpack.c.h.bf16 %v1646
      %v1664 = vunpack.c.l.bf16 %v1648
      %v1665 = vunpack.c.h.bf16 %v1648
      %v1666 = vunpack.c.l.bf16 %v1650
      %v1667 = vunpack.c.h.bf16 %v1650
      %v1668 = vunpack.c.l.bf16 %v1652
      %v1669 = vunpack.c.h.bf16 %v1652
      %v1670 = vunpack.c.l.bf16 %v1639
      %v1671 = vunpack.c.h.bf16 %v1639
      %v1672 = vunpack.c.l.bf16 %v1641
      %v1673 = vunpack.c.h.bf16 %v1641
      %v1674 = vunpack.c.l.bf16 %v1643
      %v1675 = vunpack.c.h.bf16 %v1643
      %v1676 = vunpack.c.l.bf16 %v1645
      %v1677 = vunpack.c.h.bf16 %v1645
      %v1678 = vunpack.c.l.bf16 %v1647
      %v1679 = vunpack.c.h.bf16 %v1647
      %v1680 = vunpack.c.l.bf16 %v1649
      %v1681 = vunpack.c.h.bf16 %v1649
      %v1682 = vunpack.c.l.bf16 %v1651
      %v1683 = vunpack.c.h.bf16 %v1651
      %v1684 = vunpack.c.l.bf16 %v1653
      %v1685 = vunpack.c.h.bf16 %v1653
      %v1686 = vadd.f32 %v1654, %v1670
      %v1687 = vadd.f32 %v1655, %v1671
      %v1688 = vadd.f32 %v1656, %v1672
      %v1689 = vadd.f32 %v1657, %v1673
      %v1690 = vadd.f32 %v1658, %v1674
      %v1691 = vadd.f32 %v1659, %v1675
      %v1692 = vadd.f32 %v1660, %v1676
      %v1693 = vadd.f32 %v1661, %v1677
      %v1694 = vadd.f32 %v1662, %v1678
      %v1695 = vadd.f32 %v1663, %v1679
      %v1696 = vadd.f32 %v1664, %v1680
      %v1697 = vadd.f32 %v1665, %v1681
      %v1698 = vadd.f32 %v1666, %v1682
      %v1699 = vadd.f32 %v1667, %v1683
      %v1700 = vadd.f32 %v1668, %v1684
      %v1701 = vadd.f32 %v1669, %v1685
      %v1702 = vpack.c.bf16 %v1687, %v1686
      %v1703 = vpack.c.bf16 %v1689, %v1688
      %v1704 = vpack.c.bf16 %v1691, %v1690
      %v1705 = vpack.c.bf16 %v1693, %v1692
      %v1706 = vpack.c.bf16 %v1695, %v1694
      %v1707 = vpack.c.bf16 %v1697, %v1696
      %v1708 = vpack.c.bf16 %v1699, %v1698
      %v1709 = vpack.c.bf16 %v1701, %v1700
      %v1710 = vunpack.c.l.bf16 %v1702
      %v1711 = vunpack.c.h.bf16 %v1702
      %v1712 = vunpack.c.l.bf16 %v1703
      %v1713 = vunpack.c.h.bf16 %v1703
      %v1714 = vunpack.c.l.bf16 %v1704
      %v1715 = vunpack.c.h.bf16 %v1704
      %v1716 = vunpack.c.l.bf16 %v1705
      %v1717 = vunpack.c.h.bf16 %v1705
      %v1718 = vunpack.c.l.bf16 %v1706
      %v1719 = vunpack.c.h.bf16 %v1706
      %v1720 = vunpack.c.l.bf16 %v1707
      %v1721 = vunpack.c.h.bf16 %v1707
      %v1722 = vunpack.c.l.bf16 %v1708
      %v1723 = vunpack.c.h.bf16 %v1708
      %v1724 = vunpack.c.l.bf16 %v1709
      %v1725 = vunpack.c.h.bf16 %v1709
      %v1726 = vmul.f32 %v1710, 0.25
      %v1727 = vmul.f32 %v1711, 0.25
      %v1728 = vmul.f32 %v1712, 0.25
      %v1729 = vmul.f32 %v1713, 0.25
      %v1730 = vmul.f32 %v1714, 0.25
      %v1731 = vmul.f32 %v1715, 0.25
      %v1732 = vmul.f32 %v1716, 0.25
      %v1733 = vmul.f32 %v1717, 0.25
      %v1734 = vmul.f32 %v1718, 0.25
      %v1735 = vmul.f32 %v1719, 0.25
      %v1736 = vmul.f32 %v1720, 0.25
      %v1737 = vmul.f32 %v1721, 0.25
      %v1738 = vmul.f32 %v1722, 0.25
      %v1739 = vmul.f32 %v1723, 0.25
      %v1740 = vmul.f32 %v1724, 0.25
      %v1741 = vmul.f32 %v1725, 0.25
      %v1742 = vpack.c.bf16 %v1727, %v1726
      %v1743 = vpack.c.bf16 %v1729, %v1728
      %v1744 = vpack.c.bf16 %v1731, %v1730
      %v1745 = vpack.c.bf16 %v1733, %v1732
      %v1746 = vpack.c.bf16 %v1735, %v1734
      %v1747 = vpack.c.bf16 %v1737, %v1736
      %v1748 = vpack.c.bf16 %v1739, %v1738
      %v1749 = vpack.c.bf16 %v1741, %v1740
      %1750 = vst [vmem:[%s210] sm:$0xff] 0
      %1751 = vst [vmem:[%s210 + $0x8] sm:$0x11] 0
      %1752 = vst [vmem:[%s210 + $0x10] sm:$0xff] 0
      %1753 = vst [vmem:[%s210 + $0x18] sm:$0x11] 0
      %1754 = vst [vmem:[%s210 + $0x20] sm:$0xff] 0
      %1755 = vst [vmem:[%s210 + $0x28] sm:$0x11] 0
      %1756 = vst [vmem:[%s210 + $0x30] sm:$0xff] 0
      %1757 = vst [vmem:[%s210 + $0x38] sm:$0x11] 0
      %1758 = vst [vmem:[%s210 + $0x40] sm:$0xff] 0
      %1759 = vst [vmem:[%s210 + $0x48] sm:$0x11] 0
      %1760 = vst [vmem:[%s210 + $0x50] sm:$0xff] 0
      %1761 = vst [vmem:[%s210 + $0x58] sm:$0x11] 0
      %1762 = vst [vmem:[%s210 + $0x60] sm:$0xff] 0
      %1763 = vst [vmem:[%s210 + $0x68] sm:$0x11] 0
      %1764 = vst [vmem:[%s210 + $0x70] sm:$0xff] 0
      %1765 = vst [vmem:[%s210 + $0x78] sm:$0x11] 0
      %1766 = vst [vmem:[%s210 + $0x80] sm:$0xff] 0
      %1767 = vst [vmem:[%s210 + $0x88] sm:$0x11] 0
      %1768 = vst [vmem:[%s210 + $0x90] sm:$0xff] 0
      %1769 = vst [vmem:[%s210 + $0x98] sm:$0x11] 0
      %1770 = vst [vmem:[%s210 + $0xa0] sm:$0xff] 0
      %1771 = vst [vmem:[%s210 + $0xa8] sm:$0x11] 0
      %v1773 = vshrl.u32 %v1742, 16
      %v1775 = vrot.slane %v1773, 7
      %v1776 = vshll.u32 %v1742, 16
      %v1778 = vor.u32 %v1775, %v1776
      %v1779 = vrot.slane %v1775, 4
      %v1781 = vshrl.u32 %v1743, 16
      %v1783 = vrot.slane %v1781, 7
      %v1784 = vshll.u32 %v1743, 16
      %v1786 = vor.u32 %v1783, %v1784
      %v1787 = vrot.slane %v1783, 4
      %v1789 = vshrl.u32 %v1744, 16
      %v1791 = vrot.slane %v1789, 7
      %v1792 = vshll.u32 %v1744, 16
      %v1794 = vor.u32 %v1791, %v1792
      %v1795 = vrot.slane %v1791, 4
      %v1797 = vshrl.u32 %v1745, 16
      %v1799 = vrot.slane %v1797, 7
      %v1800 = vshll.u32 %v1745, 16
      %v1802 = vor.u32 %v1799, %v1800
      %v1803 = vrot.slane %v1799, 4
      %v1805 = vshrl.u32 %v1746, 16
      %v1807 = vrot.slane %v1805, 7
      %v1808 = vshll.u32 %v1746, 16
      %v1810 = vor.u32 %v1807, %v1808
      %v1811 = vrot.slane %v1807, 4
      %v1813 = vshrl.u32 %v1747, 16
      %v1815 = vrot.slane %v1813, 7
      %v1816 = vshll.u32 %v1747, 16
      %v1818 = vor.u32 %v1815, %v1816
      %v1819 = vrot.slane %v1815, 4
      %v1821 = vshrl.u32 %v1748, 16
      %v1823 = vrot.slane %v1821, 7
      %v1824 = vshll.u32 %v1748, 16
      %v1826 = vor.u32 %v1823, %v1824
      %v1827 = vrot.slane %v1823, 4
      %v1829 = vshrl.u32 %v1749, 16
      %v1831 = vrot.slane %v1829, 7
      %v1832 = vshll.u32 %v1749, 16
      %v1834 = vor.u32 %v1831, %v1832
      %v1835 = vrot.slane %v1831, 4
      %s1852 = scalar_lea.vmem %s210, 16
      %v1853 = vld [vmem:[%s1852] sm:$0xff]
      %v1854 = vsel %vm1064, %v1778, %v1853
      %1855 = vst [vmem:[%s1852] sm:$0xff] %v1854
      %v1856 = vld [vmem:[%s1852 + $0x8] sm:$0x11]
      %v1857 = vsel %vm1074, %v1779, %v1856
      %1858 = vst [vmem:[%s1852 + $0x8] sm:$0x11] %v1857
      %v1859 = vld [vmem:[%s1852 + $0x10] sm:$0xff]
      %v1860 = vsel %vm1064, %v1786, %v1859
      %1861 = vst [vmem:[%s1852 + $0x10] sm:$0xff] %v1860
      %v1862 = vld [vmem:[%s1852 + $0x18] sm:$0x11]
      %v1863 = vsel %vm1074, %v1787, %v1862
      %1864 = vst [vmem:[%s1852 + $0x18] sm:$0x11] %v1863
      %v1865 = vld [vmem:[%s1852 + $0x20] sm:$0xff]
      %v1866 = vsel %vm1064, %v1794, %v1865
      %1867 = vst [vmem:[%s1852 + $0x20] sm:$0xff] %v1866
      %v1868 = vld [vmem:[%s1852 + $0x28] sm:$0x11]
      %v1869 = vsel %vm1074, %v1795, %v1868
      %1870 = vst [vmem:[%s1852 + $0x28] sm:$0x11] %v1869
      %v1871 = vld [vmem:[%s1852 + $0x30] sm:$0xff]
      %v1872 = vsel %vm1064, %v1802, %v1871
      %1873 = vst [vmem:[%s1852 + $0x30] sm:$0xff] %v1872
      %v1874 = vld [vmem:[%s1852 + $0x38] sm:$0x11]
      %v1875 = vsel %vm1074, %v1803, %v1874
      %1876 = vst [vmem:[%s1852 + $0x38] sm:$0x11] %v1875
      %v1877 = vld [vmem:[%s1852 + $0x40] sm:$0xff]
      %v1878 = vsel %vm1064, %v1810, %v1877
      %1879 = vst [vmem:[%s1852 + $0x40] sm:$0xff] %v1878
      %v1880 = vld [vmem:[%s1852 + $0x48] sm:$0x11]
      %v1881 = vsel %vm1074, %v1811, %v1880
      %1882 = vst [vmem:[%s1852 + $0x48] sm:$0x11] %v1881
      %v1883 = vld [vmem:[%s1852 + $0x50] sm:$0xff]
      %v1884 = vsel %vm1064, %v1818, %v1883
      %1885 = vst [vmem:[%s1852 + $0x50] sm:$0xff] %v1884
      %v1886 = vld [vmem:[%s1852 + $0x58] sm:$0x11]
      %v1887 = vsel %vm1074, %v1819, %v1886
      %1888 = vst [vmem:[%s1852 + $0x58] sm:$0x11] %v1887
      %v1889 = vld [vmem:[%s1852 + $0x60] sm:$0xff]
      %v1890 = vsel %vm1064, %v1826, %v1889
      %1891 = vst [vmem:[%s1852 + $0x60] sm:$0xff] %v1890
      %v1892 = vld [vmem:[%s1852 + $0x68] sm:$0x11]
      %v1893 = vsel %vm1074, %v1827, %v1892
      %1894 = vst [vmem:[%s1852 + $0x68] sm:$0x11] %v1893
      %v1895 = vld [vmem:[%s1852 + $0x70] sm:$0xff]
      %v1896 = vsel %vm1064, %v1834, %v1895
      %1897 = vst [vmem:[%s1852 + $0x70] sm:$0xff] %v1896
      %v1898 = vld [vmem:[%s1852 + $0x78] sm:$0x11]
      %v1899 = vsel %vm1074, %v1835, %v1898
      %1900 = vst [vmem:[%s1852 + $0x78] sm:$0x11] %v1899
      %p1901 = scmp.lt.s32.totalorder %s16, 1
      %s1902 = scalar_select %p1901, %s16, 1
      %s1903 = smul.addr %s1902, 114
      %s1904 = smul.addr %s1903, 4
      %s1905 = scalar_lea.vmem %s3, %s1904
      %p1906 = scmp.lt.s32.totalorder %s16, 1
      %s1907 = scalar_select %p1906, %s16, 1
      %s1908 = smul.addr %s1907, 44
      %s1909 = smul.addr %s1908, 4
      %s1910 = scalar_lea.vmem %s4, %s1909
      // Predicated region
      $region33: #{frequency_transfer_forward.3} parent=31 // pred_check
        %p1911 = pneg %p102
      $region34: #{frequency_transfer_forward.3} parent=31 // pred_check_branch
        %1913 = sbr.rel (%p1911) target = $region36
      $region35: #{frequency_transfer_forward.3} parent=31 // pred_region
        _
      $region36: #{frequency_transfer_forward.3} parent=31 // pred_fallthru
        _
      // Predicated region
      $region37: #{frequency_transfer_forward.3} parent=31 // pred_check
        %p1914 = pneg %p128
      $region38: #{frequency_transfer_forward.3} parent=31 // pred_check_branch
        %1916 = sbr.rel (%p1914) target = $region40
      $region39: #{frequency_transfer_forward.3} parent=31 // pred_region
        _
      $region40: #{frequency_transfer_forward.3} parent=31 // pred_fallthru
        _
    $region32: #{frequency_transfer_forward.3} parent=5 // pred_fallthru
      _
    %p1917 = scmp.le.s32.totalorder 2, %s11
    // Predicated region
    $region41: #{frequency_transfer_forward.3} parent=5 // pred_check
      %p1918 = pneg %p1917
    $region42: #{frequency_transfer_forward.3} parent=5 // pred_check_branch
      %1920 = sbr.rel (%p1918) target = $region44
    $region43: #{frequency_transfer_forward.3} parent=5 // pred_region
      %s1921 = ssub.s32 %s11, 2
      // Predicated region
      $region45: #{frequency_transfer_forward.3} parent=43 // pred_check
        %p1922 = pneg %p108
      $region46: #{frequency_transfer_forward.3} parent=43 // pred_check_branch
        %1924 = sbr.rel (%p1922) target = $region48
      $region47: #{frequency_transfer_forward.3} parent=43 // pred_region
        %p1925 = scmp.lt.s32.totalorder %s17, 1
        %s1926 = scalar_select %p1925, %s17, 1
        %s1927 = smul.addr %s1926, 114
        %s1928 = smul.addr %s1927, 4
        %s1929 = scalar_lea.vmem %s3, %s1928
      $region48: #{frequency_transfer_forward.3} parent=43 // pred_fallthru
        _
      // Predicated region
      $region49: #{frequency_transfer_forward.3} parent=43 // pred_check
        %p1930 = pneg %p134
      $region50: #{frequency_transfer_forward.3} parent=43 // pred_check_branch
        %1932 = sbr.rel (%p1930) target = $region52
      $region51: #{frequency_transfer_forward.3} parent=43 // pred_region
        %p1933 = scmp.lt.s32.totalorder %s17, 1
        %s1934 = scalar_select %p1933, %s17, 1
        %s1935 = smul.addr %s1934, 44
        %s1936 = smul.addr %s1935, 4
        %s1937 = scalar_lea.vmem %s4, %s1936
      $region52: #{frequency_transfer_forward.3} parent=43 // pred_fallthru
        _
    $region44: #{frequency_transfer_forward.3} parent=5 // pred_fallthru
      _
  $region6: #{frequency_transfer_forward.3} parent=0 // loop_footer
    %s15 = sadd.s32 1, %s11
  $region7: #{frequency_transfer_forward.3} parent=0 // loop_footer_branch
    %10 = sbr.rel target = $region3
  $region8: #{frequency_transfer_forward.3} parent=0 // loop_exit
    _

// kernel: frequency_transfer_forward.4
$region0: #{frequency_transfer_forward.4}
  #allocation0 [shape = 'u32[]', space=smem, size = 0x4, offset = 0x4, fixed_abs, tag = 'smem constant byte address 0x4 - core index']
  #allocation1 [shape = 'u32[72,128]{1,0:T(1,128)}', space=vmem, size = 0x9000, scoped, tag = 'internal scratch']
  %s0 = inlined_call_operand.vmem [shape: bf16[2,342,256], index: 0, kind: input, shape index: {}]
  %s1 = inlined_call_operand.vmem [shape: bf16[9,256,128], index: 1, kind: input, shape index: {}]
  %s2 = inlined_call_operand.vmem [shape: f32[1,128], index: 2, kind: input, shape index: {}]
  %s3 = inlined_call_operand.vmem [shape: bf16[2,288,128], index: 3, kind: output, shape index: {}]
  %s4 = sld [smem:[#allocation0]]
  $region45: #{frequency_transfer_forward.4} parent=0
    _
  %s6 = ssub.s32 1, %s4
  %s7 = scalar_select 0, %s6, %s4
  loop: start=0, step=1, limit=4
  $region2: #{frequency_transfer_forward.4} parent=0 // loop_pre_header
    _
  $region3: #{frequency_transfer_forward.4} parent=0 // loop_header
    %s9 = sphi 0, %s13
    %p10 = scmp.ge.s32.totalorder %s9, 4
    %s19 = sphi 0, %s21
    %s22 = sphi 0, %s19
    %s23 = sphi 0, %s22
    %s39 = sphi 0, %s23
    %s43 = sphi 0, %s43
    %s45 = sphi 0, %s43
    %s46 = sphi 0, %s45
    %s60 = sphi 0, %s46
    %s64 = sphi 0, %s64
    %s66 = sphi 0, %s64
    %s67 = sphi 0, %s66
    %s81 = sphi 0, %s67
    %s87 = sphi 0, %s89
    %s90 = sphi 0, %s87
    %s91 = sphi 0, %s90
    %s107 = sphi 0, %s91
  $region4: #{frequency_transfer_forward.4} parent=0 // loop_header_branch
    %12 = sbr.rel (%p10) target = $region8
  $region5: #{frequency_transfer_forward.4} parent=0 // loop_body
    %s14 = ssub.s32 %s9, 1
    %s15 = ssub.s32 %s9, 2
    %s16 = sadd.s32 %s9, 1
    %s17 = ssub.s32 %s9, %s16
    %p18 = scmp.eq.s32.totalorder %s17, 0
    %s20 = sadd.s32 %s19, 1
    %s21 = scalar_select %p18, %s19, %s20
    %p24 = pneg %p18
    %p25 = scmp.eq.s32.totalorder %s9, 1
    %p26 = por %p24, %p25
    %p27 = scmp.ne.s32.totalorder %s19, %s22
    %p28 = scmp.eq.s32.totalorder %s9, 0
    %p29 = por %p27, %p28
    %p30 = scmp.ne.s32.totalorder %s19, %s22
    %p31 = scmp.eq.s32.totalorder %s14, 1
    %p32 = por %p30, %p31
    %p33 = scmp.ne.s32.totalorder %s22, %s23
    %p34 = scmp.eq.s32.totalorder %s14, 0
    %p35 = por %p33, %p34
    %p36 = scmp.ne.s32.totalorder %s22, %s23
    %p37 = scmp.eq.s32.totalorder %s15, 1
    %p38 = por %p36, %p37
    %p40 = scmp.ne.s32.totalorder %s23, %s39
    %p41 = scmp.eq.s32.totalorder %s15, 0
    %p42 = por %p40, %p41
    %s44 = sadd.s32 %s43, 1
    %p47 = scmp.eq.s32.totalorder %s9, 1
    %p48 = scmp.ne.s32.totalorder %s43, %s45
    %p49 = scmp.eq.s32.totalorder %s9, 0
    %p50 = por %p48, %p49
    %p51 = scmp.ne.s32.totalorder %s43, %s45
    %p52 = scmp.eq.s32.totalorder %s14, 1
    %p53 = por %p51, %p52
    %p54 = scmp.ne.s32.totalorder %s45, %s46
    %p55 = scmp.eq.s32.totalorder %s14, 0
    %p56 = por %p54, %p55
    %p57 = scmp.ne.s32.totalorder %s45, %s46
    %p58 = scmp.eq.s32.totalorder %s15, 1
    %p59 = por %p57, %p58
    %p61 = scmp.ne.s32.totalorder %s46, %s60
    %p62 = scmp.eq.s32.totalorder %s15, 0
    %p63 = por %p61, %p62
    %s65 = sadd.s32 %s64, 1
    %p68 = scmp.eq.s32.totalorder %s9, 1
    %p69 = scmp.ne.s32.totalorder %s64, %s66
    %p70 = scmp.eq.s32.totalorder %s9, 0
    %p71 = por %p69, %p70
    %p72 = scmp.ne.s32.totalorder %s64, %s66
    %p73 = scmp.eq.s32.totalorder %s14, 1
    %p74 = por %p72, %p73
    %p75 = scmp.ne.s32.totalorder %s66, %s67
    %p76 = scmp.eq.s32.totalorder %s14, 0
    %p77 = por %p75, %p76
    %p78 = scmp.ne.s32.totalorder %s66, %s67
    %p79 = scmp.eq.s32.totalorder %s15, 1
    %p80 = por %p78, %p79
    %p82 = scmp.ne.s32.totalorder %s67, %s81
    %p83 = scmp.eq.s32.totalorder %s15, 0
    %p84 = por %p82, %p83
    %s85 = ssub.s32 %s9, %s16
    %p86 = scmp.eq.s32.totalorder %s85, 0
    %s88 = sadd.s32 %s87, 1
    %s89 = scalar_select %p86, %s87, %s88
    %p92 = pneg %p86
    %p93 = scmp.eq.s32.totalorder %s9, 1
    %p94 = por %p92, %p93
    %p95 = scmp.ne.s32.totalorder %s87, %s90
    %p96 = scmp.eq.s32.totalorder %s9, 0
    %p97 = por %p95, %p96
    %p98 = scmp.ne.s32.totalorder %s87, %s90
    %p99 = scmp.eq.s32.totalorder %s14, 1
    %p100 = por %p98, %p99
    %p101 = scmp.ne.s32.totalorder %s90, %s91
    %p102 = scmp.eq.s32.totalorder %s14, 0
    %p103 = por %p101, %p102
    %p104 = scmp.ne.s32.totalorder %s90, %s91
    %p105 = scmp.eq.s32.totalorder %s15, 1
    %p106 = por %p104, %p105
    %p108 = scmp.ne.s32.totalorder %s91, %s107
    %p109 = scmp.eq.s32.totalorder %s15, 0
    %p110 = por %p108, %p109
    %p111 = scmp.le.s32.totalorder 1, %s9
    %p112 = scmp.lt.s32.totalorder %s9, 3
    %p113 = pnand %p111, %p112
    %p114 = pneg %p113
    // Predicated region
    $region9: #{frequency_transfer_forward.4} parent=5 // pred_check
      _
    $region10: #{frequency_transfer_forward.4} parent=5 // pred_check_branch
      %116 = sbr.rel (%p113) target = $region12
    $region11: #{frequency_transfer_forward.4} parent=5 // pred_region
      %s117 = ssub.s32 %s9, 1
      // Predicated region
      $region13: #{frequency_transfer_forward.4} parent=11 // pred_check
        %p118 = pneg %p56
      $region14: #{frequency_transfer_forward.4} parent=11 // pred_check_branch
        %120 = sbr.rel (%p118) target = $region16
      $region15: #{frequency_transfer_forward.4} parent=11 // pred_region
        _
      $region16: #{frequency_transfer_forward.4} parent=11 // pred_fallthru
        _
      // Predicated region
      $region17: #{frequency_transfer_forward.4} parent=11 // pred_check
        %p121 = pneg %p77
      $region18: #{frequency_transfer_forward.4} parent=11 // pred_check_branch
        %123 = sbr.rel (%p121) target = $region20
      $region19: #{frequency_transfer_forward.4} parent=11 // pred_region
        _
      $region20: #{frequency_transfer_forward.4} parent=11 // pred_fallthru
        _
    $region12: #{frequency_transfer_forward.4} parent=5 // pred_fallthru
      _
    %p124 = scmp.lt.s32.totalorder %s9, 2
    // Predicated region
    $region21: #{frequency_transfer_forward.4} parent=5 // pred_check
      %p125 = pneg %p124
    $region22: #{frequency_transfer_forward.4} parent=5 // pred_check_branch
      %127 = sbr.rel (%p125) target = $region24
    $region23: #{frequency_transfer_forward.4} parent=5 // pred_region
      // Predicated region
      $region25: #{frequency_transfer_forward.4} parent=23 // pred_check
        %p128 = pneg %p29
      $region26: #{frequency_transfer_forward.4} parent=23 // pred_check_branch
        %130 = sbr.rel (%p128) target = $region28
      $region27: #{frequency_transfer_forward.4} parent=23 // pred_region
        %p131 = scmp.lt.s32.totalorder %s9, 1
        %s132 = scalar_select %p131, %s9, 1
        %s133 = smul.addr %s132, 86
        %s134 = smul.addr %s133, 4
        %s135 = scalar_lea.vmem %s0, %s134
      $region28: #{frequency_transfer_forward.4} parent=23 // pred_fallthru
        _
    $region24: #{frequency_transfer_forward.4} parent=5 // pred_fallthru
      _
    %p136 = scmp.le.s32.totalorder 1, %s9
    %p137 = scmp.lt.s32.totalorder %s9, 3
    %p138 = pnand %p136, %p137
    %p139 = pneg %p138
    // Predicated region
    $region29: #{frequency_transfer_forward.4} parent=5 // pred_check
      _
    $region30: #{frequency_transfer_forward.4} parent=5 // pred_check_branch
      %141 = sbr.rel (%p138) target = $region32
    $region31: #{frequency_transfer_forward.4} parent=5 // pred_region
      %s142 = ssub.s32 %s9, 1
      %p143 = scmp.lt.s32.totalorder %s14, 1
      %s144 = scalar_select %p143, %s14, 1
      %s145 = smul.addr %s144, 86
      %s146 = smul.addr %s145, 4
      %s147 = scalar_lea.vmem %s0, %s146
      %p148 = pneg %p35
      %p149 = pneg %p32
      %p150 = pneg %p56
      %p151 = pneg %p53
      %p152 = pneg %p77
      %p153 = pneg %p74
      %p154 = pneg %p103
      %p155 = pneg %p100
      %p156 = scmp.lt.s32.totalorder %s14, 1
      %s157 = scalar_select %p156, %s14, 1
      %s158 = smul.addr %s157, 36
      %s159 = smul.addr %s158, 4
      %s160 = scalar_lea.vmem %s3, %s159
      %p161 = scmp.lt.s32.totalorder %s14, 1
      %s162 = scalar_select %p161, %s14, 1
      %s163 = smul.addr %s162, 86
      %s164 = smul.addr %s163, 4
      %s165 = scalar_lea.vmem %s0, %s164
      %p166 = scmp.lt.s32.totalorder %s14, 1
      %s167 = scalar_select %p166, %s14, 1
      %s168 = smul.addr %s167, 36
      %s169 = smul.addr %s168, 4
      %s170 = scalar_lea.vmem %s3, %s169
      %v171 = vld [vmem:[%s165] sm:$0xff]
      %v172 = vld [vmem:[%s165 + $0x8] sm:$0xff]
      %v173 = vld [vmem:[%s165 + $0x10] sm:$0xff]
      %v174 = vld [vmem:[%s165 + $0x18] sm:$0xff]
      %v175 = vld [vmem:[%s165 + $0x20] sm:$0xff]
      %v176 = vld [vmem:[%s165 + $0x28] sm:$0xff]
      %v177 = vld [vmem:[%s165 + $0x30] sm:$0xff]
      %v178 = vld [vmem:[%s165 + $0x38] sm:$0xff]
      %v179 = vld [vmem:[%s165 + $0x40] sm:$0xff]
      %v180 = vld [vmem:[%s165 + $0x48] sm:$0xff]
      %v181 = vld [vmem:[%s165 + $0x50] sm:$0xff]
      %v182 = vld [vmem:[%s165 + $0x58] sm:$0xff]
      %v183 = vld [vmem:[%s165 + $0x60] sm:$0xff]
      %v184 = vld [vmem:[%s165 + $0x68] sm:$0xff]
      %v185 = vld [vmem:[%s165 + $0x70] sm:$0xff]
      %v186 = vld [vmem:[%s165 + $0x78] sm:$0xff]
      %v187 = vld [vmem:[%s165 + $0x80] sm:$0xff]
      %v188 = vld [vmem:[%s165 + $0x88] sm:$0xff]
      %v189 = vld [vmem:[%s165 + $0x90] sm:$0xff]
      %v190 = vld [vmem:[%s165 + $0x98] sm:$0xff]
      %v191 = vld [vmem:[%s165 + $0xa0] sm:$0xff]
      %v192 = vld [vmem:[%s165 + $0xa8] sm:$0xff]
      %v193 = vld [vmem:[%s165 + $0xb0] sm:$0xff]
      %v194 = vld [vmem:[%s165 + $0xb8] sm:$0xff]
      %v195 = vld [vmem:[%s165 + $0xc0] sm:$0xff]
      %v196 = vld [vmem:[%s165 + $0xc8] sm:$0xff]
      %v197 = vld [vmem:[%s165 + $0xd0] sm:$0xff]
      %v198 = vld [vmem:[%s165 + $0xd8] sm:$0xff]
      %v199 = vld [vmem:[%s165 + $0xe0] sm:$0xff]
      %v200 = vld [vmem:[%s165 + $0xe8] sm:$0xff]
      %v201 = vld [vmem:[%s165 + $0xf0] sm:$0xff]
      %v202 = vld [vmem:[%s165 + $0xf8] sm:$0xff]
      %v203 = vld [vmem:[%s165 + $0x100] sm:$0xff]
      %v204 = vld [vmem:[%s165 + $0x108] sm:$0xff]
      %v205 = vld [vmem:[%s165 + $0x110] sm:$0xff]
      %v206 = vld [vmem:[%s165 + $0x118] sm:$0xff]
      %v207 = vld [vmem:[%s1] sm:$0xf]
      %v208 = vld [vmem:[%s1 + $0x4] sm:$0xf]
      %v209 = vld [vmem:[%s1 + $0x8] sm:$0xf]
      %v210 = vld [vmem:[%s1 + $0xc] sm:$0xf]
      %v211 = vld [vmem:[%s1 + $0x10] sm:$0xf]
      %v212 = vld [vmem:[%s1 + $0x14] sm:$0xf]
      %v213 = vld [vmem:[%s1 + $0x18] sm:$0xf]
      %v214 = vld [vmem:[%s1 + $0x1c] sm:$0xf]
      %v215 = vld [vmem:[%s1 + $0x20] sm:$0xf]
      %v216 = vld [vmem:[%s1 + $0x24] sm:$0xf]
      %v217 = vld [vmem:[%s1 + $0x28] sm:$0xf]
      %v218 = vld [vmem:[%s1 + $0x2c] sm:$0xf]
      %v219 = vld [vmem:[%s1 + $0x30] sm:$0xf]
      %v220 = vld [vmem:[%s1 + $0x34] sm:$0xf]
      %v221 = vld [vmem:[%s1 + $0x38] sm:$0xf]
      %v222 = vld [vmem:[%s1 + $0x3c] sm:$0xf]
      %v223 = vld [vmem:[%s1 + $0x40] sm:$0xf]
      %v224 = vld [vmem:[%s1 + $0x44] sm:$0xf]
      %v225 = vld [vmem:[%s1 + $0x48] sm:$0xf]
      %v226 = vld [vmem:[%s1 + $0x4c] sm:$0xf]
      %v227 = vld [vmem:[%s1 + $0x50] sm:$0xf]
      %v228 = vld [vmem:[%s1 + $0x54] sm:$0xf]
      %v229 = vld [vmem:[%s1 + $0x58] sm:$0xf]
      %v230 = vld [vmem:[%s1 + $0x5c] sm:$0xf]
      %v231 = vld [vmem:[%s1 + $0x60] sm:$0xf]
      %v232 = vld [vmem:[%s1 + $0x64] sm:$0xf]
      %v233 = vld [vmem:[%s1 + $0x68] sm:$0xf]
      %v234 = vld [vmem:[%s1 + $0x6c] sm:$0xf]
      %v235 = vld [vmem:[%s1 + $0x70] sm:$0xf]
      %v236 = vld [vmem:[%s1 + $0x74] sm:$0xf]
      %v237 = vld [vmem:[%s1 + $0x78] sm:$0xf]
      %v238 = vld [vmem:[%s1 + $0x7c] sm:$0xf]
      %v239 = vld [vmem:[%s165 + $0x120] sm:$0x11]
      %s240 = scalar_lea.vmem %s1, 128
      %v241 = vld [vmem:[%s240] sm:$0xf]
      %v242 = vld [vmem:[%s240 + $0x4] sm:$0xf]
      %v243 = vld [vmem:[%s240 + $0x8] sm:$0xf]
      %v244 = vld [vmem:[%s240 + $0xc] sm:$0xf]
      %v245 = vld [vmem:[%s240 + $0x10] sm:$0xf]
      %v246 = vld [vmem:[%s240 + $0x14] sm:$0xf]
      %v247 = vld [vmem:[%s240 + $0x18] sm:$0xf]
      %v248 = vld [vmem:[%s240 + $0x1c] sm:$0xf]
      %v249 = vld [vmem:[%s240 + $0x20] sm:$0xf]
      %v250 = vld [vmem:[%s240 + $0x24] sm:$0xf]
      %v251 = vld [vmem:[%s240 + $0x28] sm:$0xf]
      %v252 = vld [vmem:[%s240 + $0x2c] sm:$0xf]
      %v253 = vld [vmem:[%s240 + $0x30] sm:$0xf]
      %v254 = vld [vmem:[%s240 + $0x34] sm:$0xf]
      %v255 = vld [vmem:[%s240 + $0x38] sm:$0xf]
      %v256 = vld [vmem:[%s240 + $0x3c] sm:$0xf]
      %v257 = vld [vmem:[%s240 + $0x40] sm:$0xf]
      %v258 = vld [vmem:[%s240 + $0x44] sm:$0xf]
      %v259 = vld [vmem:[%s240 + $0x48] sm:$0xf]
      %v260 = vld [vmem:[%s240 + $0x4c] sm:$0xf]
      %v261 = vld [vmem:[%s240 + $0x50] sm:$0xf]
      %v262 = vld [vmem:[%s240 + $0x54] sm:$0xf]
      %v263 = vld [vmem:[%s240 + $0x58] sm:$0xf]
      %v264 = vld [vmem:[%s240 + $0x5c] sm:$0xf]
      %v265 = vld [vmem:[%s240 + $0x60] sm:$0xf]
      %v266 = vld [vmem:[%s240 + $0x64] sm:$0xf]
      %v267 = vld [vmem:[%s240 + $0x68] sm:$0xf]
      %v268 = vld [vmem:[%s240 + $0x6c] sm:$0xf]
      %v269 = vld [vmem:[%s240 + $0x70] sm:$0xf]
      %v270 = vld [vmem:[%s240 + $0x74] sm:$0xf]
      %v271 = vld [vmem:[%s240 + $0x78] sm:$0xf]
      %v272 = vld [vmem:[%s240 + $0x7c] sm:$0xf]
      %v310 = vunpack.c.l.b16 %v171
      %v311 = vunpack.c.h.b16 %v171
      %v312 = vunpack.c.l.b16 %v172
      %v313 = vunpack.c.h.b16 %v172
      %v314 = vunpack.c.l.b16 %v173
      %v315 = vunpack.c.h.b16 %v173
      %v316 = vunpack.c.l.b16 %v174
      %v317 = vunpack.c.h.b16 %v174
      %v318 = vunpack.c.l.b16 %v175
      %v319 = vunpack.c.h.b16 %v175
      %v320 = vunpack.c.l.b16 %v176
      %v321 = vunpack.c.h.b16 %v176
      %v322 = vunpack.c.l.b16 %v177
      %v323 = vunpack.c.h.b16 %v177
      %v324 = vunpack.c.l.b16 %v178
      %v325 = vunpack.c.h.b16 %v178
      %v326 = vunpack.c.l.b16 %v179
      %v327 = vunpack.c.h.b16 %v179
      %v328 = vunpack.c.l.b16 %v180
      %v329 = vunpack.c.h.b16 %v180
      %v330 = vunpack.c.l.b16 %v181
      %v331 = vunpack.c.h.b16 %v181
      %v332 = vunpack.c.l.b16 %v182
      %v333 = vunpack.c.h.b16 %v182
      %v334 = vunpack.c.l.b16 %v183
      %v335 = vunpack.c.h.b16 %v183
      %v336 = vunpack.c.l.b16 %v184
      %v337 = vunpack.c.h.b16 %v184
      %v338 = vunpack.c.l.b16 %v185
      %v339 = vunpack.c.h.b16 %v185
      %v340 = vunpack.c.l.b16 %v186
      %v341 = vunpack.c.h.b16 %v186
      %v342 = vunpack.c.l.b16 %v187
      %v343 = vunpack.c.h.b16 %v187
      %v344 = vunpack.c.l.b16 %v188
      %v345 = vunpack.c.h.b16 %v188
      %v346 = vunpack.c.l.b16 %v189
      %v347 = vunpack.c.h.b16 %v189
      %v348 = vunpack.c.l.b16 %v190
      %v349 = vunpack.c.h.b16 %v190
      %v350 = vunpack.c.l.b16 %v191
      %v351 = vunpack.c.h.b16 %v191
      %v352 = vunpack.c.l.b16 %v192
      %v353 = vunpack.c.h.b16 %v192
      %v354 = vunpack.c.l.b16 %v193
      %v355 = vunpack.c.h.b16 %v193
      %v356 = vunpack.c.l.b16 %v194
      %v357 = vunpack.c.h.b16 %v194
      %v358 = vunpack.c.l.b16 %v195
      %v359 = vunpack.c.h.b16 %v195
      %v360 = vunpack.c.l.b16 %v196
      %v361 = vunpack.c.h.b16 %v196
      %v362 = vunpack.c.l.b16 %v197
      %v363 = vunpack.c.h.b16 %v197
      %v364 = vunpack.c.l.b16 %v198
      %v365 = vunpack.c.h.b16 %v198
      %v366 = vunpack.c.l.b16 %v199
      %v367 = vunpack.c.h.b16 %v199
      %v368 = vunpack.c.l.b16 %v200
      %v369 = vunpack.c.h.b16 %v200
      %v370 = vunpack.c.l.b16 %v201
      %v371 = vunpack.c.h.b16 %v201
      %v372 = vunpack.c.l.b16 %v202
      %v373 = vunpack.c.h.b16 %v202
      %v374 = vunpack.c.l.b16 %v203
      %v375 = vunpack.c.h.b16 %v203
      %v376 = vunpack.c.l.b16 %v204
      %v377 = vunpack.c.h.b16 %v204
      %v378 = vunpack.c.l.b16 %v205
      %v379 = vunpack.c.h.b16 %v205
      %v380 = vunpack.c.l.b16 %v206
      %v381 = vunpack.c.h.b16 %v206
      %v382 = vunpack.c.l.b16 %v239
      %v383 = vunpack.c.h.b16 %v239
      %v384 = vpack.c.b16 %v312, %v310
      %v385 = vpack.c.b16 %v313, %v311
      %v386 = vpack.c.b16 %v316, %v314
      %v387 = vpack.c.b16 %v317, %v315
      %v388 = vpack.c.b16 %v320, %v318
      %v389 = vpack.c.b16 %v321, %v319
      %v390 = vpack.c.b16 %v324, %v322
      %v391 = vpack.c.b16 %v325, %v323
      %v392 = vpack.c.b16 %v328, %v326
      %v393 = vpack.c.b16 %v329, %v327
      %v394 = vpack.c.b16 %v332, %v330
      %v395 = vpack.c.b16 %v333, %v331
      %v396 = vpack.c.b16 %v336, %v334
      %v397 = vpack.c.b16 %v337, %v335
      %v398 = vpack.c.b16 %v340, %v338
      %v399 = vpack.c.b16 %v341, %v339
      %v400 = vpack.c.b16 %v344, %v342
      %v401 = vpack.c.b16 %v345, %v343
      %v402 = vpack.c.b16 %v348, %v346
      %v403 = vpack.c.b16 %v349, %v347
      %v404 = vpack.c.b16 %v352, %v350
      %v405 = vpack.c.b16 %v353, %v351
      %v406 = vpack.c.b16 %v356, %v354
      %v407 = vpack.c.b16 %v357, %v355
      %v408 = vpack.c.b16 %v360, %v358
      %v409 = vpack.c.b16 %v361, %v359
      %v410 = vpack.c.b16 %v364, %v362
      %v411 = vpack.c.b16 %v365, %v363
      %v412 = vpack.c.b16 %v368, %v366
      %v413 = vpack.c.b16 %v369, %v367
      %v414 = vpack.c.b16 %v372, %v370
      %v415 = vpack.c.b16 %v373, %v371
      %v416 = vpack.c.b16 %v376, %v374
      %v417 = vpack.c.b16 %v377, %v375
      %v418 = vpack.c.b16 %v380, %v378
      %v419 = vpack.c.b16 %v381, %v379
      %v420 = vpack.c.b16 %v382, %v382
      %v421 = vpack.c.b16 %v383, %v383
      %vm422 = vsmask.f32 7424
      %v424 = vshrl.u32 %v384, 16
      %v426 = vshll.u32 %v384, 16
      %v428 = vrot.slane %v426, 1
      %v429 = vor.u32 %v424, %v428
      %v431 = vshll.u32 %v386, 16
      %v433 = vrot.slane %v431, 1
      %v434 = vsel %vm422, %v429, %v433
      %v436 = vshrl.u32 %v385, 16
      %v438 = vshll.u32 %v385, 16
      %v440 = vrot.slane %v438, 1
      %v441 = vor.u32 %v436, %v440
      %v443 = vshll.u32 %v387, 16
      %v445 = vrot.slane %v443, 1
      %v446 = vsel %vm422, %v441, %v445
      %v447 = vshrl.u32 %v386, 16
      %v449 = vor.u32 %v447, %v433
      %v451 = vshll.u32 %v388, 16
      %v453 = vrot.slane %v451, 1
      %v454 = vsel %vm422, %v449, %v453
      %v455 = vshrl.u32 %v387, 16
      %v457 = vor.u32 %v455, %v445
      %v459 = vshll.u32 %v389, 16
      %v461 = vrot.slane %v459, 1
      %v462 = vsel %vm422, %v457, %v461
      %v463 = vshrl.u32 %v388, 16
      %v465 = vor.u32 %v463, %v453
      %v467 = vshll.u32 %v390, 16
      %v469 = vrot.slane %v467, 1
      %v470 = vsel %vm422, %v465, %v469
      %v471 = vshrl.u32 %v389, 16
      %v473 = vor.u32 %v471, %v461
      %v475 = vshll.u32 %v391, 16
      %v477 = vrot.slane %v475, 1
      %v478 = vsel %vm422, %v473, %v477
      %v479 = vshrl.u32 %v390, 16
      %v481 = vor.u32 %v479, %v469
      %v483 = vshll.u32 %v392, 16
      %v485 = vrot.slane %v483, 1
      %v486 = vsel %vm422, %v481, %v485
      %v487 = vshrl.u32 %v391, 16
      %v489 = vor.u32 %v487, %v477
      %v491 = vshll.u32 %v393, 16
      %v493 = vrot.slane %v491, 1
      %v494 = vsel %vm422, %v489, %v493
      %v495 = vshrl.u32 %v392, 16
      %v497 = vor.u32 %v495, %v485
      %v499 = vshll.u32 %v394, 16
      %v501 = vrot.slane %v499, 1
      %v502 = vsel %vm422, %v497, %v501
      %v503 = vshrl.u32 %v393, 16
      %v505 = vor.u32 %v503, %v493
      %v507 = vshll.u32 %v395, 16
      %v509 = vrot.slane %v507, 1
      %v510 = vsel %vm422, %v505, %v509
      %v511 = vshrl.u32 %v394, 16
      %v513 = vor.u32 %v511, %v501
      %v515 = vshll.u32 %v396, 16
      %v517 = vrot.slane %v515, 1
      %v518 = vsel %vm422, %v513, %v517
      %v519 = vshrl.u32 %v395, 16
      %v521 = vor.u32 %v519, %v509
      %v523 = vshll.u32 %v397, 16
      %v525 = vrot.slane %v523, 1
      %v526 = vsel %vm422, %v521, %v525
      %v527 = vshrl.u32 %v396, 16
      %v529 = vor.u32 %v527, %v517
      %v531 = vshll.u32 %v398, 16
      %v533 = vrot.slane %v531, 1
      %v534 = vsel %vm422, %v529, %v533
      %v535 = vshrl.u32 %v397, 16
      %v537 = vor.u32 %v535, %v525
      %v539 = vshll.u32 %v399, 16
      %v541 = vrot.slane %v539, 1
      %v542 = vsel %vm422, %v537, %v541
      %v543 = vshrl.u32 %v398, 16
      %v545 = vor.u32 %v543, %v533
      %v547 = vshll.u32 %v400, 16
      %v549 = vrot.slane %v547, 1
      %v550 = vsel %vm422, %v545, %v549
      %v551 = vshrl.u32 %v399, 16
      %v553 = vor.u32 %v551, %v541
      %v555 = vshll.u32 %v401, 16
      %v557 = vrot.slane %v555, 1
      %v558 = vsel %vm422, %v553, %v557
      %v559 = vshrl.u32 %v400, 16
      %v561 = vor.u32 %v559, %v549
      %v563 = vshll.u32 %v402, 16
      %v565 = vrot.slane %v563, 1
      %v566 = vsel %vm422, %v561, %v565
      %v567 = vshrl.u32 %v401, 16
      %v569 = vor.u32 %v567, %v557
      %v571 = vshll.u32 %v403, 16
      %v573 = vrot.slane %v571, 1
      %v574 = vsel %vm422, %v569, %v573
      %v575 = vshrl.u32 %v402, 16
      %v577 = vor.u32 %v575, %v565
      %v579 = vshll.u32 %v404, 16
      %v581 = vrot.slane %v579, 1
      %v582 = vsel %vm422, %v577, %v581
      %v583 = vshrl.u32 %v403, 16
      %v585 = vor.u32 %v583, %v573
      %v587 = vshll.u32 %v405, 16
      %v589 = vrot.slane %v587, 1
      %v590 = vsel %vm422, %v585, %v589
      %v591 = vshrl.u32 %v404, 16
      %v593 = vor.u32 %v591, %v581
      %v595 = vshll.u32 %v406, 16
      %v597 = vrot.slane %v595, 1
      %v598 = vsel %vm422, %v593, %v597
      %v599 = vshrl.u32 %v405, 16
      %v601 = vor.u32 %v599, %v589
      %v603 = vshll.u32 %v407, 16
      %v605 = vrot.slane %v603, 1
      %v606 = vsel %vm422, %v601, %v605
      %v607 = vshrl.u32 %v406, 16
      %v609 = vor.u32 %v607, %v597
      %v611 = vshll.u32 %v408, 16
      %v613 = vrot.slane %v611, 1
      %v614 = vsel %vm422, %v609, %v613
      %v615 = vshrl.u32 %v407, 16
      %v617 = vor.u32 %v615, %v605
      %v619 = vshll.u32 %v409, 16
      %v621 = vrot.slane %v619, 1
      %v622 = vsel %vm422, %v617, %v621
      %v623 = vshrl.u32 %v408, 16
      %v625 = vor.u32 %v623, %v613
      %v627 = vshll.u32 %v410, 16
      %v629 = vrot.slane %v627, 1
      %v630 = vsel %vm422, %v625, %v629
      %v631 = vshrl.u32 %v409, 16
      %v633 = vor.u32 %v631, %v621
      %v635 = vshll.u32 %v411, 16
      %v637 = vrot.slane %v635, 1
      %v638 = vsel %vm422, %v633, %v637
      %v639 = vshrl.u32 %v410, 16
      %v641 = vor.u32 %v639, %v629
      %v643 = vshll.u32 %v412, 16
      %v645 = vrot.slane %v643, 1
      %v646 = vsel %vm422, %v641, %v645
      %v647 = vshrl.u32 %v411, 16
      %v649 = vor.u32 %v647, %v637
      %v651 = vshll.u32 %v413, 16
      %v653 = vrot.slane %v651, 1
      %v654 = vsel %vm422, %v649, %v653
      %v655 = vshrl.u32 %v412, 16
      %v657 = vor.u32 %v655, %v645
      %v659 = vshll.u32 %v414, 16
      %v661 = vrot.slane %v659, 1
      %v662 = vsel %vm422, %v657, %v661
      %v663 = vshrl.u32 %v413, 16
      %v665 = vor.u32 %v663, %v653
      %v667 = vshll.u32 %v415, 16
      %v669 = vrot.slane %v667, 1
      %v670 = vsel %vm422, %v665, %v669
      %v671 = vshrl.u32 %v414, 16
      %v673 = vor.u32 %v671, %v661
      %v675 = vshll.u32 %v416, 16
      %v677 = vrot.slane %v675, 1
      %v678 = vsel %vm422, %v673, %v677
      %v679 = vshrl.u32 %v415, 16
      %v681 = vor.u32 %v679, %v669
      %v683 = vshll.u32 %v417, 16
      %v685 = vrot.slane %v683, 1
      %v686 = vsel %vm422, %v681, %v685
      %v687 = vshrl.u32 %v416, 16
      %v689 = vor.u32 %v687, %v677
      %v691 = vshll.u32 %v418, 16
      %v693 = vrot.slane %v691, 1
      %v694 = vsel %vm422, %v689, %v693
      %v695 = vshrl.u32 %v417, 16
      %v697 = vor.u32 %v695, %v685
      %v699 = vshll.u32 %v419, 16
      %v701 = vrot.slane %v699, 1
      %v702 = vsel %vm422, %v697, %v701
      %v703 = vshrl.u32 %v418, 16
      %v705 = vor.u32 %v703, %v693
      %v707 = vshll.u32 %v420, 16
      %v709 = vrot.slane %v707, 1
      %v710 = vsel %vm422, %v705, %v709
      %v711 = vshrl.u32 %v419, 16
      %v713 = vor.u32 %v711, %v701
      %v715 = vshll.u32 %v421, 16
      %v717 = vrot.slane %v715, 1
      %v718 = vsel %vm422, %v713, %v717
      %v787 = vunpack.c.l.b16 %v241
      %v788 = vunpack.c.l.b16 %v242
      %v789 = vunpack.c.l.b16 %v243
      %v790 = vunpack.c.l.b16 %v244
      %v791 = vunpack.c.l.b16 %v245
      %v792 = vunpack.c.l.b16 %v246
      %v793 = vunpack.c.l.b16 %v247
      %v794 = vunpack.c.l.b16 %v248
      %v795 = vunpack.c.l.b16 %v249
      %v796 = vunpack.c.l.b16 %v250
      %v797 = vunpack.c.l.b16 %v251
      %v798 = vunpack.c.l.b16 %v252
      %v799 = vunpack.c.l.b16 %v253
      %v800 = vunpack.c.l.b16 %v254
      %v801 = vunpack.c.l.b16 %v255
      %v802 = vunpack.c.l.b16 %v256
      %v803 = vunpack.c.l.b16 %v257
      %v804 = vunpack.c.l.b16 %v258
      %v805 = vunpack.c.l.b16 %v259
      %v806 = vunpack.c.l.b16 %v260
      %v807 = vunpack.c.l.b16 %v261
      %v808 = vunpack.c.l.b16 %v262
      %v809 = vunpack.c.l.b16 %v263
      %v810 = vunpack.c.l.b16 %v264
      %v811 = vunpack.c.l.b16 %v265
      %v812 = vunpack.c.l.b16 %v266
      %v813 = vunpack.c.l.b16 %v267
      %v814 = vunpack.c.l.b16 %v268
      %v815 = vunpack.c.l.b16 %v269
      %v816 = vunpack.c.l.b16 %v270
      %v817 = vunpack.c.l.b16 %v271
      %v818 = vunpack.c.l.b16 %v272
      %v819 = vpack.c.b16 %v788, %v787
      %v820 = vpack.c.b16 %v790, %v789
      %v821 = vpack.c.b16 %v792, %v791
      %v822 = vpack.c.b16 %v794, %v793
      %v823 = vpack.c.b16 %v796, %v795
      %v824 = vpack.c.b16 %v798, %v797
      %v825 = vpack.c.b16 %v800, %v799
      %v826 = vpack.c.b16 %v802, %v801
      %v827 = vpack.c.b16 %v804, %v803
      %v828 = vpack.c.b16 %v806, %v805
      %v829 = vpack.c.b16 %v808, %v807
      %v830 = vpack.c.b16 %v810, %v809
      %v831 = vpack.c.b16 %v812, %v811
      %v832 = vpack.c.b16 %v814, %v813
      %v833 = vpack.c.b16 %v816, %v815
      %v834 = vpack.c.b16 %v818, %v817
      %851 = vmatpush.bf16.msra.mxu0 %v826
      %852 = vmatpush.bf16.msra.mxu0 %v825
      %853 = vmatpush.bf16.msra.mxu0 %v824
      %854 = vmatpush.bf16.msra.mxu0 %v823
      %855 = vmatpush.bf16.msra.mxu0 %v822
      %856 = vmatpush.bf16.msra.mxu0 %v821
      %857 = vmatpush.bf16.msra.mxu0 %v820
      %858 = vmatpush.bf16.msra.mxu0 %v819
      %859 = vmatmul.bf16.gmra.mxu0 %v434
      %v860 = vpop.f32.mrf.mxu0
      %v861 = vadd.f32 0.0, %v860
      %v862 = vpop.f32.mrf.mxu0
      %v863 = vadd.f32 0.0, %v862
      %864 = vmatmul.bf16.gmra.mxu0 %v454
      %v865 = vpop.f32.mrf.mxu0
      %v866 = vadd.f32 0.0, %v865
      %v867 = vpop.f32.mrf.mxu0
      %v868 = vadd.f32 0.0, %v867
      %869 = vmatmul.bf16.gmra.mxu0 %v470
      %v870 = vpop.f32.mrf.mxu0
      %v871 = vadd.f32 0.0, %v870
      %v872 = vpop.f32.mrf.mxu0
      %v873 = vadd.f32 0.0, %v872
      %874 = vmatmul.bf16.gmra.mxu0 %v486
      %v875 = vpop.f32.mrf.mxu0
      %v876 = vadd.f32 0.0, %v875
      %v877 = vpop.f32.mrf.mxu0
      %v878 = vadd.f32 0.0, %v877
      %879 = vmatmul.bf16.gmra.mxu0 %v502
      %v880 = vpop.f32.mrf.mxu0
      %v881 = vadd.f32 0.0, %v880
      %v882 = vpop.f32.mrf.mxu0
      %v883 = vadd.f32 0.0, %v882
      %884 = vmatmul.bf16.gmra.mxu0 %v518
      %v885 = vpop.f32.mrf.mxu0
      %v886 = vadd.f32 0.0, %v885
      %v887 = vpop.f32.mrf.mxu0
      %v888 = vadd.f32 0.0, %v887
      %889 = vmatmul.bf16.gmra.mxu0 %v534
      %v890 = vpop.f32.mrf.mxu0
      %v891 = vadd.f32 0.0, %v890
      %v892 = vpop.f32.mrf.mxu0
      %v893 = vadd.f32 0.0, %v892
      %894 = vmatmul.bf16.gmra.mxu0 %v550
      %v895 = vpop.f32.mrf.mxu0
      %v896 = vadd.f32 0.0, %v895
      %v897 = vpop.f32.mrf.mxu0
      %v898 = vadd.f32 0.0, %v897
      %899 = vmatmul.bf16.gmra.mxu0 %v566
      %v900 = vpop.f32.mrf.mxu0
      %v901 = vadd.f32 0.0, %v900
      %v902 = vpop.f32.mrf.mxu0
      %v903 = vadd.f32 0.0, %v902
      %904 = vmatmul.bf16.gmra.mxu0 %v582
      %v905 = vpop.f32.mrf.mxu0
      %v906 = vadd.f32 0.0, %v905
      %v907 = vpop.f32.mrf.mxu0
      %v908 = vadd.f32 0.0, %v907
      %909 = vmatmul.bf16.gmra.mxu0 %v598
      %v910 = vpop.f32.mrf.mxu0
      %v911 = vadd.f32 0.0, %v910
      %v912 = vpop.f32.mrf.mxu0
      %v913 = vadd.f32 0.0, %v912
      %914 = vmatmul.bf16.gmra.mxu0 %v614
      %v915 = vpop.f32.mrf.mxu0
      %v916 = vadd.f32 0.0, %v915
      %v917 = vpop.f32.mrf.mxu0
      %v918 = vadd.f32 0.0, %v917
      %919 = vmatmul.bf16.gmra.mxu0 %v630
      %v920 = vpop.f32.mrf.mxu0
      %v921 = vadd.f32 0.0, %v920
      %v922 = vpop.f32.mrf.mxu0
      %v923 = vadd.f32 0.0, %v922
      %924 = vmatmul.bf16.gmra.mxu0 %v646
      %v925 = vpop.f32.mrf.mxu0
      %v926 = vadd.f32 0.0, %v925
      %v927 = vpop.f32.mrf.mxu0
      %v928 = vadd.f32 0.0, %v927
      %929 = vmatmul.bf16.gmra.mxu0 %v662
      %v930 = vpop.f32.mrf.mxu0
      %v931 = vadd.f32 0.0, %v930
      %v932 = vpop.f32.mrf.mxu0
      %v933 = vadd.f32 0.0, %v932
      %934 = vmatmul.bf16.gmra.mxu0 %v678
      %v935 = vpop.f32.mrf.mxu0
      %v936 = vadd.f32 0.0, %v935
      %v937 = vpop.f32.mrf.mxu0
      %v938 = vadd.f32 0.0, %v937
      %939 = vmatmul.bf16.gmra.mxu0 %v694
      %v940 = vpop.f32.mrf.mxu0
      %v941 = vadd.f32 0.0, %v940
      %v942 = vpop.f32.mrf.mxu0
      %v943 = vadd.f32 0.0, %v942
      %944 = vmatmul.bf16.gmra.mxu0 %v710
      %v945 = vpop.f32.mrf.mxu0
      %v946 = vadd.f32 0.0, %v945
      %v947 = vpop.f32.mrf.mxu0
      %v948 = vadd.f32 0.0, %v947
      %949 = vdwg.mxu0
      %950 = vmatpush.bf16.msra.mxu0 %v834
      %951 = vmatpush.bf16.msra.mxu0 %v833
      %952 = vmatpush.bf16.msra.mxu0 %v832
      %953 = vmatpush.bf16.msra.mxu0 %v831
      %954 = vmatpush.bf16.msra.mxu0 %v830
      %955 = vmatpush.bf16.msra.mxu0 %v829
      %956 = vmatpush.bf16.msra.mxu0 %v828
      %957 = vmatpush.bf16.msra.mxu0 %v827
      %958 = vmatmul.bf16.gmra.mxu0 %v446
      %v959 = vpop.f32.mrf.mxu0
      %v960 = vadd.f32 %v861, %v959
      %v961 = vpop.f32.mrf.mxu0
      %v962 = vadd.f32 %v863, %v961
      %963 = vmatmul.bf16.gmra.mxu0 %v462
      %v964 = vpop.f32.mrf.mxu0
      %v965 = vadd.f32 %v866, %v964
      %v966 = vpop.f32.mrf.mxu0
      %v967 = vadd.f32 %v868, %v966
      %968 = vmatmul.bf16.gmra.mxu0 %v478
      %v969 = vpop.f32.mrf.mxu0
      %v970 = vadd.f32 %v871, %v969
      %v971 = vpop.f32.mrf.mxu0
      %v972 = vadd.f32 %v873, %v971
      %973 = vmatmul.bf16.gmra.mxu0 %v494
      %v974 = vpop.f32.mrf.mxu0
      %v975 = vadd.f32 %v876, %v974
      %v976 = vpop.f32.mrf.mxu0
      %v977 = vadd.f32 %v878, %v976
      %978 = vmatmul.bf16.gmra.mxu0 %v510
      %v979 = vpop.f32.mrf.mxu0
      %v980 = vadd.f32 %v881, %v979
      %v981 = vpop.f32.mrf.mxu0
      %v982 = vadd.f32 %v883, %v981
      %983 = vmatmul.bf16.gmra.mxu0 %v526
      %v984 = vpop.f32.mrf.mxu0
      %v985 = vadd.f32 %v886, %v984
      %v986 = vpop.f32.mrf.mxu0
      %v987 = vadd.f32 %v888, %v986
      %988 = vmatmul.bf16.gmra.mxu0 %v542
      %v989 = vpop.f32.mrf.mxu0
      %v990 = vadd.f32 %v891, %v989
      %v991 = vpop.f32.mrf.mxu0
      %v992 = vadd.f32 %v893, %v991
      %993 = vmatmul.bf16.gmra.mxu0 %v558
      %v994 = vpop.f32.mrf.mxu0
      %v995 = vadd.f32 %v896, %v994
      %v996 = vpop.f32.mrf.mxu0
      %v997 = vadd.f32 %v898, %v996
      %998 = vmatmul.bf16.gmra.mxu0 %v574
      %v999 = vpop.f32.mrf.mxu0
      %v1000 = vadd.f32 %v901, %v999
      %v1001 = vpop.f32.mrf.mxu0
      %v1002 = vadd.f32 %v903, %v1001
      %1003 = vmatmul.bf16.gmra.mxu0 %v590
      %v1004 = vpop.f32.mrf.mxu0
      %v1005 = vadd.f32 %v906, %v1004
      %v1006 = vpop.f32.mrf.mxu0
      %v1007 = vadd.f32 %v908, %v1006
      %1008 = vmatmul.bf16.gmra.mxu0 %v606
      %v1009 = vpop.f32.mrf.mxu0
      %v1010 = vadd.f32 %v911, %v1009
      %v1011 = vpop.f32.mrf.mxu0
      %v1012 = vadd.f32 %v913, %v1011
      %1013 = vmatmul.bf16.gmra.mxu0 %v622
      %v1014 = vpop.f32.mrf.mxu0
      %v1015 = vadd.f32 %v916, %v1014
      %v1016 = vpop.f32.mrf.mxu0
      %v1017 = vadd.f32 %v918, %v1016
      %1018 = vmatmul.bf16.gmra.mxu0 %v638
      %v1019 = vpop.f32.mrf.mxu0
      %v1020 = vadd.f32 %v921, %v1019
      %v1021 = vpop.f32.mrf.mxu0
      %v1022 = vadd.f32 %v923, %v1021
      %1023 = vmatmul.bf16.gmra.mxu0 %v654
      %v1024 = vpop.f32.mrf.mxu0
      %v1025 = vadd.f32 %v926, %v1024
      %v1026 = vpop.f32.mrf.mxu0
      %v1027 = vadd.f32 %v928, %v1026
      %1028 = vmatmul.bf16.gmra.mxu0 %v670
      %v1029 = vpop.f32.mrf.mxu0
      %v1030 = vadd.f32 %v931, %v1029
      %v1031 = vpop.f32.mrf.mxu0
      %v1032 = vadd.f32 %v933, %v1031
      %1033 = vmatmul.bf16.gmra.mxu0 %v686
      %v1034 = vpop.f32.mrf.mxu0
      %v1035 = vadd.f32 %v936, %v1034
      %v1036 = vpop.f32.mrf.mxu0
      %v1037 = vadd.f32 %v938, %v1036
      %1038 = vmatmul.bf16.gmra.mxu0 %v702
      %v1039 = vpop.f32.mrf.mxu0
      %v1040 = vadd.f32 %v941, %v1039
      %v1041 = vpop.f32.mrf.mxu0
      %v1042 = vadd.f32 %v943, %v1041
      %1043 = vmatmul.bf16.gmra.mxu0 %v718
      %v1044 = vpop.f32.mrf.mxu0
      %v1045 = vadd.f32 %v946, %v1044
      %v1046 = vpop.f32.mrf.mxu0
      %v1047 = vadd.f32 %v948, %v1046
      %1048 = vdwg.mxu0
      %v1117 = vunpack.c.l.b16 %v207
      %v1118 = vunpack.c.l.b16 %v208
      %v1119 = vunpack.c.l.b16 %v209
      %v1120 = vunpack.c.l.b16 %v210
      %v1121 = vunpack.c.l.b16 %v211
      %v1122 = vunpack.c.l.b16 %v212
      %v1123 = vunpack.c.l.b16 %v213
      %v1124 = vunpack.c.l.b16 %v214
      %v1125 = vunpack.c.l.b16 %v215
      %v1126 = vunpack.c.l.b16 %v216
      %v1127 = vunpack.c.l.b16 %v217
      %v1128 = vunpack.c.l.b16 %v218
      %v1129 = vunpack.c.l.b16 %v219
      %v1130 = vunpack.c.l.b16 %v220
      %v1131 = vunpack.c.l.b16 %v221
      %v1132 = vunpack.c.l.b16 %v222
      %v1133 = vunpack.c.l.b16 %v223
      %v1134 = vunpack.c.l.b16 %v224
      %v1135 = vunpack.c.l.b16 %v225
      %v1136 = vunpack.c.l.b16 %v226
      %v1137 = vunpack.c.l.b16 %v227
      %v1138 = vunpack.c.l.b16 %v228
      %v1139 = vunpack.c.l.b16 %v229
      %v1140 = vunpack.c.l.b16 %v230
      %v1141 = vunpack.c.l.b16 %v231
      %v1142 = vunpack.c.l.b16 %v232
      %v1143 = vunpack.c.l.b16 %v233
      %v1144 = vunpack.c.l.b16 %v234
      %v1145 = vunpack.c.l.b16 %v235
      %v1146 = vunpack.c.l.b16 %v236
      %v1147 = vunpack.c.l.b16 %v237
      %v1148 = vunpack.c.l.b16 %v238
      %v1149 = vpack.c.b16 %v1118, %v1117
      %v1150 = vpack.c.b16 %v1120, %v1119
      %v1151 = vpack.c.b16 %v1122, %v1121
      %v1152 = vpack.c.b16 %v1124, %v1123
      %v1153 = vpack.c.b16 %v1126, %v1125
      %v1154 = vpack.c.b16 %v1128, %v1127
      %v1155 = vpack.c.b16 %v1130, %v1129
      %v1156 = vpack.c.b16 %v1132, %v1131
      %v1157 = vpack.c.b16 %v1134, %v1133
      %v1158 = vpack.c.b16 %v1136, %v1135
      %v1159 = vpack.c.b16 %v1138, %v1137
      %v1160 = vpack.c.b16 %v1140, %v1139
      %v1161 = vpack.c.b16 %v1142, %v1141
      %v1162 = vpack.c.b16 %v1144, %v1143
      %v1163 = vpack.c.b16 %v1146, %v1145
      %v1164 = vpack.c.b16 %v1148, %v1147
      %1181 = vmatpush.bf16.msra.mxu0 %v1156
      %1182 = vmatpush.bf16.msra.mxu0 %v1155
      %1183 = vmatpush.bf16.msra.mxu0 %v1154
      %1184 = vmatpush.bf16.msra.mxu0 %v1153
      %1185 = vmatpush.bf16.msra.mxu0 %v1152
      %1186 = vmatpush.bf16.msra.mxu0 %v1151
      %1187 = vmatpush.bf16.msra.mxu0 %v1150
      %1188 = vmatpush.bf16.msra.mxu0 %v1149
      %1189 = vmatmul.bf16.gmra.mxu0 %v384
      %v1190 = vpop.f32.mrf.mxu0
      %v1191 = vadd.f32 %v960, %v1190
      %v1192 = vpop.f32.mrf.mxu0
      %v1193 = vadd.f32 %v962, %v1192
      %1194 = vmatmul.bf16.gmra.mxu0 %v386
      %v1195 = vpop.f32.mrf.mxu0
      %v1196 = vadd.f32 %v965, %v1195
      %v1197 = vpop.f32.mrf.mxu0
      %v1198 = vadd.f32 %v967, %v1197
      %1199 = vmatmul.bf16.gmra.mxu0 %v388
      %v1200 = vpop.f32.mrf.mxu0
      %v1201 = vadd.f32 %v970, %v1200
      %v1202 = vpop.f32.mrf.mxu0
      %v1203 = vadd.f32 %v972, %v1202
      %1204 = vmatmul.bf16.gmra.mxu0 %v390
      %v1205 = vpop.f32.mrf.mxu0
      %v1206 = vadd.f32 %v975, %v1205
      %v1207 = vpop.f32.mrf.mxu0
      %v1208 = vadd.f32 %v977, %v1207
      %1209 = vmatmul.bf16.gmra.mxu0 %v392
      %v1210 = vpop.f32.mrf.mxu0
      %v1211 = vadd.f32 %v980, %v1210
      %v1212 = vpop.f32.mrf.mxu0
      %v1213 = vadd.f32 %v982, %v1212
      %1214 = vmatmul.bf16.gmra.mxu0 %v394
      %v1215 = vpop.f32.mrf.mxu0
      %v1216 = vadd.f32 %v985, %v1215
      %v1217 = vpop.f32.mrf.mxu0
      %v1218 = vadd.f32 %v987, %v1217
      %1219 = vmatmul.bf16.gmra.mxu0 %v396
      %v1220 = vpop.f32.mrf.mxu0
      %v1221 = vadd.f32 %v990, %v1220
      %v1222 = vpop.f32.mrf.mxu0
      %v1223 = vadd.f32 %v992, %v1222
      %1224 = vmatmul.bf16.gmra.mxu0 %v398
      %v1225 = vpop.f32.mrf.mxu0
      %v1226 = vadd.f32 %v995, %v1225
      %v1227 = vpop.f32.mrf.mxu0
      %v1228 = vadd.f32 %v997, %v1227
      %1229 = vmatmul.bf16.gmra.mxu0 %v400
      %v1230 = vpop.f32.mrf.mxu0
      %v1231 = vadd.f32 %v1000, %v1230
      %v1232 = vpop.f32.mrf.mxu0
      %v1233 = vadd.f32 %v1002, %v1232
      %1234 = vmatmul.bf16.gmra.mxu0 %v402
      %v1235 = vpop.f32.mrf.mxu0
      %v1236 = vadd.f32 %v1005, %v1235
      %v1237 = vpop.f32.mrf.mxu0
      %v1238 = vadd.f32 %v1007, %v1237
      %1239 = vmatmul.bf16.gmra.mxu0 %v404
      %v1240 = vpop.f32.mrf.mxu0
      %v1241 = vadd.f32 %v1010, %v1240
      %v1242 = vpop.f32.mrf.mxu0
      %v1243 = vadd.f32 %v1012, %v1242
      %1244 = vmatmul.bf16.gmra.mxu0 %v406
      %v1245 = vpop.f32.mrf.mxu0
      %v1246 = vadd.f32 %v1015, %v1245
      %v1247 = vpop.f32.mrf.mxu0
      %v1248 = vadd.f32 %v1017, %v1247
      %1249 = vmatmul.bf16.gmra.mxu0 %v408
      %v1250 = vpop.f32.mrf.mxu0
      %v1251 = vadd.f32 %v1020, %v1250
      %v1252 = vpop.f32.mrf.mxu0
      %v1253 = vadd.f32 %v1022, %v1252
      %1254 = vmatmul.bf16.gmra.mxu0 %v410
      %v1255 = vpop.f32.mrf.mxu0
      %v1256 = vadd.f32 %v1025, %v1255
      %v1257 = vpop.f32.mrf.mxu0
      %v1258 = vadd.f32 %v1027, %v1257
      %1259 = vmatmul.bf16.gmra.mxu0 %v412
      %v1260 = vpop.f32.mrf.mxu0
      %v1261 = vadd.f32 %v1030, %v1260
      %v1262 = vpop.f32.mrf.mxu0
      %v1263 = vadd.f32 %v1032, %v1262
      %1264 = vmatmul.bf16.gmra.mxu0 %v414
      %v1265 = vpop.f32.mrf.mxu0
      %v1266 = vadd.f32 %v1035, %v1265
      %v1267 = vpop.f32.mrf.mxu0
      %v1268 = vadd.f32 %v1037, %v1267
      %1269 = vmatmul.bf16.gmra.mxu0 %v416
      %v1270 = vpop.f32.mrf.mxu0
      %v1271 = vadd.f32 %v1040, %v1270
      %v1272 = vpop.f32.mrf.mxu0
      %v1273 = vadd.f32 %v1042, %v1272
      %1274 = vmatmul.bf16.gmra.mxu0 %v418
      %v1275 = vpop.f32.mrf.mxu0
      %v1276 = vadd.f32 %v1045, %v1275
      %v1277 = vpop.f32.mrf.mxu0
      %v1278 = vadd.f32 %v1047, %v1277
      %1279 = vdwg.mxu0
      %1280 = vmatpush.bf16.msra.mxu0 %v1164
      %1281 = vmatpush.bf16.msra.mxu0 %v1163
      %1282 = vmatpush.bf16.msra.mxu0 %v1162
      %1283 = vmatpush.bf16.msra.mxu0 %v1161
      %1284 = vmatpush.bf16.msra.mxu0 %v1160
      %1285 = vmatpush.bf16.msra.mxu0 %v1159
      %1286 = vmatpush.bf16.msra.mxu0 %v1158
      %1287 = vmatpush.bf16.msra.mxu0 %v1157
      %1288 = vmatmul.bf16.gmra.mxu0 %v385
      %v1289 = vpop.f32.mrf.mxu0
      %v1290 = vadd.f32 %v1191, %v1289
      %v1291 = vpop.f32.mrf.mxu0
      %v1292 = vadd.f32 %v1193, %v1291
      %1293 = vmatmul.bf16.gmra.mxu0 %v387
      %v1294 = vpop.f32.mrf.mxu0
      %v1295 = vadd.f32 %v1196, %v1294
      %v1296 = vpop.f32.mrf.mxu0
      %v1297 = vadd.f32 %v1198, %v1296
      %1298 = vmatmul.bf16.gmra.mxu0 %v389
      %v1299 = vpop.f32.mrf.mxu0
      %v1300 = vadd.f32 %v1201, %v1299
      %v1301 = vpop.f32.mrf.mxu0
      %v1302 = vadd.f32 %v1203, %v1301
      %1303 = vmatmul.bf16.gmra.mxu0 %v391
      %v1304 = vpop.f32.mrf.mxu0
      %v1305 = vadd.f32 %v1206, %v1304
      %v1306 = vpop.f32.mrf.mxu0
      %v1307 = vadd.f32 %v1208, %v1306
      %1308 = vmatmul.bf16.gmra.mxu0 %v393
      %v1309 = vpop.f32.mrf.mxu0
      %v1310 = vadd.f32 %v1211, %v1309
      %v1311 = vpop.f32.mrf.mxu0
      %v1312 = vadd.f32 %v1213, %v1311
      %1313 = vmatmul.bf16.gmra.mxu0 %v395
      %v1314 = vpop.f32.mrf.mxu0
      %v1315 = vadd.f32 %v1216, %v1314
      %v1316 = vpop.f32.mrf.mxu0
      %v1317 = vadd.f32 %v1218, %v1316
      %1318 = vmatmul.bf16.gmra.mxu0 %v397
      %v1319 = vpop.f32.mrf.mxu0
      %v1320 = vadd.f32 %v1221, %v1319
      %v1321 = vpop.f32.mrf.mxu0
      %v1322 = vadd.f32 %v1223, %v1321
      %1323 = vmatmul.bf16.gmra.mxu0 %v399
      %v1324 = vpop.f32.mrf.mxu0
      %v1325 = vadd.f32 %v1226, %v1324
      %v1326 = vpop.f32.mrf.mxu0
      %v1327 = vadd.f32 %v1228, %v1326
      %1328 = vmatmul.bf16.gmra.mxu0 %v401
      %v1329 = vpop.f32.mrf.mxu0
      %v1330 = vadd.f32 %v1231, %v1329
      %v1331 = vpop.f32.mrf.mxu0
      %v1332 = vadd.f32 %v1233, %v1331
      %1333 = vmatmul.bf16.gmra.mxu0 %v403
      %v1334 = vpop.f32.mrf.mxu0
      %v1335 = vadd.f32 %v1236, %v1334
      %v1336 = vpop.f32.mrf.mxu0
      %v1337 = vadd.f32 %v1238, %v1336
      %1338 = vmatmul.bf16.gmra.mxu0 %v405
      %v1339 = vpop.f32.mrf.mxu0
      %v1340 = vadd.f32 %v1241, %v1339
      %v1341 = vpop.f32.mrf.mxu0
      %v1342 = vadd.f32 %v1243, %v1341
      %1343 = vmatmul.bf16.gmra.mxu0 %v407
      %v1344 = vpop.f32.mrf.mxu0
      %v1345 = vadd.f32 %v1246, %v1344
      %v1346 = vpop.f32.mrf.mxu0
      %v1347 = vadd.f32 %v1248, %v1346
      %1348 = vmatmul.bf16.gmra.mxu0 %v409
      %v1349 = vpop.f32.mrf.mxu0
      %v1350 = vadd.f32 %v1251, %v1349
      %v1351 = vpop.f32.mrf.mxu0
      %v1352 = vadd.f32 %v1253, %v1351
      %1353 = vmatmul.bf16.gmra.mxu0 %v411
      %v1354 = vpop.f32.mrf.mxu0
      %v1355 = vadd.f32 %v1256, %v1354
      %v1356 = vpop.f32.mrf.mxu0
      %v1357 = vadd.f32 %v1258, %v1356
      %1358 = vmatmul.bf16.gmra.mxu0 %v413
      %v1359 = vpop.f32.mrf.mxu0
      %v1360 = vadd.f32 %v1261, %v1359
      %v1361 = vpop.f32.mrf.mxu0
      %v1362 = vadd.f32 %v1263, %v1361
      %1363 = vmatmul.bf16.gmra.mxu0 %v415
      %v1364 = vpop.f32.mrf.mxu0
      %v1365 = vadd.f32 %v1266, %v1364
      %v1366 = vpop.f32.mrf.mxu0
      %v1367 = vadd.f32 %v1268, %v1366
      %1368 = vmatmul.bf16.gmra.mxu0 %v417
      %v1369 = vpop.f32.mrf.mxu0
      %v1370 = vadd.f32 %v1271, %v1369
      %v1371 = vpop.f32.mrf.mxu0
      %v1372 = vadd.f32 %v1273, %v1371
      %1373 = vmatmul.bf16.gmra.mxu0 %v419
      %v1374 = vpop.f32.mrf.mxu0
      %v1375 = vadd.f32 %v1276, %v1374
      %v1376 = vpop.f32.mrf.mxu0
      %v1377 = vadd.f32 %v1278, %v1376
      %1378 = vdwg.mxu0
      %v1379 = vld [vmem:[%s165] sm:$0xee]
      %s1380 = scalar_lea.vmem %s1, 256
      %v1381 = vld [vmem:[%s1380] sm:$0xf]
      %v1382 = vld [vmem:[%s1380 + $0x4] sm:$0xf]
      %v1383 = vld [vmem:[%s1380 + $0x8] sm:$0xf]
      %v1384 = vld [vmem:[%s1380 + $0xc] sm:$0xf]
      %v1385 = vld [vmem:[%s1380 + $0x10] sm:$0xf]
      %v1386 = vld [vmem:[%s1380 + $0x14] sm:$0xf]
      %v1387 = vld [vmem:[%s1380 + $0x18] sm:$0xf]
      %v1388 = vld [vmem:[%s1380 + $0x1c] sm:$0xf]
      %v1389 = vld [vmem:[%s1380 + $0x20] sm:$0xf]
      %v1390 = vld [vmem:[%s1380 + $0x24] sm:$0xf]
      %v1391 = vld [vmem:[%s1380 + $0x28] sm:$0xf]
      %v1392 = vld [vmem:[%s1380 + $0x2c] sm:$0xf]
      %v1393 = vld [vmem:[%s1380 + $0x30] sm:$0xf]
      %v1394 = vld [vmem:[%s1380 + $0x34] sm:$0xf]
      %v1395 = vld [vmem:[%s1380 + $0x38] sm:$0xf]
      %v1396 = vld [vmem:[%s1380 + $0x3c] sm:$0xf]
      %v1397 = vld [vmem:[%s1380 + $0x40] sm:$0xf]
      %v1398 = vld [vmem:[%s1380 + $0x44] sm:$0xf]
      %v1399 = vld [vmem:[%s1380 + $0x48] sm:$0xf]
      %v1400 = vld [vmem:[%s1380 + $0x4c] sm:$0xf]
      %v1401 = vld [vmem:[%s1380 + $0x50] sm:$0xf]
      %v1402 = vld [vmem:[%s1380 + $0x54] sm:$0xf]
      %v1403 = vld [vmem:[%s1380 + $0x58] sm:$0xf]
      %v1404 = vld [vmem:[%s1380 + $0x5c] sm:$0xf]
      %v1405 = vld [vmem:[%s1380 + $0x60] sm:$0xf]
      %v1406 = vld [vmem:[%s1380 + $0x64] sm:$0xf]
      %v1407 = vld [vmem:[%s1380 + $0x68] sm:$0xf]
      %v1408 = vld [vmem:[%s1380 + $0x6c] sm:$0xf]
      %v1409 = vld [vmem:[%s1380 + $0x70] sm:$0xf]
      %v1410 = vld [vmem:[%s1380 + $0x74] sm:$0xf]
      %v1411 = vld [vmem:[%s1380 + $0x78] sm:$0xf]
      %v1412 = vld [vmem:[%s1380 + $0x7c] sm:$0xf]
      %v1414 = vunpack.c.l.b16 %v1379
      %v1415 = vunpack.c.h.b16 %v1379
      %v1416 = vpack.c.b16 %v312, %v1414
      %v1417 = vpack.c.b16 %v313, %v1415
      %vm1418 = vcmask 1046528
      %v1419 = vrot.slane %v1416, 1
      %v1420 = vrot.slane %v386, 1
      %v1421 = vsel %vm1418, %v1419, %v1420
      %v1422 = vrot.slane %v1417, 1
      %v1423 = vrot.slane %v387, 1
      %v1424 = vsel %vm1418, %v1422, %v1423
      %v1425 = vrot.slane %v388, 1
      %v1426 = vsel %vm1418, %v1420, %v1425
      %v1427 = vrot.slane %v389, 1
      %v1428 = vsel %vm1418, %v1423, %v1427
      %v1429 = vrot.slane %v390, 1
      %v1430 = vsel %vm1418, %v1425, %v1429
      %v1431 = vrot.slane %v391, 1
      %v1432 = vsel %vm1418, %v1427, %v1431
      %v1433 = vrot.slane %v392, 1
      %v1434 = vsel %vm1418, %v1429, %v1433
      %v1435 = vrot.slane %v393, 1
      %v1436 = vsel %vm1418, %v1431, %v1435
      %v1437 = vrot.slane %v394, 1
      %v1438 = vsel %vm1418, %v1433, %v1437
      %v1439 = vrot.slane %v395, 1
      %v1440 = vsel %vm1418, %v1435, %v1439
      %v1441 = vrot.slane %v396, 1
      %v1442 = vsel %vm1418, %v1437, %v1441
      %v1443 = vrot.slane %v397, 1
      %v1444 = vsel %vm1418, %v1439, %v1443
      %v1445 = vrot.slane %v398, 1
      %v1446 = vsel %vm1418, %v1441, %v1445
      %v1447 = vrot.slane %v399, 1
      %v1448 = vsel %vm1418, %v1443, %v1447
      %v1449 = vrot.slane %v400, 1
      %v1450 = vsel %vm1418, %v1445, %v1449
      %v1451 = vrot.slane %v401, 1
      %v1452 = vsel %vm1418, %v1447, %v1451
      %v1453 = vrot.slane %v402, 1
      %v1454 = vsel %vm1418, %v1449, %v1453
      %v1455 = vrot.slane %v403, 1
      %v1456 = vsel %vm1418, %v1451, %v1455
      %v1457 = vrot.slane %v404, 1
      %v1458 = vsel %vm1418, %v1453, %v1457
      %v1459 = vrot.slane %v405, 1
      %v1460 = vsel %vm1418, %v1455, %v1459
      %v1461 = vrot.slane %v406, 1
      %v1462 = vsel %vm1418, %v1457, %v1461
      %v1463 = vrot.slane %v407, 1
      %v1464 = vsel %vm1418, %v1459, %v1463
      %v1465 = vrot.slane %v408, 1
      %v1466 = vsel %vm1418, %v1461, %v1465
      %v1467 = vrot.slane %v409, 1
      %v1468 = vsel %vm1418, %v1463, %v1467
      %v1469 = vrot.slane %v410, 1
      %v1470 = vsel %vm1418, %v1465, %v1469
      %v1471 = vrot.slane %v411, 1
      %v1472 = vsel %vm1418, %v1467, %v1471
      %v1473 = vrot.slane %v412, 1
      %v1474 = vsel %vm1418, %v1469, %v1473
      %v1475 = vrot.slane %v413, 1
      %v1476 = vsel %vm1418, %v1471, %v1475
      %v1477 = vrot.slane %v414, 1
      %v1478 = vsel %vm1418, %v1473, %v1477
      %v1479 = vrot.slane %v415, 1
      %v1480 = vsel %vm1418, %v1475, %v1479
      %v1481 = vrot.slane %v416, 1
      %v1482 = vsel %vm1418, %v1477, %v1481
      %v1483 = vrot.slane %v417, 1
      %v1484 = vsel %vm1418, %v1479, %v1483
      %v1485 = vrot.slane %v418, 1
      %v1486 = vsel %vm1418, %v1481, %v1485
      %v1487 = vrot.slane %v419, 1
      %v1488 = vsel %vm1418, %v1483, %v1487
      %v1489 = vrot.slane %v420, 1
      %v1490 = vsel %vm1418, %v1485, %v1489
      %v1491 = vrot.slane %v421, 1
      %v1492 = vsel %vm1418, %v1487, %v1491
      %v1561 = vunpack.c.l.b16 %v1381
      %v1562 = vunpack.c.l.b16 %v1382
      %v1563 = vunpack.c.l.b16 %v1383
      %v1564 = vunpack.c.l.b16 %v1384
      %v1565 = vunpack.c.l.b16 %v1385
      %v1566 = vunpack.c.l.b16 %v1386
      %v1567 = vunpack.c.l.b16 %v1387
      %v1568 = vunpack.c.l.b16 %v1388
      %v1569 = vunpack.c.l.b16 %v1389
      %v1570 = vunpack.c.l.b16 %v1390
      %v1571 = vunpack.c.l.b16 %v1391
      %v1572 = vunpack.c.l.b16 %v1392
      %v1573 = vunpack.c.l.b16 %v1393
      %v1574 = vunpack.c.l.b16 %v1394
      %v1575 = vunpack.c.l.b16 %v1395
      %v1576 = vunpack.c.l.b16 %v1396
      %v1577 = vunpack.c.l.b16 %v1397
      %v1578 = vunpack.c.l.b16 %v1398
      %v1579 = vunpack.c.l.b16 %v1399
      %v1580 = vunpack.c.l.b16 %v1400
      %v1581 = vunpack.c.l.b16 %v1401
      %v1582 = vunpack.c.l.b16 %v1402
      %v1583 = vunpack.c.l.b16 %v1403
      %v1584 = vunpack.c.l.b16 %v1404
      %v1585 = vunpack.c.l.b16 %v1405
      %v1586 = vunpack.c.l.b16 %v1406
      %v1587 = vunpack.c.l.b16 %v1407
      %v1588 = vunpack.c.l.b16 %v1408
      %v1589 = vunpack.c.l.b16 %v1409
      %v1590 = vunpack.c.l.b16 %v1410
      %v1591 = vunpack.c.l.b16 %v1411
      %v1592 = vunpack.c.l.b16 %v1412
      %v1593 = vpack.c.b16 %v1562, %v1561
      %v1594 = vpack.c.b16 %v1564, %v1563
      %v1595 = vpack.c.b16 %v1566, %v1565
      %v1596 = vpack.c.b16 %v1568, %v1567
      %v1597 = vpack.c.b16 %v1570, %v1569
      %v1598 = vpack.c.b16 %v1572, %v1571
      %v1599 = vpack.c.b16 %v1574, %v1573
      %v1600 = vpack.c.b16 %v1576, %v1575
      %v1601 = vpack.c.b16 %v1578, %v1577
      %v1602 = vpack.c.b16 %v1580, %v1579
      %v1603 = vpack.c.b16 %v1582, %v1581
      %v1604 = vpack.c.b16 %v1584, %v1583
      %v1605 = vpack.c.b16 %v1586, %v1585
      %v1606 = vpack.c.b16 %v1588, %v1587
      %v1607 = vpack.c.b16 %v1590, %v1589
      %v1608 = vpack.c.b16 %v1592, %v1591
      %1625 = vmatpush.bf16.msra.mxu0 %v1600
      %1626 = vmatpush.bf16.msra.mxu0 %v1599
      %1627 = vmatpush.bf16.msra.mxu0 %v1598
      %1628 = vmatpush.bf16.msra.mxu0 %v1597
      %1629 = vmatpush.bf16.msra.mxu0 %v1596
      %1630 = vmatpush.bf16.msra.mxu0 %v1595
      %1631 = vmatpush.bf16.msra.mxu0 %v1594
      %1632 = vmatpush.bf16.msra.mxu0 %v1593
      %1633 = vmatmul.bf16.gmra.mxu0 %v1421
      %v1634 = vpop.f32.mrf.mxu0
      %v1635 = vadd.f32 0.0, %v1634
      %v1636 = vpop.f32.mrf.mxu0
      %v1637 = vadd.f32 0.0, %v1636
      %1638 = vmatmul.bf16.gmra.mxu0 %v1426
      %v1639 = vpop.f32.mrf.mxu0
      %v1640 = vadd.f32 0.0, %v1639
      %v1641 = vpop.f32.mrf.mxu0
      %v1642 = vadd.f32 0.0, %v1641
      %1643 = vmatmul.bf16.gmra.mxu0 %v1430
      %v1644 = vpop.f32.mrf.mxu0
      %v1645 = vadd.f32 0.0, %v1644
      %v1646 = vpop.f32.mrf.mxu0
      %v1647 = vadd.f32 0.0, %v1646
      %1648 = vmatmul.bf16.gmra.mxu0 %v1434
      %v1649 = vpop.f32.mrf.mxu0
      %v1650 = vadd.f32 0.0, %v1649
      %v1651 = vpop.f32.mrf.mxu0
      %v1652 = vadd.f32 0.0, %v1651
      %1653 = vmatmul.bf16.gmra.mxu0 %v1438
      %v1654 = vpop.f32.mrf.mxu0
      %v1655 = vadd.f32 0.0, %v1654
      %v1656 = vpop.f32.mrf.mxu0
      %v1657 = vadd.f32 0.0, %v1656
      %1658 = vmatmul.bf16.gmra.mxu0 %v1442
      %v1659 = vpop.f32.mrf.mxu0
      %v1660 = vadd.f32 0.0, %v1659
      %v1661 = vpop.f32.mrf.mxu0
      %v1662 = vadd.f32 0.0, %v1661
      %1663 = vmatmul.bf16.gmra.mxu0 %v1446
      %v1664 = vpop.f32.mrf.mxu0
      %v1665 = vadd.f32 0.0, %v1664
      %v1666 = vpop.f32.mrf.mxu0
      %v1667 = vadd.f32 0.0, %v1666
      %1668 = vmatmul.bf16.gmra.mxu0 %v1450
      %v1669 = vpop.f32.mrf.mxu0
      %v1670 = vadd.f32 0.0, %v1669
      %v1671 = vpop.f32.mrf.mxu0
      %v1672 = vadd.f32 0.0, %v1671
      %1673 = vmatmul.bf16.gmra.mxu0 %v1454
      %v1674 = vpop.f32.mrf.mxu0
      %v1675 = vadd.f32 0.0, %v1674
      %v1676 = vpop.f32.mrf.mxu0
      %v1677 = vadd.f32 0.0, %v1676
      %1678 = vmatmul.bf16.gmra.mxu0 %v1458
      %v1679 = vpop.f32.mrf.mxu0
      %v1680 = vadd.f32 0.0, %v1679
      %v1681 = vpop.f32.mrf.mxu0
      %v1682 = vadd.f32 0.0, %v1681
      %1683 = vmatmul.bf16.gmra.mxu0 %v1462
      %v1684 = vpop.f32.mrf.mxu0
      %v1685 = vadd.f32 0.0, %v1684
      %v1686 = vpop.f32.mrf.mxu0
      %v1687 = vadd.f32 0.0, %v1686
      %1688 = vmatmul.bf16.gmra.mxu0 %v1466
      %v1689 = vpop.f32.mrf.mxu0
      %v1690 = vadd.f32 0.0, %v1689
      %v1691 = vpop.f32.mrf.mxu0
      %v1692 = vadd.f32 0.0, %v1691
      %1693 = vmatmul.bf16.gmra.mxu0 %v1470
      %v1694 = vpop.f32.mrf.mxu0
      %v1695 = vadd.f32 0.0, %v1694
      %v1696 = vpop.f32.mrf.mxu0
      %v1697 = vadd.f32 0.0, %v1696
      %1698 = vmatmul.bf16.gmra.mxu0 %v1474
      %v1699 = vpop.f32.mrf.mxu0
      %v1700 = vadd.f32 0.0, %v1699
      %v1701 = vpop.f32.mrf.mxu0
      %v1702 = vadd.f32 0.0, %v1701
      %1703 = vmatmul.bf16.gmra.mxu0 %v1478
      %v1704 = vpop.f32.mrf.mxu0
      %v1705 = vadd.f32 0.0, %v1704
      %v1706 = vpop.f32.mrf.mxu0
      %v1707 = vadd.f32 0.0, %v1706
      %1708 = vmatmul.bf16.gmra.mxu0 %v1482
      %v1709 = vpop.f32.mrf.mxu0
      %v1710 = vadd.f32 0.0, %v1709
      %v1711 = vpop.f32.mrf.mxu0
      %v1712 = vadd.f32 0.0, %v1711
      %1713 = vmatmul.bf16.gmra.mxu0 %v1486
      %v1714 = vpop.f32.mrf.mxu0
      %v1715 = vadd.f32 0.0, %v1714
      %v1716 = vpop.f32.mrf.mxu0
      %v1717 = vadd.f32 0.0, %v1716
      %1718 = vmatmul.bf16.gmra.mxu0 %v1490
      %v1719 = vpop.f32.mrf.mxu0
      %v1720 = vadd.f32 0.0, %v1719
      %v1721 = vpop.f32.mrf.mxu0
      %v1722 = vadd.f32 0.0, %v1721
      %1723 = vdwg.mxu0
      %1724 = vmatpush.bf16.msra.mxu0 %v1608
      %1725 = vmatpush.bf16.msra.mxu0 %v1607
      %1726 = vmatpush.bf16.msra.mxu0 %v1606
      %1727 = vmatpush.bf16.msra.mxu0 %v1605
      %1728 = vmatpush.bf16.msra.mxu0 %v1604
      %1729 = vmatpush.bf16.msra.mxu0 %v1603
      %1730 = vmatpush.bf16.msra.mxu0 %v1602
      %1731 = vmatpush.bf16.msra.mxu0 %v1601
      %1732 = vmatmul.bf16.gmra.mxu0 %v1424
      %v1733 = vpop.f32.mrf.mxu0
      %v1734 = vadd.f32 %v1635, %v1733
      %v1735 = vpop.f32.mrf.mxu0
      %v1736 = vadd.f32 %v1637, %v1735
      %1737 = vmatmul.bf16.gmra.mxu0 %v1428
      %v1738 = vpop.f32.mrf.mxu0
      %v1739 = vadd.f32 %v1640, %v1738
      %v1740 = vpop.f32.mrf.mxu0
      %v1741 = vadd.f32 %v1642, %v1740
      %1742 = vmatmul.bf16.gmra.mxu0 %v1432
      %v1743 = vpop.f32.mrf.mxu0
      %v1744 = vadd.f32 %v1645, %v1743
      %v1745 = vpop.f32.mrf.mxu0
      %v1746 = vadd.f32 %v1647, %v1745
      %1747 = vmatmul.bf16.gmra.mxu0 %v1436
      %v1748 = vpop.f32.mrf.mxu0
      %v1749 = vadd.f32 %v1650, %v1748
      %v1750 = vpop.f32.mrf.mxu0
      %v1751 = vadd.f32 %v1652, %v1750
      %1752 = vmatmul.bf16.gmra.mxu0 %v1440
      %v1753 = vpop.f32.mrf.mxu0
      %v1754 = vadd.f32 %v1655, %v1753
      %v1755 = vpop.f32.mrf.mxu0
      %v1756 = vadd.f32 %v1657, %v1755
      %1757 = vmatmul.bf16.gmra.mxu0 %v1444
      %v1758 = vpop.f32.mrf.mxu0
      %v1759 = vadd.f32 %v1660, %v1758
      %v1760 = vpop.f32.mrf.mxu0
      %v1761 = vadd.f32 %v1662, %v1760
      %1762 = vmatmul.bf16.gmra.mxu0 %v1448
      %v1763 = vpop.f32.mrf.mxu0
      %v1764 = vadd.f32 %v1665, %v1763
      %v1765 = vpop.f32.mrf.mxu0
      %v1766 = vadd.f32 %v1667, %v1765
      %1767 = vmatmul.bf16.gmra.mxu0 %v1452
      %v1768 = vpop.f32.mrf.mxu0
      %v1769 = vadd.f32 %v1670, %v1768
      %v1770 = vpop.f32.mrf.mxu0
      %v1771 = vadd.f32 %v1672, %v1770
      %1772 = vmatmul.bf16.gmra.mxu0 %v1456
      %v1773 = vpop.f32.mrf.mxu0
      %v1774 = vadd.f32 %v1675, %v1773
      %v1775 = vpop.f32.mrf.mxu0
      %v1776 = vadd.f32 %v1677, %v1775
      %1777 = vmatmul.bf16.gmra.mxu0 %v1460
      %v1778 = vpop.f32.mrf.mxu0
      %v1779 = vadd.f32 %v1680, %v1778
      %v1780 = vpop.f32.mrf.mxu0
      %v1781 = vadd.f32 %v1682, %v1780
      %1782 = vmatmul.bf16.gmra.mxu0 %v1464
      %v1783 = vpop.f32.mrf.mxu0
      %v1784 = vadd.f32 %v1685, %v1783
      %v1785 = vpop.f32.mrf.mxu0
      %v1786 = vadd.f32 %v1687, %v1785
      %1787 = vmatmul.bf16.gmra.mxu0 %v1468
      %v1788 = vpop.f32.mrf.mxu0
      %v1789 = vadd.f32 %v1690, %v1788
      %v1790 = vpop.f32.mrf.mxu0
      %v1791 = vadd.f32 %v1692, %v1790
      %1792 = vmatmul.bf16.gmra.mxu0 %v1472
      %v1793 = vpop.f32.mrf.mxu0
      %v1794 = vadd.f32 %v1695, %v1793
      %v1795 = vpop.f32.mrf.mxu0
      %v1796 = vadd.f32 %v1697, %v1795
      %1797 = vmatmul.bf16.gmra.mxu0 %v1476
      %v1798 = vpop.f32.mrf.mxu0
      %v1799 = vadd.f32 %v1700, %v1798
      %v1800 = vpop.f32.mrf.mxu0
      %v1801 = vadd.f32 %v1702, %v1800
      %1802 = vmatmul.bf16.gmra.mxu0 %v1480
      %v1803 = vpop.f32.mrf.mxu0
      %v1804 = vadd.f32 %v1705, %v1803
      %v1805 = vpop.f32.mrf.mxu0
      %v1806 = vadd.f32 %v1707, %v1805
      %1807 = vmatmul.bf16.gmra.mxu0 %v1484
      %v1808 = vpop.f32.mrf.mxu0
      %v1809 = vadd.f32 %v1710, %v1808
      %v1810 = vpop.f32.mrf.mxu0
      %v1811 = vadd.f32 %v1712, %v1810
      %1812 = vmatmul.bf16.gmra.mxu0 %v1488
      %v1813 = vpop.f32.mrf.mxu0
      %v1814 = vadd.f32 %v1715, %v1813
      %v1815 = vpop.f32.mrf.mxu0
      %v1816 = vadd.f32 %v1717, %v1815
      %1817 = vmatmul.bf16.gmra.mxu0 %v1492
      %v1818 = vpop.f32.mrf.mxu0
      %v1819 = vadd.f32 %v1720, %v1818
      %v1820 = vpop.f32.mrf.mxu0
      %v1821 = vadd.f32 %v1722, %v1820
      %1822 = vdwg.mxu0
      %v1823 = vadd.f32 %v1290, %v1734
      %v1824 = vadd.f32 %v1292, %v1736
      %v1825 = vadd.f32 %v1295, %v1739
      %v1826 = vadd.f32 %v1297, %v1741
      %v1827 = vadd.f32 %v1300, %v1744
      %v1828 = vadd.f32 %v1302, %v1746
      %v1829 = vadd.f32 %v1305, %v1749
      %v1830 = vadd.f32 %v1307, %v1751
      %v1831 = vadd.f32 %v1310, %v1754
      %v1832 = vadd.f32 %v1312, %v1756
      %v1833 = vadd.f32 %v1315, %v1759
      %v1834 = vadd.f32 %v1317, %v1761
      %v1835 = vadd.f32 %v1320, %v1764
      %v1836 = vadd.f32 %v1322, %v1766
      %v1837 = vadd.f32 %v1325, %v1769
      %v1838 = vadd.f32 %v1327, %v1771
      %v1839 = vadd.f32 %v1330, %v1774
      %v1840 = vadd.f32 %v1332, %v1776
      %v1841 = vadd.f32 %v1335, %v1779
      %v1842 = vadd.f32 %v1337, %v1781
      %v1843 = vadd.f32 %v1340, %v1784
      %v1844 = vadd.f32 %v1342, %v1786
      %v1845 = vadd.f32 %v1345, %v1789
      %v1846 = vadd.f32 %v1347, %v1791
      %v1847 = vadd.f32 %v1350, %v1794
      %v1848 = vadd.f32 %v1352, %v1796
      %v1849 = vadd.f32 %v1355, %v1799
      %v1850 = vadd.f32 %v1357, %v1801
      %v1851 = vadd.f32 %v1360, %v1804
      %v1852 = vadd.f32 %v1362, %v1806
      %v1853 = vadd.f32 %v1365, %v1809
      %v1854 = vadd.f32 %v1367, %v1811
      %v1855 = vadd.f32 %v1370, %v1814
      %v1856 = vadd.f32 %v1372, %v1816
      %v1857 = vadd.f32 %v1375, %v1819
      %v1858 = vadd.f32 %v1377, %v1821
      %v1859 = vld [vmem:[%s165 + $0x10] sm:$0xee]
      %v1860 = vld [vmem:[%s165 + $0x18] sm:$0xff]
      %v1861 = vld [vmem:[%s165 + $0x20] sm:$0xff]
      %v1862 = vld [vmem:[%s165 + $0x28] sm:$0xff]
      %v1863 = vld [vmem:[%s165 + $0x30] sm:$0xff]
      %v1864 = vld [vmem:[%s165 + $0x38] sm:$0xff]
      %v1865 = vld [vmem:[%s165 + $0x40] sm:$0xff]
      %v1866 = vld [vmem:[%s165 + $0x48] sm:$0xff]
      %v1867 = vld [vmem:[%s165 + $0x50] sm:$0xff]
      %v1868 = vld [vmem:[%s165 + $0x58] sm:$0xff]
      %v1869 = vld [vmem:[%s165 + $0x60] sm:$0xff]
      %v1870 = vld [vmem:[%s165 + $0x68] sm:$0xff]
      %v1871 = vld [vmem:[%s165 + $0x70] sm:$0xff]
      %v1872 = vld [vmem:[%s165 + $0x78] sm:$0xff]
      %v1873 = vld [vmem:[%s165 + $0x80] sm:$0xff]
      %v1874 = vld [vmem:[%s165 + $0x88] sm:$0xff]
      %v1875 = vld [vmem:[%s165 + $0x90] sm:$0xff]
      %v1876 = vld [vmem:[%s165 + $0x98] sm:$0xff]
      %v1877 = vld [vmem:[%s165 + $0xa0] sm:$0xff]
      %v1878 = vld [vmem:[%s165 + $0xa8] sm:$0xff]
      %v1879 = vld [vmem:[%s165 + $0xb0] sm:$0xff]
      %v1880 = vld [vmem:[%s165 + $0xb8] sm:$0xff]
      %v1881 = vld [vmem:[%s165 + $0xc0] sm:$0xff]
      %v1882 = vld [vmem:[%s165 + $0xc8] sm:$0xff]
      %v1883 = vld [vmem:[%s165 + $0xd0] sm:$0xff]
      %v1884 = vld [vmem:[%s165 + $0xd8] sm:$0xff]
      %v1885 = vld [vmem:[%s165 + $0xe0] sm:$0xff]
      %v1886 = vld [vmem:[%s165 + $0xe8] sm:$0xff]
      %v1887 = vld [vmem:[%s165 + $0xf0] sm:$0xff]
      %v1888 = vld [vmem:[%s165 + $0xf8] sm:$0xff]
      %v1889 = vld [vmem:[%s165 + $0x100] sm:$0xff]
      %v1890 = vld [vmem:[%s165 + $0x108] sm:$0xff]
      %v1891 = vld [vmem:[%s165 + $0x110] sm:$0xff]
      %v1892 = vld [vmem:[%s165 + $0x118] sm:$0xff]
      %v1893 = vld [vmem:[%s165 + $0x120] sm:$0xff]
      %v1894 = vld [vmem:[%s165 + $0x128] sm:$0xff]
      %v1895 = vld [vmem:[%s165 + $0x130] sm:$0x11]
      %s1896 = scalar_lea.vmem %s1, 384
      %v1897 = vld [vmem:[%s1896] sm:$0xf]
      %v1898 = vld [vmem:[%s1896 + $0x4] sm:$0xf]
      %v1899 = vld [vmem:[%s1896 + $0x8] sm:$0xf]
      %v1900 = vld [vmem:[%s1896 + $0xc] sm:$0xf]
      %v1901 = vld [vmem:[%s1896 + $0x10] sm:$0xf]
      %v1902 = vld [vmem:[%s1896 + $0x14] sm:$0xf]
      %v1903 = vld [vmem:[%s1896 + $0x18] sm:$0xf]
      %v1904 = vld [vmem:[%s1896 + $0x1c] sm:$0xf]
      %v1905 = vld [vmem:[%s1896 + $0x20] sm:$0xf]
      %v1906 = vld [vmem:[%s1896 + $0x24] sm:$0xf]
      %v1907 = vld [vmem:[%s1896 + $0x28] sm:$0xf]
      %v1908 = vld [vmem:[%s1896 + $0x2c] sm:$0xf]
      %v1909 = vld [vmem:[%s1896 + $0x30] sm:$0xf]
      %v1910 = vld [vmem:[%s1896 + $0x34] sm:$0xf]
      %v1911 = vld [vmem:[%s1896 + $0x38] sm:$0xf]
      %v1912 = vld [vmem:[%s1896 + $0x3c] sm:$0xf]
      %v1913 = vld [vmem:[%s1896 + $0x40] sm:$0xf]
      %v1914 = vld [vmem:[%s1896 + $0x44] sm:$0xf]
      %v1915 = vld [vmem:[%s1896 + $0x48] sm:$0xf]
      %v1916 = vld [vmem:[%s1896 + $0x4c] sm:$0xf]
      %v1917 = vld [vmem:[%s1896 + $0x50] sm:$0xf]
      %v1918 = vld [vmem:[%s1896 + $0x54] sm:$0xf]
      %v1919 = vld [vmem:[%s1896 + $0x58] sm:$0xf]
      %v1920 = vld [vmem:[%s1896 + $0x5c] sm:$0xf]
      %v1921 = vld [vmem:[%s1896 + $0x60] sm:$0xf]
      %v1922 = vld [vmem:[%s1896 + $0x64] sm:$0xf]
      %v1923 = vld [vmem:[%s1896 + $0x68] sm:$0xf]
      %v1924 = vld [vmem:[%s1896 + $0x6c] sm:$0xf]
      %v1925 = vld [vmem:[%s1896 + $0x70] sm:$0xf]
      %v1926 = vld [vmem:[%s1896 + $0x74] sm:$0xf]
      %v1927 = vld [vmem:[%s1896 + $0x78] sm:$0xf]
      %v1928 = vld [vmem:[%s1896 + $0x7c] sm:$0xf]
      %v1966 = vunpack.c.l.b16 %v1859
      %v1967 = vunpack.c.h.b16 %v1859
      %v1968 = vunpack.c.l.b16 %v1860
      %v1969 = vunpack.c.h.b16 %v1860
      %v1970 = vunpack.c.l.b16 %v1861
      %v1971 = vunpack.c.h.b16 %v1861
      %v1972 = vunpack.c.l.b16 %v1862
      %v1973 = vunpack.c.h.b16 %v1862
      %v1974 = vunpack.c.l.b16 %v1863
      %v1975 = vunpack.c.h.b16 %v1863
      %v1976 = vunpack.c.l.b16 %v1864
      %v1977 = vunpack.c.h.b16 %v1864
      %v1978 = vunpack.c.l.b16 %v1865
      %v1979 = vunpack.c.h.b16 %v1865
      %v1980 = vunpack.c.l.b16 %v1866
      %v1981 = vunpack.c.h.b16 %v1866
      %v1982 = vunpack.c.l.b16 %v1867
      %v1983 = vunpack.c.h.b16 %v1867
      %v1984 = vunpack.c.l.b16 %v1868
      %v1985 = vunpack.c.h.b16 %v1868
      %v1986 = vunpack.c.l.b16 %v1869
      %v1987 = vunpack.c.h.b16 %v1869
      %v1988 = vunpack.c.l.b16 %v1870
      %v1989 = vunpack.c.h.b16 %v1870
      %v1990 = vunpack.c.l.b16 %v1871
      %v1991 = vunpack.c.h.b16 %v1871
      %v1992 = vunpack.c.l.b16 %v1872
      %v1993 = vunpack.c.h.b16 %v1872
      %v1994 = vunpack.c.l.b16 %v1873
      %v1995 = vunpack.c.h.b16 %v1873
      %v1996 = vunpack.c.l.b16 %v1874
      %v1997 = vunpack.c.h.b16 %v1874
      %v1998 = vunpack.c.l.b16 %v1875
      %v1999 = vunpack.c.h.b16 %v1875
      %v2000 = vunpack.c.l.b16 %v1876
      %v2001 = vunpack.c.h.b16 %v1876
      %v2002 = vunpack.c.l.b16 %v1877
      %v2003 = vunpack.c.h.b16 %v1877
      %v2004 = vunpack.c.l.b16 %v1878
      %v2005 = vunpack.c.h.b16 %v1878
      %v2006 = vunpack.c.l.b16 %v1879
      %v2007 = vunpack.c.h.b16 %v1879
      %v2008 = vunpack.c.l.b16 %v1880
      %v2009 = vunpack.c.h.b16 %v1880
      %v2010 = vunpack.c.l.b16 %v1881
      %v2011 = vunpack.c.h.b16 %v1881
      %v2012 = vunpack.c.l.b16 %v1882
      %v2013 = vunpack.c.h.b16 %v1882
      %v2014 = vunpack.c.l.b16 %v1883
      %v2015 = vunpack.c.h.b16 %v1883
      %v2016 = vunpack.c.l.b16 %v1884
      %v2017 = vunpack.c.h.b16 %v1884
      %v2018 = vunpack.c.l.b16 %v1885
      %v2019 = vunpack.c.h.b16 %v1885
      %v2020 = vunpack.c.l.b16 %v1886
      %v2021 = vunpack.c.h.b16 %v1886
      %v2022 = vunpack.c.l.b16 %v1887
      %v2023 = vunpack.c.h.b16 %v1887
      %v2024 = vunpack.c.l.b16 %v1888
      %v2025 = vunpack.c.h.b16 %v1888
      %v2026 = vunpack.c.l.b16 %v1889
      %v2027 = vunpack.c.h.b16 %v1889
      %v2028 = vunpack.c.l.b16 %v1890
      %v2029 = vunpack.c.h.b16 %v1890
      %v2030 = vunpack.c.l.b16 %v1891
      %v2031 = vunpack.c.h.b16 %v1891
      %v2032 = vunpack.c.l.b16 %v1892
      %v2033 = vunpack.c.h.b16 %v1892
      %v2034 = vunpack.c.l.b16 %v1893
      %v2035 = vunpack.c.h.b16 %v1893
      %v2036 = vunpack.c.l.b16 %v1894
      %v2037 = vunpack.c.h.b16 %v1894
      %v2038 = vunpack.c.l.b16 %v1895
      %v2039 = vunpack.c.h.b16 %v1895
      %v2040 = vpack.c.b16 %v1968, %v1966
      %v2041 = vpack.c.b16 %v1969, %v1967
      %v2042 = vpack.c.b16 %v1972, %v1970
      %v2043 = vpack.c.b16 %v1973, %v1971
      %v2044 = vpack.c.b16 %v1976, %v1974
      %v2045 = vpack.c.b16 %v1977, %v1975
      %v2046 = vpack.c.b16 %v1980, %v1978
      %v2047 = vpack.c.b16 %v1981, %v1979
      %v2048 = vpack.c.b16 %v1984, %v1982
      %v2049 = vpack.c.b16 %v1985, %v1983
      %v2050 = vpack.c.b16 %v1988, %v1986
      %v2051 = vpack.c.b16 %v1989, %v1987
      %v2052 = vpack.c.b16 %v1992, %v1990
      %v2053 = vpack.c.b16 %v1993, %v1991
      %v2054 = vpack.c.b16 %v1996, %v1994
      %v2055 = vpack.c.b16 %v1997, %v1995
      %v2056 = vpack.c.b16 %v2000, %v1998
      %v2057 = vpack.c.b16 %v2001, %v1999
      %v2058 = vpack.c.b16 %v2004, %v2002
      %v2059 = vpack.c.b16 %v2005, %v2003
      %v2060 = vpack.c.b16 %v2008, %v2006
      %v2061 = vpack.c.b16 %v2009, %v2007
      %v2062 = vpack.c.b16 %v2012, %v2010
      %v2063 = vpack.c.b16 %v2013, %v2011
      %v2064 = vpack.c.b16 %v2016, %v2014
      %v2065 = vpack.c.b16 %v2017, %v2015
      %v2066 = vpack.c.b16 %v2020, %v2018
      %v2067 = vpack.c.b16 %v2021, %v2019
      %v2068 = vpack.c.b16 %v2024, %v2022
      %v2069 = vpack.c.b16 %v2025, %v2023
      %v2070 = vpack.c.b16 %v2028, %v2026
      %v2071 = vpack.c.b16 %v2029, %v2027
      %v2072 = vpack.c.b16 %v2032, %v2030
      %v2073 = vpack.c.b16 %v2033, %v2031
      %v2074 = vpack.c.b16 %v2036, %v2034
      %v2075 = vpack.c.b16 %v2037, %v2035
      %v2076 = vpack.c.b16 %v2038, %v2038
      %v2077 = vpack.c.b16 %v2039, %v2039
      %v2078 = vrot.slane %v2040, 1
      %v2079 = vrot.slane %v2042, 1
      %v2080 = vsel %vm1418, %v2078, %v2079
      %v2081 = vrot.slane %v2041, 1
      %v2082 = vrot.slane %v2043, 1
      %v2083 = vsel %vm1418, %v2081, %v2082
      %v2084 = vrot.slane %v2044, 1
      %v2085 = vsel %vm1418, %v2079, %v2084
      %v2086 = vrot.slane %v2045, 1
      %v2087 = vsel %vm1418, %v2082, %v2086
      %v2088 = vrot.slane %v2046, 1
      %v2089 = vsel %vm1418, %v2084, %v2088
      %v2090 = vrot.slane %v2047, 1
      %v2091 = vsel %vm1418, %v2086, %v2090
      %v2092 = vrot.slane %v2048, 1
      %v2093 = vsel %vm1418, %v2088, %v2092
      %v2094 = vrot.slane %v2049, 1
      %v2095 = vsel %vm1418, %v2090, %v2094
      %v2096 = vrot.slane %v2050, 1
      %v2097 = vsel %vm1418, %v2092, %v2096
      %v2098 = vrot.slane %v2051, 1
      %v2099 = vsel %vm1418, %v2094, %v2098
      %v2100 = vrot.slane %v2052, 1
      %v2101 = vsel %vm1418, %v2096, %v2100
      %v2102 = vrot.slane %v2053, 1
      %v2103 = vsel %vm1418, %v2098, %v2102
      %v2104 = vrot.slane %v2054, 1
      %v2105 = vsel %vm1418, %v2100, %v2104
      %v2106 = vrot.slane %v2055, 1
      %v2107 = vsel %vm1418, %v2102, %v2106
      %v2108 = vrot.slane %v2056, 1
      %v2109 = vsel %vm1418, %v2104, %v2108
      %v2110 = vrot.slane %v2057, 1
      %v2111 = vsel %vm1418, %v2106, %v2110
      %v2112 = vrot.slane %v2058, 1
      %v2113 = vsel %vm1418, %v2108, %v2112
      %v2114 = vrot.slane %v2059, 1
      %v2115 = vsel %vm1418, %v2110, %v2114
      %v2116 = vrot.slane %v2060, 1
      %v2117 = vsel %vm1418, %v2112, %v2116
      %v2118 = vrot.slane %v2061, 1
      %v2119 = vsel %vm1418, %v2114, %v2118
      %v2120 = vrot.slane %v2062, 1
      %v2121 = vsel %vm1418, %v2116, %v2120
      %v2122 = vrot.slane %v2063, 1
      %v2123 = vsel %vm1418, %v2118, %v2122
      %v2124 = vrot.slane %v2064, 1
      %v2125 = vsel %vm1418, %v2120, %v2124
      %v2126 = vrot.slane %v2065, 1
      %v2127 = vsel %vm1418, %v2122, %v2126
      %v2128 = vrot.slane %v2066, 1
      %v2129 = vsel %vm1418, %v2124, %v2128
      %v2130 = vrot.slane %v2067, 1
      %v2131 = vsel %vm1418, %v2126, %v2130
      %v2132 = vrot.slane %v2068, 1
      %v2133 = vsel %vm1418, %v2128, %v2132
      %v2134 = vrot.slane %v2069, 1
      %v2135 = vsel %vm1418, %v2130, %v2134
      %v2136 = vrot.slane %v2070, 1
      %v2137 = vsel %vm1418, %v2132, %v2136
      %v2138 = vrot.slane %v2071, 1
      %v2139 = vsel %vm1418, %v2134, %v2138
      %v2140 = vrot.slane %v2072, 1
      %v2141 = vsel %vm1418, %v2136, %v2140
      %v2142 = vrot.slane %v2073, 1
      %v2143 = vsel %vm1418, %v2138, %v2142
      %v2144 = vrot.slane %v2074, 1
      %v2145 = vsel %vm1418, %v2140, %v2144
      %v2146 = vrot.slane %v2075, 1
      %v2147 = vsel %vm1418, %v2142, %v2146
      %v2148 = vrot.slane %v2076, 1
      %v2149 = vsel %vm1418, %v2144, %v2148
      %v2150 = vrot.slane %v2077, 1
      %v2151 = vsel %vm1418, %v2146, %v2150
      %v2220 = vunpack.c.l.b16 %v1897
      %v2221 = vunpack.c.l.b16 %v1898
      %v2222 = vunpack.c.l.b16 %v1899
      %v2223 = vunpack.c.l.b16 %v1900
      %v2224 = vunpack.c.l.b16 %v1901
      %v2225 = vunpack.c.l.b16 %v1902
      %v2226 = vunpack.c.l.b16 %v1903
      %v2227 = vunpack.c.l.b16 %v1904
      %v2228 = vunpack.c.l.b16 %v1905
      %v2229 = vunpack.c.l.b16 %v1906
      %v2230 = vunpack.c.l.b16 %v1907
      %v2231 = vunpack.c.l.b16 %v1908
      %v2232 = vunpack.c.l.b16 %v1909
      %v2233 = vunpack.c.l.b16 %v1910
      %v2234 = vunpack.c.l.b16 %v1911
      %v2235 = vunpack.c.l.b16 %v1912
      %v2236 = vunpack.c.l.b16 %v1913
      %v2237 = vunpack.c.l.b16 %v1914
      %v2238 = vunpack.c.l.b16 %v1915
      %v2239 = vunpack.c.l.b16 %v1916
      %v2240 = vunpack.c.l.b16 %v1917
      %v2241 = vunpack.c.l.b16 %v1918
      %v2242 = vunpack.c.l.b16 %v1919
      %v2243 = vunpack.c.l.b16 %v1920
      %v2244 = vunpack.c.l.b16 %v1921
      %v2245 = vunpack.c.l.b16 %v1922
      %v2246 = vunpack.c.l.b16 %v1923
      %v2247 = vunpack.c.l.b16 %v1924
      %v2248 = vunpack.c.l.b16 %v1925
      %v2249 = vunpack.c.l.b16 %v1926
      %v2250 = vunpack.c.l.b16 %v1927
      %v2251 = vunpack.c.l.b16 %v1928
      %v2252 = vpack.c.b16 %v2221, %v2220
      %v2253 = vpack.c.b16 %v2223, %v2222
      %v2254 = vpack.c.b16 %v2225, %v2224
      %v2255 = vpack.c.b16 %v2227, %v2226
      %v2256 = vpack.c.b16 %v2229, %v2228
      %v2257 = vpack.c.b16 %v2231, %v2230
      %v2258 = vpack.c.b16 %v2233, %v2232
      %v2259 = vpack.c.b16 %v2235, %v2234
      %v2260 = vpack.c.b16 %v2237, %v2236
      %v2261 = vpack.c.b16 %v2239, %v2238
      %v2262 = vpack.c.b16 %v2241, %v2240
      %v2263 = vpack.c.b16 %v2243, %v2242
      %v2264 = vpack.c.b16 %v2245, %v2244
      %v2265 = vpack.c.b16 %v2247, %v2246
      %v2266 = vpack.c.b16 %v2249, %v2248
      %v2267 = vpack.c.b16 %v2251, %v2250
      %2284 = vmatpush.bf16.msra.mxu0 %v2259
      %2285 = vmatpush.bf16.msra.mxu0 %v2258
      %2286 = vmatpush.bf16.msra.mxu0 %v2257
      %2287 = vmatpush.bf16.msra.mxu0 %v2256
      %2288 = vmatpush.bf16.msra.mxu0 %v2255
      %2289 = vmatpush.bf16.msra.mxu0 %v2254
      %2290 = vmatpush.bf16.msra.mxu0 %v2253
      %2291 = vmatpush.bf16.msra.mxu0 %v2252
      %2292 = vmatmul.bf16.gmra.mxu0 %v2080
      %v2293 = vpop.f32.mrf.mxu0
      %v2294 = vadd.f32 0.0, %v2293
      %v2295 = vpop.f32.mrf.mxu0
      %v2296 = vadd.f32 0.0, %v2295
      %2297 = vmatmul.bf16.gmra.mxu0 %v2085
      %v2298 = vpop.f32.mrf.mxu0
      %v2299 = vadd.f32 0.0, %v2298
      %v2300 = vpop.f32.mrf.mxu0
      %v2301 = vadd.f32 0.0, %v2300
      %2302 = vmatmul.bf16.gmra.mxu0 %v2089
      %v2303 = vpop.f32.mrf.mxu0
      %v2304 = vadd.f32 0.0, %v2303
      %v2305 = vpop.f32.mrf.mxu0
      %v2306 = vadd.f32 0.0, %v2305
      %2307 = vmatmul.bf16.gmra.mxu0 %v2093
      %v2308 = vpop.f32.mrf.mxu0
      %v2309 = vadd.f32 0.0, %v2308
      %v2310 = vpop.f32.mrf.mxu0
      %v2311 = vadd.f32 0.0, %v2310
      %2312 = vmatmul.bf16.gmra.mxu0 %v2097
      %v2313 = vpop.f32.mrf.mxu0
      %v2314 = vadd.f32 0.0, %v2313
      %v2315 = vpop.f32.mrf.mxu0
      %v2316 = vadd.f32 0.0, %v2315
      %2317 = vmatmul.bf16.gmra.mxu0 %v2101
      %v2318 = vpop.f32.mrf.mxu0
      %v2319 = vadd.f32 0.0, %v2318
      %v2320 = vpop.f32.mrf.mxu0
      %v2321 = vadd.f32 0.0, %v2320
      %2322 = vmatmul.bf16.gmra.mxu0 %v2105
      %v2323 = vpop.f32.mrf.mxu0
      %v2324 = vadd.f32 0.0, %v2323
      %v2325 = vpop.f32.mrf.mxu0
      %v2326 = vadd.f32 0.0, %v2325
      %2327 = vmatmul.bf16.gmra.mxu0 %v2109
      %v2328 = vpop.f32.mrf.mxu0
      %v2329 = vadd.f32 0.0, %v2328
      %v2330 = vpop.f32.mrf.mxu0
      %v2331 = vadd.f32 0.0, %v2330
      %2332 = vmatmul.bf16.gmra.mxu0 %v2113
      %v2333 = vpop.f32.mrf.mxu0
      %v2334 = vadd.f32 0.0, %v2333
      %v2335 = vpop.f32.mrf.mxu0
      %v2336 = vadd.f32 0.0, %v2335
      %2337 = vmatmul.bf16.gmra.mxu0 %v2117
      %v2338 = vpop.f32.mrf.mxu0
      %v2339 = vadd.f32 0.0, %v2338
      %v2340 = vpop.f32.mrf.mxu0
      %v2341 = vadd.f32 0.0, %v2340
      %2342 = vmatmul.bf16.gmra.mxu0 %v2121
      %v2343 = vpop.f32.mrf.mxu0
      %v2344 = vadd.f32 0.0, %v2343
      %v2345 = vpop.f32.mrf.mxu0
      %v2346 = vadd.f32 0.0, %v2345
      %2347 = vmatmul.bf16.gmra.mxu0 %v2125
      %v2348 = vpop.f32.mrf.mxu0
      %v2349 = vadd.f32 0.0, %v2348
      %v2350 = vpop.f32.mrf.mxu0
      %v2351 = vadd.f32 0.0, %v2350
      %2352 = vmatmul.bf16.gmra.mxu0 %v2129
      %v2353 = vpop.f32.mrf.mxu0
      %v2354 = vadd.f32 0.0, %v2353
      %v2355 = vpop.f32.mrf.mxu0
      %v2356 = vadd.f32 0.0, %v2355
      %2357 = vmatmul.bf16.gmra.mxu0 %v2133
      %v2358 = vpop.f32.mrf.mxu0
      %v2359 = vadd.f32 0.0, %v2358
      %v2360 = vpop.f32.mrf.mxu0
      %v2361 = vadd.f32 0.0, %v2360
      %2362 = vmatmul.bf16.gmra.mxu0 %v2137
      %v2363 = vpop.f32.mrf.mxu0
      %v2364 = vadd.f32 0.0, %v2363
      %v2365 = vpop.f32.mrf.mxu0
      %v2366 = vadd.f32 0.0, %v2365
      %2367 = vmatmul.bf16.gmra.mxu0 %v2141
      %v2368 = vpop.f32.mrf.mxu0
      %v2369 = vadd.f32 0.0, %v2368
      %v2370 = vpop.f32.mrf.mxu0
      %v2371 = vadd.f32 0.0, %v2370
      %2372 = vmatmul.bf16.gmra.mxu0 %v2145
      %v2373 = vpop.f32.mrf.mxu0
      %v2374 = vadd.f32 0.0, %v2373
      %v2375 = vpop.f32.mrf.mxu0
      %v2376 = vadd.f32 0.0, %v2375
      %2377 = vmatmul.bf16.gmra.mxu0 %v2149
      %v2378 = vpop.f32.mrf.mxu0
      %v2379 = vadd.f32 0.0, %v2378
      %v2380 = vpop.f32.mrf.mxu0
      %v2381 = vadd.f32 0.0, %v2380
      %2382 = vdwg.mxu0
      %2383 = vmatpush.bf16.msra.mxu0 %v2267
      %2384 = vmatpush.bf16.msra.mxu0 %v2266
      %2385 = vmatpush.bf16.msra.mxu0 %v2265
      %2386 = vmatpush.bf16.msra.mxu0 %v2264
      %2387 = vmatpush.bf16.msra.mxu0 %v2263
      %2388 = vmatpush.bf16.msra.mxu0 %v2262
      %2389 = vmatpush.bf16.msra.mxu0 %v2261
      %2390 = vmatpush.bf16.msra.mxu0 %v2260
      %2391 = vmatmul.bf16.gmra.mxu0 %v2083
      %v2392 = vpop.f32.mrf.mxu0
      %v2393 = vadd.f32 %v2294, %v2392
      %v2394 = vpop.f32.mrf.mxu0
      %v2395 = vadd.f32 %v2296, %v2394
      %2396 = vmatmul.bf16.gmra.mxu0 %v2087
      %v2397 = vpop.f32.mrf.mxu0
      %v2398 = vadd.f32 %v2299, %v2397
      %v2399 = vpop.f32.mrf.mxu0
      %v2400 = vadd.f32 %v2301, %v2399
      %2401 = vmatmul.bf16.gmra.mxu0 %v2091
      %v2402 = vpop.f32.mrf.mxu0
      %v2403 = vadd.f32 %v2304, %v2402
      %v2404 = vpop.f32.mrf.mxu0
      %v2405 = vadd.f32 %v2306, %v2404
      %2406 = vmatmul.bf16.gmra.mxu0 %v2095
      %v2407 = vpop.f32.mrf.mxu0
      %v2408 = vadd.f32 %v2309, %v2407
      %v2409 = vpop.f32.mrf.mxu0
      %v2410 = vadd.f32 %v2311, %v2409
      %2411 = vmatmul.bf16.gmra.mxu0 %v2099
      %v2412 = vpop.f32.mrf.mxu0
      %v2413 = vadd.f32 %v2314, %v2412
      %v2414 = vpop.f32.mrf.mxu0
      %v2415 = vadd.f32 %v2316, %v2414
      %2416 = vmatmul.bf16.gmra.mxu0 %v2103
      %v2417 = vpop.f32.mrf.mxu0
      %v2418 = vadd.f32 %v2319, %v2417
      %v2419 = vpop.f32.mrf.mxu0
      %v2420 = vadd.f32 %v2321, %v2419
      %2421 = vmatmul.bf16.gmra.mxu0 %v2107
      %v2422 = vpop.f32.mrf.mxu0
      %v2423 = vadd.f32 %v2324, %v2422
      %v2424 = vpop.f32.mrf.mxu0
      %v2425 = vadd.f32 %v2326, %v2424
      %2426 = vmatmul.bf16.gmra.mxu0 %v2111
      %v2427 = vpop.f32.mrf.mxu0
      %v2428 = vadd.f32 %v2329, %v2427
      %v2429 = vpop.f32.mrf.mxu0
      %v2430 = vadd.f32 %v2331, %v2429
      %2431 = vmatmul.bf16.gmra.mxu0 %v2115
      %v2432 = vpop.f32.mrf.mxu0
      %v2433 = vadd.f32 %v2334, %v2432
      %v2434 = vpop.f32.mrf.mxu0
      %v2435 = vadd.f32 %v2336, %v2434
      %2436 = vmatmul.bf16.gmra.mxu0 %v2119
      %v2437 = vpop.f32.mrf.mxu0
      %v2438 = vadd.f32 %v2339, %v2437
      %v2439 = vpop.f32.mrf.mxu0
      %v2440 = vadd.f32 %v2341, %v2439
      %2441 = vmatmul.bf16.gmra.mxu0 %v2123
      %v2442 = vpop.f32.mrf.mxu0
      %v2443 = vadd.f32 %v2344, %v2442
      %v2444 = vpop.f32.mrf.mxu0
      %v2445 = vadd.f32 %v2346, %v2444
      %2446 = vmatmul.bf16.gmra.mxu0 %v2127
      %v2447 = vpop.f32.mrf.mxu0
      %v2448 = vadd.f32 %v2349, %v2447
      %v2449 = vpop.f32.mrf.mxu0
      %v2450 = vadd.f32 %v2351, %v2449
      %2451 = vmatmul.bf16.gmra.mxu0 %v2131
      %v2452 = vpop.f32.mrf.mxu0
      %v2453 = vadd.f32 %v2354, %v2452
      %v2454 = vpop.f32.mrf.mxu0
      %v2455 = vadd.f32 %v2356, %v2454
      %2456 = vmatmul.bf16.gmra.mxu0 %v2135
      %v2457 = vpop.f32.mrf.mxu0
      %v2458 = vadd.f32 %v2359, %v2457
      %v2459 = vpop.f32.mrf.mxu0
      %v2460 = vadd.f32 %v2361, %v2459
      %2461 = vmatmul.bf16.gmra.mxu0 %v2139
      %v2462 = vpop.f32.mrf.mxu0
      %v2463 = vadd.f32 %v2364, %v2462
      %v2464 = vpop.f32.mrf.mxu0
      %v2465 = vadd.f32 %v2366, %v2464
      %2466 = vmatmul.bf16.gmra.mxu0 %v2143
      %v2467 = vpop.f32.mrf.mxu0
      %v2468 = vadd.f32 %v2369, %v2467
      %v2469 = vpop.f32.mrf.mxu0
      %v2470 = vadd.f32 %v2371, %v2469
      %2471 = vmatmul.bf16.gmra.mxu0 %v2147
      %v2472 = vpop.f32.mrf.mxu0
      %v2473 = vadd.f32 %v2374, %v2472
      %v2474 = vpop.f32.mrf.mxu0
      %v2475 = vadd.f32 %v2376, %v2474
      %2476 = vmatmul.bf16.gmra.mxu0 %v2151
      %v2477 = vpop.f32.mrf.mxu0
      %v2478 = vadd.f32 %v2379, %v2477
      %v2479 = vpop.f32.mrf.mxu0
      %v2480 = vadd.f32 %v2381, %v2479
      %2481 = vdwg.mxu0
      %v2482 = vadd.f32 %v1823, %v2393
      %v2483 = vadd.f32 %v1824, %v2395
      %v2484 = vadd.f32 %v1825, %v2398
      %v2485 = vadd.f32 %v1826, %v2400
      %v2486 = vadd.f32 %v1827, %v2403
      %v2487 = vadd.f32 %v1828, %v2405
      %v2488 = vadd.f32 %v1829, %v2408
      %v2489 = vadd.f32 %v1830, %v2410
      %v2490 = vadd.f32 %v1831, %v2413
      %v2491 = vadd.f32 %v1832, %v2415
      %v2492 = vadd.f32 %v1833, %v2418
      %v2493 = vadd.f32 %v1834, %v2420
      %v2494 = vadd.f32 %v1835, %v2423
      %v2495 = vadd.f32 %v1836, %v2425
      %v2496 = vadd.f32 %v1837, %v2428
      %v2497 = vadd.f32 %v1838, %v2430
      %v2498 = vadd.f32 %v1839, %v2433
      %v2499 = vadd.f32 %v1840, %v2435
      %v2500 = vadd.f32 %v1841, %v2438
      %v2501 = vadd.f32 %v1842, %v2440
      %v2502 = vadd.f32 %v1843, %v2443
      %v2503 = vadd.f32 %v1844, %v2445
      %v2504 = vadd.f32 %v1845, %v2448
      %v2505 = vadd.f32 %v1846, %v2450
      %v2506 = vadd.f32 %v1847, %v2453
      %v2507 = vadd.f32 %v1848, %v2455
      %v2508 = vadd.f32 %v1849, %v2458
      %v2509 = vadd.f32 %v1850, %v2460
      %v2510 = vadd.f32 %v1851, %v2463
      %v2511 = vadd.f32 %v1852, %v2465
      %v2512 = vadd.f32 %v1853, %v2468
      %v2513 = vadd.f32 %v1854, %v2470
      %v2514 = vadd.f32 %v1855, %v2473
      %v2515 = vadd.f32 %v1856, %v2475
      %v2516 = vadd.f32 %v1857, %v2478
      %v2517 = vadd.f32 %v1858, %v2480
      %v2518 = vld [vmem:[%s165 + $0x130] sm:$0x33]
      %s2519 = scalar_lea.vmem %s1, 512
      %v2520 = vld [vmem:[%s2519] sm:$0xf]
      %v2521 = vld [vmem:[%s2519 + $0x4] sm:$0xf]
      %v2522 = vld [vmem:[%s2519 + $0x8] sm:$0xf]
      %v2523 = vld [vmem:[%s2519 + $0xc] sm:$0xf]
      %v2524 = vld [vmem:[%s2519 + $0x10] sm:$0xf]
      %v2525 = vld [vmem:[%s2519 + $0x14] sm:$0xf]
      %v2526 = vld [vmem:[%s2519 + $0x18] sm:$0xf]
      %v2527 = vld [vmem:[%s2519 + $0x1c] sm:$0xf]
      %v2528 = vld [vmem:[%s2519 + $0x20] sm:$0xf]
      %v2529 = vld [vmem:[%s2519 + $0x24] sm:$0xf]
      %v2530 = vld [vmem:[%s2519 + $0x28] sm:$0xf]
      %v2531 = vld [vmem:[%s2519 + $0x2c] sm:$0xf]
      %v2532 = vld [vmem:[%s2519 + $0x30] sm:$0xf]
      %v2533 = vld [vmem:[%s2519 + $0x34] sm:$0xf]
      %v2534 = vld [vmem:[%s2519 + $0x38] sm:$0xf]
      %v2535 = vld [vmem:[%s2519 + $0x3c] sm:$0xf]
      %v2536 = vld [vmem:[%s2519 + $0x40] sm:$0xf]
      %v2537 = vld [vmem:[%s2519 + $0x44] sm:$0xf]
      %v2538 = vld [vmem:[%s2519 + $0x48] sm:$0xf]
      %v2539 = vld [vmem:[%s2519 + $0x4c] sm:$0xf]
      %v2540 = vld [vmem:[%s2519 + $0x50] sm:$0xf]
      %v2541 = vld [vmem:[%s2519 + $0x54] sm:$0xf]
      %v2542 = vld [vmem:[%s2519 + $0x58] sm:$0xf]
      %v2543 = vld [vmem:[%s2519 + $0x5c] sm:$0xf]
      %v2544 = vld [vmem:[%s2519 + $0x60] sm:$0xf]
      %v2545 = vld [vmem:[%s2519 + $0x64] sm:$0xf]
      %v2546 = vld [vmem:[%s2519 + $0x68] sm:$0xf]
      %v2547 = vld [vmem:[%s2519 + $0x6c] sm:$0xf]
      %v2548 = vld [vmem:[%s2519 + $0x70] sm:$0xf]
      %v2549 = vld [vmem:[%s2519 + $0x74] sm:$0xf]
      %v2550 = vld [vmem:[%s2519 + $0x78] sm:$0xf]
      %v2551 = vld [vmem:[%s2519 + $0x7c] sm:$0xf]
      %v2553 = vunpack.c.l.b16 %v2518
      %v2554 = vunpack.c.h.b16 %v2518
      %v2555 = vpack.c.b16 %v2553, %v2553
      %v2556 = vpack.c.b16 %v2554, %v2554
      %vm2557 = vsmask.f32 6400
      %v2559 = vshrl.u32 %v2040, 16
      %v2561 = vrot.slane %v2559, 1
      %v2562 = vshll.u32 %v2040, 16
      %v2564 = vrot.slane %v2562, 2
      %v2565 = vor.u32 %v2561, %v2564
      %v2567 = vshrl.u32 %v2042, 16
      %v2569 = vrot.slane %v2567, 1
      %v2570 = vshll.u32 %v2042, 16
      %v2572 = vrot.slane %v2570, 2
      %v2573 = vor.u32 %v2569, %v2572
      %v2574 = vsel %vm2557, %v2565, %v2573
      %v2576 = vshrl.u32 %v2041, 16
      %v2578 = vrot.slane %v2576, 1
      %v2579 = vshll.u32 %v2041, 16
      %v2581 = vrot.slane %v2579, 2
      %v2582 = vor.u32 %v2578, %v2581
      %v2584 = vshrl.u32 %v2043, 16
      %v2586 = vrot.slane %v2584, 1
      %v2587 = vshll.u32 %v2043, 16
      %v2589 = vrot.slane %v2587, 2
      %v2590 = vor.u32 %v2586, %v2589
      %v2591 = vsel %vm2557, %v2582, %v2590
      %v2593 = vshrl.u32 %v2044, 16
      %v2595 = vrot.slane %v2593, 1
      %v2596 = vshll.u32 %v2044, 16
      %v2598 = vrot.slane %v2596, 2
      %v2599 = vor.u32 %v2595, %v2598
      %v2600 = vsel %vm2557, %v2573, %v2599
      %v2602 = vshrl.u32 %v2045, 16
      %v2604 = vrot.slane %v2602, 1
      %v2605 = vshll.u32 %v2045, 16
      %v2607 = vrot.slane %v2605, 2
      %v2608 = vor.u32 %v2604, %v2607
      %v2609 = vsel %vm2557, %v2590, %v2608
      %v2611 = vshrl.u32 %v2046, 16
      %v2613 = vrot.slane %v2611, 1
      %v2614 = vshll.u32 %v2046, 16
      %v2616 = vrot.slane %v2614, 2
      %v2617 = vor.u32 %v2613, %v2616
      %v2618 = vsel %vm2557, %v2599, %v2617
      %v2620 = vshrl.u32 %v2047, 16
      %v2622 = vrot.slane %v2620, 1
      %v2623 = vshll.u32 %v2047, 16
      %v2625 = vrot.slane %v2623, 2
      %v2626 = vor.u32 %v2622, %v2625
      %v2627 = vsel %vm2557, %v2608, %v2626
      %v2629 = vshrl.u32 %v2048, 16
      %v2631 = vrot.slane %v2629, 1
      %v2632 = vshll.u32 %v2048, 16
      %v2634 = vrot.slane %v2632, 2
      %v2635 = vor.u32 %v2631, %v2634
      %v2636 = vsel %vm2557, %v2617, %v2635
      %v2638 = vshrl.u32 %v2049, 16
      %v2640 = vrot.slane %v2638, 1
      %v2641 = vshll.u32 %v2049, 16
      %v2643 = vrot.slane %v2641, 2
      %v2644 = vor.u32 %v2640, %v2643
      %v2645 = vsel %vm2557, %v2626, %v2644
      %v2647 = vshrl.u32 %v2050, 16
      %v2649 = vrot.slane %v2647, 1
      %v2650 = vshll.u32 %v2050, 16
      %v2652 = vrot.slane %v2650, 2
      %v2653 = vor.u32 %v2649, %v2652
      %v2654 = vsel %vm2557, %v2635, %v2653
      %v2656 = vshrl.u32 %v2051, 16
      %v2658 = vrot.slane %v2656, 1
      %v2659 = vshll.u32 %v2051, 16
      %v2661 = vrot.slane %v2659, 2
      %v2662 = vor.u32 %v2658, %v2661
      %v2663 = vsel %vm2557, %v2644, %v2662
      %v2665 = vshrl.u32 %v2052, 16
      %v2667 = vrot.slane %v2665, 1
      %v2668 = vshll.u32 %v2052, 16
      %v2670 = vrot.slane %v2668, 2
      %v2671 = vor.u32 %v2667, %v2670
      %v2672 = vsel %vm2557, %v2653, %v2671
      %v2674 = vshrl.u32 %v2053, 16
      %v2676 = vrot.slane %v2674, 1
      %v2677 = vshll.u32 %v2053, 16
      %v2679 = vrot.slane %v2677, 2
      %v2680 = vor.u32 %v2676, %v2679
      %v2681 = vsel %vm2557, %v2662, %v2680
      %v2683 = vshrl.u32 %v2054, 16
      %v2685 = vrot.slane %v2683, 1
      %v2686 = vshll.u32 %v2054, 16
      %v2688 = vrot.slane %v2686, 2
      %v2689 = vor.u32 %v2685, %v2688
      %v2690 = vsel %vm2557, %v2671, %v2689
      %v2692 = vshrl.u32 %v2055, 16
      %v2694 = vrot.slane %v2692, 1
      %v2695 = vshll.u32 %v2055, 16
      %v2697 = vrot.slane %v2695, 2
      %v2698 = vor.u32 %v2694, %v2697
      %v2699 = vsel %vm2557, %v2680, %v2698
      %v2701 = vshrl.u32 %v2056, 16
      %v2703 = vrot.slane %v2701, 1
      %v2704 = vshll.u32 %v2056, 16
      %v2706 = vrot.slane %v2704, 2
      %v2707 = vor.u32 %v2703, %v2706
      %v2708 = vsel %vm2557, %v2689, %v2707
      %v2710 = vshrl.u32 %v2057, 16
      %v2712 = vrot.slane %v2710, 1
      %v2713 = vshll.u32 %v2057, 16
      %v2715 = vrot.slane %v2713, 2
      %v2716 = vor.u32 %v2712, %v2715
      %v2717 = vsel %vm2557, %v2698, %v2716
      %v2719 = vshrl.u32 %v2058, 16
      %v2721 = vrot.slane %v2719, 1
      %v2722 = vshll.u32 %v2058, 16
      %v2724 = vrot.slane %v2722, 2
      %v2725 = vor.u32 %v2721, %v2724
      %v2726 = vsel %vm2557, %v2707, %v2725
      %v2728 = vshrl.u32 %v2059, 16
      %v2730 = vrot.slane %v2728, 1
      %v2731 = vshll.u32 %v2059, 16
      %v2733 = vrot.slane %v2731, 2
      %v2734 = vor.u32 %v2730, %v2733
      %v2735 = vsel %vm2557, %v2716, %v2734
      %v2737 = vshrl.u32 %v2060, 16
      %v2739 = vrot.slane %v2737, 1
      %v2740 = vshll.u32 %v2060, 16
      %v2742 = vrot.slane %v2740, 2
      %v2743 = vor.u32 %v2739, %v2742
      %v2744 = vsel %vm2557, %v2725, %v2743
      %v2746 = vshrl.u32 %v2061, 16
      %v2748 = vrot.slane %v2746, 1
      %v2749 = vshll.u32 %v2061, 16
      %v2751 = vrot.slane %v2749, 2
      %v2752 = vor.u32 %v2748, %v2751
      %v2753 = vsel %vm2557, %v2734, %v2752
      %v2755 = vshrl.u32 %v2062, 16
      %v2757 = vrot.slane %v2755, 1
      %v2758 = vshll.u32 %v2062, 16
      %v2760 = vrot.slane %v2758, 2
      %v2761 = vor.u32 %v2757, %v2760
      %v2762 = vsel %vm2557, %v2743, %v2761
      %v2764 = vshrl.u32 %v2063, 16
      %v2766 = vrot.slane %v2764, 1
      %v2767 = vshll.u32 %v2063, 16
      %v2769 = vrot.slane %v2767, 2
      %v2770 = vor.u32 %v2766, %v2769
      %v2771 = vsel %vm2557, %v2752, %v2770
      %v2773 = vshrl.u32 %v2064, 16
      %v2775 = vrot.slane %v2773, 1
      %v2776 = vshll.u32 %v2064, 16
      %v2778 = vrot.slane %v2776, 2
      %v2779 = vor.u32 %v2775, %v2778
      %v2780 = vsel %vm2557, %v2761, %v2779
      %v2782 = vshrl.u32 %v2065, 16
      %v2784 = vrot.slane %v2782, 1
      %v2785 = vshll.u32 %v2065, 16
      %v2787 = vrot.slane %v2785, 2
      %v2788 = vor.u32 %v2784, %v2787
      %v2789 = vsel %vm2557, %v2770, %v2788
      %v2791 = vshrl.u32 %v2066, 16
      %v2793 = vrot.slane %v2791, 1
      %v2794 = vshll.u32 %v2066, 16
      %v2796 = vrot.slane %v2794, 2
      %v2797 = vor.u32 %v2793, %v2796
      %v2798 = vsel %vm2557, %v2779, %v2797
      %v2800 = vshrl.u32 %v2067, 16
      %v2802 = vrot.slane %v2800, 1
      %v2803 = vshll.u32 %v2067, 16
      %v2805 = vrot.slane %v2803, 2
      %v2806 = vor.u32 %v2802, %v2805
      %v2807 = vsel %vm2557, %v2788, %v2806
      %v2809 = vshrl.u32 %v2068, 16
      %v2811 = vrot.slane %v2809, 1
      %v2812 = vshll.u32 %v2068, 16
      %v2814 = vrot.slane %v2812, 2
      %v2815 = vor.u32 %v2811, %v2814
      %v2816 = vsel %vm2557, %v2797, %v2815
      %v2818 = vshrl.u32 %v2069, 16
      %v2820 = vrot.slane %v2818, 1
      %v2821 = vshll.u32 %v2069, 16
      %v2823 = vrot.slane %v2821, 2
      %v2824 = vor.u32 %v2820, %v2823
      %v2825 = vsel %vm2557, %v2806, %v2824
      %v2827 = vshrl.u32 %v2070, 16
      %v2829 = vrot.slane %v2827, 1
      %v2830 = vshll.u32 %v2070, 16
      %v2832 = vrot.slane %v2830, 2
      %v2833 = vor.u32 %v2829, %v2832
      %v2834 = vsel %vm2557, %v2815, %v2833
      %v2836 = vshrl.u32 %v2071, 16
      %v2838 = vrot.slane %v2836, 1
      %v2839 = vshll.u32 %v2071, 16
      %v2841 = vrot.slane %v2839, 2
      %v2842 = vor.u32 %v2838, %v2841
      %v2843 = vsel %vm2557, %v2824, %v2842
      %v2845 = vshrl.u32 %v2072, 16
      %v2847 = vrot.slane %v2845, 1
      %v2848 = vshll.u32 %v2072, 16
      %v2850 = vrot.slane %v2848, 2
      %v2851 = vor.u32 %v2847, %v2850
      %v2852 = vsel %vm2557, %v2833, %v2851
      %v2854 = vshrl.u32 %v2073, 16
      %v2856 = vrot.slane %v2854, 1
      %v2857 = vshll.u32 %v2073, 16
      %v2859 = vrot.slane %v2857, 2
      %v2860 = vor.u32 %v2856, %v2859
      %v2861 = vsel %vm2557, %v2842, %v2860
      %v2863 = vshrl.u32 %v2074, 16
      %v2865 = vrot.slane %v2863, 1
      %v2866 = vshll.u32 %v2074, 16
      %v2868 = vrot.slane %v2866, 2
      %v2869 = vor.u32 %v2865, %v2868
      %v2870 = vsel %vm2557, %v2851, %v2869
      %v2872 = vshrl.u32 %v2075, 16
      %v2874 = vrot.slane %v2872, 1
      %v2875 = vshll.u32 %v2075, 16
      %v2877 = vrot.slane %v2875, 2
      %v2878 = vor.u32 %v2874, %v2877
      %v2879 = vsel %vm2557, %v2860, %v2878
      %v2881 = vshrl.u32 %v2555, 16
      %v2883 = vrot.slane %v2881, 1
      %v2884 = vshll.u32 %v2555, 16
      %v2886 = vrot.slane %v2884, 2
      %v2887 = vor.u32 %v2883, %v2886
      %v2888 = vsel %vm2557, %v2869, %v2887
      %v2890 = vshrl.u32 %v2556, 16
      %v2892 = vrot.slane %v2890, 1
      %v2893 = vshll.u32 %v2556, 16
      %v2895 = vrot.slane %v2893, 2
      %v2896 = vor.u32 %v2892, %v2895
      %v2897 = vsel %vm2557, %v2878, %v2896
      %v2966 = vunpack.c.l.b16 %v2520
      %v2967 = vunpack.c.l.b16 %v2521
      %v2968 = vunpack.c.l.b16 %v2522
      %v2969 = vunpack.c.l.b16 %v2523
      %v2970 = vunpack.c.l.b16 %v2524
      %v2971 = vunpack.c.l.b16 %v2525
      %v2972 = vunpack.c.l.b16 %v2526
      %v2973 = vunpack.c.l.b16 %v2527
      %v2974 = vunpack.c.l.b16 %v2528
      %v2975 = vunpack.c.l.b16 %v2529
      %v2976 = vunpack.c.l.b16 %v2530
      %v2977 = vunpack.c.l.b16 %v2531
      %v2978 = vunpack.c.l.b16 %v2532
      %v2979 = vunpack.c.l.b16 %v2533
      %v2980 = vunpack.c.l.b16 %v2534
      %v2981 = vunpack.c.l.b16 %v2535
      %v2982 = vunpack.c.l.b16 %v2536
      %v2983 = vunpack.c.l.b16 %v2537
      %v2984 = vunpack.c.l.b16 %v2538
      %v2985 = vunpack.c.l.b16 %v2539
      %v2986 = vunpack.c.l.b16 %v2540
      %v2987 = vunpack.c.l.b16 %v2541
      %v2988 = vunpack.c.l.b16 %v2542
      %v2989 = vunpack.c.l.b16 %v2543
      %v2990 = vunpack.c.l.b16 %v2544
      %v2991 = vunpack.c.l.b16 %v2545
      %v2992 = vunpack.c.l.b16 %v2546
      %v2993 = vunpack.c.l.b16 %v2547
      %v2994 = vunpack.c.l.b16 %v2548
      %v2995 = vunpack.c.l.b16 %v2549
      %v2996 = vunpack.c.l.b16 %v2550
      %v2997 = vunpack.c.l.b16 %v2551
      %v2998 = vpack.c.b16 %v2967, %v2966
      %v2999 = vpack.c.b16 %v2969, %v2968
      %v3000 = vpack.c.b16 %v2971, %v2970
      %v3001 = vpack.c.b16 %v2973, %v2972
      %v3002 = vpack.c.b16 %v2975, %v2974
      %v3003 = vpack.c.b16 %v2977, %v2976
      %v3004 = vpack.c.b16 %v2979, %v2978
      %v3005 = vpack.c.b16 %v2981, %v2980
      %v3006 = vpack.c.b16 %v2983, %v2982
      %v3007 = vpack.c.b16 %v2985, %v2984
      %v3008 = vpack.c.b16 %v2987, %v2986
      %v3009 = vpack.c.b16 %v2989, %v2988
      %v3010 = vpack.c.b16 %v2991, %v2990
      %v3011 = vpack.c.b16 %v2993, %v2992
      %v3012 = vpack.c.b16 %v2995, %v2994
      %v3013 = vpack.c.b16 %v2997, %v2996
      %3030 = vmatpush.bf16.msra.mxu0 %v3005
      %3031 = vmatpush.bf16.msra.mxu0 %v3004
      %3032 = vmatpush.bf16.msra.mxu0 %v3003
      %3033 = vmatpush.bf16.msra.mxu0 %v3002
      %3034 = vmatpush.bf16.msra.mxu0 %v3001
      %3035 = vmatpush.bf16.msra.mxu0 %v3000
      %3036 = vmatpush.bf16.msra.mxu0 %v2999
      %3037 = vmatpush.bf16.msra.mxu0 %v2998
      %3038 = vmatmul.bf16.gmra.mxu0 %v2574
      %v3039 = vpop.f32.mrf.mxu0
      %v3040 = vadd.f32 0.0, %v3039
      %v3041 = vpop.f32.mrf.mxu0
      %v3042 = vadd.f32 0.0, %v3041
      %3043 = vmatmul.bf16.gmra.mxu0 %v2600
      %v3044 = vpop.f32.mrf.mxu0
      %v3045 = vadd.f32 0.0, %v3044
      %v3046 = vpop.f32.mrf.mxu0
      %v3047 = vadd.f32 0.0, %v3046
      %3048 = vmatmul.bf16.gmra.mxu0 %v2618
      %v3049 = vpop.f32.mrf.mxu0
      %v3050 = vadd.f32 0.0, %v3049
      %v3051 = vpop.f32.mrf.mxu0
      %v3052 = vadd.f32 0.0, %v3051
      %3053 = vmatmul.bf16.gmra.mxu0 %v2636
      %v3054 = vpop.f32.mrf.mxu0
      %v3055 = vadd.f32 0.0, %v3054
      %v3056 = vpop.f32.mrf.mxu0
      %v3057 = vadd.f32 0.0, %v3056
      %3058 = vmatmul.bf16.gmra.mxu0 %v2654
      %v3059 = vpop.f32.mrf.mxu0
      %v3060 = vadd.f32 0.0, %v3059
      %v3061 = vpop.f32.mrf.mxu0
      %v3062 = vadd.f32 0.0, %v3061
      %3063 = vmatmul.bf16.gmra.mxu0 %v2672
      %v3064 = vpop.f32.mrf.mxu0
      %v3065 = vadd.f32 0.0, %v3064
      %v3066 = vpop.f32.mrf.mxu0
      %v3067 = vadd.f32 0.0, %v3066
      %3068 = vmatmul.bf16.gmra.mxu0 %v2690
      %v3069 = vpop.f32.mrf.mxu0
      %v3070 = vadd.f32 0.0, %v3069
      %v3071 = vpop.f32.mrf.mxu0
      %v3072 = vadd.f32 0.0, %v3071
      %3073 = vmatmul.bf16.gmra.mxu0 %v2708
      %v3074 = vpop.f32.mrf.mxu0
      %v3075 = vadd.f32 0.0, %v3074
      %v3076 = vpop.f32.mrf.mxu0
      %v3077 = vadd.f32 0.0, %v3076
      %3078 = vmatmul.bf16.gmra.mxu0 %v2726
      %v3079 = vpop.f32.mrf.mxu0
      %v3080 = vadd.f32 0.0, %v3079
      %v3081 = vpop.f32.mrf.mxu0
      %v3082 = vadd.f32 0.0, %v3081
      %3083 = vmatmul.bf16.gmra.mxu0 %v2744
      %v3084 = vpop.f32.mrf.mxu0
      %v3085 = vadd.f32 0.0, %v3084
      %v3086 = vpop.f32.mrf.mxu0
      %v3087 = vadd.f32 0.0, %v3086
      %3088 = vmatmul.bf16.gmra.mxu0 %v2762
      %v3089 = vpop.f32.mrf.mxu0
      %v3090 = vadd.f32 0.0, %v3089
      %v3091 = vpop.f32.mrf.mxu0
      %v3092 = vadd.f32 0.0, %v3091
      %3093 = vmatmul.bf16.gmra.mxu0 %v2780
      %v3094 = vpop.f32.mrf.mxu0
      %v3095 = vadd.f32 0.0, %v3094
      %v3096 = vpop.f32.mrf.mxu0
      %v3097 = vadd.f32 0.0, %v3096
      %3098 = vmatmul.bf16.gmra.mxu0 %v2798
      %v3099 = vpop.f32.mrf.mxu0
      %v3100 = vadd.f32 0.0, %v3099
      %v3101 = vpop.f32.mrf.mxu0
      %v3102 = vadd.f32 0.0, %v3101
      %3103 = vmatmul.bf16.gmra.mxu0 %v2816
      %v3104 = vpop.f32.mrf.mxu0
      %v3105 = vadd.f32 0.0, %v3104
      %v3106 = vpop.f32.mrf.mxu0
      %v3107 = vadd.f32 0.0, %v3106
      %3108 = vmatmul.bf16.gmra.mxu0 %v2834
      %v3109 = vpop.f32.mrf.mxu0
      %v3110 = vadd.f32 0.0, %v3109
      %v3111 = vpop.f32.mrf.mxu0
      %v3112 = vadd.f32 0.0, %v3111
      %3113 = vmatmul.bf16.gmra.mxu0 %v2852
      %v3114 = vpop.f32.mrf.mxu0
      %v3115 = vadd.f32 0.0, %v3114
      %v3116 = vpop.f32.mrf.mxu0
      %v3117 = vadd.f32 0.0, %v3116
      %3118 = vmatmul.bf16.gmra.mxu0 %v2870
      %v3119 = vpop.f32.mrf.mxu0
      %v3120 = vadd.f32 0.0, %v3119
      %v3121 = vpop.f32.mrf.mxu0
      %v3122 = vadd.f32 0.0, %v3121
      %3123 = vmatmul.bf16.gmra.mxu0 %v2888
      %v3124 = vpop.f32.mrf.mxu0
      %v3125 = vadd.f32 0.0, %v3124
      %v3126 = vpop.f32.mrf.mxu0
      %v3127 = vadd.f32 0.0, %v3126
      %3128 = vdwg.mxu0
      %3129 = vmatpush.bf16.msra.mxu0 %v3013
      %3130 = vmatpush.bf16.msra.mxu0 %v3012
      %3131 = vmatpush.bf16.msra.mxu0 %v3011
      %3132 = vmatpush.bf16.msra.mxu0 %v3010
      %3133 = vmatpush.bf16.msra.mxu0 %v3009
      %3134 = vmatpush.bf16.msra.mxu0 %v3008
      %3135 = vmatpush.bf16.msra.mxu0 %v3007
      %3136 = vmatpush.bf16.msra.mxu0 %v3006
      %3137 = vmatmul.bf16.gmra.mxu0 %v2591
      %v3138 = vpop.f32.mrf.mxu0
      %v3139 = vadd.f32 %v3040, %v3138
      %v3140 = vpop.f32.mrf.mxu0
      %v3141 = vadd.f32 %v3042, %v3140
      %3142 = vmatmul.bf16.gmra.mxu0 %v2609
      %v3143 = vpop.f32.mrf.mxu0
      %v3144 = vadd.f32 %v3045, %v3143
      %v3145 = vpop.f32.mrf.mxu0
      %v3146 = vadd.f32 %v3047, %v3145
      %3147 = vmatmul.bf16.gmra.mxu0 %v2627
      %v3148 = vpop.f32.mrf.mxu0
      %v3149 = vadd.f32 %v3050, %v3148
      %v3150 = vpop.f32.mrf.mxu0
      %v3151 = vadd.f32 %v3052, %v3150
      %3152 = vmatmul.bf16.gmra.mxu0 %v2645
      %v3153 = vpop.f32.mrf.mxu0
      %v3154 = vadd.f32 %v3055, %v3153
      %v3155 = vpop.f32.mrf.mxu0
      %v3156 = vadd.f32 %v3057, %v3155
      %3157 = vmatmul.bf16.gmra.mxu0 %v2663
      %v3158 = vpop.f32.mrf.mxu0
      %v3159 = vadd.f32 %v3060, %v3158
      %v3160 = vpop.f32.mrf.mxu0
      %v3161 = vadd.f32 %v3062, %v3160
      %3162 = vmatmul.bf16.gmra.mxu0 %v2681
      %v3163 = vpop.f32.mrf.mxu0
      %v3164 = vadd.f32 %v3065, %v3163
      %v3165 = vpop.f32.mrf.mxu0
      %v3166 = vadd.f32 %v3067, %v3165
      %3167 = vmatmul.bf16.gmra.mxu0 %v2699
      %v3168 = vpop.f32.mrf.mxu0
      %v3169 = vadd.f32 %v3070, %v3168
      %v3170 = vpop.f32.mrf.mxu0
      %v3171 = vadd.f32 %v3072, %v3170
      %3172 = vmatmul.bf16.gmra.mxu0 %v2717
      %v3173 = vpop.f32.mrf.mxu0
      %v3174 = vadd.f32 %v3075, %v3173
      %v3175 = vpop.f32.mrf.mxu0
      %v3176 = vadd.f32 %v3077, %v3175
      %3177 = vmatmul.bf16.gmra.mxu0 %v2735
      %v3178 = vpop.f32.mrf.mxu0
      %v3179 = vadd.f32 %v3080, %v3178
      %v3180 = vpop.f32.mrf.mxu0
      %v3181 = vadd.f32 %v3082, %v3180
      %3182 = vmatmul.bf16.gmra.mxu0 %v2753
      %v3183 = vpop.f32.mrf.mxu0
      %v3184 = vadd.f32 %v3085, %v3183
      %v3185 = vpop.f32.mrf.mxu0
      %v3186 = vadd.f32 %v3087, %v3185
      %3187 = vmatmul.bf16.gmra.mxu0 %v2771
      %v3188 = vpop.f32.mrf.mxu0
      %v3189 = vadd.f32 %v3090, %v3188
      %v3190 = vpop.f32.mrf.mxu0
      %v3191 = vadd.f32 %v3092, %v3190
      %3192 = vmatmul.bf16.gmra.mxu0 %v2789
      %v3193 = vpop.f32.mrf.mxu0
      %v3194 = vadd.f32 %v3095, %v3193
      %v3195 = vpop.f32.mrf.mxu0
      %v3196 = vadd.f32 %v3097, %v3195
      %3197 = vmatmul.bf16.gmra.mxu0 %v2807
      %v3198 = vpop.f32.mrf.mxu0
      %v3199 = vadd.f32 %v3100, %v3198
      %v3200 = vpop.f32.mrf.mxu0
      %v3201 = vadd.f32 %v3102, %v3200
      %3202 = vmatmul.bf16.gmra.mxu0 %v2825
      %v3203 = vpop.f32.mrf.mxu0
      %v3204 = vadd.f32 %v3105, %v3203
      %v3205 = vpop.f32.mrf.mxu0
      %v3206 = vadd.f32 %v3107, %v3205
      %3207 = vmatmul.bf16.gmra.mxu0 %v2843
      %v3208 = vpop.f32.mrf.mxu0
      %v3209 = vadd.f32 %v3110, %v3208
      %v3210 = vpop.f32.mrf.mxu0
      %v3211 = vadd.f32 %v3112, %v3210
      %3212 = vmatmul.bf16.gmra.mxu0 %v2861
      %v3213 = vpop.f32.mrf.mxu0
      %v3214 = vadd.f32 %v3115, %v3213
      %v3215 = vpop.f32.mrf.mxu0
      %v3216 = vadd.f32 %v3117, %v3215
      %3217 = vmatmul.bf16.gmra.mxu0 %v2879
      %v3218 = vpop.f32.mrf.mxu0
      %v3219 = vadd.f32 %v3120, %v3218
      %v3220 = vpop.f32.mrf.mxu0
      %v3221 = vadd.f32 %v3122, %v3220
      %3222 = vmatmul.bf16.gmra.mxu0 %v2897
      %v3223 = vpop.f32.mrf.mxu0
      %v3224 = vadd.f32 %v3125, %v3223
      %v3225 = vpop.f32.mrf.mxu0
      %v3226 = vadd.f32 %v3127, %v3225
      %3227 = vdwg.mxu0
      %v3228 = vadd.f32 %v2482, %v3139
      %v3229 = vadd.f32 %v2483, %v3141
      %v3230 = vadd.f32 %v2484, %v3144
      %v3231 = vadd.f32 %v2485, %v3146
      %v3232 = vadd.f32 %v2486, %v3149
      %v3233 = vadd.f32 %v2487, %v3151
      %v3234 = vadd.f32 %v2488, %v3154
      %v3235 = vadd.f32 %v2489, %v3156
      %v3236 = vadd.f32 %v2490, %v3159
      %v3237 = vadd.f32 %v2491, %v3161
      %v3238 = vadd.f32 %v2492, %v3164
      %v3239 = vadd.f32 %v2493, %v3166
      %v3240 = vadd.f32 %v2494, %v3169
      %v3241 = vadd.f32 %v2495, %v3171
      %v3242 = vadd.f32 %v2496, %v3174
      %v3243 = vadd.f32 %v2497, %v3176
      %v3244 = vadd.f32 %v2498, %v3179
      %v3245 = vadd.f32 %v2499, %v3181
      %v3246 = vadd.f32 %v2500, %v3184
      %v3247 = vadd.f32 %v2501, %v3186
      %v3248 = vadd.f32 %v2502, %v3189
      %v3249 = vadd.f32 %v2503, %v3191
      %v3250 = vadd.f32 %v2504, %v3194
      %v3251 = vadd.f32 %v2505, %v3196
      %v3252 = vadd.f32 %v2506, %v3199
      %v3253 = vadd.f32 %v2507, %v3201
      %v3254 = vadd.f32 %v2508, %v3204
      %v3255 = vadd.f32 %v2509, %v3206
      %v3256 = vadd.f32 %v2510, %v3209
      %v3257 = vadd.f32 %v2511, %v3211
      %v3258 = vadd.f32 %v2512, %v3214
      %v3259 = vadd.f32 %v2513, %v3216
      %v3260 = vadd.f32 %v2514, %v3219
      %v3261 = vadd.f32 %v2515, %v3221
      %v3262 = vadd.f32 %v2516, %v3224
      %v3263 = vadd.f32 %v2517, %v3226
      %v3264 = vld [vmem:[%s165 + $0x10] sm:$0xcc]
      %s3265 = scalar_lea.vmem %s1, 640
      %v3266 = vld [vmem:[%s3265] sm:$0xf]
      %v3267 = vld [vmem:[%s3265 + $0x4] sm:$0xf]
      %v3268 = vld [vmem:[%s3265 + $0x8] sm:$0xf]
      %v3269 = vld [vmem:[%s3265 + $0xc] sm:$0xf]
      %v3270 = vld [vmem:[%s3265 + $0x10] sm:$0xf]
      %v3271 = vld [vmem:[%s3265 + $0x14] sm:$0xf]
      %v3272 = vld [vmem:[%s3265 + $0x18] sm:$0xf]
      %v3273 = vld [vmem:[%s3265 + $0x1c] sm:$0xf]
      %v3274 = vld [vmem:[%s3265 + $0x20] sm:$0xf]
      %v3275 = vld [vmem:[%s3265 + $0x24] sm:$0xf]
      %v3276 = vld [vmem:[%s3265 + $0x28] sm:$0xf]
      %v3277 = vld [vmem:[%s3265 + $0x2c] sm:$0xf]
      %v3278 = vld [vmem:[%s3265 + $0x30] sm:$0xf]
      %v3279 = vld [vmem:[%s3265 + $0x34] sm:$0xf]
      %v3280 = vld [vmem:[%s3265 + $0x38] sm:$0xf]
      %v3281 = vld [vmem:[%s3265 + $0x3c] sm:$0xf]
      %v3282 = vld [vmem:[%s3265 + $0x40] sm:$0xf]
      %v3283 = vld [vmem:[%s3265 + $0x44] sm:$0xf]
      %v3284 = vld [vmem:[%s3265 + $0x48] sm:$0xf]
      %v3285 = vld [vmem:[%s3265 + $0x4c] sm:$0xf]
      %v3286 = vld [vmem:[%s3265 + $0x50] sm:$0xf]
      %v3287 = vld [vmem:[%s3265 + $0x54] sm:$0xf]
      %v3288 = vld [vmem:[%s3265 + $0x58] sm:$0xf]
      %v3289 = vld [vmem:[%s3265 + $0x5c] sm:$0xf]
      %v3290 = vld [vmem:[%s3265 + $0x60] sm:$0xf]
      %v3291 = vld [vmem:[%s3265 + $0x64] sm:$0xf]
      %v3292 = vld [vmem:[%s3265 + $0x68] sm:$0xf]
      %v3293 = vld [vmem:[%s3265 + $0x6c] sm:$0xf]
      %v3294 = vld [vmem:[%s3265 + $0x70] sm:$0xf]
      %v3295 = vld [vmem:[%s3265 + $0x74] sm:$0xf]
      %v3296 = vld [vmem:[%s3265 + $0x78] sm:$0xf]
      %v3297 = vld [vmem:[%s3265 + $0x7c] sm:$0xf]
      %v3299 = vunpack.c.l.b16 %v3264
      %v3300 = vunpack.c.h.b16 %v3264
      %v3301 = vpack.c.b16 %v1968, %v3299
      %v3302 = vpack.c.b16 %v1969, %v3300
      %vm3303 = vcmask 1045504
      %v3304 = vrot.slane %v3301, 2
      %v3305 = vrot.slane %v2042, 2
      %v3306 = vsel %vm3303, %v3304, %v3305
      %v3307 = vrot.slane %v3302, 2
      %v3308 = vrot.slane %v2043, 2
      %v3309 = vsel %vm3303, %v3307, %v3308
      %v3310 = vrot.slane %v2044, 2
      %v3311 = vsel %vm3303, %v3305, %v3310
      %v3312 = vrot.slane %v2045, 2
      %v3313 = vsel %vm3303, %v3308, %v3312
      %v3314 = vrot.slane %v2046, 2
      %v3315 = vsel %vm3303, %v3310, %v3314
      %v3316 = vrot.slane %v2047, 2
      %v3317 = vsel %vm3303, %v3312, %v3316
      %v3318 = vrot.slane %v2048, 2
      %v3319 = vsel %vm3303, %v3314, %v3318
      %v3320 = vrot.slane %v2049, 2
      %v3321 = vsel %vm3303, %v3316, %v3320
      %v3322 = vrot.slane %v2050, 2
      %v3323 = vsel %vm3303, %v3318, %v3322
      %v3324 = vrot.slane %v2051, 2
      %v3325 = vsel %vm3303, %v3320, %v3324
      %v3326 = vrot.slane %v2052, 2
      %v3327 = vsel %vm3303, %v3322, %v3326
      %v3328 = vrot.slane %v2053, 2
      %v3329 = vsel %vm3303, %v3324, %v3328
      %v3330 = vrot.slane %v2054, 2
      %v3331 = vsel %vm3303, %v3326, %v3330
      %v3332 = vrot.slane %v2055, 2
      %v3333 = vsel %vm3303, %v3328, %v3332
      %v3334 = vrot.slane %v2056, 2
      %v3335 = vsel %vm3303, %v3330, %v3334
      %v3336 = vrot.slane %v2057, 2
      %v3337 = vsel %vm3303, %v3332, %v3336
      %v3338 = vrot.slane %v2058, 2
      %v3339 = vsel %vm3303, %v3334, %v3338
      %v3340 = vrot.slane %v2059, 2
      %v3341 = vsel %vm3303, %v3336, %v3340
      %v3342 = vrot.slane %v2060, 2
      %v3343 = vsel %vm3303, %v3338, %v3342
      %v3344 = vrot.slane %v2061, 2
      %v3345 = vsel %vm3303, %v3340, %v3344
      %v3346 = vrot.slane %v2062, 2
      %v3347 = vsel %vm3303, %v3342, %v3346
      %v3348 = vrot.slane %v2063, 2
      %v3349 = vsel %vm3303, %v3344, %v3348
      %v3350 = vrot.slane %v2064, 2
      %v3351 = vsel %vm3303, %v3346, %v3350
      %v3352 = vrot.slane %v2065, 2
      %v3353 = vsel %vm3303, %v3348, %v3352
      %v3354 = vrot.slane %v2066, 2
      %v3355 = vsel %vm3303, %v3350, %v3354
      %v3356 = vrot.slane %v2067, 2
      %v3357 = vsel %vm3303, %v3352, %v3356
      %v3358 = vrot.slane %v2068, 2
      %v3359 = vsel %vm3303, %v3354, %v3358
      %v3360 = vrot.slane %v2069, 2
      %v3361 = vsel %vm3303, %v3356, %v3360
      %v3362 = vrot.slane %v2070, 2
      %v3363 = vsel %vm3303, %v3358, %v3362
      %v3364 = vrot.slane %v2071, 2
      %v3365 = vsel %vm3303, %v3360, %v3364
      %v3366 = vrot.slane %v2072, 2
      %v3367 = vsel %vm3303, %v3362, %v3366
      %v3368 = vrot.slane %v2073, 2
      %v3369 = vsel %vm3303, %v3364, %v3368
      %v3370 = vrot.slane %v2074, 2
      %v3371 = vsel %vm3303, %v3366, %v3370
      %v3372 = vrot.slane %v2075, 2
      %v3373 = vsel %vm3303, %v3368, %v3372
      %v3374 = vrot.slane %v2555, 2
      %v3375 = vsel %vm3303, %v3370, %v3374
      %v3376 = vrot.slane %v2556, 2
      %v3377 = vsel %vm3303, %v3372, %v3376
      %v3446 = vunpack.c.l.b16 %v3266
      %v3447 = vunpack.c.l.b16 %v3267
      %v3448 = vunpack.c.l.b16 %v3268
      %v3449 = vunpack.c.l.b16 %v3269
      %v3450 = vunpack.c.l.b16 %v3270
      %v3451 = vunpack.c.l.b16 %v3271
      %v3452 = vunpack.c.l.b16 %v3272
      %v3453 = vunpack.c.l.b16 %v3273
      %v3454 = vunpack.c.l.b16 %v3274
      %v3455 = vunpack.c.l.b16 %v3275
      %v3456 = vunpack.c.l.b16 %v3276
      %v3457 = vunpack.c.l.b16 %v3277
      %v3458 = vunpack.c.l.b16 %v3278
      %v3459 = vunpack.c.l.b16 %v3279
      %v3460 = vunpack.c.l.b16 %v3280
      %v3461 = vunpack.c.l.b16 %v3281
      %v3462 = vunpack.c.l.b16 %v3282
      %v3463 = vunpack.c.l.b16 %v3283
      %v3464 = vunpack.c.l.b16 %v3284
      %v3465 = vunpack.c.l.b16 %v3285
      %v3466 = vunpack.c.l.b16 %v3286
      %v3467 = vunpack.c.l.b16 %v3287
      %v3468 = vunpack.c.l.b16 %v3288
      %v3469 = vunpack.c.l.b16 %v3289
      %v3470 = vunpack.c.l.b16 %v3290
      %v3471 = vunpack.c.l.b16 %v3291
      %v3472 = vunpack.c.l.b16 %v3292
      %v3473 = vunpack.c.l.b16 %v3293
      %v3474 = vunpack.c.l.b16 %v3294
      %v3475 = vunpack.c.l.b16 %v3295
      %v3476 = vunpack.c.l.b16 %v3296
      %v3477 = vunpack.c.l.b16 %v3297
      %v3478 = vpack.c.b16 %v3447, %v3446
      %v3479 = vpack.c.b16 %v3449, %v3448
      %v3480 = vpack.c.b16 %v3451, %v3450
      %v3481 = vpack.c.b16 %v3453, %v3452
      %v3482 = vpack.c.b16 %v3455, %v3454
      %v3483 = vpack.c.b16 %v3457, %v3456
      %v3484 = vpack.c.b16 %v3459, %v3458
      %v3485 = vpack.c.b16 %v3461, %v3460
      %v3486 = vpack.c.b16 %v3463, %v3462
      %v3487 = vpack.c.b16 %v3465, %v3464
      %v3488 = vpack.c.b16 %v3467, %v3466
      %v3489 = vpack.c.b16 %v3469, %v3468
      %v3490 = vpack.c.b16 %v3471, %v3470
      %v3491 = vpack.c.b16 %v3473, %v3472
      %v3492 = vpack.c.b16 %v3475, %v3474
      %v3493 = vpack.c.b16 %v3477, %v3476
      %3510 = vmatpush.bf16.msra.mxu0 %v3485
      %3511 = vmatpush.bf16.msra.mxu0 %v3484
      %3512 = vmatpush.bf16.msra.mxu0 %v3483
      %3513 = vmatpush.bf16.msra.mxu0 %v3482
      %3514 = vmatpush.bf16.msra.mxu0 %v3481
      %3515 = vmatpush.bf16.msra.mxu0 %v3480
      %3516 = vmatpush.bf16.msra.mxu0 %v3479
      %3517 = vmatpush.bf16.msra.mxu0 %v3478
      %3518 = vmatmul.bf16.gmra.mxu0 %v3306
      %v3519 = vpop.f32.mrf.mxu0
      %v3520 = vadd.f32 0.0, %v3519
      %v3521 = vpop.f32.mrf.mxu0
      %v3522 = vadd.f32 0.0, %v3521
      %3523 = vmatmul.bf16.gmra.mxu0 %v3311
      %v3524 = vpop.f32.mrf.mxu0
      %v3525 = vadd.f32 0.0, %v3524
      %v3526 = vpop.f32.mrf.mxu0
      %v3527 = vadd.f32 0.0, %v3526
      %3528 = vmatmul.bf16.gmra.mxu0 %v3315
      %v3529 = vpop.f32.mrf.mxu0
      %v3530 = vadd.f32 0.0, %v3529
      %v3531 = vpop.f32.mrf.mxu0
      %v3532 = vadd.f32 0.0, %v3531
      %3533 = vmatmul.bf16.gmra.mxu0 %v3319
      %v3534 = vpop.f32.mrf.mxu0
      %v3535 = vadd.f32 0.0, %v3534
      %v3536 = vpop.f32.mrf.mxu0
      %v3537 = vadd.f32 0.0, %v3536
      %3538 = vmatmul.bf16.gmra.mxu0 %v3323
      %v3539 = vpop.f32.mrf.mxu0
      %v3540 = vadd.f32 0.0, %v3539
      %v3541 = vpop.f32.mrf.mxu0
      %v3542 = vadd.f32 0.0, %v3541
      %3543 = vmatmul.bf16.gmra.mxu0 %v3327
      %v3544 = vpop.f32.mrf.mxu0
      %v3545 = vadd.f32 0.0, %v3544
      %v3546 = vpop.f32.mrf.mxu0
      %v3547 = vadd.f32 0.0, %v3546
      %3548 = vmatmul.bf16.gmra.mxu0 %v3331
      %v3549 = vpop.f32.mrf.mxu0
      %v3550 = vadd.f32 0.0, %v3549
      %v3551 = vpop.f32.mrf.mxu0
      %v3552 = vadd.f32 0.0, %v3551
      %3553 = vmatmul.bf16.gmra.mxu0 %v3335
      %v3554 = vpop.f32.mrf.mxu0
      %v3555 = vadd.f32 0.0, %v3554
      %v3556 = vpop.f32.mrf.mxu0
      %v3557 = vadd.f32 0.0, %v3556
      %3558 = vmatmul.bf16.gmra.mxu0 %v3339
      %v3559 = vpop.f32.mrf.mxu0
      %v3560 = vadd.f32 0.0, %v3559
      %v3561 = vpop.f32.mrf.mxu0
      %v3562 = vadd.f32 0.0, %v3561
      %3563 = vmatmul.bf16.gmra.mxu0 %v3343
      %v3564 = vpop.f32.mrf.mxu0
      %v3565 = vadd.f32 0.0, %v3564
      %v3566 = vpop.f32.mrf.mxu0
      %v3567 = vadd.f32 0.0, %v3566
      %3568 = vmatmul.bf16.gmra.mxu0 %v3347
      %v3569 = vpop.f32.mrf.mxu0
      %v3570 = vadd.f32 0.0, %v3569
      %v3571 = vpop.f32.mrf.mxu0
      %v3572 = vadd.f32 0.0, %v3571
      %3573 = vmatmul.bf16.gmra.mxu0 %v3351
      %v3574 = vpop.f32.mrf.mxu0
      %v3575 = vadd.f32 0.0, %v3574
      %v3576 = vpop.f32.mrf.mxu0
      %v3577 = vadd.f32 0.0, %v3576
      %3578 = vmatmul.bf16.gmra.mxu0 %v3355
      %v3579 = vpop.f32.mrf.mxu0
      %v3580 = vadd.f32 0.0, %v3579
      %v3581 = vpop.f32.mrf.mxu0
      %v3582 = vadd.f32 0.0, %v3581
      %3583 = vmatmul.bf16.gmra.mxu0 %v3359
      %v3584 = vpop.f32.mrf.mxu0
      %v3585 = vadd.f32 0.0, %v3584
      %v3586 = vpop.f32.mrf.mxu0
      %v3587 = vadd.f32 0.0, %v3586
      %3588 = vmatmul.bf16.gmra.mxu0 %v3363
      %v3589 = vpop.f32.mrf.mxu0
      %v3590 = vadd.f32 0.0, %v3589
      %v3591 = vpop.f32.mrf.mxu0
      %v3592 = vadd.f32 0.0, %v3591
      %3593 = vmatmul.bf16.gmra.mxu0 %v3367
      %v3594 = vpop.f32.mrf.mxu0
      %v3595 = vadd.f32 0.0, %v3594
      %v3596 = vpop.f32.mrf.mxu0
      %v3597 = vadd.f32 0.0, %v3596
      %3598 = vmatmul.bf16.gmra.mxu0 %v3371
      %v3599 = vpop.f32.mrf.mxu0
      %v3600 = vadd.f32 0.0, %v3599
      %v3601 = vpop.f32.mrf.mxu0
      %v3602 = vadd.f32 0.0, %v3601
      %3603 = vmatmul.bf16.gmra.mxu0 %v3375
      %v3604 = vpop.f32.mrf.mxu0
      %v3605 = vadd.f32 0.0, %v3604
      %v3606 = vpop.f32.mrf.mxu0
      %v3607 = vadd.f32 0.0, %v3606
      %3608 = vdwg.mxu0
      %3609 = vmatpush.bf16.msra.mxu0 %v3493
      %3610 = vmatpush.bf16.msra.mxu0 %v3492
      %3611 = vmatpush.bf16.msra.mxu0 %v3491
      %3612 = vmatpush.bf16.msra.mxu0 %v3490
      %3613 = vmatpush.bf16.msra.mxu0 %v3489
      %3614 = vmatpush.bf16.msra.mxu0 %v3488
      %3615 = vmatpush.bf16.msra.mxu0 %v3487
      %3616 = vmatpush.bf16.msra.mxu0 %v3486
      %3617 = vmatmul.bf16.gmra.mxu0 %v3309
      %v3618 = vpop.f32.mrf.mxu0
      %v3619 = vadd.f32 %v3520, %v3618
      %v3620 = vpop.f32.mrf.mxu0
      %v3621 = vadd.f32 %v3522, %v3620
      %3622 = vmatmul.bf16.gmra.mxu0 %v3313
      %v3623 = vpop.f32.mrf.mxu0
      %v3624 = vadd.f32 %v3525, %v3623
      %v3625 = vpop.f32.mrf.mxu0
      %v3626 = vadd.f32 %v3527, %v3625
      %3627 = vmatmul.bf16.gmra.mxu0 %v3317
      %v3628 = vpop.f32.mrf.mxu0
      %v3629 = vadd.f32 %v3530, %v3628
      %v3630 = vpop.f32.mrf.mxu0
      %v3631 = vadd.f32 %v3532, %v3630
      %3632 = vmatmul.bf16.gmra.mxu0 %v3321
      %v3633 = vpop.f32.mrf.mxu0
      %v3634 = vadd.f32 %v3535, %v3633
      %v3635 = vpop.f32.mrf.mxu0
      %v3636 = vadd.f32 %v3537, %v3635
      %3637 = vmatmul.bf16.gmra.mxu0 %v3325
      %v3638 = vpop.f32.mrf.mxu0
      %v3639 = vadd.f32 %v3540, %v3638
      %v3640 = vpop.f32.mrf.mxu0
      %v3641 = vadd.f32 %v3542, %v3640
      %3642 = vmatmul.bf16.gmra.mxu0 %v3329
      %v3643 = vpop.f32.mrf.mxu0
      %v3644 = vadd.f32 %v3545, %v3643
      %v3645 = vpop.f32.mrf.mxu0
      %v3646 = vadd.f32 %v3547, %v3645
      %3647 = vmatmul.bf16.gmra.mxu0 %v3333
      %v3648 = vpop.f32.mrf.mxu0
      %v3649 = vadd.f32 %v3550, %v3648
      %v3650 = vpop.f32.mrf.mxu0
      %v3651 = vadd.f32 %v3552, %v3650
      %3652 = vmatmul.bf16.gmra.mxu0 %v3337
      %v3653 = vpop.f32.mrf.mxu0
      %v3654 = vadd.f32 %v3555, %v3653
      %v3655 = vpop.f32.mrf.mxu0
      %v3656 = vadd.f32 %v3557, %v3655
      %3657 = vmatmul.bf16.gmra.mxu0 %v3341
      %v3658 = vpop.f32.mrf.mxu0
      %v3659 = vadd.f32 %v3560, %v3658
      %v3660 = vpop.f32.mrf.mxu0
      %v3661 = vadd.f32 %v3562, %v3660
      %3662 = vmatmul.bf16.gmra.mxu0 %v3345
      %v3663 = vpop.f32.mrf.mxu0
      %v3664 = vadd.f32 %v3565, %v3663
      %v3665 = vpop.f32.mrf.mxu0
      %v3666 = vadd.f32 %v3567, %v3665
      %3667 = vmatmul.bf16.gmra.mxu0 %v3349
      %v3668 = vpop.f32.mrf.mxu0
      %v3669 = vadd.f32 %v3570, %v3668
      %v3670 = vpop.f32.mrf.mxu0
      %v3671 = vadd.f32 %v3572, %v3670
      %3672 = vmatmul.bf16.gmra.mxu0 %v3353
      %v3673 = vpop.f32.mrf.mxu0
      %v3674 = vadd.f32 %v3575, %v3673
      %v3675 = vpop.f32.mrf.mxu0
      %v3676 = vadd.f32 %v3577, %v3675
      %3677 = vmatmul.bf16.gmra.mxu0 %v3357
      %v3678 = vpop.f32.mrf.mxu0
      %v3679 = vadd.f32 %v3580, %v3678
      %v3680 = vpop.f32.mrf.mxu0
      %v3681 = vadd.f32 %v3582, %v3680
      %3682 = vmatmul.bf16.gmra.mxu0 %v3361
      %v3683 = vpop.f32.mrf.mxu0
      %v3684 = vadd.f32 %v3585, %v3683
      %v3685 = vpop.f32.mrf.mxu0
      %v3686 = vadd.f32 %v3587, %v3685
      %3687 = vmatmul.bf16.gmra.mxu0 %v3365
      %v3688 = vpop.f32.mrf.mxu0
      %v3689 = vadd.f32 %v3590, %v3688
      %v3690 = vpop.f32.mrf.mxu0
      %v3691 = vadd.f32 %v3592, %v3690
      %3692 = vmatmul.bf16.gmra.mxu0 %v3369
      %v3693 = vpop.f32.mrf.mxu0
      %v3694 = vadd.f32 %v3595, %v3693
      %v3695 = vpop.f32.mrf.mxu0
      %v3696 = vadd.f32 %v3597, %v3695
      %3697 = vmatmul.bf16.gmra.mxu0 %v3373
      %v3698 = vpop.f32.mrf.mxu0
      %v3699 = vadd.f32 %v3600, %v3698
      %v3700 = vpop.f32.mrf.mxu0
      %v3701 = vadd.f32 %v3602, %v3700
      %3702 = vmatmul.bf16.gmra.mxu0 %v3377
      %v3703 = vpop.f32.mrf.mxu0
      %v3704 = vadd.f32 %v3605, %v3703
      %v3705 = vpop.f32.mrf.mxu0
      %v3706 = vadd.f32 %v3607, %v3705
      %3707 = vdwg.mxu0
      %v3708 = vadd.f32 %v3228, %v3619
      %v3709 = vadd.f32 %v3229, %v3621
      %v3710 = vadd.f32 %v3230, %v3624
      %v3711 = vadd.f32 %v3231, %v3626
      %v3712 = vadd.f32 %v3232, %v3629
      %v3713 = vadd.f32 %v3233, %v3631
      %v3714 = vadd.f32 %v3234, %v3634
      %v3715 = vadd.f32 %v3235, %v3636
      %v3716 = vadd.f32 %v3236, %v3639
      %v3717 = vadd.f32 %v3237, %v3641
      %v3718 = vadd.f32 %v3238, %v3644
      %v3719 = vadd.f32 %v3239, %v3646
      %v3720 = vadd.f32 %v3240, %v3649
      %v3721 = vadd.f32 %v3241, %v3651
      %v3722 = vadd.f32 %v3242, %v3654
      %v3723 = vadd.f32 %v3243, %v3656
      %v3724 = vadd.f32 %v3244, %v3659
      %v3725 = vadd.f32 %v3245, %v3661
      %v3726 = vadd.f32 %v3246, %v3664
      %v3727 = vadd.f32 %v3247, %v3666
      %v3728 = vadd.f32 %v3248, %v3669
      %v3729 = vadd.f32 %v3249, %v3671
      %v3730 = vadd.f32 %v3250, %v3674
      %v3731 = vadd.f32 %v3251, %v3676
      %v3732 = vadd.f32 %v3252, %v3679
      %v3733 = vadd.f32 %v3253, %v3681
      %v3734 = vadd.f32 %v3254, %v3684
      %v3735 = vadd.f32 %v3255, %v3686
      %v3736 = vadd.f32 %v3256, %v3689
      %v3737 = vadd.f32 %v3257, %v3691
      %v3738 = vadd.f32 %v3258, %v3694
      %v3739 = vadd.f32 %v3259, %v3696
      %v3740 = vadd.f32 %v3260, %v3699
      %v3741 = vadd.f32 %v3261, %v3701
      %v3742 = vadd.f32 %v3262, %v3704
      %v3743 = vadd.f32 %v3263, %v3706
      %v3744 = vld [vmem:[%s165 + $0x20] sm:$0xcc]
      %v3745 = vld [vmem:[%s165 + $0x28] sm:$0xff]
      %v3746 = vld [vmem:[%s165 + $0x30] sm:$0xff]
      %v3747 = vld [vmem:[%s165 + $0x38] sm:$0xff]
      %v3748 = vld [vmem:[%s165 + $0x40] sm:$0xff]
      %v3749 = vld [vmem:[%s165 + $0x48] sm:$0xff]
      %v3750 = vld [vmem:[%s165 + $0x50] sm:$0xff]
      %v3751 = vld [vmem:[%s165 + $0x58] sm:$0xff]
      %v3752 = vld [vmem:[%s165 + $0x60] sm:$0xff]
      %v3753 = vld [vmem:[%s165 + $0x68] sm:$0xff]
      %v3754 = vld [vmem:[%s165 + $0x70] sm:$0xff]
      %v3755 = vld [vmem:[%s165 + $0x78] sm:$0xff]
      %v3756 = vld [vmem:[%s165 + $0x80] sm:$0xff]
      %v3757 = vld [vmem:[%s165 + $0x88] sm:$0xff]
      %v3758 = vld [vmem:[%s165 + $0x90] sm:$0xff]
      %v3759 = vld [vmem:[%s165 + $0x98] sm:$0xff]
      %v3760 = vld [vmem:[%s165 + $0xa0] sm:$0xff]
      %v3761 = vld [vmem:[%s165 + $0xa8] sm:$0xff]
      %v3762 = vld [vmem:[%s165 + $0xb0] sm:$0xff]
      %v3763 = vld [vmem:[%s165 + $0xb8] sm:$0xff]
      %v3764 = vld [vmem:[%s165 + $0xc0] sm:$0xff]
      %v3765 = vld [vmem:[%s165 + $0xc8] sm:$0xff]
      %v3766 = vld [vmem:[%s165 + $0xd0] sm:$0xff]
      %v3767 = vld [vmem:[%s165 + $0xd8] sm:$0xff]
      %v3768 = vld [vmem:[%s165 + $0xe0] sm:$0xff]
      %v3769 = vld [vmem:[%s165 + $0xe8] sm:$0xff]
      %v3770 = vld [vmem:[%s165 + $0xf0] sm:$0xff]
      %v3771 = vld [vmem:[%s165 + $0xf8] sm:$0xff]
      %v3772 = vld [vmem:[%s165 + $0x100] sm:$0xff]
      %v3773 = vld [vmem:[%s165 + $0x108] sm:$0xff]
      %v3774 = vld [vmem:[%s165 + $0x110] sm:$0xff]
      %v3775 = vld [vmem:[%s165 + $0x118] sm:$0xff]
      %v3776 = vld [vmem:[%s165 + $0x120] sm:$0xff]
      %v3777 = vld [vmem:[%s165 + $0x128] sm:$0xff]
      %v3778 = vld [vmem:[%s165 + $0x130] sm:$0xff]
      %v3779 = vld [vmem:[%s165 + $0x138] sm:$0xff]
      %v3780 = vld [vmem:[%s165 + $0x140] sm:$0x33]
      %s3781 = scalar_lea.vmem %s1, 768
      %v3782 = vld [vmem:[%s3781] sm:$0xf]
      %v3783 = vld [vmem:[%s3781 + $0x4] sm:$0xf]
      %v3784 = vld [vmem:[%s3781 + $0x8] sm:$0xf]
      %v3785 = vld [vmem:[%s3781 + $0xc] sm:$0xf]
      %v3786 = vld [vmem:[%s3781 + $0x10] sm:$0xf]
      %v3787 = vld [vmem:[%s3781 + $0x14] sm:$0xf]
      %v3788 = vld [vmem:[%s3781 + $0x18] sm:$0xf]
      %v3789 = vld [vmem:[%s3781 + $0x1c] sm:$0xf]
      %v3790 = vld [vmem:[%s3781 + $0x20] sm:$0xf]
      %v3791 = vld [vmem:[%s3781 + $0x24] sm:$0xf]
      %v3792 = vld [vmem:[%s3781 + $0x28] sm:$0xf]
      %v3793 = vld [vmem:[%s3781 + $0x2c] sm:$0xf]
      %v3794 = vld [vmem:[%s3781 + $0x30] sm:$0xf]
      %v3795 = vld [vmem:[%s3781 + $0x34] sm:$0xf]
      %v3796 = vld [vmem:[%s3781 + $0x38] sm:$0xf]
      %v3797 = vld [vmem:[%s3781 + $0x3c] sm:$0xf]
      %v3798 = vld [vmem:[%s3781 + $0x40] sm:$0xf]
      %v3799 = vld [vmem:[%s3781 + $0x44] sm:$0xf]
      %v3800 = vld [vmem:[%s3781 + $0x48] sm:$0xf]
      %v3801 = vld [vmem:[%s3781 + $0x4c] sm:$0xf]
      %v3802 = vld [vmem:[%s3781 + $0x50] sm:$0xf]
      %v3803 = vld [vmem:[%s3781 + $0x54] sm:$0xf]
      %v3804 = vld [vmem:[%s3781 + $0x58] sm:$0xf]
      %v3805 = vld [vmem:[%s3781 + $0x5c] sm:$0xf]
      %v3806 = vld [vmem:[%s3781 + $0x60] sm:$0xf]
      %v3807 = vld [vmem:[%s3781 + $0x64] sm:$0xf]
      %v3808 = vld [vmem:[%s3781 + $0x68] sm:$0xf]
      %v3809 = vld [vmem:[%s3781 + $0x6c] sm:$0xf]
      %v3810 = vld [vmem:[%s3781 + $0x70] sm:$0xf]
      %v3811 = vld [vmem:[%s3781 + $0x74] sm:$0xf]
      %v3812 = vld [vmem:[%s3781 + $0x78] sm:$0xf]
      %v3813 = vld [vmem:[%s3781 + $0x7c] sm:$0xf]
      %v3851 = vunpack.c.l.b16 %v3744
      %v3852 = vunpack.c.h.b16 %v3744
      %v3853 = vunpack.c.l.b16 %v3745
      %v3854 = vunpack.c.h.b16 %v3745
      %v3855 = vunpack.c.l.b16 %v3746
      %v3856 = vunpack.c.h.b16 %v3746
      %v3857 = vunpack.c.l.b16 %v3747
      %v3858 = vunpack.c.h.b16 %v3747
      %v3859 = vunpack.c.l.b16 %v3748
      %v3860 = vunpack.c.h.b16 %v3748
      %v3861 = vunpack.c.l.b16 %v3749
      %v3862 = vunpack.c.h.b16 %v3749
      %v3863 = vunpack.c.l.b16 %v3750
      %v3864 = vunpack.c.h.b16 %v3750
      %v3865 = vunpack.c.l.b16 %v3751
      %v3866 = vunpack.c.h.b16 %v3751
      %v3867 = vunpack.c.l.b16 %v3752
      %v3868 = vunpack.c.h.b16 %v3752
      %v3869 = vunpack.c.l.b16 %v3753
      %v3870 = vunpack.c.h.b16 %v3753
      %v3871 = vunpack.c.l.b16 %v3754
      %v3872 = vunpack.c.h.b16 %v3754
      %v3873 = vunpack.c.l.b16 %v3755
      %v3874 = vunpack.c.h.b16 %v3755
      %v3875 = vunpack.c.l.b16 %v3756
      %v3876 = vunpack.c.h.b16 %v3756
      %v3877 = vunpack.c.l.b16 %v3757
      %v3878 = vunpack.c.h.b16 %v3757
      %v3879 = vunpack.c.l.b16 %v3758
      %v3880 = vunpack.c.h.b16 %v3758
      %v3881 = vunpack.c.l.b16 %v3759
      %v3882 = vunpack.c.h.b16 %v3759
      %v3883 = vunpack.c.l.b16 %v3760
      %v3884 = vunpack.c.h.b16 %v3760
      %v3885 = vunpack.c.l.b16 %v3761
      %v3886 = vunpack.c.h.b16 %v3761
      %v3887 = vunpack.c.l.b16 %v3762
      %v3888 = vunpack.c.h.b16 %v3762
      %v3889 = vunpack.c.l.b16 %v3763
      %v3890 = vunpack.c.h.b16 %v3763
      %v3891 = vunpack.c.l.b16 %v3764
      %v3892 = vunpack.c.h.b16 %v3764
      %v3893 = vunpack.c.l.b16 %v3765
      %v3894 = vunpack.c.h.b16 %v3765
      %v3895 = vunpack.c.l.b16 %v3766
      %v3896 = vunpack.c.h.b16 %v3766
      %v3897 = vunpack.c.l.b16 %v3767
      %v3898 = vunpack.c.h.b16 %v3767
      %v3899 = vunpack.c.l.b16 %v3768
      %v3900 = vunpack.c.h.b16 %v3768
      %v3901 = vunpack.c.l.b16 %v3769
      %v3902 = vunpack.c.h.b16 %v3769
      %v3903 = vunpack.c.l.b16 %v3770
      %v3904 = vunpack.c.h.b16 %v3770
      %v3905 = vunpack.c.l.b16 %v3771
      %v3906 = vunpack.c.h.b16 %v3771
      %v3907 = vunpack.c.l.b16 %v3772
      %v3908 = vunpack.c.h.b16 %v3772
      %v3909 = vunpack.c.l.b16 %v3773
      %v3910 = vunpack.c.h.b16 %v3773
      %v3911 = vunpack.c.l.b16 %v3774
      %v3912 = vunpack.c.h.b16 %v3774
      %v3913 = vunpack.c.l.b16 %v3775
      %v3914 = vunpack.c.h.b16 %v3775
      %v3915 = vunpack.c.l.b16 %v3776
      %v3916 = vunpack.c.h.b16 %v3776
      %v3917 = vunpack.c.l.b16 %v3777
      %v3918 = vunpack.c.h.b16 %v3777
      %v3919 = vunpack.c.l.b16 %v3778
      %v3920 = vunpack.c.h.b16 %v3778
      %v3921 = vunpack.c.l.b16 %v3779
      %v3922 = vunpack.c.h.b16 %v3779
      %v3923 = vunpack.c.l.b16 %v3780
      %v3924 = vunpack.c.h.b16 %v3780
      %v3925 = vpack.c.b16 %v3853, %v3851
      %v3926 = vpack.c.b16 %v3854, %v3852
      %v3927 = vpack.c.b16 %v3857, %v3855
      %v3928 = vpack.c.b16 %v3858, %v3856
      %v3929 = vpack.c.b16 %v3861, %v3859
      %v3930 = vpack.c.b16 %v3862, %v3860
      %v3931 = vpack.c.b16 %v3865, %v3863
      %v3932 = vpack.c.b16 %v3866, %v3864
      %v3933 = vpack.c.b16 %v3869, %v3867
      %v3934 = vpack.c.b16 %v3870, %v3868
      %v3935 = vpack.c.b16 %v3873, %v3871
      %v3936 = vpack.c.b16 %v3874, %v3872
      %v3937 = vpack.c.b16 %v3877, %v3875
      %v3938 = vpack.c.b16 %v3878, %v3876
      %v3939 = vpack.c.b16 %v3881, %v3879
      %v3940 = vpack.c.b16 %v3882, %v3880
      %v3941 = vpack.c.b16 %v3885, %v3883
      %v3942 = vpack.c.b16 %v3886, %v3884
      %v3943 = vpack.c.b16 %v3889, %v3887
      %v3944 = vpack.c.b16 %v3890, %v3888
      %v3945 = vpack.c.b16 %v3893, %v3891
      %v3946 = vpack.c.b16 %v3894, %v3892
      %v3947 = vpack.c.b16 %v3897, %v3895
      %v3948 = vpack.c.b16 %v3898, %v3896
      %v3949 = vpack.c.b16 %v3901, %v3899
      %v3950 = vpack.c.b16 %v3902, %v3900
      %v3951 = vpack.c.b16 %v3905, %v3903
      %v3952 = vpack.c.b16 %v3906, %v3904
      %v3953 = vpack.c.b16 %v3909, %v3907
      %v3954 = vpack.c.b16 %v3910, %v3908
      %v3955 = vpack.c.b16 %v3913, %v3911
      %v3956 = vpack.c.b16 %v3914, %v3912
      %v3957 = vpack.c.b16 %v3917, %v3915
      %v3958 = vpack.c.b16 %v3918, %v3916
      %v3959 = vpack.c.b16 %v3921, %v3919
      %v3960 = vpack.c.b16 %v3922, %v3920
      %v3961 = vpack.c.b16 %v3923, %v3923
      %v3962 = vpack.c.b16 %v3924, %v3924
      %v3963 = vrot.slane %v3925, 2
      %v3964 = vrot.slane %v3927, 2
      %v3965 = vsel %vm3303, %v3963, %v3964
      %v3966 = vrot.slane %v3926, 2
      %v3967 = vrot.slane %v3928, 2
      %v3968 = vsel %vm3303, %v3966, %v3967
      %v3969 = vrot.slane %v3929, 2
      %v3970 = vsel %vm3303, %v3964, %v3969
      %v3971 = vrot.slane %v3930, 2
      %v3972 = vsel %vm3303, %v3967, %v3971
      %v3973 = vrot.slane %v3931, 2
      %v3974 = vsel %vm3303, %v3969, %v3973
      %v3975 = vrot.slane %v3932, 2
      %v3976 = vsel %vm3303, %v3971, %v3975
      %v3977 = vrot.slane %v3933, 2
      %v3978 = vsel %vm3303, %v3973, %v3977
      %v3979 = vrot.slane %v3934, 2
      %v3980 = vsel %vm3303, %v3975, %v3979
      %v3981 = vrot.slane %v3935, 2
      %v3982 = vsel %vm3303, %v3977, %v3981
      %v3983 = vrot.slane %v3936, 2
      %v3984 = vsel %vm3303, %v3979, %v3983
      %v3985 = vrot.slane %v3937, 2
      %v3986 = vsel %vm3303, %v3981, %v3985
      %v3987 = vrot.slane %v3938, 2
      %v3988 = vsel %vm3303, %v3983, %v3987
      %v3989 = vrot.slane %v3939, 2
      %v3990 = vsel %vm3303, %v3985, %v3989
      %v3991 = vrot.slane %v3940, 2
      %v3992 = vsel %vm3303, %v3987, %v3991
      %v3993 = vrot.slane %v3941, 2
      %v3994 = vsel %vm3303, %v3989, %v3993
      %v3995 = vrot.slane %v3942, 2
      %v3996 = vsel %vm3303, %v3991, %v3995
      %v3997 = vrot.slane %v3943, 2
      %v3998 = vsel %vm3303, %v3993, %v3997
      %v3999 = vrot.slane %v3944, 2
      %v4000 = vsel %vm3303, %v3995, %v3999
      %v4001 = vrot.slane %v3945, 2
      %v4002 = vsel %vm3303, %v3997, %v4001
      %v4003 = vrot.slane %v3946, 2
      %v4004 = vsel %vm3303, %v3999, %v4003
      %v4005 = vrot.slane %v3947, 2
      %v4006 = vsel %vm3303, %v4001, %v4005
      %v4007 = vrot.slane %v3948, 2
      %v4008 = vsel %vm3303, %v4003, %v4007
      %v4009 = vrot.slane %v3949, 2
      %v4010 = vsel %vm3303, %v4005, %v4009
      %v4011 = vrot.slane %v3950, 2
      %v4012 = vsel %vm3303, %v4007, %v4011
      %v4013 = vrot.slane %v3951, 2
      %v4014 = vsel %vm3303, %v4009, %v4013
      %v4015 = vrot.slane %v3952, 2
      %v4016 = vsel %vm3303, %v4011, %v4015
      %v4017 = vrot.slane %v3953, 2
      %v4018 = vsel %vm3303, %v4013, %v4017
      %v4019 = vrot.slane %v3954, 2
      %v4020 = vsel %vm3303, %v4015, %v4019
      %v4021 = vrot.slane %v3955, 2
      %v4022 = vsel %vm3303, %v4017, %v4021
      %v4023 = vrot.slane %v3956, 2
      %v4024 = vsel %vm3303, %v4019, %v4023
      %v4025 = vrot.slane %v3957, 2
      %v4026 = vsel %vm3303, %v4021, %v4025
      %v4027 = vrot.slane %v3958, 2
      %v4028 = vsel %vm3303, %v4023, %v4027
      %v4029 = vrot.slane %v3959, 2
      %v4030 = vsel %vm3303, %v4025, %v4029
      %v4031 = vrot.slane %v3960, 2
      %v4032 = vsel %vm3303, %v4027, %v4031
      %v4033 = vrot.slane %v3961, 2
      %v4034 = vsel %vm3303, %v4029, %v4033
      %v4035 = vrot.slane %v3962, 2
      %v4036 = vsel %vm3303, %v4031, %v4035
      %v4105 = vunpack.c.l.b16 %v3782
      %v4106 = vunpack.c.l.b16 %v3783
      %v4107 = vunpack.c.l.b16 %v3784
      %v4108 = vunpack.c.l.b16 %v3785
      %v4109 = vunpack.c.l.b16 %v3786
      %v4110 = vunpack.c.l.b16 %v3787
      %v4111 = vunpack.c.l.b16 %v3788
      %v4112 = vunpack.c.l.b16 %v3789
      %v4113 = vunpack.c.l.b16 %v3790
      %v4114 = vunpack.c.l.b16 %v3791
      %v4115 = vunpack.c.l.b16 %v3792
      %v4116 = vunpack.c.l.b16 %v3793
      %v4117 = vunpack.c.l.b16 %v3794
      %v4118 = vunpack.c.l.b16 %v3795
      %v4119 = vunpack.c.l.b16 %v3796
      %v4120 = vunpack.c.l.b16 %v3797
      %v4121 = vunpack.c.l.b16 %v3798
      %v4122 = vunpack.c.l.b16 %v3799
      %v4123 = vunpack.c.l.b16 %v3800
      %v4124 = vunpack.c.l.b16 %v3801
      %v4125 = vunpack.c.l.b16 %v3802
      %v4126 = vunpack.c.l.b16 %v3803
      %v4127 = vunpack.c.l.b16 %v3804
      %v4128 = vunpack.c.l.b16 %v3805
      %v4129 = vunpack.c.l.b16 %v3806
      %v4130 = vunpack.c.l.b16 %v3807
      %v4131 = vunpack.c.l.b16 %v3808
      %v4132 = vunpack.c.l.b16 %v3809
      %v4133 = vunpack.c.l.b16 %v3810
      %v4134 = vunpack.c.l.b16 %v3811
      %v4135 = vunpack.c.l.b16 %v3812
      %v4136 = vunpack.c.l.b16 %v3813
      %v4137 = vpack.c.b16 %v4106, %v4105
      %v4138 = vpack.c.b16 %v4108, %v4107
      %v4139 = vpack.c.b16 %v4110, %v4109
      %v4140 = vpack.c.b16 %v4112, %v4111
      %v4141 = vpack.c.b16 %v4114, %v4113
      %v4142 = vpack.c.b16 %v4116, %v4115
      %v4143 = vpack.c.b16 %v4118, %v4117
      %v4144 = vpack.c.b16 %v4120, %v4119
      %v4145 = vpack.c.b16 %v4122, %v4121
      %v4146 = vpack.c.b16 %v4124, %v4123
      %v4147 = vpack.c.b16 %v4126, %v4125
      %v4148 = vpack.c.b16 %v4128, %v4127
      %v4149 = vpack.c.b16 %v4130, %v4129
      %v4150 = vpack.c.b16 %v4132, %v4131
      %v4151 = vpack.c.b16 %v4134, %v4133
      %v4152 = vpack.c.b16 %v4136, %v4135
      %4169 = vmatpush.bf16.msra.mxu0 %v4144
      %4170 = vmatpush.bf16.msra.mxu0 %v4143
      %4171 = vmatpush.bf16.msra.mxu0 %v4142
      %4172 = vmatpush.bf16.msra.mxu0 %v4141
      %4173 = vmatpush.bf16.msra.mxu0 %v4140
      %4174 = vmatpush.bf16.msra.mxu0 %v4139
      %4175 = vmatpush.bf16.msra.mxu0 %v4138
      %4176 = vmatpush.bf16.msra.mxu0 %v4137
      %4177 = vmatmul.bf16.gmra.mxu0 %v3965
      %v4178 = vpop.f32.mrf.mxu0
      %v4179 = vadd.f32 0.0, %v4178
      %v4180 = vpop.f32.mrf.mxu0
      %v4181 = vadd.f32 0.0, %v4180
      %4182 = vmatmul.bf16.gmra.mxu0 %v3970
      %v4183 = vpop.f32.mrf.mxu0
      %v4184 = vadd.f32 0.0, %v4183
      %v4185 = vpop.f32.mrf.mxu0
      %v4186 = vadd.f32 0.0, %v4185
      %4187 = vmatmul.bf16.gmra.mxu0 %v3974
      %v4188 = vpop.f32.mrf.mxu0
      %v4189 = vadd.f32 0.0, %v4188
      %v4190 = vpop.f32.mrf.mxu0
      %v4191 = vadd.f32 0.0, %v4190
      %4192 = vmatmul.bf16.gmra.mxu0 %v3978
      %v4193 = vpop.f32.mrf.mxu0
      %v4194 = vadd.f32 0.0, %v4193
      %v4195 = vpop.f32.mrf.mxu0
      %v4196 = vadd.f32 0.0, %v4195
      %4197 = vmatmul.bf16.gmra.mxu0 %v3982
      %v4198 = vpop.f32.mrf.mxu0
      %v4199 = vadd.f32 0.0, %v4198
      %v4200 = vpop.f32.mrf.mxu0
      %v4201 = vadd.f32 0.0, %v4200
      %4202 = vmatmul.bf16.gmra.mxu0 %v3986
      %v4203 = vpop.f32.mrf.mxu0
      %v4204 = vadd.f32 0.0, %v4203
      %v4205 = vpop.f32.mrf.mxu0
      %v4206 = vadd.f32 0.0, %v4205
      %4207 = vmatmul.bf16.gmra.mxu0 %v3990
      %v4208 = vpop.f32.mrf.mxu0
      %v4209 = vadd.f32 0.0, %v4208
      %v4210 = vpop.f32.mrf.mxu0
      %v4211 = vadd.f32 0.0, %v4210
      %4212 = vmatmul.bf16.gmra.mxu0 %v3994
      %v4213 = vpop.f32.mrf.mxu0
      %v4214 = vadd.f32 0.0, %v4213
      %v4215 = vpop.f32.mrf.mxu0
      %v4216 = vadd.f32 0.0, %v4215
      %4217 = vmatmul.bf16.gmra.mxu0 %v3998
      %v4218 = vpop.f32.mrf.mxu0
      %v4219 = vadd.f32 0.0, %v4218
      %v4220 = vpop.f32.mrf.mxu0
      %v4221 = vadd.f32 0.0, %v4220
      %4222 = vmatmul.bf16.gmra.mxu0 %v4002
      %v4223 = vpop.f32.mrf.mxu0
      %v4224 = vadd.f32 0.0, %v4223
      %v4225 = vpop.f32.mrf.mxu0
      %v4226 = vadd.f32 0.0, %v4225
      %4227 = vmatmul.bf16.gmra.mxu0 %v4006
      %v4228 = vpop.f32.mrf.mxu0
      %v4229 = vadd.f32 0.0, %v4228
      %v4230 = vpop.f32.mrf.mxu0
      %v4231 = vadd.f32 0.0, %v4230
      %4232 = vmatmul.bf16.gmra.mxu0 %v4010
      %v4233 = vpop.f32.mrf.mxu0
      %v4234 = vadd.f32 0.0, %v4233
      %v4235 = vpop.f32.mrf.mxu0
      %v4236 = vadd.f32 0.0, %v4235
      %4237 = vmatmul.bf16.gmra.mxu0 %v4014
      %v4238 = vpop.f32.mrf.mxu0
      %v4239 = vadd.f32 0.0, %v4238
      %v4240 = vpop.f32.mrf.mxu0
      %v4241 = vadd.f32 0.0, %v4240
      %4242 = vmatmul.bf16.gmra.mxu0 %v4018
      %v4243 = vpop.f32.mrf.mxu0
      %v4244 = vadd.f32 0.0, %v4243
      %v4245 = vpop.f32.mrf.mxu0
      %v4246 = vadd.f32 0.0, %v4245
      %4247 = vmatmul.bf16.gmra.mxu0 %v4022
      %v4248 = vpop.f32.mrf.mxu0
      %v4249 = vadd.f32 0.0, %v4248
      %v4250 = vpop.f32.mrf.mxu0
      %v4251 = vadd.f32 0.0, %v4250
      %4252 = vmatmul.bf16.gmra.mxu0 %v4026
      %v4253 = vpop.f32.mrf.mxu0
      %v4254 = vadd.f32 0.0, %v4253
      %v4255 = vpop.f32.mrf.mxu0
      %v4256 = vadd.f32 0.0, %v4255
      %4257 = vmatmul.bf16.gmra.mxu0 %v4030
      %v4258 = vpop.f32.mrf.mxu0
      %v4259 = vadd.f32 0.0, %v4258
      %v4260 = vpop.f32.mrf.mxu0
      %v4261 = vadd.f32 0.0, %v4260
      %4262 = vmatmul.bf16.gmra.mxu0 %v4034
      %v4263 = vpop.f32.mrf.mxu0
      %v4264 = vadd.f32 0.0, %v4263
      %v4265 = vpop.f32.mrf.mxu0
      %v4266 = vadd.f32 0.0, %v4265
      %4267 = vdwg.mxu0
      %4268 = vmatpush.bf16.msra.mxu0 %v4152
      %4269 = vmatpush.bf16.msra.mxu0 %v4151
      %4270 = vmatpush.bf16.msra.mxu0 %v4150
      %4271 = vmatpush.bf16.msra.mxu0 %v4149
      %4272 = vmatpush.bf16.msra.mxu0 %v4148
      %4273 = vmatpush.bf16.msra.mxu0 %v4147
      %4274 = vmatpush.bf16.msra.mxu0 %v4146
      %4275 = vmatpush.bf16.msra.mxu0 %v4145
      %4276 = vmatmul.bf16.gmra.mxu0 %v3968
      %v4277 = vpop.f32.mrf.mxu0
      %v4278 = vadd.f32 %v4179, %v4277
      %v4279 = vpop.f32.mrf.mxu0
      %v4280 = vadd.f32 %v4181, %v4279
      %4281 = vmatmul.bf16.gmra.mxu0 %v3972
      %v4282 = vpop.f32.mrf.mxu0
      %v4283 = vadd.f32 %v4184, %v4282
      %v4284 = vpop.f32.mrf.mxu0
      %v4285 = vadd.f32 %v4186, %v4284
      %4286 = vmatmul.bf16.gmra.mxu0 %v3976
      %v4287 = vpop.f32.mrf.mxu0
      %v4288 = vadd.f32 %v4189, %v4287
      %v4289 = vpop.f32.mrf.mxu0
      %v4290 = vadd.f32 %v4191, %v4289
      %4291 = vmatmul.bf16.gmra.mxu0 %v3980
      %v4292 = vpop.f32.mrf.mxu0
      %v4293 = vadd.f32 %v4194, %v4292
      %v4294 = vpop.f32.mrf.mxu0
      %v4295 = vadd.f32 %v4196, %v4294
      %4296 = vmatmul.bf16.gmra.mxu0 %v3984
      %v4297 = vpop.f32.mrf.mxu0
      %v4298 = vadd.f32 %v4199, %v4297
      %v4299 = vpop.f32.mrf.mxu0
      %v4300 = vadd.f32 %v4201, %v4299
      %4301 = vmatmul.bf16.gmra.mxu0 %v3988
      %v4302 = vpop.f32.mrf.mxu0
      %v4303 = vadd.f32 %v4204, %v4302
      %v4304 = vpop.f32.mrf.mxu0
      %v4305 = vadd.f32 %v4206, %v4304
      %4306 = vmatmul.bf16.gmra.mxu0 %v3992
      %v4307 = vpop.f32.mrf.mxu0
      %v4308 = vadd.f32 %v4209, %v4307
      %v4309 = vpop.f32.mrf.mxu0
      %v4310 = vadd.f32 %v4211, %v4309
      %4311 = vmatmul.bf16.gmra.mxu0 %v3996
      %v4312 = vpop.f32.mrf.mxu0
      %v4313 = vadd.f32 %v4214, %v4312
      %v4314 = vpop.f32.mrf.mxu0
      %v4315 = vadd.f32 %v4216, %v4314
      %4316 = vmatmul.bf16.gmra.mxu0 %v4000
      %v4317 = vpop.f32.mrf.mxu0
      %v4318 = vadd.f32 %v4219, %v4317
      %v4319 = vpop.f32.mrf.mxu0
      %v4320 = vadd.f32 %v4221, %v4319
      %4321 = vmatmul.bf16.gmra.mxu0 %v4004
      %v4322 = vpop.f32.mrf.mxu0
      %v4323 = vadd.f32 %v4224, %v4322
      %v4324 = vpop.f32.mrf.mxu0
      %v4325 = vadd.f32 %v4226, %v4324
      %4326 = vmatmul.bf16.gmra.mxu0 %v4008
      %v4327 = vpop.f32.mrf.mxu0
      %v4328 = vadd.f32 %v4229, %v4327
      %v4329 = vpop.f32.mrf.mxu0
      %v4330 = vadd.f32 %v4231, %v4329
      %4331 = vmatmul.bf16.gmra.mxu0 %v4012
      %v4332 = vpop.f32.mrf.mxu0
      %v4333 = vadd.f32 %v4234, %v4332
      %v4334 = vpop.f32.mrf.mxu0
      %v4335 = vadd.f32 %v4236, %v4334
      %4336 = vmatmul.bf16.gmra.mxu0 %v4016
      %v4337 = vpop.f32.mrf.mxu0
      %v4338 = vadd.f32 %v4239, %v4337
      %v4339 = vpop.f32.mrf.mxu0
      %v4340 = vadd.f32 %v4241, %v4339
      %4341 = vmatmul.bf16.gmra.mxu0 %v4020
      %v4342 = vpop.f32.mrf.mxu0
      %v4343 = vadd.f32 %v4244, %v4342
      %v4344 = vpop.f32.mrf.mxu0
      %v4345 = vadd.f32 %v4246, %v4344
      %4346 = vmatmul.bf16.gmra.mxu0 %v4024
      %v4347 = vpop.f32.mrf.mxu0
      %v4348 = vadd.f32 %v4249, %v4347
      %v4349 = vpop.f32.mrf.mxu0
      %v4350 = vadd.f32 %v4251, %v4349
      %4351 = vmatmul.bf16.gmra.mxu0 %v4028
      %v4352 = vpop.f32.mrf.mxu0
      %v4353 = vadd.f32 %v4254, %v4352
      %v4354 = vpop.f32.mrf.mxu0
      %v4355 = vadd.f32 %v4256, %v4354
      %4356 = vmatmul.bf16.gmra.mxu0 %v4032
      %v4357 = vpop.f32.mrf.mxu0
      %v4358 = vadd.f32 %v4259, %v4357
      %v4359 = vpop.f32.mrf.mxu0
      %v4360 = vadd.f32 %v4261, %v4359
      %4361 = vmatmul.bf16.gmra.mxu0 %v4036
      %v4362 = vpop.f32.mrf.mxu0
      %v4363 = vadd.f32 %v4264, %v4362
      %v4364 = vpop.f32.mrf.mxu0
      %v4365 = vadd.f32 %v4266, %v4364
      %4366 = vdwg.mxu0
      %v4367 = vadd.f32 %v3708, %v4278
      %v4368 = vadd.f32 %v3709, %v4280
      %v4369 = vadd.f32 %v3710, %v4283
      %v4370 = vadd.f32 %v3711, %v4285
      %v4371 = vadd.f32 %v3712, %v4288
      %v4372 = vadd.f32 %v3713, %v4290
      %v4373 = vadd.f32 %v3714, %v4293
      %v4374 = vadd.f32 %v3715, %v4295
      %v4375 = vadd.f32 %v3716, %v4298
      %v4376 = vadd.f32 %v3717, %v4300
      %v4377 = vadd.f32 %v3718, %v4303
      %v4378 = vadd.f32 %v3719, %v4305
      %v4379 = vadd.f32 %v3720, %v4308
      %v4380 = vadd.f32 %v3721, %v4310
      %v4381 = vadd.f32 %v3722, %v4313
      %v4382 = vadd.f32 %v3723, %v4315
      %v4383 = vadd.f32 %v3724, %v4318
      %v4384 = vadd.f32 %v3725, %v4320
      %v4385 = vadd.f32 %v3726, %v4323
      %v4386 = vadd.f32 %v3727, %v4325
      %v4387 = vadd.f32 %v3728, %v4328
      %v4388 = vadd.f32 %v3729, %v4330
      %v4389 = vadd.f32 %v3730, %v4333
      %v4390 = vadd.f32 %v3731, %v4335
      %v4391 = vadd.f32 %v3732, %v4338
      %v4392 = vadd.f32 %v3733, %v4340
      %v4393 = vadd.f32 %v3734, %v4343
      %v4394 = vadd.f32 %v3735, %v4345
      %v4395 = vadd.f32 %v3736, %v4348
      %v4396 = vadd.f32 %v3737, %v4350
      %v4397 = vadd.f32 %v3738, %v4353
      %v4398 = vadd.f32 %v3739, %v4355
      %v4399 = vadd.f32 %v3740, %v4358
      %v4400 = vadd.f32 %v3741, %v4360
      %v4401 = vadd.f32 %v3742, %v4363
      %v4402 = vadd.f32 %v3743, %v4365
      %v4403 = vld [vmem:[%s165 + $0x140] sm:$0x77]
      %s4404 = scalar_lea.vmem %s1, 896
      %v4405 = vld [vmem:[%s4404] sm:$0xf]
      %v4406 = vld [vmem:[%s4404 + $0x4] sm:$0xf]
      %v4407 = vld [vmem:[%s4404 + $0x8] sm:$0xf]
      %v4408 = vld [vmem:[%s4404 + $0xc] sm:$0xf]
      %v4409 = vld [vmem:[%s4404 + $0x10] sm:$0xf]
      %v4410 = vld [vmem:[%s4404 + $0x14] sm:$0xf]
      %v4411 = vld [vmem:[%s4404 + $0x18] sm:$0xf]
      %v4412 = vld [vmem:[%s4404 + $0x1c] sm:$0xf]
      %v4413 = vld [vmem:[%s4404 + $0x20] sm:$0xf]
      %v4414 = vld [vmem:[%s4404 + $0x24] sm:$0xf]
      %v4415 = vld [vmem:[%s4404 + $0x28] sm:$0xf]
      %v4416 = vld [vmem:[%s4404 + $0x2c] sm:$0xf]
      %v4417 = vld [vmem:[%s4404 + $0x30] sm:$0xf]
      %v4418 = vld [vmem:[%s4404 + $0x34] sm:$0xf]
      %v4419 = vld [vmem:[%s4404 + $0x38] sm:$0xf]
      %v4420 = vld [vmem:[%s4404 + $0x3c] sm:$0xf]
      %v4421 = vld [vmem:[%s4404 + $0x40] sm:$0xf]
      %v4422 = vld [vmem:[%s4404 + $0x44] sm:$0xf]
      %v4423 = vld [vmem:[%s4404 + $0x48] sm:$0xf]
      %v4424 = vld [vmem:[%s4404 + $0x4c] sm:$0xf]
      %v4425 = vld [vmem:[%s4404 + $0x50] sm:$0xf]
      %v4426 = vld [vmem:[%s4404 + $0x54] sm:$0xf]
      %v4427 = vld [vmem:[%s4404 + $0x58] sm:$0xf]
      %v4428 = vld [vmem:[%s4404 + $0x5c] sm:$0xf]
      %v4429 = vld [vmem:[%s4404 + $0x60] sm:$0xf]
      %v4430 = vld [vmem:[%s4404 + $0x64] sm:$0xf]
      %v4431 = vld [vmem:[%s4404 + $0x68] sm:$0xf]
      %v4432 = vld [vmem:[%s4404 + $0x6c] sm:$0xf]
      %v4433 = vld [vmem:[%s4404 + $0x70] sm:$0xf]
      %v4434 = vld [vmem:[%s4404 + $0x74] sm:$0xf]
      %v4435 = vld [vmem:[%s4404 + $0x78] sm:$0xf]
      %v4436 = vld [vmem:[%s4404 + $0x7c] sm:$0xf]
      %v4438 = vunpack.c.l.b16 %v4403
      %v4439 = vunpack.c.h.b16 %v4403
      %v4440 = vpack.c.b16 %v4438, %v4438
      %v4441 = vpack.c.b16 %v4439, %v4439
      %vm4442 = vsmask.f32 5376
      %v4444 = vshrl.u32 %v3925, 16
      %v4446 = vrot.slane %v4444, 2
      %v4447 = vshll.u32 %v3925, 16
      %v4449 = vrot.slane %v4447, 3
      %v4450 = vor.u32 %v4446, %v4449
      %v4452 = vshrl.u32 %v3927, 16
      %v4454 = vrot.slane %v4452, 2
      %v4455 = vshll.u32 %v3927, 16
      %v4457 = vrot.slane %v4455, 3
      %v4458 = vor.u32 %v4454, %v4457
      %v4459 = vsel %vm4442, %v4450, %v4458
      %v4461 = vshrl.u32 %v3926, 16
      %v4463 = vrot.slane %v4461, 2
      %v4464 = vshll.u32 %v3926, 16
      %v4466 = vrot.slane %v4464, 3
      %v4467 = vor.u32 %v4463, %v4466
      %v4469 = vshrl.u32 %v3928, 16
      %v4471 = vrot.slane %v4469, 2
      %v4472 = vshll.u32 %v3928, 16
      %v4474 = vrot.slane %v4472, 3
      %v4475 = vor.u32 %v4471, %v4474
      %v4476 = vsel %vm4442, %v4467, %v4475
      %v4478 = vshrl.u32 %v3929, 16
      %v4480 = vrot.slane %v4478, 2
      %v4481 = vshll.u32 %v3929, 16
      %v4483 = vrot.slane %v4481, 3
      %v4484 = vor.u32 %v4480, %v4483
      %v4485 = vsel %vm4442, %v4458, %v4484
      %v4487 = vshrl.u32 %v3930, 16
      %v4489 = vrot.slane %v4487, 2
      %v4490 = vshll.u32 %v3930, 16
      %v4492 = vrot.slane %v4490, 3
      %v4493 = vor.u32 %v4489, %v4492
      %v4494 = vsel %vm4442, %v4475, %v4493
      %v4496 = vshrl.u32 %v3931, 16
      %v4498 = vrot.slane %v4496, 2
      %v4499 = vshll.u32 %v3931, 16
      %v4501 = vrot.slane %v4499, 3
      %v4502 = vor.u32 %v4498, %v4501
      %v4503 = vsel %vm4442, %v4484, %v4502
      %v4505 = vshrl.u32 %v3932, 16
      %v4507 = vrot.slane %v4505, 2
      %v4508 = vshll.u32 %v3932, 16
      %v4510 = vrot.slane %v4508, 3
      %v4511 = vor.u32 %v4507, %v4510
      %v4512 = vsel %vm4442, %v4493, %v4511
      %v4514 = vshrl.u32 %v3933, 16
      %v4516 = vrot.slane %v4514, 2
      %v4517 = vshll.u32 %v3933, 16
      %v4519 = vrot.slane %v4517, 3
      %v4520 = vor.u32 %v4516, %v4519
      %v4521 = vsel %vm4442, %v4502, %v4520
      %v4523 = vshrl.u32 %v3934, 16
      %v4525 = vrot.slane %v4523, 2
      %v4526 = vshll.u32 %v3934, 16
      %v4528 = vrot.slane %v4526, 3
      %v4529 = vor.u32 %v4525, %v4528
      %v4530 = vsel %vm4442, %v4511, %v4529
      %v4532 = vshrl.u32 %v3935, 16
      %v4534 = vrot.slane %v4532, 2
      %v4535 = vshll.u32 %v3935, 16
      %v4537 = vrot.slane %v4535, 3
      %v4538 = vor.u32 %v4534, %v4537
      %v4539 = vsel %vm4442, %v4520, %v4538
      %v4541 = vshrl.u32 %v3936, 16
      %v4543 = vrot.slane %v4541, 2
      %v4544 = vshll.u32 %v3936, 16
      %v4546 = vrot.slane %v4544, 3
      %v4547 = vor.u32 %v4543, %v4546
      %v4548 = vsel %vm4442, %v4529, %v4547
      %v4550 = vshrl.u32 %v3937, 16
      %v4552 = vrot.slane %v4550, 2
      %v4553 = vshll.u32 %v3937, 16
      %v4555 = vrot.slane %v4553, 3
      %v4556 = vor.u32 %v4552, %v4555
      %v4557 = vsel %vm4442, %v4538, %v4556
      %v4559 = vshrl.u32 %v3938, 16
      %v4561 = vrot.slane %v4559, 2
      %v4562 = vshll.u32 %v3938, 16
      %v4564 = vrot.slane %v4562, 3
      %v4565 = vor.u32 %v4561, %v4564
      %v4566 = vsel %vm4442, %v4547, %v4565
      %v4568 = vshrl.u32 %v3939, 16
      %v4570 = vrot.slane %v4568, 2
      %v4571 = vshll.u32 %v3939, 16
      %v4573 = vrot.slane %v4571, 3
      %v4574 = vor.u32 %v4570, %v4573
      %v4575 = vsel %vm4442, %v4556, %v4574
      %v4577 = vshrl.u32 %v3940, 16
      %v4579 = vrot.slane %v4577, 2
      %v4580 = vshll.u32 %v3940, 16
      %v4582 = vrot.slane %v4580, 3
      %v4583 = vor.u32 %v4579, %v4582
      %v4584 = vsel %vm4442, %v4565, %v4583
      %v4586 = vshrl.u32 %v3941, 16
      %v4588 = vrot.slane %v4586, 2
      %v4589 = vshll.u32 %v3941, 16
      %v4591 = vrot.slane %v4589, 3
      %v4592 = vor.u32 %v4588, %v4591
      %v4593 = vsel %vm4442, %v4574, %v4592
      %v4595 = vshrl.u32 %v3942, 16
      %v4597 = vrot.slane %v4595, 2
      %v4598 = vshll.u32 %v3942, 16
      %v4600 = vrot.slane %v4598, 3
      %v4601 = vor.u32 %v4597, %v4600
      %v4602 = vsel %vm4442, %v4583, %v4601
      %v4604 = vshrl.u32 %v3943, 16
      %v4606 = vrot.slane %v4604, 2
      %v4607 = vshll.u32 %v3943, 16
      %v4609 = vrot.slane %v4607, 3
      %v4610 = vor.u32 %v4606, %v4609
      %v4611 = vsel %vm4442, %v4592, %v4610
      %v4613 = vshrl.u32 %v3944, 16
      %v4615 = vrot.slane %v4613, 2
      %v4616 = vshll.u32 %v3944, 16
      %v4618 = vrot.slane %v4616, 3
      %v4619 = vor.u32 %v4615, %v4618
      %v4620 = vsel %vm4442, %v4601, %v4619
      %v4622 = vshrl.u32 %v3945, 16
      %v4624 = vrot.slane %v4622, 2
      %v4625 = vshll.u32 %v3945, 16
      %v4627 = vrot.slane %v4625, 3
      %v4628 = vor.u32 %v4624, %v4627
      %v4629 = vsel %vm4442, %v4610, %v4628
      %v4631 = vshrl.u32 %v3946, 16
      %v4633 = vrot.slane %v4631, 2
      %v4634 = vshll.u32 %v3946, 16
      %v4636 = vrot.slane %v4634, 3
      %v4637 = vor.u32 %v4633, %v4636
      %v4638 = vsel %vm4442, %v4619, %v4637
      %v4640 = vshrl.u32 %v3947, 16
      %v4642 = vrot.slane %v4640, 2
      %v4643 = vshll.u32 %v3947, 16
      %v4645 = vrot.slane %v4643, 3
      %v4646 = vor.u32 %v4642, %v4645
      %v4647 = vsel %vm4442, %v4628, %v4646
      %v4649 = vshrl.u32 %v3948, 16
      %v4651 = vrot.slane %v4649, 2
      %v4652 = vshll.u32 %v3948, 16
      %v4654 = vrot.slane %v4652, 3
      %v4655 = vor.u32 %v4651, %v4654
      %v4656 = vsel %vm4442, %v4637, %v4655
      %v4658 = vshrl.u32 %v3949, 16
      %v4660 = vrot.slane %v4658, 2
      %v4661 = vshll.u32 %v3949, 16
      %v4663 = vrot.slane %v4661, 3
      %v4664 = vor.u32 %v4660, %v4663
      %v4665 = vsel %vm4442, %v4646, %v4664
      %v4667 = vshrl.u32 %v3950, 16
      %v4669 = vrot.slane %v4667, 2
      %v4670 = vshll.u32 %v3950, 16
      %v4672 = vrot.slane %v4670, 3
      %v4673 = vor.u32 %v4669, %v4672
      %v4674 = vsel %vm4442, %v4655, %v4673
      %v4676 = vshrl.u32 %v3951, 16
      %v4678 = vrot.slane %v4676, 2
      %v4679 = vshll.u32 %v3951, 16
      %v4681 = vrot.slane %v4679, 3
      %v4682 = vor.u32 %v4678, %v4681
      %v4683 = vsel %vm4442, %v4664, %v4682
      %v4685 = vshrl.u32 %v3952, 16
      %v4687 = vrot.slane %v4685, 2
      %v4688 = vshll.u32 %v3952, 16
      %v4690 = vrot.slane %v4688, 3
      %v4691 = vor.u32 %v4687, %v4690
      %v4692 = vsel %vm4442, %v4673, %v4691
      %v4694 = vshrl.u32 %v3953, 16
      %v4696 = vrot.slane %v4694, 2
      %v4697 = vshll.u32 %v3953, 16
      %v4699 = vrot.slane %v4697, 3
      %v4700 = vor.u32 %v4696, %v4699
      %v4701 = vsel %vm4442, %v4682, %v4700
      %v4703 = vshrl.u32 %v3954, 16
      %v4705 = vrot.slane %v4703, 2
      %v4706 = vshll.u32 %v3954, 16
      %v4708 = vrot.slane %v4706, 3
      %v4709 = vor.u32 %v4705, %v4708
      %v4710 = vsel %vm4442, %v4691, %v4709
      %v4712 = vshrl.u32 %v3955, 16
      %v4714 = vrot.slane %v4712, 2
      %v4715 = vshll.u32 %v3955, 16
      %v4717 = vrot.slane %v4715, 3
      %v4718 = vor.u32 %v4714, %v4717
      %v4719 = vsel %vm4442, %v4700, %v4718
      %v4721 = vshrl.u32 %v3956, 16
      %v4723 = vrot.slane %v4721, 2
      %v4724 = vshll.u32 %v3956, 16
      %v4726 = vrot.slane %v4724, 3
      %v4727 = vor.u32 %v4723, %v4726
      %v4728 = vsel %vm4442, %v4709, %v4727
      %v4730 = vshrl.u32 %v3957, 16
      %v4732 = vrot.slane %v4730, 2
      %v4733 = vshll.u32 %v3957, 16
      %v4735 = vrot.slane %v4733, 3
      %v4736 = vor.u32 %v4732, %v4735
      %v4737 = vsel %vm4442, %v4718, %v4736
      %v4739 = vshrl.u32 %v3958, 16
      %v4741 = vrot.slane %v4739, 2
      %v4742 = vshll.u32 %v3958, 16
      %v4744 = vrot.slane %v4742, 3
      %v4745 = vor.u32 %v4741, %v4744
      %v4746 = vsel %vm4442, %v4727, %v4745
      %v4748 = vshrl.u32 %v3959, 16
      %v4750 = vrot.slane %v4748, 2
      %v4751 = vshll.u32 %v3959, 16
      %v4753 = vrot.slane %v4751, 3
      %v4754 = vor.u32 %v4750, %v4753
      %v4755 = vsel %vm4442, %v4736, %v4754
      %v4757 = vshrl.u32 %v3960, 16
      %v4759 = vrot.slane %v4757, 2
      %v4760 = vshll.u32 %v3960, 16
      %v4762 = vrot.slane %v4760, 3
      %v4763 = vor.u32 %v4759, %v4762
      %v4764 = vsel %vm4442, %v4745, %v4763
      %v4766 = vshrl.u32 %v4440, 16
      %v4768 = vrot.slane %v4766, 2
      %v4769 = vshll.u32 %v4440, 16
      %v4771 = vrot.slane %v4769, 3
      %v4772 = vor.u32 %v4768, %v4771
      %v4773 = vsel %vm4442, %v4754, %v4772
      %v4775 = vshrl.u32 %v4441, 16
      %v4777 = vrot.slane %v4775, 2
      %v4778 = vshll.u32 %v4441, 16
      %v4780 = vrot.slane %v4778, 3
      %v4781 = vor.u32 %v4777, %v4780
      %v4782 = vsel %vm4442, %v4763, %v4781
      %v4851 = vunpack.c.l.b16 %v4405
      %v4852 = vunpack.c.l.b16 %v4406
      %v4853 = vunpack.c.l.b16 %v4407
      %v4854 = vunpack.c.l.b16 %v4408
      %v4855 = vunpack.c.l.b16 %v4409
      %v4856 = vunpack.c.l.b16 %v4410
      %v4857 = vunpack.c.l.b16 %v4411
      %v4858 = vunpack.c.l.b16 %v4412
      %v4859 = vunpack.c.l.b16 %v4413
      %v4860 = vunpack.c.l.b16 %v4414
      %v4861 = vunpack.c.l.b16 %v4415
      %v4862 = vunpack.c.l.b16 %v4416
      %v4863 = vunpack.c.l.b16 %v4417
      %v4864 = vunpack.c.l.b16 %v4418
      %v4865 = vunpack.c.l.b16 %v4419
      %v4866 = vunpack.c.l.b16 %v4420
      %v4867 = vunpack.c.l.b16 %v4421
      %v4868 = vunpack.c.l.b16 %v4422
      %v4869 = vunpack.c.l.b16 %v4423
      %v4870 = vunpack.c.l.b16 %v4424
      %v4871 = vunpack.c.l.b16 %v4425
      %v4872 = vunpack.c.l.b16 %v4426
      %v4873 = vunpack.c.l.b16 %v4427
      %v4874 = vunpack.c.l.b16 %v4428
      %v4875 = vunpack.c.l.b16 %v4429
      %v4876 = vunpack.c.l.b16 %v4430
      %v4877 = vunpack.c.l.b16 %v4431
      %v4878 = vunpack.c.l.b16 %v4432
      %v4879 = vunpack.c.l.b16 %v4433
      %v4880 = vunpack.c.l.b16 %v4434
      %v4881 = vunpack.c.l.b16 %v4435
      %v4882 = vunpack.c.l.b16 %v4436
      %v4883 = vpack.c.b16 %v4852, %v4851
      %v4884 = vpack.c.b16 %v4854, %v4853
      %v4885 = vpack.c.b16 %v4856, %v4855
      %v4886 = vpack.c.b16 %v4858, %v4857
      %v4887 = vpack.c.b16 %v4860, %v4859
      %v4888 = vpack.c.b16 %v4862, %v4861
      %v4889 = vpack.c.b16 %v4864, %v4863
      %v4890 = vpack.c.b16 %v4866, %v4865
      %v4891 = vpack.c.b16 %v4868, %v4867
      %v4892 = vpack.c.b16 %v4870, %v4869
      %v4893 = vpack.c.b16 %v4872, %v4871
      %v4894 = vpack.c.b16 %v4874, %v4873
      %v4895 = vpack.c.b16 %v4876, %v4875
      %v4896 = vpack.c.b16 %v4878, %v4877
      %v4897 = vpack.c.b16 %v4880, %v4879
      %v4898 = vpack.c.b16 %v4882, %v4881
      %4915 = vmatpush.bf16.msra.mxu0 %v4890
      %4916 = vmatpush.bf16.msra.mxu0 %v4889
      %4917 = vmatpush.bf16.msra.mxu0 %v4888
      %4918 = vmatpush.bf16.msra.mxu0 %v4887
      %4919 = vmatpush.bf16.msra.mxu0 %v4886
      %4920 = vmatpush.bf16.msra.mxu0 %v4885
      %4921 = vmatpush.bf16.msra.mxu0 %v4884
      %4922 = vmatpush.bf16.msra.mxu0 %v4883
      %4923 = vmatmul.bf16.gmra.mxu0 %v4459
      %v4924 = vpop.f32.mrf.mxu0
      %v4925 = vadd.f32 0.0, %v4924
      %v4926 = vpop.f32.mrf.mxu0
      %v4927 = vadd.f32 0.0, %v4926
      %4928 = vmatmul.bf16.gmra.mxu0 %v4485
      %v4929 = vpop.f32.mrf.mxu0
      %v4930 = vadd.f32 0.0, %v4929
      %v4931 = vpop.f32.mrf.mxu0
      %v4932 = vadd.f32 0.0, %v4931
      %4933 = vmatmul.bf16.gmra.mxu0 %v4503
      %v4934 = vpop.f32.mrf.mxu0
      %v4935 = vadd.f32 0.0, %v4934
      %v4936 = vpop.f32.mrf.mxu0
      %v4937 = vadd.f32 0.0, %v4936
      %4938 = vmatmul.bf16.gmra.mxu0 %v4521
      %v4939 = vpop.f32.mrf.mxu0
      %v4940 = vadd.f32 0.0, %v4939
      %v4941 = vpop.f32.mrf.mxu0
      %v4942 = vadd.f32 0.0, %v4941
      %4943 = vmatmul.bf16.gmra.mxu0 %v4539
      %v4944 = vpop.f32.mrf.mxu0
      %v4945 = vadd.f32 0.0, %v4944
      %v4946 = vpop.f32.mrf.mxu0
      %v4947 = vadd.f32 0.0, %v4946
      %4948 = vmatmul.bf16.gmra.mxu0 %v4557
      %v4949 = vpop.f32.mrf.mxu0
      %v4950 = vadd.f32 0.0, %v4949
      %v4951 = vpop.f32.mrf.mxu0
      %v4952 = vadd.f32 0.0, %v4951
      %4953 = vmatmul.bf16.gmra.mxu0 %v4575
      %v4954 = vpop.f32.mrf.mxu0
      %v4955 = vadd.f32 0.0, %v4954
      %v4956 = vpop.f32.mrf.mxu0
      %v4957 = vadd.f32 0.0, %v4956
      %4958 = vmatmul.bf16.gmra.mxu0 %v4593
      %v4959 = vpop.f32.mrf.mxu0
      %v4960 = vadd.f32 0.0, %v4959
      %v4961 = vpop.f32.mrf.mxu0
      %v4962 = vadd.f32 0.0, %v4961
      %4963 = vmatmul.bf16.gmra.mxu0 %v4611
      %v4964 = vpop.f32.mrf.mxu0
      %v4965 = vadd.f32 0.0, %v4964
      %v4966 = vpop.f32.mrf.mxu0
      %v4967 = vadd.f32 0.0, %v4966
      %4968 = vmatmul.bf16.gmra.mxu0 %v4629
      %v4969 = vpop.f32.mrf.mxu0
      %v4970 = vadd.f32 0.0, %v4969
      %v4971 = vpop.f32.mrf.mxu0
      %v4972 = vadd.f32 0.0, %v4971
      %4973 = vmatmul.bf16.gmra.mxu0 %v4647
      %v4974 = vpop.f32.mrf.mxu0
      %v4975 = vadd.f32 0.0, %v4974
      %v4976 = vpop.f32.mrf.mxu0
      %v4977 = vadd.f32 0.0, %v4976
      %4978 = vmatmul.bf16.gmra.mxu0 %v4665
      %v4979 = vpop.f32.mrf.mxu0
      %v4980 = vadd.f32 0.0, %v4979
      %v4981 = vpop.f32.mrf.mxu0
      %v4982 = vadd.f32 0.0, %v4981
      %4983 = vmatmul.bf16.gmra.mxu0 %v4683
      %v4984 = vpop.f32.mrf.mxu0
      %v4985 = vadd.f32 0.0, %v4984
      %v4986 = vpop.f32.mrf.mxu0
      %v4987 = vadd.f32 0.0, %v4986
      %4988 = vmatmul.bf16.gmra.mxu0 %v4701
      %v4989 = vpop.f32.mrf.mxu0
      %v4990 = vadd.f32 0.0, %v4989
      %v4991 = vpop.f32.mrf.mxu0
      %v4992 = vadd.f32 0.0, %v4991
      %4993 = vmatmul.bf16.gmra.mxu0 %v4719
      %v4994 = vpop.f32.mrf.mxu0
      %v4995 = vadd.f32 0.0, %v4994
      %v4996 = vpop.f32.mrf.mxu0
      %v4997 = vadd.f32 0.0, %v4996
      %4998 = vmatmul.bf16.gmra.mxu0 %v4737
      %v4999 = vpop.f32.mrf.mxu0
      %v5000 = vadd.f32 0.0, %v4999
      %v5001 = vpop.f32.mrf.mxu0
      %v5002 = vadd.f32 0.0, %v5001
      %5003 = vmatmul.bf16.gmra.mxu0 %v4755
      %v5004 = vpop.f32.mrf.mxu0
      %v5005 = vadd.f32 0.0, %v5004
      %v5006 = vpop.f32.mrf.mxu0
      %v5007 = vadd.f32 0.0, %v5006
      %5008 = vmatmul.bf16.gmra.mxu0 %v4773
      %v5009 = vpop.f32.mrf.mxu0
      %v5010 = vadd.f32 0.0, %v5009
      %v5011 = vpop.f32.mrf.mxu0
      %v5012 = vadd.f32 0.0, %v5011
      %5013 = vdwg.mxu0
      %5014 = vmatpush.bf16.msra.mxu0 %v4898
      %5015 = vmatpush.bf16.msra.mxu0 %v4897
      %5016 = vmatpush.bf16.msra.mxu0 %v4896
      %5017 = vmatpush.bf16.msra.mxu0 %v4895
      %5018 = vmatpush.bf16.msra.mxu0 %v4894
      %5019 = vmatpush.bf16.msra.mxu0 %v4893
      %5020 = vmatpush.bf16.msra.mxu0 %v4892
      %5021 = vmatpush.bf16.msra.mxu0 %v4891
      %5022 = vmatmul.bf16.gmra.mxu0 %v4476
      %v5023 = vpop.f32.mrf.mxu0
      %v5024 = vadd.f32 %v4925, %v5023
      %v5025 = vpop.f32.mrf.mxu0
      %v5026 = vadd.f32 %v4927, %v5025
      %5027 = vmatmul.bf16.gmra.mxu0 %v4494
      %v5028 = vpop.f32.mrf.mxu0
      %v5029 = vadd.f32 %v4930, %v5028
      %v5030 = vpop.f32.mrf.mxu0
      %v5031 = vadd.f32 %v4932, %v5030
      %5032 = vmatmul.bf16.gmra.mxu0 %v4512
      %v5033 = vpop.f32.mrf.mxu0
      %v5034 = vadd.f32 %v4935, %v5033
      %v5035 = vpop.f32.mrf.mxu0
      %v5036 = vadd.f32 %v4937, %v5035
      %5037 = vmatmul.bf16.gmra.mxu0 %v4530
      %v5038 = vpop.f32.mrf.mxu0
      %v5039 = vadd.f32 %v4940, %v5038
      %v5040 = vpop.f32.mrf.mxu0
      %v5041 = vadd.f32 %v4942, %v5040
      %5042 = vmatmul.bf16.gmra.mxu0 %v4548
      %v5043 = vpop.f32.mrf.mxu0
      %v5044 = vadd.f32 %v4945, %v5043
      %v5045 = vpop.f32.mrf.mxu0
      %v5046 = vadd.f32 %v4947, %v5045
      %5047 = vmatmul.bf16.gmra.mxu0 %v4566
      %v5048 = vpop.f32.mrf.mxu0
      %v5049 = vadd.f32 %v4950, %v5048
      %v5050 = vpop.f32.mrf.mxu0
      %v5051 = vadd.f32 %v4952, %v5050
      %5052 = vmatmul.bf16.gmra.mxu0 %v4584
      %v5053 = vpop.f32.mrf.mxu0
      %v5054 = vadd.f32 %v4955, %v5053
      %v5055 = vpop.f32.mrf.mxu0
      %v5056 = vadd.f32 %v4957, %v5055
      %5057 = vmatmul.bf16.gmra.mxu0 %v4602
      %v5058 = vpop.f32.mrf.mxu0
      %v5059 = vadd.f32 %v4960, %v5058
      %v5060 = vpop.f32.mrf.mxu0
      %v5061 = vadd.f32 %v4962, %v5060
      %5062 = vmatmul.bf16.gmra.mxu0 %v4620
      %v5063 = vpop.f32.mrf.mxu0
      %v5064 = vadd.f32 %v4965, %v5063
      %v5065 = vpop.f32.mrf.mxu0
      %v5066 = vadd.f32 %v4967, %v5065
      %5067 = vmatmul.bf16.gmra.mxu0 %v4638
      %v5068 = vpop.f32.mrf.mxu0
      %v5069 = vadd.f32 %v4970, %v5068
      %v5070 = vpop.f32.mrf.mxu0
      %v5071 = vadd.f32 %v4972, %v5070
      %5072 = vmatmul.bf16.gmra.mxu0 %v4656
      %v5073 = vpop.f32.mrf.mxu0
      %v5074 = vadd.f32 %v4975, %v5073
      %v5075 = vpop.f32.mrf.mxu0
      %v5076 = vadd.f32 %v4977, %v5075
      %5077 = vmatmul.bf16.gmra.mxu0 %v4674
      %v5078 = vpop.f32.mrf.mxu0
      %v5079 = vadd.f32 %v4980, %v5078
      %v5080 = vpop.f32.mrf.mxu0
      %v5081 = vadd.f32 %v4982, %v5080
      %5082 = vmatmul.bf16.gmra.mxu0 %v4692
      %v5083 = vpop.f32.mrf.mxu0
      %v5084 = vadd.f32 %v4985, %v5083
      %v5085 = vpop.f32.mrf.mxu0
      %v5086 = vadd.f32 %v4987, %v5085
      %5087 = vmatmul.bf16.gmra.mxu0 %v4710
      %v5088 = vpop.f32.mrf.mxu0
      %v5089 = vadd.f32 %v4990, %v5088
      %v5090 = vpop.f32.mrf.mxu0
      %v5091 = vadd.f32 %v4992, %v5090
      %5092 = vmatmul.bf16.gmra.mxu0 %v4728
      %v5093 = vpop.f32.mrf.mxu0
      %v5094 = vadd.f32 %v4995, %v5093
      %v5095 = vpop.f32.mrf.mxu0
      %v5096 = vadd.f32 %v4997, %v5095
      %5097 = vmatmul.bf16.gmra.mxu0 %v4746
      %v5098 = vpop.f32.mrf.mxu0
      %v5099 = vadd.f32 %v5000, %v5098
      %v5100 = vpop.f32.mrf.mxu0
      %v5101 = vadd.f32 %v5002, %v5100
      %5102 = vmatmul.bf16.gmra.mxu0 %v4764
      %v5103 = vpop.f32.mrf.mxu0
      %v5104 = vadd.f32 %v5005, %v5103
      %v5105 = vpop.f32.mrf.mxu0
      %v5106 = vadd.f32 %v5007, %v5105
      %5107 = vmatmul.bf16.gmra.mxu0 %v4782
      %v5108 = vpop.f32.mrf.mxu0
      %v5109 = vadd.f32 %v5010, %v5108
      %v5110 = vpop.f32.mrf.mxu0
      %v5111 = vadd.f32 %v5012, %v5110
      %5112 = vdwg.mxu0
      %v5113 = vadd.f32 %v4367, %v5024
      %v5114 = vadd.f32 %v4368, %v5026
      %v5115 = vadd.f32 %v4369, %v5029
      %v5116 = vadd.f32 %v4370, %v5031
      %v5117 = vadd.f32 %v4371, %v5034
      %v5118 = vadd.f32 %v4372, %v5036
      %v5119 = vadd.f32 %v4373, %v5039
      %v5120 = vadd.f32 %v4374, %v5041
      %v5121 = vadd.f32 %v4375, %v5044
      %v5122 = vadd.f32 %v4376, %v5046
      %v5123 = vadd.f32 %v4377, %v5049
      %v5124 = vadd.f32 %v4378, %v5051
      %v5125 = vadd.f32 %v4379, %v5054
      %v5126 = vadd.f32 %v4380, %v5056
      %v5127 = vadd.f32 %v4381, %v5059
      %v5128 = vadd.f32 %v4382, %v5061
      %v5129 = vadd.f32 %v4383, %v5064
      %v5130 = vadd.f32 %v4384, %v5066
      %v5131 = vadd.f32 %v4385, %v5069
      %v5132 = vadd.f32 %v4386, %v5071
      %v5133 = vadd.f32 %v4387, %v5074
      %v5134 = vadd.f32 %v4388, %v5076
      %v5135 = vadd.f32 %v4389, %v5079
      %v5136 = vadd.f32 %v4390, %v5081
      %v5137 = vadd.f32 %v4391, %v5084
      %v5138 = vadd.f32 %v4392, %v5086
      %v5139 = vadd.f32 %v4393, %v5089
      %v5140 = vadd.f32 %v4394, %v5091
      %v5141 = vadd.f32 %v4395, %v5094
      %v5142 = vadd.f32 %v4396, %v5096
      %v5143 = vadd.f32 %v4397, %v5099
      %v5144 = vadd.f32 %v4398, %v5101
      %v5145 = vadd.f32 %v4399, %v5104
      %v5146 = vadd.f32 %v4400, %v5106
      %v5147 = vadd.f32 %v4401, %v5109
      %v5148 = vadd.f32 %v4402, %v5111
      %v5149 = vld [vmem:[%s165 + $0x20] sm:$0x88]
      %s5150 = scalar_lea.vmem %s1, 1024
      %v5151 = vld [vmem:[%s5150] sm:$0xf]
      %v5152 = vld [vmem:[%s5150 + $0x4] sm:$0xf]
      %v5153 = vld [vmem:[%s5150 + $0x8] sm:$0xf]
      %v5154 = vld [vmem:[%s5150 + $0xc] sm:$0xf]
      %v5155 = vld [vmem:[%s5150 + $0x10] sm:$0xf]
      %v5156 = vld [vmem:[%s5150 + $0x14] sm:$0xf]
      %v5157 = vld [vmem:[%s5150 + $0x18] sm:$0xf]
      %v5158 = vld [vmem:[%s5150 + $0x1c] sm:$0xf]
      %v5159 = vld [vmem:[%s5150 + $0x20] sm:$0xf]
      %v5160 = vld [vmem:[%s5150 + $0x24] sm:$0xf]
      %v5161 = vld [vmem:[%s5150 + $0x28] sm:$0xf]
      %v5162 = vld [vmem:[%s5150 + $0x2c] sm:$0xf]
      %v5163 = vld [vmem:[%s5150 + $0x30] sm:$0xf]
      %v5164 = vld [vmem:[%s5150 + $0x34] sm:$0xf]
      %v5165 = vld [vmem:[%s5150 + $0x38] sm:$0xf]
      %v5166 = vld [vmem:[%s5150 + $0x3c] sm:$0xf]
      %v5167 = vld [vmem:[%s5150 + $0x40] sm:$0xf]
      %v5168 = vld [vmem:[%s5150 + $0x44] sm:$0xf]
      %v5169 = vld [vmem:[%s5150 + $0x48] sm:$0xf]
      %v5170 = vld [vmem:[%s5150 + $0x4c] sm:$0xf]
      %v5171 = vld [vmem:[%s5150 + $0x50] sm:$0xf]
      %v5172 = vld [vmem:[%s5150 + $0x54] sm:$0xf]
      %v5173 = vld [vmem:[%s5150 + $0x58] sm:$0xf]
      %v5174 = vld [vmem:[%s5150 + $0x5c] sm:$0xf]
      %v5175 = vld [vmem:[%s5150 + $0x60] sm:$0xf]
      %v5176 = vld [vmem:[%s5150 + $0x64] sm:$0xf]
      %v5177 = vld [vmem:[%s5150 + $0x68] sm:$0xf]
      %v5178 = vld [vmem:[%s5150 + $0x6c] sm:$0xf]
      %v5179 = vld [vmem:[%s5150 + $0x70] sm:$0xf]
      %v5180 = vld [vmem:[%s5150 + $0x74] sm:$0xf]
      %v5181 = vld [vmem:[%s5150 + $0x78] sm:$0xf]
      %v5182 = vld [vmem:[%s5150 + $0x7c] sm:$0xf]
      %v5184 = vunpack.c.l.b16 %v5149
      %v5185 = vunpack.c.h.b16 %v5149
      %v5186 = vpack.c.b16 %v3853, %v5184
      %v5187 = vpack.c.b16 %v3854, %v5185
      %vm5188 = vcmask 1044480
      %v5189 = vrot.slane %v5186, 3
      %v5190 = vrot.slane %v3927, 3
      %v5191 = vsel %vm5188, %v5189, %v5190
      %v5192 = vrot.slane %v5187, 3
      %v5193 = vrot.slane %v3928, 3
      %v5194 = vsel %vm5188, %v5192, %v5193
      %v5195 = vrot.slane %v3929, 3
      %v5196 = vsel %vm5188, %v5190, %v5195
      %v5197 = vrot.slane %v3930, 3
      %v5198 = vsel %vm5188, %v5193, %v5197
      %v5199 = vrot.slane %v3931, 3
      %v5200 = vsel %vm5188, %v5195, %v5199
      %v5201 = vrot.slane %v3932, 3
      %v5202 = vsel %vm5188, %v5197, %v5201
      %v5203 = vrot.slane %v3933, 3
      %v5204 = vsel %vm5188, %v5199, %v5203
      %v5205 = vrot.slane %v3934, 3
      %v5206 = vsel %vm5188, %v5201, %v5205
      %v5207 = vrot.slane %v3935, 3
      %v5208 = vsel %vm5188, %v5203, %v5207
      %v5209 = vrot.slane %v3936, 3
      %v5210 = vsel %vm5188, %v5205, %v5209
      %v5211 = vrot.slane %v3937, 3
      %v5212 = vsel %vm5188, %v5207, %v5211
      %v5213 = vrot.slane %v3938, 3
      %v5214 = vsel %vm5188, %v5209, %v5213
      %v5215 = vrot.slane %v3939, 3
      %v5216 = vsel %vm5188, %v5211, %v5215
      %v5217 = vrot.slane %v3940, 3
      %v5218 = vsel %vm5188, %v5213, %v5217
      %v5219 = vrot.slane %v3941, 3
      %v5220 = vsel %vm5188, %v5215, %v5219
      %v5221 = vrot.slane %v3942, 3
      %v5222 = vsel %vm5188, %v5217, %v5221
      %v5223 = vrot.slane %v3943, 3
      %v5224 = vsel %vm5188, %v5219, %v5223
      %v5225 = vrot.slane %v3944, 3
      %v5226 = vsel %vm5188, %v5221, %v5225
      %v5227 = vrot.slane %v3945, 3
      %v5228 = vsel %vm5188, %v5223, %v5227
      %v5229 = vrot.slane %v3946, 3
      %v5230 = vsel %vm5188, %v5225, %v5229
      %v5231 = vrot.slane %v3947, 3
      %v5232 = vsel %vm5188, %v5227, %v5231
      %v5233 = vrot.slane %v3948, 3
      %v5234 = vsel %vm5188, %v5229, %v5233
      %v5235 = vrot.slane %v3949, 3
      %v5236 = vsel %vm5188, %v5231, %v5235
      %v5237 = vrot.slane %v3950, 3
      %v5238 = vsel %vm5188, %v5233, %v5237
      %v5239 = vrot.slane %v3951, 3
      %v5240 = vsel %vm5188, %v5235, %v5239
      %v5241 = vrot.slane %v3952, 3
      %v5242 = vsel %vm5188, %v5237, %v5241
      %v5243 = vrot.slane %v3953, 3
      %v5244 = vsel %vm5188, %v5239, %v5243
      %v5245 = vrot.slane %v3954, 3
      %v5246 = vsel %vm5188, %v5241, %v5245
      %v5247 = vrot.slane %v3955, 3
      %v5248 = vsel %vm5188, %v5243, %v5247
      %v5249 = vrot.slane %v3956, 3
      %v5250 = vsel %vm5188, %v5245, %v5249
      %v5251 = vrot.slane %v3957, 3
      %v5252 = vsel %vm5188, %v5247, %v5251
      %v5253 = vrot.slane %v3958, 3
      %v5254 = vsel %vm5188, %v5249, %v5253
      %v5255 = vrot.slane %v3959, 3
      %v5256 = vsel %vm5188, %v5251, %v5255
      %v5257 = vrot.slane %v3960, 3
      %v5258 = vsel %vm5188, %v5253, %v5257
      %v5259 = vrot.slane %v4440, 3
      %v5260 = vsel %vm5188, %v5255, %v5259
      %v5261 = vrot.slane %v4441, 3
      %v5262 = vsel %vm5188, %v5257, %v5261
      %v5331 = vunpack.c.l.b16 %v5151
      %v5332 = vunpack.c.l.b16 %v5152
      %v5333 = vunpack.c.l.b16 %v5153
      %v5334 = vunpack.c.l.b16 %v5154
      %v5335 = vunpack.c.l.b16 %v5155
      %v5336 = vunpack.c.l.b16 %v5156
      %v5337 = vunpack.c.l.b16 %v5157
      %v5338 = vunpack.c.l.b16 %v5158
      %v5339 = vunpack.c.l.b16 %v5159
      %v5340 = vunpack.c.l.b16 %v5160
      %v5341 = vunpack.c.l.b16 %v5161
      %v5342 = vunpack.c.l.b16 %v5162
      %v5343 = vunpack.c.l.b16 %v5163
      %v5344 = vunpack.c.l.b16 %v5164
      %v5345 = vunpack.c.l.b16 %v5165
      %v5346 = vunpack.c.l.b16 %v5166
      %v5347 = vunpack.c.l.b16 %v5167
      %v5348 = vunpack.c.l.b16 %v5168
      %v5349 = vunpack.c.l.b16 %v5169
      %v5350 = vunpack.c.l.b16 %v5170
      %v5351 = vunpack.c.l.b16 %v5171
      %v5352 = vunpack.c.l.b16 %v5172
      %v5353 = vunpack.c.l.b16 %v5173
      %v5354 = vunpack.c.l.b16 %v5174
      %v5355 = vunpack.c.l.b16 %v5175
      %v5356 = vunpack.c.l.b16 %v5176
      %v5357 = vunpack.c.l.b16 %v5177
      %v5358 = vunpack.c.l.b16 %v5178
      %v5359 = vunpack.c.l.b16 %v5179
      %v5360 = vunpack.c.l.b16 %v5180
      %v5361 = vunpack.c.l.b16 %v5181
      %v5362 = vunpack.c.l.b16 %v5182
      %v5363 = vpack.c.b16 %v5332, %v5331
      %v5364 = vpack.c.b16 %v5334, %v5333
      %v5365 = vpack.c.b16 %v5336, %v5335
      %v5366 = vpack.c.b16 %v5338, %v5337
      %v5367 = vpack.c.b16 %v5340, %v5339
      %v5368 = vpack.c.b16 %v5342, %v5341
      %v5369 = vpack.c.b16 %v5344, %v5343
      %v5370 = vpack.c.b16 %v5346, %v5345
      %v5371 = vpack.c.b16 %v5348, %v5347
      %v5372 = vpack.c.b16 %v5350, %v5349
      %v5373 = vpack.c.b16 %v5352, %v5351
      %v5374 = vpack.c.b16 %v5354, %v5353
      %v5375 = vpack.c.b16 %v5356, %v5355
      %v5376 = vpack.c.b16 %v5358, %v5357
      %v5377 = vpack.c.b16 %v5360, %v5359
      %v5378 = vpack.c.b16 %v5362, %v5361
      %5395 = vmatpush.bf16.msra.mxu0 %v5370
      %5396 = vmatpush.bf16.msra.mxu0 %v5369
      %5397 = vmatpush.bf16.msra.mxu0 %v5368
      %5398 = vmatpush.bf16.msra.mxu0 %v5367
      %5399 = vmatpush.bf16.msra.mxu0 %v5366
      %5400 = vmatpush.bf16.msra.mxu0 %v5365
      %5401 = vmatpush.bf16.msra.mxu0 %v5364
      %5402 = vmatpush.bf16.msra.mxu0 %v5363
      %5403 = vmatmul.bf16.gmra.mxu0 %v5191
      %v5404 = vpop.f32.mrf.mxu0
      %v5405 = vadd.f32 0.0, %v5404
      %v5406 = vpop.f32.mrf.mxu0
      %v5407 = vadd.f32 0.0, %v5406
      %5408 = vmatmul.bf16.gmra.mxu0 %v5196
      %v5409 = vpop.f32.mrf.mxu0
      %v5410 = vadd.f32 0.0, %v5409
      %v5411 = vpop.f32.mrf.mxu0
      %v5412 = vadd.f32 0.0, %v5411
      %5413 = vmatmul.bf16.gmra.mxu0 %v5200
      %v5414 = vpop.f32.mrf.mxu0
      %v5415 = vadd.f32 0.0, %v5414
      %v5416 = vpop.f32.mrf.mxu0
      %v5417 = vadd.f32 0.0, %v5416
      %5418 = vmatmul.bf16.gmra.mxu0 %v5204
      %v5419 = vpop.f32.mrf.mxu0
      %v5420 = vadd.f32 0.0, %v5419
      %v5421 = vpop.f32.mrf.mxu0
      %v5422 = vadd.f32 0.0, %v5421
      %5423 = vmatmul.bf16.gmra.mxu0 %v5208
      %v5424 = vpop.f32.mrf.mxu0
      %v5425 = vadd.f32 0.0, %v5424
      %v5426 = vpop.f32.mrf.mxu0
      %v5427 = vadd.f32 0.0, %v5426
      %5428 = vmatmul.bf16.gmra.mxu0 %v5212
      %v5429 = vpop.f32.mrf.mxu0
      %v5430 = vadd.f32 0.0, %v5429
      %v5431 = vpop.f32.mrf.mxu0
      %v5432 = vadd.f32 0.0, %v5431
      %5433 = vmatmul.bf16.gmra.mxu0 %v5216
      %v5434 = vpop.f32.mrf.mxu0
      %v5435 = vadd.f32 0.0, %v5434
      %v5436 = vpop.f32.mrf.mxu0
      %v5437 = vadd.f32 0.0, %v5436
      %5438 = vmatmul.bf16.gmra.mxu0 %v5220
      %v5439 = vpop.f32.mrf.mxu0
      %v5440 = vadd.f32 0.0, %v5439
      %v5441 = vpop.f32.mrf.mxu0
      %v5442 = vadd.f32 0.0, %v5441
      %5443 = vmatmul.bf16.gmra.mxu0 %v5224
      %v5444 = vpop.f32.mrf.mxu0
      %v5445 = vadd.f32 0.0, %v5444
      %v5446 = vpop.f32.mrf.mxu0
      %v5447 = vadd.f32 0.0, %v5446
      %5448 = vmatmul.bf16.gmra.mxu0 %v5228
      %v5449 = vpop.f32.mrf.mxu0
      %v5450 = vadd.f32 0.0, %v5449
      %v5451 = vpop.f32.mrf.mxu0
      %v5452 = vadd.f32 0.0, %v5451
      %5453 = vmatmul.bf16.gmra.mxu0 %v5232
      %v5454 = vpop.f32.mrf.mxu0
      %v5455 = vadd.f32 0.0, %v5454
      %v5456 = vpop.f32.mrf.mxu0
      %v5457 = vadd.f32 0.0, %v5456
      %5458 = vmatmul.bf16.gmra.mxu0 %v5236
      %v5459 = vpop.f32.mrf.mxu0
      %v5460 = vadd.f32 0.0, %v5459
      %v5461 = vpop.f32.mrf.mxu0
      %v5462 = vadd.f32 0.0, %v5461
      %5463 = vmatmul.bf16.gmra.mxu0 %v5240
      %v5464 = vpop.f32.mrf.mxu0
      %v5465 = vadd.f32 0.0, %v5464
      %v5466 = vpop.f32.mrf.mxu0
      %v5467 = vadd.f32 0.0, %v5466
      %5468 = vmatmul.bf16.gmra.mxu0 %v5244
      %v5469 = vpop.f32.mrf.mxu0
      %v5470 = vadd.f32 0.0, %v5469
      %v5471 = vpop.f32.mrf.mxu0
      %v5472 = vadd.f32 0.0, %v5471
      %5473 = vmatmul.bf16.gmra.mxu0 %v5248
      %v5474 = vpop.f32.mrf.mxu0
      %v5475 = vadd.f32 0.0, %v5474
      %v5476 = vpop.f32.mrf.mxu0
      %v5477 = vadd.f32 0.0, %v5476
      %5478 = vmatmul.bf16.gmra.mxu0 %v5252
      %v5479 = vpop.f32.mrf.mxu0
      %v5480 = vadd.f32 0.0, %v5479
      %v5481 = vpop.f32.mrf.mxu0
      %v5482 = vadd.f32 0.0, %v5481
      %5483 = vmatmul.bf16.gmra.mxu0 %v5256
      %v5484 = vpop.f32.mrf.mxu0
      %v5485 = vadd.f32 0.0, %v5484
      %v5486 = vpop.f32.mrf.mxu0
      %v5487 = vadd.f32 0.0, %v5486
      %5488 = vmatmul.bf16.gmra.mxu0 %v5260
      %v5489 = vpop.f32.mrf.mxu0
      %v5490 = vadd.f32 0.0, %v5489
      %v5491 = vpop.f32.mrf.mxu0
      %v5492 = vadd.f32 0.0, %v5491
      %5493 = vdwg.mxu0
      %5494 = vmatpush.bf16.msra.mxu0 %v5378
      %5495 = vmatpush.bf16.msra.mxu0 %v5377
      %5496 = vmatpush.bf16.msra.mxu0 %v5376
      %5497 = vmatpush.bf16.msra.mxu0 %v5375
      %5498 = vmatpush.bf16.msra.mxu0 %v5374
      %5499 = vmatpush.bf16.msra.mxu0 %v5373
      %5500 = vmatpush.bf16.msra.mxu0 %v5372
      %5501 = vmatpush.bf16.msra.mxu0 %v5371
      %5502 = vmatmul.bf16.gmra.mxu0 %v5194
      %v5503 = vpop.f32.mrf.mxu0
      %v5504 = vadd.f32 %v5405, %v5503
      %v5505 = vpop.f32.mrf.mxu0
      %v5506 = vadd.f32 %v5407, %v5505
      %5507 = vmatmul.bf16.gmra.mxu0 %v5198
      %v5508 = vpop.f32.mrf.mxu0
      %v5509 = vadd.f32 %v5410, %v5508
      %v5510 = vpop.f32.mrf.mxu0
      %v5511 = vadd.f32 %v5412, %v5510
      %5512 = vmatmul.bf16.gmra.mxu0 %v5202
      %v5513 = vpop.f32.mrf.mxu0
      %v5514 = vadd.f32 %v5415, %v5513
      %v5515 = vpop.f32.mrf.mxu0
      %v5516 = vadd.f32 %v5417, %v5515
      %5517 = vmatmul.bf16.gmra.mxu0 %v5206
      %v5518 = vpop.f32.mrf.mxu0
      %v5519 = vadd.f32 %v5420, %v5518
      %v5520 = vpop.f32.mrf.mxu0
      %v5521 = vadd.f32 %v5422, %v5520
      %5522 = vmatmul.bf16.gmra.mxu0 %v5210
      %v5523 = vpop.f32.mrf.mxu0
      %v5524 = vadd.f32 %v5425, %v5523
      %v5525 = vpop.f32.mrf.mxu0
      %v5526 = vadd.f32 %v5427, %v5525
      %5527 = vmatmul.bf16.gmra.mxu0 %v5214
      %v5528 = vpop.f32.mrf.mxu0
      %v5529 = vadd.f32 %v5430, %v5528
      %v5530 = vpop.f32.mrf.mxu0
      %v5531 = vadd.f32 %v5432, %v5530
      %5532 = vmatmul.bf16.gmra.mxu0 %v5218
      %v5533 = vpop.f32.mrf.mxu0
      %v5534 = vadd.f32 %v5435, %v5533
      %v5535 = vpop.f32.mrf.mxu0
      %v5536 = vadd.f32 %v5437, %v5535
      %5537 = vmatmul.bf16.gmra.mxu0 %v5222
      %v5538 = vpop.f32.mrf.mxu0
      %v5539 = vadd.f32 %v5440, %v5538
      %v5540 = vpop.f32.mrf.mxu0
      %v5541 = vadd.f32 %v5442, %v5540
      %5542 = vmatmul.bf16.gmra.mxu0 %v5226
      %v5543 = vpop.f32.mrf.mxu0
      %v5544 = vadd.f32 %v5445, %v5543
      %v5545 = vpop.f32.mrf.mxu0
      %v5546 = vadd.f32 %v5447, %v5545
      %5547 = vmatmul.bf16.gmra.mxu0 %v5230
      %v5548 = vpop.f32.mrf.mxu0
      %v5549 = vadd.f32 %v5450, %v5548
      %v5550 = vpop.f32.mrf.mxu0
      %v5551 = vadd.f32 %v5452, %v5550
      %5552 = vmatmul.bf16.gmra.mxu0 %v5234
      %v5553 = vpop.f32.mrf.mxu0
      %v5554 = vadd.f32 %v5455, %v5553
      %v5555 = vpop.f32.mrf.mxu0
      %v5556 = vadd.f32 %v5457, %v5555
      %5557 = vmatmul.bf16.gmra.mxu0 %v5238
      %v5558 = vpop.f32.mrf.mxu0
      %v5559 = vadd.f32 %v5460, %v5558
      %v5560 = vpop.f32.mrf.mxu0
      %v5561 = vadd.f32 %v5462, %v5560
      %5562 = vmatmul.bf16.gmra.mxu0 %v5242
      %v5563 = vpop.f32.mrf.mxu0
      %v5564 = vadd.f32 %v5465, %v5563
      %v5565 = vpop.f32.mrf.mxu0
      %v5566 = vadd.f32 %v5467, %v5565
      %5567 = vmatmul.bf16.gmra.mxu0 %v5246
      %v5568 = vpop.f32.mrf.mxu0
      %v5569 = vadd.f32 %v5470, %v5568
      %v5570 = vpop.f32.mrf.mxu0
      %v5571 = vadd.f32 %v5472, %v5570
      %5572 = vmatmul.bf16.gmra.mxu0 %v5250
      %v5573 = vpop.f32.mrf.mxu0
      %v5574 = vadd.f32 %v5475, %v5573
      %v5575 = vpop.f32.mrf.mxu0
      %v5576 = vadd.f32 %v5477, %v5575
      %5577 = vmatmul.bf16.gmra.mxu0 %v5254
      %v5578 = vpop.f32.mrf.mxu0
      %v5579 = vadd.f32 %v5480, %v5578
      %v5580 = vpop.f32.mrf.mxu0
      %v5581 = vadd.f32 %v5482, %v5580
      %5582 = vmatmul.bf16.gmra.mxu0 %v5258
      %v5583 = vpop.f32.mrf.mxu0
      %v5584 = vadd.f32 %v5485, %v5583
      %v5585 = vpop.f32.mrf.mxu0
      %v5586 = vadd.f32 %v5487, %v5585
      %5587 = vmatmul.bf16.gmra.mxu0 %v5262
      %v5588 = vpop.f32.mrf.mxu0
      %v5589 = vadd.f32 %v5490, %v5588
      %v5590 = vpop.f32.mrf.mxu0
      %v5591 = vadd.f32 %v5492, %v5590
      %5592 = vdwg.mxu0
      %v5593 = vadd.f32 %v5113, %v5504
      %v5594 = vadd.f32 %v5114, %v5506
      %v5595 = vadd.f32 %v5115, %v5509
      %v5596 = vadd.f32 %v5116, %v5511
      %v5597 = vadd.f32 %v5117, %v5514
      %v5598 = vadd.f32 %v5118, %v5516
      %v5599 = vadd.f32 %v5119, %v5519
      %v5600 = vadd.f32 %v5120, %v5521
      %v5601 = vadd.f32 %v5121, %v5524
      %v5602 = vadd.f32 %v5122, %v5526
      %v5603 = vadd.f32 %v5123, %v5529
      %v5604 = vadd.f32 %v5124, %v5531
      %v5605 = vadd.f32 %v5125, %v5534
      %v5606 = vadd.f32 %v5126, %v5536
      %v5607 = vadd.f32 %v5127, %v5539
      %v5608 = vadd.f32 %v5128, %v5541
      %v5609 = vadd.f32 %v5129, %v5544
      %v5610 = vadd.f32 %v5130, %v5546
      %v5611 = vadd.f32 %v5131, %v5549
      %v5612 = vadd.f32 %v5132, %v5551
      %v5613 = vadd.f32 %v5133, %v5554
      %v5614 = vadd.f32 %v5134, %v5556
      %v5615 = vadd.f32 %v5135, %v5559
      %v5616 = vadd.f32 %v5136, %v5561
      %v5617 = vadd.f32 %v5137, %v5564
      %v5618 = vadd.f32 %v5138, %v5566
      %v5619 = vadd.f32 %v5139, %v5569
      %v5620 = vadd.f32 %v5140, %v5571
      %v5621 = vadd.f32 %v5141, %v5574
      %v5622 = vadd.f32 %v5142, %v5576
      %v5623 = vadd.f32 %v5143, %v5579
      %v5624 = vadd.f32 %v5144, %v5581
      %v5625 = vadd.f32 %v5145, %v5584
      %v5626 = vadd.f32 %v5146, %v5586
      %v5627 = vadd.f32 %v5147, %v5589
      %v5628 = vadd.f32 %v5148, %v5591
      %v5629 = vld [vmem:[%s2] sm:$0x1]
      %v5631 = vperm.slane %v5629, 0
      %v5633 = vadd.f32 %v5593, %v5631
      %v5634 = vadd.f32 %v5594, %v5631
      %v5635 = vadd.f32 %v5595, %v5631
      %v5636 = vadd.f32 %v5596, %v5631
      %v5637 = vadd.f32 %v5597, %v5631
      %v5638 = vadd.f32 %v5598, %v5631
      %v5639 = vadd.f32 %v5599, %v5631
      %v5640 = vadd.f32 %v5600, %v5631
      %v5641 = vadd.f32 %v5601, %v5631
      %v5642 = vadd.f32 %v5602, %v5631
      %v5643 = vadd.f32 %v5603, %v5631
      %v5644 = vadd.f32 %v5604, %v5631
      %v5645 = vadd.f32 %v5605, %v5631
      %v5646 = vadd.f32 %v5606, %v5631
      %v5647 = vadd.f32 %v5607, %v5631
      %v5648 = vadd.f32 %v5608, %v5631
      %v5649 = vadd.f32 %v5609, %v5631
      %v5650 = vadd.f32 %v5610, %v5631
      %v5651 = vadd.f32 %v5611, %v5631
      %v5652 = vadd.f32 %v5612, %v5631
      %v5653 = vadd.f32 %v5613, %v5631
      %v5654 = vadd.f32 %v5614, %v5631
      %v5655 = vadd.f32 %v5615, %v5631
      %v5656 = vadd.f32 %v5616, %v5631
      %v5657 = vadd.f32 %v5617, %v5631
      %v5658 = vadd.f32 %v5618, %v5631
      %v5659 = vadd.f32 %v5619, %v5631
      %v5660 = vadd.f32 %v5620, %v5631
      %v5661 = vadd.f32 %v5621, %v5631
      %v5662 = vadd.f32 %v5622, %v5631
      %v5663 = vadd.f32 %v5623, %v5631
      %v5664 = vadd.f32 %v5624, %v5631
      %v5665 = vadd.f32 %v5625, %v5631
      %v5666 = vadd.f32 %v5626, %v5631
      %v5667 = vadd.f32 %v5627, %v5631
      %v5668 = vadd.f32 %v5628, %v5631
      %v5669 = vpack.c.bf16 %v5633, %v5633
      %v5670 = vpack.c.bf16 %v5634, %v5634
      %v5671 = vpack.c.bf16 %v5635, %v5635
      %v5672 = vpack.c.bf16 %v5636, %v5636
      %v5673 = vpack.c.bf16 %v5637, %v5637
      %v5674 = vpack.c.bf16 %v5638, %v5638
      %v5675 = vpack.c.bf16 %v5639, %v5639
      %v5676 = vpack.c.bf16 %v5640, %v5640
      %v5677 = vpack.c.bf16 %v5641, %v5641
      %v5678 = vpack.c.bf16 %v5642, %v5642
      %v5679 = vpack.c.bf16 %v5643, %v5643
      %v5680 = vpack.c.bf16 %v5644, %v5644
      %v5681 = vpack.c.bf16 %v5645, %v5645
      %v5682 = vpack.c.bf16 %v5646, %v5646
      %v5683 = vpack.c.bf16 %v5647, %v5647
      %v5684 = vpack.c.bf16 %v5648, %v5648
      %v5685 = vpack.c.bf16 %v5649, %v5649
      %v5686 = vpack.c.bf16 %v5650, %v5650
      %v5687 = vpack.c.bf16 %v5651, %v5651
      %v5688 = vpack.c.bf16 %v5652, %v5652
      %v5689 = vpack.c.bf16 %v5653, %v5653
      %v5690 = vpack.c.bf16 %v5654, %v5654
      %v5691 = vpack.c.bf16 %v5655, %v5655
      %v5692 = vpack.c.bf16 %v5656, %v5656
      %v5693 = vpack.c.bf16 %v5657, %v5657
      %v5694 = vpack.c.bf16 %v5658, %v5658
      %v5695 = vpack.c.bf16 %v5659, %v5659
      %v5696 = vpack.c.bf16 %v5660, %v5660
      %v5697 = vpack.c.bf16 %v5661, %v5661
      %v5698 = vpack.c.bf16 %v5662, %v5662
      %v5699 = vpack.c.bf16 %v5663, %v5663
      %v5700 = vpack.c.bf16 %v5664, %v5664
      %v5701 = vpack.c.bf16 %v5665, %v5665
      %v5702 = vpack.c.bf16 %v5666, %v5666
      %v5703 = vpack.c.bf16 %v5667, %v5667
      %v5704 = vpack.c.bf16 %v5668, %v5668
      %5705 = vst [vmem:[%s170] sm:$0xf] %v5669
      %5706 = vst [vmem:[%s170 + $0x4] sm:$0xf] %v5670
      %5707 = vst [vmem:[%s170 + $0x8] sm:$0xf] %v5671
      %5708 = vst [vmem:[%s170 + $0xc] sm:$0xf] %v5672
      %5709 = vst [vmem:[%s170 + $0x10] sm:$0xf] %v5673
      %5710 = vst [vmem:[%s170 + $0x14] sm:$0xf] %v5674
      %5711 = vst [vmem:[%s170 + $0x18] sm:$0xf] %v5675
      %5712 = vst [vmem:[%s170 + $0x1c] sm:$0xf] %v5676
      %5713 = vst [vmem:[%s170 + $0x20] sm:$0xf] %v5677
      %5714 = vst [vmem:[%s170 + $0x24] sm:$0xf] %v5678
      %5715 = vst [vmem:[%s170 + $0x28] sm:$0xf] %v5679
      %5716 = vst [vmem:[%s170 + $0x2c] sm:$0xf] %v5680
      %5717 = vst [vmem:[%s170 + $0x30] sm:$0xf] %v5681
      %5718 = vst [vmem:[%s170 + $0x34] sm:$0xf] %v5682
      %5719 = vst [vmem:[%s170 + $0x38] sm:$0xf] %v5683
      %5720 = vst [vmem:[%s170 + $0x3c] sm:$0xf] %v5684
      %5721 = vst [vmem:[%s170 + $0x40] sm:$0xf] %v5685
      %5722 = vst [vmem:[%s170 + $0x44] sm:$0xf] %v5686
      %5723 = vst [vmem:[%s170 + $0x48] sm:$0xf] %v5687
      %5724 = vst [vmem:[%s170 + $0x4c] sm:$0xf] %v5688
      %5725 = vst [vmem:[%s170 + $0x50] sm:$0xf] %v5689
      %5726 = vst [vmem:[%s170 + $0x54] sm:$0xf] %v5690
      %5727 = vst [vmem:[%s170 + $0x58] sm:$0xf] %v5691
      %5728 = vst [vmem:[%s170 + $0x5c] sm:$0xf] %v5692
      %5729 = vst [vmem:[%s170 + $0x60] sm:$0xf] %v5693
      %5730 = vst [vmem:[%s170 + $0x64] sm:$0xf] %v5694
      %5731 = vst [vmem:[%s170 + $0x68] sm:$0xf] %v5695
      %5732 = vst [vmem:[%s170 + $0x6c] sm:$0xf] %v5696
      %5733 = vst [vmem:[%s170 + $0x70] sm:$0xf] %v5697
      %5734 = vst [vmem:[%s170 + $0x74] sm:$0xf] %v5698
      %5735 = vst [vmem:[%s170 + $0x78] sm:$0xf] %v5699
      %5736 = vst [vmem:[%s170 + $0x7c] sm:$0xf] %v5700
      %5737 = vst [vmem:[%s170 + $0x80] sm:$0xf] %v5701
      %5738 = vst [vmem:[%s170 + $0x84] sm:$0xf] %v5702
      %5739 = vst [vmem:[%s170 + $0x88] sm:$0xf] %v5703
      %5740 = vst [vmem:[%s170 + $0x8c] sm:$0xf] %v5704
      %p5741 = scmp.lt.s32.totalorder %s14, 1
      %s5742 = scalar_select %p5741, %s14, 1
      %s5743 = smul.addr %s5742, 36
      %s5744 = smul.addr %s5743, 4
      %s5745 = scalar_lea.vmem %s3, %s5744
      // Predicated region
      $region33: #{frequency_transfer_forward.4} parent=31 // pred_check
        %p5746 = pneg %p100
      $region34: #{frequency_transfer_forward.4} parent=31 // pred_check_branch
        %5748 = sbr.rel (%p5746) target = $region36
      $region35: #{frequency_transfer_forward.4} parent=31 // pred_region
        _
      $region36: #{frequency_transfer_forward.4} parent=31 // pred_fallthru
        _
    $region32: #{frequency_transfer_forward.4} parent=5 // pred_fallthru
      _
    %p5749 = scmp.le.s32.totalorder 2, %s9
    // Predicated region
    $region37: #{frequency_transfer_forward.4} parent=5 // pred_check
      %p5750 = pneg %p5749
    $region38: #{frequency_transfer_forward.4} parent=5 // pred_check_branch
      %5752 = sbr.rel (%p5750) target = $region40
    $region39: #{frequency_transfer_forward.4} parent=5 // pred_region
      %s5753 = ssub.s32 %s9, 2
      // Predicated region
      $region41: #{frequency_transfer_forward.4} parent=39 // pred_check
        %p5754 = pneg %p106
      $region42: #{frequency_transfer_forward.4} parent=39 // pred_check_branch
        %5756 = sbr.rel (%p5754) target = $region44
      $region43: #{frequency_transfer_forward.4} parent=39 // pred_region
        %p5757 = scmp.lt.s32.totalorder %s15, 1
        %s5758 = scalar_select %p5757, %s15, 1
        %s5759 = smul.addr %s5758, 36
        %s5760 = smul.addr %s5759, 4
        %s5761 = scalar_lea.vmem %s3, %s5760
      $region44: #{frequency_transfer_forward.4} parent=39 // pred_fallthru
        _
    $region40: #{frequency_transfer_forward.4} parent=5 // pred_fallthru
      _
  $region6: #{frequency_transfer_forward.4} parent=0 // loop_footer
    %s13 = sadd.s32 1, %s9
  $region7: #{frequency_transfer_forward.4} parent=0 // loop_footer_branch
    %8 = sbr.rel target = $region3
  $region8: #{frequency_transfer_forward.4} parent=0 // loop_exit
    _

// kernel: frequency_transfer_forward.5
$region0: #{frequency_transfer_forward.5}
  #allocation0 [shape = 'u32[]', space=smem, size = 0x4, offset = 0x4, fixed_abs, tag = 'smem constant byte address 0x4 - core index']
  #allocation1 [shape = 'u32[72,128]{1,0:T(1,128)}', space=vmem, size = 0x9000, scoped, tag = 'internal scratch']
  %s0 = inlined_call_operand.vmem [shape: bf16[2,110,256], index: 0, kind: input, shape index: {}]
  %s1 = inlined_call_operand.vmem [shape: bf16[9,256,256], index: 1, kind: input, shape index: {}]
  %s2 = inlined_call_operand.vmem [shape: f32[1,256], index: 2, kind: input, shape index: {}]
  %s3 = inlined_call_operand.vmem [shape: bf16[2,80,256], index: 3, kind: output, shape index: {}]
  %s4 = sld [smem:[#allocation0]]
  $region45: #{frequency_transfer_forward.5} parent=0
    _
  %s6 = ssub.s32 1, %s4
  %s7 = scalar_select 0, %s6, %s4
  loop: start=0, step=1, limit=4
  $region2: #{frequency_transfer_forward.5} parent=0 // loop_pre_header
    _
  $region3: #{frequency_transfer_forward.5} parent=0 // loop_header
    %s9 = sphi 0, %s13
    %p10 = scmp.ge.s32.totalorder %s9, 4
    %s19 = sphi 0, %s21
    %s22 = sphi 0, %s19
    %s23 = sphi 0, %s22
    %s39 = sphi 0, %s23
    %s43 = sphi 0, %s43
    %s45 = sphi 0, %s43
    %s46 = sphi 0, %s45
    %s60 = sphi 0, %s46
    %s64 = sphi 0, %s64
    %s66 = sphi 0, %s64
    %s67 = sphi 0, %s66
    %s81 = sphi 0, %s67
    %s87 = sphi 0, %s89
    %s90 = sphi 0, %s87
    %s91 = sphi 0, %s90
    %s107 = sphi 0, %s91
  $region4: #{frequency_transfer_forward.5} parent=0 // loop_header_branch
    %12 = sbr.rel (%p10) target = $region8
  $region5: #{frequency_transfer_forward.5} parent=0 // loop_body
    %s14 = ssub.s32 %s9, 1
    %s15 = ssub.s32 %s9, 2
    %s16 = sadd.s32 %s9, 1
    %s17 = ssub.s32 %s9, %s16
    %p18 = scmp.eq.s32.totalorder %s17, 0
    %s20 = sadd.s32 %s19, 1
    %s21 = scalar_select %p18, %s19, %s20
    %p24 = pneg %p18
    %p25 = scmp.eq.s32.totalorder %s9, 1
    %p26 = por %p24, %p25
    %p27 = scmp.ne.s32.totalorder %s19, %s22
    %p28 = scmp.eq.s32.totalorder %s9, 0
    %p29 = por %p27, %p28
    %p30 = scmp.ne.s32.totalorder %s19, %s22
    %p31 = scmp.eq.s32.totalorder %s14, 1
    %p32 = por %p30, %p31
    %p33 = scmp.ne.s32.totalorder %s22, %s23
    %p34 = scmp.eq.s32.totalorder %s14, 0
    %p35 = por %p33, %p34
    %p36 = scmp.ne.s32.totalorder %s22, %s23
    %p37 = scmp.eq.s32.totalorder %s15, 1
    %p38 = por %p36, %p37
    %p40 = scmp.ne.s32.totalorder %s23, %s39
    %p41 = scmp.eq.s32.totalorder %s15, 0
    %p42 = por %p40, %p41
    %s44 = sadd.s32 %s43, 1
    %p47 = scmp.eq.s32.totalorder %s9, 1
    %p48 = scmp.ne.s32.totalorder %s43, %s45
    %p49 = scmp.eq.s32.totalorder %s9, 0
    %p50 = por %p48, %p49
    %p51 = scmp.ne.s32.totalorder %s43, %s45
    %p52 = scmp.eq.s32.totalorder %s14, 1
    %p53 = por %p51, %p52
    %p54 = scmp.ne.s32.totalorder %s45, %s46
    %p55 = scmp.eq.s32.totalorder %s14, 0
    %p56 = por %p54, %p55
    %p57 = scmp.ne.s32.totalorder %s45, %s46
    %p58 = scmp.eq.s32.totalorder %s15, 1
    %p59 = por %p57, %p58
    %p61 = scmp.ne.s32.totalorder %s46, %s60
    %p62 = scmp.eq.s32.totalorder %s15, 0
    %p63 = por %p61, %p62
    %s65 = sadd.s32 %s64, 1
    %p68 = scmp.eq.s32.totalorder %s9, 1
    %p69 = scmp.ne.s32.totalorder %s64, %s66
    %p70 = scmp.eq.s32.totalorder %s9, 0
    %p71 = por %p69, %p70
    %p72 = scmp.ne.s32.totalorder %s64, %s66
    %p73 = scmp.eq.s32.totalorder %s14, 1
    %p74 = por %p72, %p73
    %p75 = scmp.ne.s32.totalorder %s66, %s67
    %p76 = scmp.eq.s32.totalorder %s14, 0
    %p77 = por %p75, %p76
    %p78 = scmp.ne.s32.totalorder %s66, %s67
    %p79 = scmp.eq.s32.totalorder %s15, 1
    %p80 = por %p78, %p79
    %p82 = scmp.ne.s32.totalorder %s67, %s81
    %p83 = scmp.eq.s32.totalorder %s15, 0
    %p84 = por %p82, %p83
    %s85 = ssub.s32 %s9, %s16
    %p86 = scmp.eq.s32.totalorder %s85, 0
    %s88 = sadd.s32 %s87, 1
    %s89 = scalar_select %p86, %s87, %s88
    %p92 = pneg %p86
    %p93 = scmp.eq.s32.totalorder %s9, 1
    %p94 = por %p92, %p93
    %p95 = scmp.ne.s32.totalorder %s87, %s90
    %p96 = scmp.eq.s32.totalorder %s9, 0
    %p97 = por %p95, %p96
    %p98 = scmp.ne.s32.totalorder %s87, %s90
    %p99 = scmp.eq.s32.totalorder %s14, 1
    %p100 = por %p98, %p99
    %p101 = scmp.ne.s32.totalorder %s90, %s91
    %p102 = scmp.eq.s32.totalorder %s14, 0
    %p103 = por %p101, %p102
    %p104 = scmp.ne.s32.totalorder %s90, %s91
    %p105 = scmp.eq.s32.totalorder %s15, 1
    %p106 = por %p104, %p105
    %p108 = scmp.ne.s32.totalorder %s91, %s107
    %p109 = scmp.eq.s32.totalorder %s15, 0
    %p110 = por %p108, %p109
    %p111 = scmp.le.s32.totalorder 1, %s9
    %p112 = scmp.lt.s32.totalorder %s9, 3
    %p113 = pnand %p111, %p112
    %p114 = pneg %p113
    // Predicated region
    $region9: #{frequency_transfer_forward.5} parent=5 // pred_check
      _
    $region10: #{frequency_transfer_forward.5} parent=5 // pred_check_branch
      %116 = sbr.rel (%p113) target = $region12
    $region11: #{frequency_transfer_forward.5} parent=5 // pred_region
      %s117 = ssub.s32 %s9, 1
      // Predicated region
      $region13: #{frequency_transfer_forward.5} parent=11 // pred_check
        %p118 = pneg %p56
      $region14: #{frequency_transfer_forward.5} parent=11 // pred_check_branch
        %120 = sbr.rel (%p118) target = $region16
      $region15: #{frequency_transfer_forward.5} parent=11 // pred_region
        _
      $region16: #{frequency_transfer_forward.5} parent=11 // pred_fallthru
        _
      // Predicated region
      $region17: #{frequency_transfer_forward.5} parent=11 // pred_check
        %p121 = pneg %p77
      $region18: #{frequency_transfer_forward.5} parent=11 // pred_check_branch
        %123 = sbr.rel (%p121) target = $region20
      $region19: #{frequency_transfer_forward.5} parent=11 // pred_region
        _
      $region20: #{frequency_transfer_forward.5} parent=11 // pred_fallthru
        _
    $region12: #{frequency_transfer_forward.5} parent=5 // pred_fallthru
      _
    %p124 = scmp.lt.s32.totalorder %s9, 2
    // Predicated region
    $region21: #{frequency_transfer_forward.5} parent=5 // pred_check
      %p125 = pneg %p124
    $region22: #{frequency_transfer_forward.5} parent=5 // pred_check_branch
      %127 = sbr.rel (%p125) target = $region24
    $region23: #{frequency_transfer_forward.5} parent=5 // pred_region
      // Predicated region
      $region25: #{frequency_transfer_forward.5} parent=23 // pred_check
        %p128 = pneg %p29
      $region26: #{frequency_transfer_forward.5} parent=23 // pred_check_branch
        %130 = sbr.rel (%p128) target = $region28
      $region27: #{frequency_transfer_forward.5} parent=23 // pred_region
        %p131 = scmp.lt.s32.totalorder %s9, 1
        %s132 = scalar_select %p131, %s9, 1
        %s133 = smul.addr %s132, 28
        %s134 = smul.addr %s133, 4
        %s135 = scalar_lea.vmem %s0, %s134
      $region28: #{frequency_transfer_forward.5} parent=23 // pred_fallthru
        _
    $region24: #{frequency_transfer_forward.5} parent=5 // pred_fallthru
      _
    %p136 = scmp.le.s32.totalorder 1, %s9
    %p137 = scmp.lt.s32.totalorder %s9, 3
    %p138 = pnand %p136, %p137
    %p139 = pneg %p138
    // Predicated region
    $region29: #{frequency_transfer_forward.5} parent=5 // pred_check
      _
    $region30: #{frequency_transfer_forward.5} parent=5 // pred_check_branch
      %141 = sbr.rel (%p138) target = $region32
    $region31: #{frequency_transfer_forward.5} parent=5 // pred_region
      %s142 = ssub.s32 %s9, 1
      %p143 = scmp.lt.s32.totalorder %s14, 1
      %s144 = scalar_select %p143, %s14, 1
      %s145 = smul.addr %s144, 28
      %s146 = smul.addr %s145, 4
      %s147 = scalar_lea.vmem %s0, %s146
      %p148 = pneg %p35
      %p149 = pneg %p32
      %p150 = pneg %p56
      %p151 = pneg %p53
      %p152 = pneg %p77
      %p153 = pneg %p74
      %p154 = pneg %p103
      %p155 = pneg %p100
      %p156 = scmp.lt.s32.totalorder %s14, 1
      %s157 = scalar_select %p156, %s14, 1
      %s158 = smul.addr %s157, 20
      %s159 = smul.addr %s158, 4
      %s160 = scalar_lea.vmem %s3, %s159
      %p161 = scmp.lt.s32.totalorder %s14, 1
      %s162 = scalar_select %p161, %s14, 1
      %s163 = smul.addr %s162, 28
      %s164 = smul.addr %s163, 4
      %s165 = scalar_lea.vmem %s0, %s164
      %p166 = scmp.lt.s32.totalorder %s14, 1
      %s167 = scalar_select %p166, %s14, 1
      %s168 = smul.addr %s167, 20
      %s169 = smul.addr %s168, 4
      %s170 = scalar_lea.vmem %s3, %s169
      %v171 = vld [vmem:[%s165] sm:$0xff]
      %v172 = vld [vmem:[%s165 + $0x8] sm:$0xff]
      %v173 = vld [vmem:[%s165 + $0x10] sm:$0xff]
      %v174 = vld [vmem:[%s165 + $0x18] sm:$0xff]
      %v175 = vld [vmem:[%s165 + $0x20] sm:$0xff]
      %v176 = vld [vmem:[%s165 + $0x28] sm:$0xff]
      %v177 = vld [vmem:[%s165 + $0x30] sm:$0xff]
      %v178 = vld [vmem:[%s165 + $0x38] sm:$0xff]
      %v179 = vld [vmem:[%s165 + $0x40] sm:$0xff]
      %v180 = vld [vmem:[%s165 + $0x48] sm:$0xff]
      %v181 = vld [vmem:[%s1] sm:$0xff]
      %v182 = vld [vmem:[%s1 + $0x8] sm:$0xff]
      %v183 = vld [vmem:[%s1 + $0x10] sm:$0xff]
      %v184 = vld [vmem:[%s1 + $0x18] sm:$0xff]
      %v185 = vld [vmem:[%s1 + $0x20] sm:$0xff]
      %v186 = vld [vmem:[%s1 + $0x28] sm:$0xff]
      %v187 = vld [vmem:[%s1 + $0x30] sm:$0xff]
      %v188 = vld [vmem:[%s1 + $0x38] sm:$0xff]
      %v189 = vld [vmem:[%s1 + $0x40] sm:$0xff]
      %v190 = vld [vmem:[%s1 + $0x48] sm:$0xff]
      %v191 = vld [vmem:[%s1 + $0x50] sm:$0xff]
      %v192 = vld [vmem:[%s1 + $0x58] sm:$0xff]
      %v193 = vld [vmem:[%s1 + $0x60] sm:$0xff]
      %v194 = vld [vmem:[%s1 + $0x68] sm:$0xff]
      %v195 = vld [vmem:[%s1 + $0x70] sm:$0xff]
      %v196 = vld [vmem:[%s1 + $0x78] sm:$0xff]
      %v197 = vld [vmem:[%s1 + $0x80] sm:$0xff]
      %v198 = vld [vmem:[%s1 + $0x88] sm:$0xff]
      %v199 = vld [vmem:[%s1 + $0x90] sm:$0xff]
      %v200 = vld [vmem:[%s1 + $0x98] sm:$0xff]
      %v201 = vld [vmem:[%s1 + $0xa0] sm:$0xff]
      %v202 = vld [vmem:[%s1 + $0xa8] sm:$0xff]
      %v203 = vld [vmem:[%s1 + $0xb0] sm:$0xff]
      %v204 = vld [vmem:[%s1 + $0xb8] sm:$0xff]
      %v205 = vld [vmem:[%s1 + $0xc0] sm:$0xff]
      %v206 = vld [vmem:[%s1 + $0xc8] sm:$0xff]
      %v207 = vld [vmem:[%s1 + $0xd0] sm:$0xff]
      %v208 = vld [vmem:[%s1 + $0xd8] sm:$0xff]
      %v209 = vld [vmem:[%s1 + $0xe0] sm:$0xff]
      %v210 = vld [vmem:[%s1 + $0xe8] sm:$0xff]
      %v211 = vld [vmem:[%s1 + $0xf0] sm:$0xff]
      %v212 = vld [vmem:[%s1 + $0xf8] sm:$0xff]
      %v213 = vld [vmem:[%s165 + $0x50] sm:$0x11]
      %s214 = scalar_lea.vmem %s1, 256
      %v215 = vld [vmem:[%s214] sm:$0xff]
      %v216 = vld [vmem:[%s214 + $0x8] sm:$0xff]
      %v217 = vld [vmem:[%s214 + $0x10] sm:$0xff]
      %v218 = vld [vmem:[%s214 + $0x18] sm:$0xff]
      %v219 = vld [vmem:[%s214 + $0x20] sm:$0xff]
      %v220 = vld [vmem:[%s214 + $0x28] sm:$0xff]
      %v221 = vld [vmem:[%s214 + $0x30] sm:$0xff]
      %v222 = vld [vmem:[%s214 + $0x38] sm:$0xff]
      %v223 = vld [vmem:[%s214 + $0x40] sm:$0xff]
      %v224 = vld [vmem:[%s214 + $0x48] sm:$0xff]
      %v225 = vld [vmem:[%s214 + $0x50] sm:$0xff]
      %v226 = vld [vmem:[%s214 + $0x58] sm:$0xff]
      %v227 = vld [vmem:[%s214 + $0x60] sm:$0xff]
      %v228 = vld [vmem:[%s214 + $0x68] sm:$0xff]
      %v229 = vld [vmem:[%s214 + $0x70] sm:$0xff]
      %v230 = vld [vmem:[%s214 + $0x78] sm:$0xff]
      %v231 = vld [vmem:[%s214 + $0x80] sm:$0xff]
      %v232 = vld [vmem:[%s214 + $0x88] sm:$0xff]
      %v233 = vld [vmem:[%s214 + $0x90] sm:$0xff]
      %v234 = vld [vmem:[%s214 + $0x98] sm:$0xff]
      %v235 = vld [vmem:[%s214 + $0xa0] sm:$0xff]
      %v236 = vld [vmem:[%s214 + $0xa8] sm:$0xff]
      %v237 = vld [vmem:[%s214 + $0xb0] sm:$0xff]
      %v238 = vld [vmem:[%s214 + $0xb8] sm:$0xff]
      %v239 = vld [vmem:[%s214 + $0xc0] sm:$0xff]
      %v240 = vld [vmem:[%s214 + $0xc8] sm:$0xff]
      %v241 = vld [vmem:[%s214 + $0xd0] sm:$0xff]
      %v242 = vld [vmem:[%s214 + $0xd8] sm:$0xff]
      %v243 = vld [vmem:[%s214 + $0xe0] sm:$0xff]
      %v244 = vld [vmem:[%s214 + $0xe8] sm:$0xff]
      %v245 = vld [vmem:[%s214 + $0xf0] sm:$0xff]
      %v246 = vld [vmem:[%s214 + $0xf8] sm:$0xff]
      %v258 = vunpack.c.l.b16 %v171
      %v259 = vunpack.c.h.b16 %v171
      %v260 = vunpack.c.l.b16 %v172
      %v261 = vunpack.c.h.b16 %v172
      %v262 = vunpack.c.l.b16 %v173
      %v263 = vunpack.c.h.b16 %v173
      %v264 = vunpack.c.l.b16 %v174
      %v265 = vunpack.c.h.b16 %v174
      %v266 = vunpack.c.l.b16 %v175
      %v267 = vunpack.c.h.b16 %v175
      %v268 = vunpack.c.l.b16 %v176
      %v269 = vunpack.c.h.b16 %v176
      %v270 = vunpack.c.l.b16 %v177
      %v271 = vunpack.c.h.b16 %v177
      %v272 = vunpack.c.l.b16 %v178
      %v273 = vunpack.c.h.b16 %v178
      %v274 = vunpack.c.l.b16 %v179
      %v275 = vunpack.c.h.b16 %v179
      %v276 = vunpack.c.l.b16 %v180
      %v277 = vunpack.c.h.b16 %v180
      %v278 = vunpack.c.l.b16 %v213
      %v279 = vunpack.c.h.b16 %v213
      %v280 = vpack.c.b16 %v260, %v258
      %v281 = vpack.c.b16 %v261, %v259
      %v282 = vpack.c.b16 %v264, %v262
      %v283 = vpack.c.b16 %v265, %v263
      %v284 = vpack.c.b16 %v268, %v266
      %v285 = vpack.c.b16 %v269, %v267
      %v286 = vpack.c.b16 %v272, %v270
      %v287 = vpack.c.b16 %v273, %v271
      %v288 = vpack.c.b16 %v276, %v274
      %v289 = vpack.c.b16 %v277, %v275
      %v290 = vpack.c.b16 %v278, %v278
      %v291 = vpack.c.b16 %v279, %v279
      %vm292 = vsmask.f32 7424
      %v294 = vshrl.u32 %v280, 16
      %v296 = vshll.u32 %v280, 16
      %v298 = vrot.slane %v296, 1
      %v299 = vor.u32 %v294, %v298
      %v301 = vshll.u32 %v282, 16
      %v303 = vrot.slane %v301, 1
      %v304 = vsel %vm292, %v299, %v303
      %v306 = vshrl.u32 %v281, 16
      %v308 = vshll.u32 %v281, 16
      %v310 = vrot.slane %v308, 1
      %v311 = vor.u32 %v306, %v310
      %v313 = vshll.u32 %v283, 16
      %v315 = vrot.slane %v313, 1
      %v316 = vsel %vm292, %v311, %v315
      %v317 = vshrl.u32 %v282, 16
      %v319 = vor.u32 %v317, %v303
      %v321 = vshll.u32 %v284, 16
      %v323 = vrot.slane %v321, 1
      %v324 = vsel %vm292, %v319, %v323
      %v325 = vshrl.u32 %v283, 16
      %v327 = vor.u32 %v325, %v315
      %v329 = vshll.u32 %v285, 16
      %v331 = vrot.slane %v329, 1
      %v332 = vsel %vm292, %v327, %v331
      %v333 = vshrl.u32 %v284, 16
      %v335 = vor.u32 %v333, %v323
      %v337 = vshll.u32 %v286, 16
      %v339 = vrot.slane %v337, 1
      %v340 = vsel %vm292, %v335, %v339
      %v341 = vshrl.u32 %v285, 16
      %v343 = vor.u32 %v341, %v331
      %v345 = vshll.u32 %v287, 16
      %v347 = vrot.slane %v345, 1
      %v348 = vsel %vm292, %v343, %v347
      %v349 = vshrl.u32 %v286, 16
      %v351 = vor.u32 %v349, %v339
      %v353 = vshll.u32 %v288, 16
      %v355 = vrot.slane %v353, 1
      %v356 = vsel %vm292, %v351, %v355
      %v357 = vshrl.u32 %v287, 16
      %v359 = vor.u32 %v357, %v347
      %v361 = vshll.u32 %v289, 16
      %v363 = vrot.slane %v361, 1
      %v364 = vsel %vm292, %v359, %v363
      %v365 = vshrl.u32 %v288, 16
      %v367 = vor.u32 %v365, %v355
      %v369 = vshll.u32 %v290, 16
      %v371 = vrot.slane %v369, 1
      %v372 = vsel %vm292, %v367, %v371
      %v373 = vshrl.u32 %v289, 16
      %v375 = vor.u32 %v373, %v363
      %v377 = vshll.u32 %v291, 16
      %v379 = vrot.slane %v377, 1
      %v380 = vsel %vm292, %v375, %v379
      %v423 = vunpack.c.l.b16 %v215
      %v424 = vunpack.c.h.b16 %v215
      %v425 = vunpack.c.l.b16 %v216
      %v426 = vunpack.c.h.b16 %v216
      %v427 = vunpack.c.l.b16 %v217
      %v428 = vunpack.c.h.b16 %v217
      %v429 = vunpack.c.l.b16 %v218
      %v430 = vunpack.c.h.b16 %v218
      %v431 = vunpack.c.l.b16 %v219
      %v432 = vunpack.c.h.b16 %v219
      %v433 = vunpack.c.l.b16 %v220
      %v434 = vunpack.c.h.b16 %v220
      %v435 = vunpack.c.l.b16 %v221
      %v436 = vunpack.c.h.b16 %v221
      %v437 = vunpack.c.l.b16 %v222
      %v438 = vunpack.c.h.b16 %v222
      %v439 = vunpack.c.l.b16 %v223
      %v440 = vunpack.c.h.b16 %v223
      %v441 = vunpack.c.l.b16 %v224
      %v442 = vunpack.c.h.b16 %v224
      %v443 = vunpack.c.l.b16 %v225
      %v444 = vunpack.c.h.b16 %v225
      %v445 = vunpack.c.l.b16 %v226
      %v446 = vunpack.c.h.b16 %v226
      %v447 = vunpack.c.l.b16 %v227
      %v448 = vunpack.c.h.b16 %v227
      %v449 = vunpack.c.l.b16 %v228
      %v450 = vunpack.c.h.b16 %v228
      %v451 = vunpack.c.l.b16 %v229
      %v452 = vunpack.c.h.b16 %v229
      %v453 = vunpack.c.l.b16 %v230
      %v454 = vunpack.c.h.b16 %v230
      %v455 = vunpack.c.l.b16 %v231
      %v456 = vunpack.c.h.b16 %v231
      %v457 = vunpack.c.l.b16 %v232
      %v458 = vunpack.c.h.b16 %v232
      %v459 = vunpack.c.l.b16 %v233
      %v460 = vunpack.c.h.b16 %v233
      %v461 = vunpack.c.l.b16 %v234
      %v462 = vunpack.c.h.b16 %v234
      %v463 = vunpack.c.l.b16 %v235
      %v464 = vunpack.c.h.b16 %v235
      %v465 = vunpack.c.l.b16 %v236
      %v466 = vunpack.c.h.b16 %v236
      %v467 = vunpack.c.l.b16 %v237
      %v468 = vunpack.c.h.b16 %v237
      %v469 = vunpack.c.l.b16 %v238
      %v470 = vunpack.c.h.b16 %v238
      %v471 = vunpack.c.l.b16 %v239
      %v472 = vunpack.c.h.b16 %v239
      %v473 = vunpack.c.l.b16 %v240
      %v474 = vunpack.c.h.b16 %v240
      %v475 = vunpack.c.l.b16 %v241
      %v476 = vunpack.c.h.b16 %v241
      %v477 = vunpack.c.l.b16 %v242
      %v478 = vunpack.c.h.b16 %v242
      %v479 = vunpack.c.l.b16 %v243
      %v480 = vunpack.c.h.b16 %v243
      %v481 = vunpack.c.l.b16 %v244
      %v482 = vunpack.c.h.b16 %v244
      %v483 = vunpack.c.l.b16 %v245
      %v484 = vunpack.c.h.b16 %v245
      %v485 = vunpack.c.l.b16 %v246
      %v486 = vunpack.c.h.b16 %v246
      %v487 = vpack.c.b16 %v425, %v423
      %v488 = vpack.c.b16 %v426, %v424
      %v489 = vpack.c.b16 %v429, %v427
      %v490 = vpack.c.b16 %v430, %v428
      %v491 = vpack.c.b16 %v433, %v431
      %v492 = vpack.c.b16 %v434, %v432
      %v493 = vpack.c.b16 %v437, %v435
      %v494 = vpack.c.b16 %v438, %v436
      %v495 = vpack.c.b16 %v441, %v439
      %v496 = vpack.c.b16 %v442, %v440
      %v497 = vpack.c.b16 %v445, %v443
      %v498 = vpack.c.b16 %v446, %v444
      %v499 = vpack.c.b16 %v449, %v447
      %v500 = vpack.c.b16 %v450, %v448
      %v501 = vpack.c.b16 %v453, %v451
      %v502 = vpack.c.b16 %v454, %v452
      %v503 = vpack.c.b16 %v457, %v455
      %v504 = vpack.c.b16 %v458, %v456
      %v505 = vpack.c.b16 %v461, %v459
      %v506 = vpack.c.b16 %v462, %v460
      %v507 = vpack.c.b16 %v465, %v463
      %v508 = vpack.c.b16 %v466, %v464
      %v509 = vpack.c.b16 %v469, %v467
      %v510 = vpack.c.b16 %v470, %v468
      %v511 = vpack.c.b16 %v473, %v471
      %v512 = vpack.c.b16 %v474, %v472
      %v513 = vpack.c.b16 %v477, %v475
      %v514 = vpack.c.b16 %v478, %v476
      %v515 = vpack.c.b16 %v481, %v479
      %v516 = vpack.c.b16 %v482, %v480
      %v517 = vpack.c.b16 %v485, %v483
      %v518 = vpack.c.b16 %v486, %v484
      %551 = vmatpush.bf16.msra.mxu0 %v501
      %552 = vmatpush.bf16.msra.mxu0 %v499
      %553 = vmatpush.bf16.msra.mxu0 %v497
      %554 = vmatpush.bf16.msra.mxu0 %v495
      %555 = vmatpush.bf16.msra.mxu0 %v493
      %556 = vmatpush.bf16.msra.mxu0 %v491
      %557 = vmatpush.bf16.msra.mxu0 %v489
      %558 = vmatpush.bf16.msra.mxu0 %v487
      %559 = vmatmul.bf16.gmra.mxu0 %v304
      %v560 = vpop.f32.mrf.mxu0
      %v561 = vadd.f32 0.0, %v560
      %v562 = vpop.f32.mrf.mxu0
      %v563 = vadd.f32 0.0, %v562
      %564 = vmatmul.bf16.gmra.mxu0 %v324
      %v565 = vpop.f32.mrf.mxu0
      %v566 = vadd.f32 0.0, %v565
      %v567 = vpop.f32.mrf.mxu0
      %v568 = vadd.f32 0.0, %v567
      %569 = vmatmul.bf16.gmra.mxu0 %v340
      %v570 = vpop.f32.mrf.mxu0
      %v571 = vadd.f32 0.0, %v570
      %v572 = vpop.f32.mrf.mxu0
      %v573 = vadd.f32 0.0, %v572
      %574 = vmatmul.bf16.gmra.mxu0 %v356
      %v575 = vpop.f32.mrf.mxu0
      %v576 = vadd.f32 0.0, %v575
      %v577 = vpop.f32.mrf.mxu0
      %v578 = vadd.f32 0.0, %v577
      %579 = vmatmul.bf16.gmra.mxu0 %v372
      %v580 = vpop.f32.mrf.mxu0
      %v581 = vadd.f32 0.0, %v580
      %v582 = vpop.f32.mrf.mxu0
      %v583 = vadd.f32 0.0, %v582
      %584 = vdwg.mxu0
      %585 = vmatpush.bf16.msra.mxu0 %v517
      %586 = vmatpush.bf16.msra.mxu0 %v515
      %587 = vmatpush.bf16.msra.mxu0 %v513
      %588 = vmatpush.bf16.msra.mxu0 %v511
      %589 = vmatpush.bf16.msra.mxu0 %v509
      %590 = vmatpush.bf16.msra.mxu0 %v507
      %591 = vmatpush.bf16.msra.mxu0 %v505
      %592 = vmatpush.bf16.msra.mxu0 %v503
      %593 = vmatmul.bf16.gmra.mxu0 %v316
      %v594 = vpop.f32.mrf.mxu0
      %v595 = vadd.f32 %v561, %v594
      %v596 = vpop.f32.mrf.mxu0
      %v597 = vadd.f32 %v563, %v596
      %598 = vmatmul.bf16.gmra.mxu0 %v332
      %v599 = vpop.f32.mrf.mxu0
      %v600 = vadd.f32 %v566, %v599
      %v601 = vpop.f32.mrf.mxu0
      %v602 = vadd.f32 %v568, %v601
      %603 = vmatmul.bf16.gmra.mxu0 %v348
      %v604 = vpop.f32.mrf.mxu0
      %v605 = vadd.f32 %v571, %v604
      %v606 = vpop.f32.mrf.mxu0
      %v607 = vadd.f32 %v573, %v606
      %608 = vmatmul.bf16.gmra.mxu0 %v364
      %v609 = vpop.f32.mrf.mxu0
      %v610 = vadd.f32 %v576, %v609
      %v611 = vpop.f32.mrf.mxu0
      %v612 = vadd.f32 %v578, %v611
      %613 = vmatmul.bf16.gmra.mxu0 %v380
      %v614 = vpop.f32.mrf.mxu0
      %v615 = vadd.f32 %v581, %v614
      %v616 = vpop.f32.mrf.mxu0
      %v617 = vadd.f32 %v583, %v616
      %618 = vdwg.mxu0
      %619 = vmatpush.bf16.msra.mxu0 %v502
      %620 = vmatpush.bf16.msra.mxu0 %v500
      %621 = vmatpush.bf16.msra.mxu0 %v498
      %622 = vmatpush.bf16.msra.mxu0 %v496
      %623 = vmatpush.bf16.msra.mxu0 %v494
      %624 = vmatpush.bf16.msra.mxu0 %v492
      %625 = vmatpush.bf16.msra.mxu0 %v490
      %626 = vmatpush.bf16.msra.mxu0 %v488
      %627 = vmatmul.bf16.gmra.mxu0 %v304
      %v628 = vpop.f32.mrf.mxu0
      %v629 = vadd.f32 0.0, %v628
      %v630 = vpop.f32.mrf.mxu0
      %v631 = vadd.f32 0.0, %v630
      %632 = vmatmul.bf16.gmra.mxu0 %v324
      %v633 = vpop.f32.mrf.mxu0
      %v634 = vadd.f32 0.0, %v633
      %v635 = vpop.f32.mrf.mxu0
      %v636 = vadd.f32 0.0, %v635
      %637 = vmatmul.bf16.gmra.mxu0 %v340
      %v638 = vpop.f32.mrf.mxu0
      %v639 = vadd.f32 0.0, %v638
      %v640 = vpop.f32.mrf.mxu0
      %v641 = vadd.f32 0.0, %v640
      %642 = vmatmul.bf16.gmra.mxu0 %v356
      %v643 = vpop.f32.mrf.mxu0
      %v644 = vadd.f32 0.0, %v643
      %v645 = vpop.f32.mrf.mxu0
      %v646 = vadd.f32 0.0, %v645
      %647 = vmatmul.bf16.gmra.mxu0 %v372
      %v648 = vpop.f32.mrf.mxu0
      %v649 = vadd.f32 0.0, %v648
      %v650 = vpop.f32.mrf.mxu0
      %v651 = vadd.f32 0.0, %v650
      %652 = vdwg.mxu0
      %653 = vmatpush.bf16.msra.mxu0 %v518
      %654 = vmatpush.bf16.msra.mxu0 %v516
      %655 = vmatpush.bf16.msra.mxu0 %v514
      %656 = vmatpush.bf16.msra.mxu0 %v512
      %657 = vmatpush.bf16.msra.mxu0 %v510
      %658 = vmatpush.bf16.msra.mxu0 %v508
      %659 = vmatpush.bf16.msra.mxu0 %v506
      %660 = vmatpush.bf16.msra.mxu0 %v504
      %661 = vmatmul.bf16.gmra.mxu0 %v316
      %v662 = vpop.f32.mrf.mxu0
      %v663 = vadd.f32 %v629, %v662
      %v664 = vpop.f32.mrf.mxu0
      %v665 = vadd.f32 %v631, %v664
      %666 = vmatmul.bf16.gmra.mxu0 %v332
      %v667 = vpop.f32.mrf.mxu0
      %v668 = vadd.f32 %v634, %v667
      %v669 = vpop.f32.mrf.mxu0
      %v670 = vadd.f32 %v636, %v669
      %671 = vmatmul.bf16.gmra.mxu0 %v348
      %v672 = vpop.f32.mrf.mxu0
      %v673 = vadd.f32 %v639, %v672
      %v674 = vpop.f32.mrf.mxu0
      %v675 = vadd.f32 %v641, %v674
      %676 = vmatmul.bf16.gmra.mxu0 %v364
      %v677 = vpop.f32.mrf.mxu0
      %v678 = vadd.f32 %v644, %v677
      %v679 = vpop.f32.mrf.mxu0
      %v680 = vadd.f32 %v646, %v679
      %681 = vmatmul.bf16.gmra.mxu0 %v380
      %v682 = vpop.f32.mrf.mxu0
      %v683 = vadd.f32 %v649, %v682
      %v684 = vpop.f32.mrf.mxu0
      %v685 = vadd.f32 %v651, %v684
      %686 = vdwg.mxu0
      %v729 = vunpack.c.l.b16 %v181
      %v730 = vunpack.c.h.b16 %v181
      %v731 = vunpack.c.l.b16 %v182
      %v732 = vunpack.c.h.b16 %v182
      %v733 = vunpack.c.l.b16 %v183
      %v734 = vunpack.c.h.b16 %v183
      %v735 = vunpack.c.l.b16 %v184
      %v736 = vunpack.c.h.b16 %v184
      %v737 = vunpack.c.l.b16 %v185
      %v738 = vunpack.c.h.b16 %v185
      %v739 = vunpack.c.l.b16 %v186
      %v740 = vunpack.c.h.b16 %v186
      %v741 = vunpack.c.l.b16 %v187
      %v742 = vunpack.c.h.b16 %v187
      %v743 = vunpack.c.l.b16 %v188
      %v744 = vunpack.c.h.b16 %v188
      %v745 = vunpack.c.l.b16 %v189
      %v746 = vunpack.c.h.b16 %v189
      %v747 = vunpack.c.l.b16 %v190
      %v748 = vunpack.c.h.b16 %v190
      %v749 = vunpack.c.l.b16 %v191
      %v750 = vunpack.c.h.b16 %v191
      %v751 = vunpack.c.l.b16 %v192
      %v752 = vunpack.c.h.b16 %v192
      %v753 = vunpack.c.l.b16 %v193
      %v754 = vunpack.c.h.b16 %v193
      %v755 = vunpack.c.l.b16 %v194
      %v756 = vunpack.c.h.b16 %v194
      %v757 = vunpack.c.l.b16 %v195
      %v758 = vunpack.c.h.b16 %v195
      %v759 = vunpack.c.l.b16 %v196
      %v760 = vunpack.c.h.b16 %v196
      %v761 = vunpack.c.l.b16 %v197
      %v762 = vunpack.c.h.b16 %v197
      %v763 = vunpack.c.l.b16 %v198
      %v764 = vunpack.c.h.b16 %v198
      %v765 = vunpack.c.l.b16 %v199
      %v766 = vunpack.c.h.b16 %v199
      %v767 = vunpack.c.l.b16 %v200
      %v768 = vunpack.c.h.b16 %v200
      %v769 = vunpack.c.l.b16 %v201
      %v770 = vunpack.c.h.b16 %v201
      %v771 = vunpack.c.l.b16 %v202
      %v772 = vunpack.c.h.b16 %v202
      %v773 = vunpack.c.l.b16 %v203
      %v774 = vunpack.c.h.b16 %v203
      %v775 = vunpack.c.l.b16 %v204
      %v776 = vunpack.c.h.b16 %v204
      %v777 = vunpack.c.l.b16 %v205
      %v778 = vunpack.c.h.b16 %v205
      %v779 = vunpack.c.l.b16 %v206
      %v780 = vunpack.c.h.b16 %v206
      %v781 = vunpack.c.l.b16 %v207
      %v782 = vunpack.c.h.b16 %v207
      %v783 = vunpack.c.l.b16 %v208
      %v784 = vunpack.c.h.b16 %v208
      %v785 = vunpack.c.l.b16 %v209
      %v786 = vunpack.c.h.b16 %v209
      %v787 = vunpack.c.l.b16 %v210
      %v788 = vunpack.c.h.b16 %v210
      %v789 = vunpack.c.l.b16 %v211
      %v790 = vunpack.c.h.b16 %v211
      %v791 = vunpack.c.l.b16 %v212
      %v792 = vunpack.c.h.b16 %v212
      %v793 = vpack.c.b16 %v731, %v729
      %v794 = vpack.c.b16 %v732, %v730
      %v795 = vpack.c.b16 %v735, %v733
      %v796 = vpack.c.b16 %v736, %v734
      %v797 = vpack.c.b16 %v739, %v737
      %v798 = vpack.c.b16 %v740, %v738
      %v799 = vpack.c.b16 %v743, %v741
      %v800 = vpack.c.b16 %v744, %v742
      %v801 = vpack.c.b16 %v747, %v745
      %v802 = vpack.c.b16 %v748, %v746
      %v803 = vpack.c.b16 %v751, %v749
      %v804 = vpack.c.b16 %v752, %v750
      %v805 = vpack.c.b16 %v755, %v753
      %v806 = vpack.c.b16 %v756, %v754
      %v807 = vpack.c.b16 %v759, %v757
      %v808 = vpack.c.b16 %v760, %v758
      %v809 = vpack.c.b16 %v763, %v761
      %v810 = vpack.c.b16 %v764, %v762
      %v811 = vpack.c.b16 %v767, %v765
      %v812 = vpack.c.b16 %v768, %v766
      %v813 = vpack.c.b16 %v771, %v769
      %v814 = vpack.c.b16 %v772, %v770
      %v815 = vpack.c.b16 %v775, %v773
      %v816 = vpack.c.b16 %v776, %v774
      %v817 = vpack.c.b16 %v779, %v777
      %v818 = vpack.c.b16 %v780, %v778
      %v819 = vpack.c.b16 %v783, %v781
      %v820 = vpack.c.b16 %v784, %v782
      %v821 = vpack.c.b16 %v787, %v785
      %v822 = vpack.c.b16 %v788, %v786
      %v823 = vpack.c.b16 %v791, %v789
      %v824 = vpack.c.b16 %v792, %v790
      %857 = vmatpush.bf16.msra.mxu0 %v807
      %858 = vmatpush.bf16.msra.mxu0 %v805
      %859 = vmatpush.bf16.msra.mxu0 %v803
      %860 = vmatpush.bf16.msra.mxu0 %v801
      %861 = vmatpush.bf16.msra.mxu0 %v799
      %862 = vmatpush.bf16.msra.mxu0 %v797
      %863 = vmatpush.bf16.msra.mxu0 %v795
      %864 = vmatpush.bf16.msra.mxu0 %v793
      %865 = vmatmul.bf16.gmra.mxu0 %v280
      %v866 = vpop.f32.mrf.mxu0
      %v867 = vadd.f32 %v595, %v866
      %v868 = vpop.f32.mrf.mxu0
      %v869 = vadd.f32 %v597, %v868
      %870 = vmatmul.bf16.gmra.mxu0 %v282
      %v871 = vpop.f32.mrf.mxu0
      %v872 = vadd.f32 %v600, %v871
      %v873 = vpop.f32.mrf.mxu0
      %v874 = vadd.f32 %v602, %v873
      %875 = vmatmul.bf16.gmra.mxu0 %v284
      %v876 = vpop.f32.mrf.mxu0
      %v877 = vadd.f32 %v605, %v876
      %v878 = vpop.f32.mrf.mxu0
      %v879 = vadd.f32 %v607, %v878
      %880 = vmatmul.bf16.gmra.mxu0 %v286
      %v881 = vpop.f32.mrf.mxu0
      %v882 = vadd.f32 %v610, %v881
      %v883 = vpop.f32.mrf.mxu0
      %v884 = vadd.f32 %v612, %v883
      %885 = vmatmul.bf16.gmra.mxu0 %v288
      %v886 = vpop.f32.mrf.mxu0
      %v887 = vadd.f32 %v615, %v886
      %v888 = vpop.f32.mrf.mxu0
      %v889 = vadd.f32 %v617, %v888
      %890 = vdwg.mxu0
      %891 = vmatpush.bf16.msra.mxu0 %v823
      %892 = vmatpush.bf16.msra.mxu0 %v821
      %893 = vmatpush.bf16.msra.mxu0 %v819
      %894 = vmatpush.bf16.msra.mxu0 %v817
      %895 = vmatpush.bf16.msra.mxu0 %v815
      %896 = vmatpush.bf16.msra.mxu0 %v813
      %897 = vmatpush.bf16.msra.mxu0 %v811
      %898 = vmatpush.bf16.msra.mxu0 %v809
      %899 = vmatmul.bf16.gmra.mxu0 %v281
      %v900 = vpop.f32.mrf.mxu0
      %v901 = vadd.f32 %v867, %v900
      %v902 = vpop.f32.mrf.mxu0
      %v903 = vadd.f32 %v869, %v902
      %904 = vmatmul.bf16.gmra.mxu0 %v283
      %v905 = vpop.f32.mrf.mxu0
      %v906 = vadd.f32 %v872, %v905
      %v907 = vpop.f32.mrf.mxu0
      %v908 = vadd.f32 %v874, %v907
      %909 = vmatmul.bf16.gmra.mxu0 %v285
      %v910 = vpop.f32.mrf.mxu0
      %v911 = vadd.f32 %v877, %v910
      %v912 = vpop.f32.mrf.mxu0
      %v913 = vadd.f32 %v879, %v912
      %914 = vmatmul.bf16.gmra.mxu0 %v287
      %v915 = vpop.f32.mrf.mxu0
      %v916 = vadd.f32 %v882, %v915
      %v917 = vpop.f32.mrf.mxu0
      %v918 = vadd.f32 %v884, %v917
      %919 = vmatmul.bf16.gmra.mxu0 %v289
      %v920 = vpop.f32.mrf.mxu0
      %v921 = vadd.f32 %v887, %v920
      %v922 = vpop.f32.mrf.mxu0
      %v923 = vadd.f32 %v889, %v922
      %924 = vdwg.mxu0
      %925 = vmatpush.bf16.msra.mxu0 %v808
      %926 = vmatpush.bf16.msra.mxu0 %v806
      %927 = vmatpush.bf16.msra.mxu0 %v804
      %928 = vmatpush.bf16.msra.mxu0 %v802
      %929 = vmatpush.bf16.msra.mxu0 %v800
      %930 = vmatpush.bf16.msra.mxu0 %v798
      %931 = vmatpush.bf16.msra.mxu0 %v796
      %932 = vmatpush.bf16.msra.mxu0 %v794
      %933 = vmatmul.bf16.gmra.mxu0 %v280
      %v934 = vpop.f32.mrf.mxu0
      %v935 = vadd.f32 %v663, %v934
      %v936 = vpop.f32.mrf.mxu0
      %v937 = vadd.f32 %v665, %v936
      %938 = vmatmul.bf16.gmra.mxu0 %v282
      %v939 = vpop.f32.mrf.mxu0
      %v940 = vadd.f32 %v668, %v939
      %v941 = vpop.f32.mrf.mxu0
      %v942 = vadd.f32 %v670, %v941
      %943 = vmatmul.bf16.gmra.mxu0 %v284
      %v944 = vpop.f32.mrf.mxu0
      %v945 = vadd.f32 %v673, %v944
      %v946 = vpop.f32.mrf.mxu0
      %v947 = vadd.f32 %v675, %v946
      %948 = vmatmul.bf16.gmra.mxu0 %v286
      %v949 = vpop.f32.mrf.mxu0
      %v950 = vadd.f32 %v678, %v949
      %v951 = vpop.f32.mrf.mxu0
      %v952 = vadd.f32 %v680, %v951
      %953 = vmatmul.bf16.gmra.mxu0 %v288
      %v954 = vpop.f32.mrf.mxu0
      %v955 = vadd.f32 %v683, %v954
      %v956 = vpop.f32.mrf.mxu0
      %v957 = vadd.f32 %v685, %v956
      %958 = vdwg.mxu0
      %959 = vmatpush.bf16.msra.mxu0 %v824
      %960 = vmatpush.bf16.msra.mxu0 %v822
      %961 = vmatpush.bf16.msra.mxu0 %v820
      %962 = vmatpush.bf16.msra.mxu0 %v818
      %963 = vmatpush.bf16.msra.mxu0 %v816
      %964 = vmatpush.bf16.msra.mxu0 %v814
      %965 = vmatpush.bf16.msra.mxu0 %v812
      %966 = vmatpush.bf16.msra.mxu0 %v810
      %967 = vmatmul.bf16.gmra.mxu0 %v281
      %v968 = vpop.f32.mrf.mxu0
      %v969 = vadd.f32 %v935, %v968
      %v970 = vpop.f32.mrf.mxu0
      %v971 = vadd.f32 %v937, %v970
      %972 = vmatmul.bf16.gmra.mxu0 %v283
      %v973 = vpop.f32.mrf.mxu0
      %v974 = vadd.f32 %v940, %v973
      %v975 = vpop.f32.mrf.mxu0
      %v976 = vadd.f32 %v942, %v975
      %977 = vmatmul.bf16.gmra.mxu0 %v285
      %v978 = vpop.f32.mrf.mxu0
      %v979 = vadd.f32 %v945, %v978
      %v980 = vpop.f32.mrf.mxu0
      %v981 = vadd.f32 %v947, %v980
      %982 = vmatmul.bf16.gmra.mxu0 %v287
      %v983 = vpop.f32.mrf.mxu0
      %v984 = vadd.f32 %v950, %v983
      %v985 = vpop.f32.mrf.mxu0
      %v986 = vadd.f32 %v952, %v985
      %987 = vmatmul.bf16.gmra.mxu0 %v289
      %v988 = vpop.f32.mrf.mxu0
      %v989 = vadd.f32 %v955, %v988
      %v990 = vpop.f32.mrf.mxu0
      %v991 = vadd.f32 %v957, %v990
      %992 = vdwg.mxu0
      %v993 = vld [vmem:[%s165] sm:$0xee]
      %s994 = scalar_lea.vmem %s1, 512
      %v995 = vld [vmem:[%s994] sm:$0xff]
      %v996 = vld [vmem:[%s994 + $0x8] sm:$0xff]
      %v997 = vld [vmem:[%s994 + $0x10] sm:$0xff]
      %v998 = vld [vmem:[%s994 + $0x18] sm:$0xff]
      %v999 = vld [vmem:[%s994 + $0x20] sm:$0xff]
      %v1000 = vld [vmem:[%s994 + $0x28] sm:$0xff]
      %v1001 = vld [vmem:[%s994 + $0x30] sm:$0xff]
      %v1002 = vld [vmem:[%s994 + $0x38] sm:$0xff]
      %v1003 = vld [vmem:[%s994 + $0x40] sm:$0xff]
      %v1004 = vld [vmem:[%s994 + $0x48] sm:$0xff]
      %v1005 = vld [vmem:[%s994 + $0x50] sm:$0xff]
      %v1006 = vld [vmem:[%s994 + $0x58] sm:$0xff]
      %v1007 = vld [vmem:[%s994 + $0x60] sm:$0xff]
      %v1008 = vld [vmem:[%s994 + $0x68] sm:$0xff]
      %v1009 = vld [vmem:[%s994 + $0x70] sm:$0xff]
      %v1010 = vld [vmem:[%s994 + $0x78] sm:$0xff]
      %v1011 = vld [vmem:[%s994 + $0x80] sm:$0xff]
      %v1012 = vld [vmem:[%s994 + $0x88] sm:$0xff]
      %v1013 = vld [vmem:[%s994 + $0x90] sm:$0xff]
      %v1014 = vld [vmem:[%s994 + $0x98] sm:$0xff]
      %v1015 = vld [vmem:[%s994 + $0xa0] sm:$0xff]
      %v1016 = vld [vmem:[%s994 + $0xa8] sm:$0xff]
      %v1017 = vld [vmem:[%s994 + $0xb0] sm:$0xff]
      %v1018 = vld [vmem:[%s994 + $0xb8] sm:$0xff]
      %v1019 = vld [vmem:[%s994 + $0xc0] sm:$0xff]
      %v1020 = vld [vmem:[%s994 + $0xc8] sm:$0xff]
      %v1021 = vld [vmem:[%s994 + $0xd0] sm:$0xff]
      %v1022 = vld [vmem:[%s994 + $0xd8] sm:$0xff]
      %v1023 = vld [vmem:[%s994 + $0xe0] sm:$0xff]
      %v1024 = vld [vmem:[%s994 + $0xe8] sm:$0xff]
      %v1025 = vld [vmem:[%s994 + $0xf0] sm:$0xff]
      %v1026 = vld [vmem:[%s994 + $0xf8] sm:$0xff]
      %v1028 = vunpack.c.l.b16 %v993
      %v1029 = vunpack.c.h.b16 %v993
      %v1030 = vpack.c.b16 %v260, %v1028
      %v1031 = vpack.c.b16 %v261, %v1029
      %vm1032 = vcmask 1046528
      %v1033 = vrot.slane %v1030, 1
      %v1034 = vrot.slane %v282, 1
      %v1035 = vsel %vm1032, %v1033, %v1034
      %v1036 = vrot.slane %v1031, 1
      %v1037 = vrot.slane %v283, 1
      %v1038 = vsel %vm1032, %v1036, %v1037
      %v1039 = vrot.slane %v284, 1
      %v1040 = vsel %vm1032, %v1034, %v1039
      %v1041 = vrot.slane %v285, 1
      %v1042 = vsel %vm1032, %v1037, %v1041
      %v1043 = vrot.slane %v286, 1
      %v1044 = vsel %vm1032, %v1039, %v1043
      %v1045 = vrot.slane %v287, 1
      %v1046 = vsel %vm1032, %v1041, %v1045
      %v1047 = vrot.slane %v288, 1
      %v1048 = vsel %vm1032, %v1043, %v1047
      %v1049 = vrot.slane %v289, 1
      %v1050 = vsel %vm1032, %v1045, %v1049
      %v1051 = vrot.slane %v290, 1
      %v1052 = vsel %vm1032, %v1047, %v1051
      %v1053 = vrot.slane %v291, 1
      %v1054 = vsel %vm1032, %v1049, %v1053
      %v1097 = vunpack.c.l.b16 %v995
      %v1098 = vunpack.c.h.b16 %v995
      %v1099 = vunpack.c.l.b16 %v996
      %v1100 = vunpack.c.h.b16 %v996
      %v1101 = vunpack.c.l.b16 %v997
      %v1102 = vunpack.c.h.b16 %v997
      %v1103 = vunpack.c.l.b16 %v998
      %v1104 = vunpack.c.h.b16 %v998
      %v1105 = vunpack.c.l.b16 %v999
      %v1106 = vunpack.c.h.b16 %v999
      %v1107 = vunpack.c.l.b16 %v1000
      %v1108 = vunpack.c.h.b16 %v1000
      %v1109 = vunpack.c.l.b16 %v1001
      %v1110 = vunpack.c.h.b16 %v1001
      %v1111 = vunpack.c.l.b16 %v1002
      %v1112 = vunpack.c.h.b16 %v1002
      %v1113 = vunpack.c.l.b16 %v1003
      %v1114 = vunpack.c.h.b16 %v1003
      %v1115 = vunpack.c.l.b16 %v1004
      %v1116 = vunpack.c.h.b16 %v1004
      %v1117 = vunpack.c.l.b16 %v1005
      %v1118 = vunpack.c.h.b16 %v1005
      %v1119 = vunpack.c.l.b16 %v1006
      %v1120 = vunpack.c.h.b16 %v1006
      %v1121 = vunpack.c.l.b16 %v1007
      %v1122 = vunpack.c.h.b16 %v1007
      %v1123 = vunpack.c.l.b16 %v1008
      %v1124 = vunpack.c.h.b16 %v1008
      %v1125 = vunpack.c.l.b16 %v1009
      %v1126 = vunpack.c.h.b16 %v1009
      %v1127 = vunpack.c.l.b16 %v1010
      %v1128 = vunpack.c.h.b16 %v1010
      %v1129 = vunpack.c.l.b16 %v1011
      %v1130 = vunpack.c.h.b16 %v1011
      %v1131 = vunpack.c.l.b16 %v1012
      %v1132 = vunpack.c.h.b16 %v1012
      %v1133 = vunpack.c.l.b16 %v1013
      %v1134 = vunpack.c.h.b16 %v1013
      %v1135 = vunpack.c.l.b16 %v1014
      %v1136 = vunpack.c.h.b16 %v1014
      %v1137 = vunpack.c.l.b16 %v1015
      %v1138 = vunpack.c.h.b16 %v1015
      %v1139 = vunpack.c.l.b16 %v1016
      %v1140 = vunpack.c.h.b16 %v1016
      %v1141 = vunpack.c.l.b16 %v1017
      %v1142 = vunpack.c.h.b16 %v1017
      %v1143 = vunpack.c.l.b16 %v1018
      %v1144 = vunpack.c.h.b16 %v1018
      %v1145 = vunpack.c.l.b16 %v1019
      %v1146 = vunpack.c.h.b16 %v1019
      %v1147 = vunpack.c.l.b16 %v1020
      %v1148 = vunpack.c.h.b16 %v1020
      %v1149 = vunpack.c.l.b16 %v1021
      %v1150 = vunpack.c.h.b16 %v1021
      %v1151 = vunpack.c.l.b16 %v1022
      %v1152 = vunpack.c.h.b16 %v1022
      %v1153 = vunpack.c.l.b16 %v1023
      %v1154 = vunpack.c.h.b16 %v1023
      %v1155 = vunpack.c.l.b16 %v1024
      %v1156 = vunpack.c.h.b16 %v1024
      %v1157 = vunpack.c.l.b16 %v1025
      %v1158 = vunpack.c.h.b16 %v1025
      %v1159 = vunpack.c.l.b16 %v1026
      %v1160 = vunpack.c.h.b16 %v1026
      %v1161 = vpack.c.b16 %v1099, %v1097
      %v1162 = vpack.c.b16 %v1100, %v1098
      %v1163 = vpack.c.b16 %v1103, %v1101
      %v1164 = vpack.c.b16 %v1104, %v1102
      %v1165 = vpack.c.b16 %v1107, %v1105
      %v1166 = vpack.c.b16 %v1108, %v1106
      %v1167 = vpack.c.b16 %v1111, %v1109
      %v1168 = vpack.c.b16 %v1112, %v1110
      %v1169 = vpack.c.b16 %v1115, %v1113
      %v1170 = vpack.c.b16 %v1116, %v1114
      %v1171 = vpack.c.b16 %v1119, %v1117
      %v1172 = vpack.c.b16 %v1120, %v1118
      %v1173 = vpack.c.b16 %v1123, %v1121
      %v1174 = vpack.c.b16 %v1124, %v1122
      %v1175 = vpack.c.b16 %v1127, %v1125
      %v1176 = vpack.c.b16 %v1128, %v1126
      %v1177 = vpack.c.b16 %v1131, %v1129
      %v1178 = vpack.c.b16 %v1132, %v1130
      %v1179 = vpack.c.b16 %v1135, %v1133
      %v1180 = vpack.c.b16 %v1136, %v1134
      %v1181 = vpack.c.b16 %v1139, %v1137
      %v1182 = vpack.c.b16 %v1140, %v1138
      %v1183 = vpack.c.b16 %v1143, %v1141
      %v1184 = vpack.c.b16 %v1144, %v1142
      %v1185 = vpack.c.b16 %v1147, %v1145
      %v1186 = vpack.c.b16 %v1148, %v1146
      %v1187 = vpack.c.b16 %v1151, %v1149
      %v1188 = vpack.c.b16 %v1152, %v1150
      %v1189 = vpack.c.b16 %v1155, %v1153
      %v1190 = vpack.c.b16 %v1156, %v1154
      %v1191 = vpack.c.b16 %v1159, %v1157
      %v1192 = vpack.c.b16 %v1160, %v1158
      %1225 = vmatpush.bf16.msra.mxu0 %v1175
      %1226 = vmatpush.bf16.msra.mxu0 %v1173
      %1227 = vmatpush.bf16.msra.mxu0 %v1171
      %1228 = vmatpush.bf16.msra.mxu0 %v1169
      %1229 = vmatpush.bf16.msra.mxu0 %v1167
      %1230 = vmatpush.bf16.msra.mxu0 %v1165
      %1231 = vmatpush.bf16.msra.mxu0 %v1163
      %1232 = vmatpush.bf16.msra.mxu0 %v1161
      %1233 = vmatmul.bf16.gmra.mxu0 %v1035
      %v1234 = vpop.f32.mrf.mxu0
      %v1235 = vadd.f32 0.0, %v1234
      %v1236 = vpop.f32.mrf.mxu0
      %v1237 = vadd.f32 0.0, %v1236
      %1238 = vmatmul.bf16.gmra.mxu0 %v1040
      %v1239 = vpop.f32.mrf.mxu0
      %v1240 = vadd.f32 0.0, %v1239
      %v1241 = vpop.f32.mrf.mxu0
      %v1242 = vadd.f32 0.0, %v1241
      %1243 = vmatmul.bf16.gmra.mxu0 %v1044
      %v1244 = vpop.f32.mrf.mxu0
      %v1245 = vadd.f32 0.0, %v1244
      %v1246 = vpop.f32.mrf.mxu0
      %v1247 = vadd.f32 0.0, %v1246
      %1248 = vmatmul.bf16.gmra.mxu0 %v1048
      %v1249 = vpop.f32.mrf.mxu0
      %v1250 = vadd.f32 0.0, %v1249
      %v1251 = vpop.f32.mrf.mxu0
      %v1252 = vadd.f32 0.0, %v1251
      %1253 = vmatmul.bf16.gmra.mxu0 %v1052
      %v1254 = vpop.f32.mrf.mxu0
      %v1255 = vadd.f32 0.0, %v1254
      %v1256 = vpop.f32.mrf.mxu0
      %v1257 = vadd.f32 0.0, %v1256
      %1258 = vdwg.mxu0
      %1259 = vmatpush.bf16.msra.mxu0 %v1191
      %1260 = vmatpush.bf16.msra.mxu0 %v1189
      %1261 = vmatpush.bf16.msra.mxu0 %v1187
      %1262 = vmatpush.bf16.msra.mxu0 %v1185
      %1263 = vmatpush.bf16.msra.mxu0 %v1183
      %1264 = vmatpush.bf16.msra.mxu0 %v1181
      %1265 = vmatpush.bf16.msra.mxu0 %v1179
      %1266 = vmatpush.bf16.msra.mxu0 %v1177
      %1267 = vmatmul.bf16.gmra.mxu0 %v1038
      %v1268 = vpop.f32.mrf.mxu0
      %v1269 = vadd.f32 %v1235, %v1268
      %v1270 = vpop.f32.mrf.mxu0
      %v1271 = vadd.f32 %v1237, %v1270
      %1272 = vmatmul.bf16.gmra.mxu0 %v1042
      %v1273 = vpop.f32.mrf.mxu0
      %v1274 = vadd.f32 %v1240, %v1273
      %v1275 = vpop.f32.mrf.mxu0
      %v1276 = vadd.f32 %v1242, %v1275
      %1277 = vmatmul.bf16.gmra.mxu0 %v1046
      %v1278 = vpop.f32.mrf.mxu0
      %v1279 = vadd.f32 %v1245, %v1278
      %v1280 = vpop.f32.mrf.mxu0
      %v1281 = vadd.f32 %v1247, %v1280
      %1282 = vmatmul.bf16.gmra.mxu0 %v1050
      %v1283 = vpop.f32.mrf.mxu0
      %v1284 = vadd.f32 %v1250, %v1283
      %v1285 = vpop.f32.mrf.mxu0
      %v1286 = vadd.f32 %v1252, %v1285
      %1287 = vmatmul.bf16.gmra.mxu0 %v1054
      %v1288 = vpop.f32.mrf.mxu0
      %v1289 = vadd.f32 %v1255, %v1288
      %v1290 = vpop.f32.mrf.mxu0
      %v1291 = vadd.f32 %v1257, %v1290
      %1292 = vdwg.mxu0
      %1293 = vmatpush.bf16.msra.mxu0 %v1176
      %1294 = vmatpush.bf16.msra.mxu0 %v1174
      %1295 = vmatpush.bf16.msra.mxu0 %v1172
      %1296 = vmatpush.bf16.msra.mxu0 %v1170
      %1297 = vmatpush.bf16.msra.mxu0 %v1168
      %1298 = vmatpush.bf16.msra.mxu0 %v1166
      %1299 = vmatpush.bf16.msra.mxu0 %v1164
      %1300 = vmatpush.bf16.msra.mxu0 %v1162
      %1301 = vmatmul.bf16.gmra.mxu0 %v1035
      %v1302 = vpop.f32.mrf.mxu0
      %v1303 = vadd.f32 0.0, %v1302
      %v1304 = vpop.f32.mrf.mxu0
      %v1305 = vadd.f32 0.0, %v1304
      %1306 = vmatmul.bf16.gmra.mxu0 %v1040
      %v1307 = vpop.f32.mrf.mxu0
      %v1308 = vadd.f32 0.0, %v1307
      %v1309 = vpop.f32.mrf.mxu0
      %v1310 = vadd.f32 0.0, %v1309
      %1311 = vmatmul.bf16.gmra.mxu0 %v1044
      %v1312 = vpop.f32.mrf.mxu0
      %v1313 = vadd.f32 0.0, %v1312
      %v1314 = vpop.f32.mrf.mxu0
      %v1315 = vadd.f32 0.0, %v1314
      %1316 = vmatmul.bf16.gmra.mxu0 %v1048
      %v1317 = vpop.f32.mrf.mxu0
      %v1318 = vadd.f32 0.0, %v1317
      %v1319 = vpop.f32.mrf.mxu0
      %v1320 = vadd.f32 0.0, %v1319
      %1321 = vmatmul.bf16.gmra.mxu0 %v1052
      %v1322 = vpop.f32.mrf.mxu0
      %v1323 = vadd.f32 0.0, %v1322
      %v1324 = vpop.f32.mrf.mxu0
      %v1325 = vadd.f32 0.0, %v1324
      %1326 = vdwg.mxu0
      %1327 = vmatpush.bf16.msra.mxu0 %v1192
      %1328 = vmatpush.bf16.msra.mxu0 %v1190
      %1329 = vmatpush.bf16.msra.mxu0 %v1188
      %1330 = vmatpush.bf16.msra.mxu0 %v1186
      %1331 = vmatpush.bf16.msra.mxu0 %v1184
      %1332 = vmatpush.bf16.msra.mxu0 %v1182
      %1333 = vmatpush.bf16.msra.mxu0 %v1180
      %1334 = vmatpush.bf16.msra.mxu0 %v1178
      %1335 = vmatmul.bf16.gmra.mxu0 %v1038
      %v1336 = vpop.f32.mrf.mxu0
      %v1337 = vadd.f32 %v1303, %v1336
      %v1338 = vpop.f32.mrf.mxu0
      %v1339 = vadd.f32 %v1305, %v1338
      %1340 = vmatmul.bf16.gmra.mxu0 %v1042
      %v1341 = vpop.f32.mrf.mxu0
      %v1342 = vadd.f32 %v1308, %v1341
      %v1343 = vpop.f32.mrf.mxu0
      %v1344 = vadd.f32 %v1310, %v1343
      %1345 = vmatmul.bf16.gmra.mxu0 %v1046
      %v1346 = vpop.f32.mrf.mxu0
      %v1347 = vadd.f32 %v1313, %v1346
      %v1348 = vpop.f32.mrf.mxu0
      %v1349 = vadd.f32 %v1315, %v1348
      %1350 = vmatmul.bf16.gmra.mxu0 %v1050
      %v1351 = vpop.f32.mrf.mxu0
      %v1352 = vadd.f32 %v1318, %v1351
      %v1353 = vpop.f32.mrf.mxu0
      %v1354 = vadd.f32 %v1320, %v1353
      %1355 = vmatmul.bf16.gmra.mxu0 %v1054
      %v1356 = vpop.f32.mrf.mxu0
      %v1357 = vadd.f32 %v1323, %v1356
      %v1358 = vpop.f32.mrf.mxu0
      %v1359 = vadd.f32 %v1325, %v1358
      %1360 = vdwg.mxu0
      %v1361 = vadd.f32 %v901, %v1269
      %v1362 = vadd.f32 %v969, %v1337
      %v1363 = vadd.f32 %v903, %v1271
      %v1364 = vadd.f32 %v971, %v1339
      %v1365 = vadd.f32 %v906, %v1274
      %v1366 = vadd.f32 %v974, %v1342
      %v1367 = vadd.f32 %v908, %v1276
      %v1368 = vadd.f32 %v976, %v1344
      %v1369 = vadd.f32 %v911, %v1279
      %v1370 = vadd.f32 %v979, %v1347
      %v1371 = vadd.f32 %v913, %v1281
      %v1372 = vadd.f32 %v981, %v1349
      %v1373 = vadd.f32 %v916, %v1284
      %v1374 = vadd.f32 %v984, %v1352
      %v1375 = vadd.f32 %v918, %v1286
      %v1376 = vadd.f32 %v986, %v1354
      %v1377 = vadd.f32 %v921, %v1289
      %v1378 = vadd.f32 %v989, %v1357
      %v1379 = vadd.f32 %v923, %v1291
      %v1380 = vadd.f32 %v991, %v1359
      %v1381 = vld [vmem:[%s165 + $0x8] sm:$0xee]
      %v1382 = vld [vmem:[%s165 + $0x10] sm:$0xff]
      %v1383 = vld [vmem:[%s165 + $0x18] sm:$0xff]
      %v1384 = vld [vmem:[%s165 + $0x20] sm:$0xff]
      %v1385 = vld [vmem:[%s165 + $0x28] sm:$0xff]
      %v1386 = vld [vmem:[%s165 + $0x30] sm:$0xff]
      %v1387 = vld [vmem:[%s165 + $0x38] sm:$0xff]
      %v1388 = vld [vmem:[%s165 + $0x40] sm:$0xff]
      %v1389 = vld [vmem:[%s165 + $0x48] sm:$0xff]
      %v1390 = vld [vmem:[%s165 + $0x50] sm:$0xff]
      %v1391 = vld [vmem:[%s165 + $0x58] sm:$0x11]
      %s1392 = scalar_lea.vmem %s1, 768
      %v1393 = vld [vmem:[%s1392] sm:$0xff]
      %v1394 = vld [vmem:[%s1392 + $0x8] sm:$0xff]
      %v1395 = vld [vmem:[%s1392 + $0x10] sm:$0xff]
      %v1396 = vld [vmem:[%s1392 + $0x18] sm:$0xff]
      %v1397 = vld [vmem:[%s1392 + $0x20] sm:$0xff]
      %v1398 = vld [vmem:[%s1392 + $0x28] sm:$0xff]
      %v1399 = vld [vmem:[%s1392 + $0x30] sm:$0xff]
      %v1400 = vld [vmem:[%s1392 + $0x38] sm:$0xff]
      %v1401 = vld [vmem:[%s1392 + $0x40] sm:$0xff]
      %v1402 = vld [vmem:[%s1392 + $0x48] sm:$0xff]
      %v1403 = vld [vmem:[%s1392 + $0x50] sm:$0xff]
      %v1404 = vld [vmem:[%s1392 + $0x58] sm:$0xff]
      %v1405 = vld [vmem:[%s1392 + $0x60] sm:$0xff]
      %v1406 = vld [vmem:[%s1392 + $0x68] sm:$0xff]
      %v1407 = vld [vmem:[%s1392 + $0x70] sm:$0xff]
      %v1408 = vld [vmem:[%s1392 + $0x78] sm:$0xff]
      %v1409 = vld [vmem:[%s1392 + $0x80] sm:$0xff]
      %v1410 = vld [vmem:[%s1392 + $0x88] sm:$0xff]
      %v1411 = vld [vmem:[%s1392 + $0x90] sm:$0xff]
      %v1412 = vld [vmem:[%s1392 + $0x98] sm:$0xff]
      %v1413 = vld [vmem:[%s1392 + $0xa0] sm:$0xff]
      %v1414 = vld [vmem:[%s1392 + $0xa8] sm:$0xff]
      %v1415 = vld [vmem:[%s1392 + $0xb0] sm:$0xff]
      %v1416 = vld [vmem:[%s1392 + $0xb8] sm:$0xff]
      %v1417 = vld [vmem:[%s1392 + $0xc0] sm:$0xff]
      %v1418 = vld [vmem:[%s1392 + $0xc8] sm:$0xff]
      %v1419 = vld [vmem:[%s1392 + $0xd0] sm:$0xff]
      %v1420 = vld [vmem:[%s1392 + $0xd8] sm:$0xff]
      %v1421 = vld [vmem:[%s1392 + $0xe0] sm:$0xff]
      %v1422 = vld [vmem:[%s1392 + $0xe8] sm:$0xff]
      %v1423 = vld [vmem:[%s1392 + $0xf0] sm:$0xff]
      %v1424 = vld [vmem:[%s1392 + $0xf8] sm:$0xff]
      %v1436 = vunpack.c.l.b16 %v1381
      %v1437 = vunpack.c.h.b16 %v1381
      %v1438 = vunpack.c.l.b16 %v1382
      %v1439 = vunpack.c.h.b16 %v1382
      %v1440 = vunpack.c.l.b16 %v1383
      %v1441 = vunpack.c.h.b16 %v1383
      %v1442 = vunpack.c.l.b16 %v1384
      %v1443 = vunpack.c.h.b16 %v1384
      %v1444 = vunpack.c.l.b16 %v1385
      %v1445 = vunpack.c.h.b16 %v1385
      %v1446 = vunpack.c.l.b16 %v1386
      %v1447 = vunpack.c.h.b16 %v1386
      %v1448 = vunpack.c.l.b16 %v1387
      %v1449 = vunpack.c.h.b16 %v1387
      %v1450 = vunpack.c.l.b16 %v1388
      %v1451 = vunpack.c.h.b16 %v1388
      %v1452 = vunpack.c.l.b16 %v1389
      %v1453 = vunpack.c.h.b16 %v1389
      %v1454 = vunpack.c.l.b16 %v1390
      %v1455 = vunpack.c.h.b16 %v1390
      %v1456 = vunpack.c.l.b16 %v1391
      %v1457 = vunpack.c.h.b16 %v1391
      %v1458 = vpack.c.b16 %v1438, %v1436
      %v1459 = vpack.c.b16 %v1439, %v1437
      %v1460 = vpack.c.b16 %v1442, %v1440
      %v1461 = vpack.c.b16 %v1443, %v1441
      %v1462 = vpack.c.b16 %v1446, %v1444
      %v1463 = vpack.c.b16 %v1447, %v1445
      %v1464 = vpack.c.b16 %v1450, %v1448
      %v1465 = vpack.c.b16 %v1451, %v1449
      %v1466 = vpack.c.b16 %v1454, %v1452
      %v1467 = vpack.c.b16 %v1455, %v1453
      %v1468 = vpack.c.b16 %v1456, %v1456
      %v1469 = vpack.c.b16 %v1457, %v1457
      %v1470 = vrot.slane %v1458, 1
      %v1471 = vrot.slane %v1460, 1
      %v1472 = vsel %vm1032, %v1470, %v1471
      %v1473 = vrot.slane %v1459, 1
      %v1474 = vrot.slane %v1461, 1
      %v1475 = vsel %vm1032, %v1473, %v1474
      %v1476 = vrot.slane %v1462, 1
      %v1477 = vsel %vm1032, %v1471, %v1476
      %v1478 = vrot.slane %v1463, 1
      %v1479 = vsel %vm1032, %v1474, %v1478
      %v1480 = vrot.slane %v1464, 1
      %v1481 = vsel %vm1032, %v1476, %v1480
      %v1482 = vrot.slane %v1465, 1
      %v1483 = vsel %vm1032, %v1478, %v1482
      %v1484 = vrot.slane %v1466, 1
      %v1485 = vsel %vm1032, %v1480, %v1484
      %v1486 = vrot.slane %v1467, 1
      %v1487 = vsel %vm1032, %v1482, %v1486
      %v1488 = vrot.slane %v1468, 1
      %v1489 = vsel %vm1032, %v1484, %v1488
      %v1490 = vrot.slane %v1469, 1
      %v1491 = vsel %vm1032, %v1486, %v1490
      %v1534 = vunpack.c.l.b16 %v1393
      %v1535 = vunpack.c.h.b16 %v1393
      %v1536 = vunpack.c.l.b16 %v1394
      %v1537 = vunpack.c.h.b16 %v1394
      %v1538 = vunpack.c.l.b16 %v1395
      %v1539 = vunpack.c.h.b16 %v1395
      %v1540 = vunpack.c.l.b16 %v1396
      %v1541 = vunpack.c.h.b16 %v1396
      %v1542 = vunpack.c.l.b16 %v1397
      %v1543 = vunpack.c.h.b16 %v1397
      %v1544 = vunpack.c.l.b16 %v1398
      %v1545 = vunpack.c.h.b16 %v1398
      %v1546 = vunpack.c.l.b16 %v1399
      %v1547 = vunpack.c.h.b16 %v1399
      %v1548 = vunpack.c.l.b16 %v1400
      %v1549 = vunpack.c.h.b16 %v1400
      %v1550 = vunpack.c.l.b16 %v1401
      %v1551 = vunpack.c.h.b16 %v1401
      %v1552 = vunpack.c.l.b16 %v1402
      %v1553 = vunpack.c.h.b16 %v1402
      %v1554 = vunpack.c.l.b16 %v1403
      %v1555 = vunpack.c.h.b16 %v1403
      %v1556 = vunpack.c.l.b16 %v1404
      %v1557 = vunpack.c.h.b16 %v1404
      %v1558 = vunpack.c.l.b16 %v1405
      %v1559 = vunpack.c.h.b16 %v1405
      %v1560 = vunpack.c.l.b16 %v1406
      %v1561 = vunpack.c.h.b16 %v1406
      %v1562 = vunpack.c.l.b16 %v1407
      %v1563 = vunpack.c.h.b16 %v1407
      %v1564 = vunpack.c.l.b16 %v1408
      %v1565 = vunpack.c.h.b16 %v1408
      %v1566 = vunpack.c.l.b16 %v1409
      %v1567 = vunpack.c.h.b16 %v1409
      %v1568 = vunpack.c.l.b16 %v1410
      %v1569 = vunpack.c.h.b16 %v1410
      %v1570 = vunpack.c.l.b16 %v1411
      %v1571 = vunpack.c.h.b16 %v1411
      %v1572 = vunpack.c.l.b16 %v1412
      %v1573 = vunpack.c.h.b16 %v1412
      %v1574 = vunpack.c.l.b16 %v1413
      %v1575 = vunpack.c.h.b16 %v1413
      %v1576 = vunpack.c.l.b16 %v1414
      %v1577 = vunpack.c.h.b16 %v1414
      %v1578 = vunpack.c.l.b16 %v1415
      %v1579 = vunpack.c.h.b16 %v1415
      %v1580 = vunpack.c.l.b16 %v1416
      %v1581 = vunpack.c.h.b16 %v1416
      %v1582 = vunpack.c.l.b16 %v1417
      %v1583 = vunpack.c.h.b16 %v1417
      %v1584 = vunpack.c.l.b16 %v1418
      %v1585 = vunpack.c.h.b16 %v1418
      %v1586 = vunpack.c.l.b16 %v1419
      %v1587 = vunpack.c.h.b16 %v1419
      %v1588 = vunpack.c.l.b16 %v1420
      %v1589 = vunpack.c.h.b16 %v1420
      %v1590 = vunpack.c.l.b16 %v1421
      %v1591 = vunpack.c.h.b16 %v1421
      %v1592 = vunpack.c.l.b16 %v1422
      %v1593 = vunpack.c.h.b16 %v1422
      %v1594 = vunpack.c.l.b16 %v1423
      %v1595 = vunpack.c.h.b16 %v1423
      %v1596 = vunpack.c.l.b16 %v1424
      %v1597 = vunpack.c.h.b16 %v1424
      %v1598 = vpack.c.b16 %v1536, %v1534
      %v1599 = vpack.c.b16 %v1537, %v1535
      %v1600 = vpack.c.b16 %v1540, %v1538
      %v1601 = vpack.c.b16 %v1541, %v1539
      %v1602 = vpack.c.b16 %v1544, %v1542
      %v1603 = vpack.c.b16 %v1545, %v1543
      %v1604 = vpack.c.b16 %v1548, %v1546
      %v1605 = vpack.c.b16 %v1549, %v1547
      %v1606 = vpack.c.b16 %v1552, %v1550
      %v1607 = vpack.c.b16 %v1553, %v1551
      %v1608 = vpack.c.b16 %v1556, %v1554
      %v1609 = vpack.c.b16 %v1557, %v1555
      %v1610 = vpack.c.b16 %v1560, %v1558
      %v1611 = vpack.c.b16 %v1561, %v1559
      %v1612 = vpack.c.b16 %v1564, %v1562
      %v1613 = vpack.c.b16 %v1565, %v1563
      %v1614 = vpack.c.b16 %v1568, %v1566
      %v1615 = vpack.c.b16 %v1569, %v1567
      %v1616 = vpack.c.b16 %v1572, %v1570
      %v1617 = vpack.c.b16 %v1573, %v1571
      %v1618 = vpack.c.b16 %v1576, %v1574
      %v1619 = vpack.c.b16 %v1577, %v1575
      %v1620 = vpack.c.b16 %v1580, %v1578
      %v1621 = vpack.c.b16 %v1581, %v1579
      %v1622 = vpack.c.b16 %v1584, %v1582
      %v1623 = vpack.c.b16 %v1585, %v1583
      %v1624 = vpack.c.b16 %v1588, %v1586
      %v1625 = vpack.c.b16 %v1589, %v1587
      %v1626 = vpack.c.b16 %v1592, %v1590
      %v1627 = vpack.c.b16 %v1593, %v1591
      %v1628 = vpack.c.b16 %v1596, %v1594
      %v1629 = vpack.c.b16 %v1597, %v1595
      %1662 = vmatpush.bf16.msra.mxu0 %v1612
      %1663 = vmatpush.bf16.msra.mxu0 %v1610
      %1664 = vmatpush.bf16.msra.mxu0 %v1608
      %1665 = vmatpush.bf16.msra.mxu0 %v1606
      %1666 = vmatpush.bf16.msra.mxu0 %v1604
      %1667 = vmatpush.bf16.msra.mxu0 %v1602
      %1668 = vmatpush.bf16.msra.mxu0 %v1600
      %1669 = vmatpush.bf16.msra.mxu0 %v1598
      %1670 = vmatmul.bf16.gmra.mxu0 %v1472
      %v1671 = vpop.f32.mrf.mxu0
      %v1672 = vadd.f32 0.0, %v1671
      %v1673 = vpop.f32.mrf.mxu0
      %v1674 = vadd.f32 0.0, %v1673
      %1675 = vmatmul.bf16.gmra.mxu0 %v1477
      %v1676 = vpop.f32.mrf.mxu0
      %v1677 = vadd.f32 0.0, %v1676
      %v1678 = vpop.f32.mrf.mxu0
      %v1679 = vadd.f32 0.0, %v1678
      %1680 = vmatmul.bf16.gmra.mxu0 %v1481
      %v1681 = vpop.f32.mrf.mxu0
      %v1682 = vadd.f32 0.0, %v1681
      %v1683 = vpop.f32.mrf.mxu0
      %v1684 = vadd.f32 0.0, %v1683
      %1685 = vmatmul.bf16.gmra.mxu0 %v1485
      %v1686 = vpop.f32.mrf.mxu0
      %v1687 = vadd.f32 0.0, %v1686
      %v1688 = vpop.f32.mrf.mxu0
      %v1689 = vadd.f32 0.0, %v1688
      %1690 = vmatmul.bf16.gmra.mxu0 %v1489
      %v1691 = vpop.f32.mrf.mxu0
      %v1692 = vadd.f32 0.0, %v1691
      %v1693 = vpop.f32.mrf.mxu0
      %v1694 = vadd.f32 0.0, %v1693
      %1695 = vdwg.mxu0
      %1696 = vmatpush.bf16.msra.mxu0 %v1628
      %1697 = vmatpush.bf16.msra.mxu0 %v1626
      %1698 = vmatpush.bf16.msra.mxu0 %v1624
      %1699 = vmatpush.bf16.msra.mxu0 %v1622
      %1700 = vmatpush.bf16.msra.mxu0 %v1620
      %1701 = vmatpush.bf16.msra.mxu0 %v1618
      %1702 = vmatpush.bf16.msra.mxu0 %v1616
      %1703 = vmatpush.bf16.msra.mxu0 %v1614
      %1704 = vmatmul.bf16.gmra.mxu0 %v1475
      %v1705 = vpop.f32.mrf.mxu0
      %v1706 = vadd.f32 %v1672, %v1705
      %v1707 = vpop.f32.mrf.mxu0
      %v1708 = vadd.f32 %v1674, %v1707
      %1709 = vmatmul.bf16.gmra.mxu0 %v1479
      %v1710 = vpop.f32.mrf.mxu0
      %v1711 = vadd.f32 %v1677, %v1710
      %v1712 = vpop.f32.mrf.mxu0
      %v1713 = vadd.f32 %v1679, %v1712
      %1714 = vmatmul.bf16.gmra.mxu0 %v1483
      %v1715 = vpop.f32.mrf.mxu0
      %v1716 = vadd.f32 %v1682, %v1715
      %v1717 = vpop.f32.mrf.mxu0
      %v1718 = vadd.f32 %v1684, %v1717
      %1719 = vmatmul.bf16.gmra.mxu0 %v1487
      %v1720 = vpop.f32.mrf.mxu0
      %v1721 = vadd.f32 %v1687, %v1720
      %v1722 = vpop.f32.mrf.mxu0
      %v1723 = vadd.f32 %v1689, %v1722
      %1724 = vmatmul.bf16.gmra.mxu0 %v1491
      %v1725 = vpop.f32.mrf.mxu0
      %v1726 = vadd.f32 %v1692, %v1725
      %v1727 = vpop.f32.mrf.mxu0
      %v1728 = vadd.f32 %v1694, %v1727
      %1729 = vdwg.mxu0
      %1730 = vmatpush.bf16.msra.mxu0 %v1613
      %1731 = vmatpush.bf16.msra.mxu0 %v1611
      %1732 = vmatpush.bf16.msra.mxu0 %v1609
      %1733 = vmatpush.bf16.msra.mxu0 %v1607
      %1734 = vmatpush.bf16.msra.mxu0 %v1605
      %1735 = vmatpush.bf16.msra.mxu0 %v1603
      %1736 = vmatpush.bf16.msra.mxu0 %v1601
      %1737 = vmatpush.bf16.msra.mxu0 %v1599
      %1738 = vmatmul.bf16.gmra.mxu0 %v1472
      %v1739 = vpop.f32.mrf.mxu0
      %v1740 = vadd.f32 0.0, %v1739
      %v1741 = vpop.f32.mrf.mxu0
      %v1742 = vadd.f32 0.0, %v1741
      %1743 = vmatmul.bf16.gmra.mxu0 %v1477
      %v1744 = vpop.f32.mrf.mxu0
      %v1745 = vadd.f32 0.0, %v1744
      %v1746 = vpop.f32.mrf.mxu0
      %v1747 = vadd.f32 0.0, %v1746
      %1748 = vmatmul.bf16.gmra.mxu0 %v1481
      %v1749 = vpop.f32.mrf.mxu0
      %v1750 = vadd.f32 0.0, %v1749
      %v1751 = vpop.f32.mrf.mxu0
      %v1752 = vadd.f32 0.0, %v1751
      %1753 = vmatmul.bf16.gmra.mxu0 %v1485
      %v1754 = vpop.f32.mrf.mxu0
      %v1755 = vadd.f32 0.0, %v1754
      %v1756 = vpop.f32.mrf.mxu0
      %v1757 = vadd.f32 0.0, %v1756
      %1758 = vmatmul.bf16.gmra.mxu0 %v1489
      %v1759 = vpop.f32.mrf.mxu0
      %v1760 = vadd.f32 0.0, %v1759
      %v1761 = vpop.f32.mrf.mxu0
      %v1762 = vadd.f32 0.0, %v1761
      %1763 = vdwg.mxu0
      %1764 = vmatpush.bf16.msra.mxu0 %v1629
      %1765 = vmatpush.bf16.msra.mxu0 %v1627
      %1766 = vmatpush.bf16.msra.mxu0 %v1625
      %1767 = vmatpush.bf16.msra.mxu0 %v1623
      %1768 = vmatpush.bf16.msra.mxu0 %v1621
      %1769 = vmatpush.bf16.msra.mxu0 %v1619
      %1770 = vmatpush.bf16.msra.mxu0 %v1617
      %1771 = vmatpush.bf16.msra.mxu0 %v1615
      %1772 = vmatmul.bf16.gmra.mxu0 %v1475
      %v1773 = vpop.f32.mrf.mxu0
      %v1774 = vadd.f32 %v1740, %v1773
      %v1775 = vpop.f32.mrf.mxu0
      %v1776 = vadd.f32 %v1742, %v1775
      %1777 = vmatmul.bf16.gmra.mxu0 %v1479
      %v1778 = vpop.f32.mrf.mxu0
      %v1779 = vadd.f32 %v1745, %v1778
      %v1780 = vpop.f32.mrf.mxu0
      %v1781 = vadd.f32 %v1747, %v1780
      %1782 = vmatmul.bf16.gmra.mxu0 %v1483
      %v1783 = vpop.f32.mrf.mxu0
      %v1784 = vadd.f32 %v1750, %v1783
      %v1785 = vpop.f32.mrf.mxu0
      %v1786 = vadd.f32 %v1752, %v1785
      %1787 = vmatmul.bf16.gmra.mxu0 %v1487
      %v1788 = vpop.f32.mrf.mxu0
      %v1789 = vadd.f32 %v1755, %v1788
      %v1790 = vpop.f32.mrf.mxu0
      %v1791 = vadd.f32 %v1757, %v1790
      %1792 = vmatmul.bf16.gmra.mxu0 %v1491
      %v1793 = vpop.f32.mrf.mxu0
      %v1794 = vadd.f32 %v1760, %v1793
      %v1795 = vpop.f32.mrf.mxu0
      %v1796 = vadd.f32 %v1762, %v1795
      %1797 = vdwg.mxu0
      %v1798 = vadd.f32 %v1361, %v1706
      %v1799 = vadd.f32 %v1362, %v1774
      %v1800 = vadd.f32 %v1363, %v1708
      %v1801 = vadd.f32 %v1364, %v1776
      %v1802 = vadd.f32 %v1365, %v1711
      %v1803 = vadd.f32 %v1366, %v1779
      %v1804 = vadd.f32 %v1367, %v1713
      %v1805 = vadd.f32 %v1368, %v1781
      %v1806 = vadd.f32 %v1369, %v1716
      %v1807 = vadd.f32 %v1370, %v1784
      %v1808 = vadd.f32 %v1371, %v1718
      %v1809 = vadd.f32 %v1372, %v1786
      %v1810 = vadd.f32 %v1373, %v1721
      %v1811 = vadd.f32 %v1374, %v1789
      %v1812 = vadd.f32 %v1375, %v1723
      %v1813 = vadd.f32 %v1376, %v1791
      %v1814 = vadd.f32 %v1377, %v1726
      %v1815 = vadd.f32 %v1378, %v1794
      %v1816 = vadd.f32 %v1379, %v1728
      %v1817 = vadd.f32 %v1380, %v1796
      %v1818 = vld [vmem:[%s165 + $0x58] sm:$0x33]
      %s1819 = scalar_lea.vmem %s1, 1024
      %v1820 = vld [vmem:[%s1819] sm:$0xff]
      %v1821 = vld [vmem:[%s1819 + $0x8] sm:$0xff]
      %v1822 = vld [vmem:[%s1819 + $0x10] sm:$0xff]
      %v1823 = vld [vmem:[%s1819 + $0x18] sm:$0xff]
      %v1824 = vld [vmem:[%s1819 + $0x20] sm:$0xff]
      %v1825 = vld [vmem:[%s1819 + $0x28] sm:$0xff]
      %v1826 = vld [vmem:[%s1819 + $0x30] sm:$0xff]
      %v1827 = vld [vmem:[%s1819 + $0x38] sm:$0xff]
      %v1828 = vld [vmem:[%s1819 + $0x40] sm:$0xff]
      %v1829 = vld [vmem:[%s1819 + $0x48] sm:$0xff]
      %v1830 = vld [vmem:[%s1819 + $0x50] sm:$0xff]
      %v1831 = vld [vmem:[%s1819 + $0x58] sm:$0xff]
      %v1832 = vld [vmem:[%s1819 + $0x60] sm:$0xff]
      %v1833 = vld [vmem:[%s1819 + $0x68] sm:$0xff]
      %v1834 = vld [vmem:[%s1819 + $0x70] sm:$0xff]
      %v1835 = vld [vmem:[%s1819 + $0x78] sm:$0xff]
      %v1836 = vld [vmem:[%s1819 + $0x80] sm:$0xff]
      %v1837 = vld [vmem:[%s1819 + $0x88] sm:$0xff]
      %v1838 = vld [vmem:[%s1819 + $0x90] sm:$0xff]
      %v1839 = vld [vmem:[%s1819 + $0x98] sm:$0xff]
      %v1840 = vld [vmem:[%s1819 + $0xa0] sm:$0xff]
      %v1841 = vld [vmem:[%s1819 + $0xa8] sm:$0xff]
      %v1842 = vld [vmem:[%s1819 + $0xb0] sm:$0xff]
      %v1843 = vld [vmem:[%s1819 + $0xb8] sm:$0xff]
      %v1844 = vld [vmem:[%s1819 + $0xc0] sm:$0xff]
      %v1845 = vld [vmem:[%s1819 + $0xc8] sm:$0xff]
      %v1846 = vld [vmem:[%s1819 + $0xd0] sm:$0xff]
      %v1847 = vld [vmem:[%s1819 + $0xd8] sm:$0xff]
      %v1848 = vld [vmem:[%s1819 + $0xe0] sm:$0xff]
      %v1849 = vld [vmem:[%s1819 + $0xe8] sm:$0xff]
      %v1850 = vld [vmem:[%s1819 + $0xf0] sm:$0xff]
      %v1851 = vld [vmem:[%s1819 + $0xf8] sm:$0xff]
      %v1853 = vunpack.c.l.b16 %v1818
      %v1854 = vunpack.c.h.b16 %v1818
      %v1855 = vpack.c.b16 %v1853, %v1853
      %v1856 = vpack.c.b16 %v1854, %v1854
      %vm1857 = vsmask.f32 6400
      %v1859 = vshrl.u32 %v1458, 16
      %v1861 = vrot.slane %v1859, 1
      %v1862 = vshll.u32 %v1458, 16
      %v1864 = vrot.slane %v1862, 2
      %v1865 = vor.u32 %v1861, %v1864
      %v1867 = vshrl.u32 %v1460, 16
      %v1869 = vrot.slane %v1867, 1
      %v1870 = vshll.u32 %v1460, 16
      %v1872 = vrot.slane %v1870, 2
      %v1873 = vor.u32 %v1869, %v1872
      %v1874 = vsel %vm1857, %v1865, %v1873
      %v1876 = vshrl.u32 %v1459, 16
      %v1878 = vrot.slane %v1876, 1
      %v1879 = vshll.u32 %v1459, 16
      %v1881 = vrot.slane %v1879, 2
      %v1882 = vor.u32 %v1878, %v1881
      %v1884 = vshrl.u32 %v1461, 16
      %v1886 = vrot.slane %v1884, 1
      %v1887 = vshll.u32 %v1461, 16
      %v1889 = vrot.slane %v1887, 2
      %v1890 = vor.u32 %v1886, %v1889
      %v1891 = vsel %vm1857, %v1882, %v1890
      %v1893 = vshrl.u32 %v1462, 16
      %v1895 = vrot.slane %v1893, 1
      %v1896 = vshll.u32 %v1462, 16
      %v1898 = vrot.slane %v1896, 2
      %v1899 = vor.u32 %v1895, %v1898
      %v1900 = vsel %vm1857, %v1873, %v1899
      %v1902 = vshrl.u32 %v1463, 16
      %v1904 = vrot.slane %v1902, 1
      %v1905 = vshll.u32 %v1463, 16
      %v1907 = vrot.slane %v1905, 2
      %v1908 = vor.u32 %v1904, %v1907
      %v1909 = vsel %vm1857, %v1890, %v1908
      %v1911 = vshrl.u32 %v1464, 16
      %v1913 = vrot.slane %v1911, 1
      %v1914 = vshll.u32 %v1464, 16
      %v1916 = vrot.slane %v1914, 2
      %v1917 = vor.u32 %v1913, %v1916
      %v1918 = vsel %vm1857, %v1899, %v1917
      %v1920 = vshrl.u32 %v1465, 16
      %v1922 = vrot.slane %v1920, 1
      %v1923 = vshll.u32 %v1465, 16
      %v1925 = vrot.slane %v1923, 2
      %v1926 = vor.u32 %v1922, %v1925
      %v1927 = vsel %vm1857, %v1908, %v1926
      %v1929 = vshrl.u32 %v1466, 16
      %v1931 = vrot.slane %v1929, 1
      %v1932 = vshll.u32 %v1466, 16
      %v1934 = vrot.slane %v1932, 2
      %v1935 = vor.u32 %v1931, %v1934
      %v1936 = vsel %vm1857, %v1917, %v1935
      %v1938 = vshrl.u32 %v1467, 16
      %v1940 = vrot.slane %v1938, 1
      %v1941 = vshll.u32 %v1467, 16
      %v1943 = vrot.slane %v1941, 2
      %v1944 = vor.u32 %v1940, %v1943
      %v1945 = vsel %vm1857, %v1926, %v1944
      %v1947 = vshrl.u32 %v1855, 16
      %v1949 = vrot.slane %v1947, 1
      %v1950 = vshll.u32 %v1855, 16
      %v1952 = vrot.slane %v1950, 2
      %v1953 = vor.u32 %v1949, %v1952
      %v1954 = vsel %vm1857, %v1935, %v1953
      %v1956 = vshrl.u32 %v1856, 16
      %v1958 = vrot.slane %v1956, 1
      %v1959 = vshll.u32 %v1856, 16
      %v1961 = vrot.slane %v1959, 2
      %v1962 = vor.u32 %v1958, %v1961
      %v1963 = vsel %vm1857, %v1944, %v1962
      %v2006 = vunpack.c.l.b16 %v1820
      %v2007 = vunpack.c.h.b16 %v1820
      %v2008 = vunpack.c.l.b16 %v1821
      %v2009 = vunpack.c.h.b16 %v1821
      %v2010 = vunpack.c.l.b16 %v1822
      %v2011 = vunpack.c.h.b16 %v1822
      %v2012 = vunpack.c.l.b16 %v1823
      %v2013 = vunpack.c.h.b16 %v1823
      %v2014 = vunpack.c.l.b16 %v1824
      %v2015 = vunpack.c.h.b16 %v1824
      %v2016 = vunpack.c.l.b16 %v1825
      %v2017 = vunpack.c.h.b16 %v1825
      %v2018 = vunpack.c.l.b16 %v1826
      %v2019 = vunpack.c.h.b16 %v1826
      %v2020 = vunpack.c.l.b16 %v1827
      %v2021 = vunpack.c.h.b16 %v1827
      %v2022 = vunpack.c.l.b16 %v1828
      %v2023 = vunpack.c.h.b16 %v1828
      %v2024 = vunpack.c.l.b16 %v1829
      %v2025 = vunpack.c.h.b16 %v1829
      %v2026 = vunpack.c.l.b16 %v1830
      %v2027 = vunpack.c.h.b16 %v1830
      %v2028 = vunpack.c.l.b16 %v1831
      %v2029 = vunpack.c.h.b16 %v1831
      %v2030 = vunpack.c.l.b16 %v1832
      %v2031 = vunpack.c.h.b16 %v1832
      %v2032 = vunpack.c.l.b16 %v1833
      %v2033 = vunpack.c.h.b16 %v1833
      %v2034 = vunpack.c.l.b16 %v1834
      %v2035 = vunpack.c.h.b16 %v1834
      %v2036 = vunpack.c.l.b16 %v1835
      %v2037 = vunpack.c.h.b16 %v1835
      %v2038 = vunpack.c.l.b16 %v1836
      %v2039 = vunpack.c.h.b16 %v1836
      %v2040 = vunpack.c.l.b16 %v1837
      %v2041 = vunpack.c.h.b16 %v1837
      %v2042 = vunpack.c.l.b16 %v1838
      %v2043 = vunpack.c.h.b16 %v1838
      %v2044 = vunpack.c.l.b16 %v1839
      %v2045 = vunpack.c.h.b16 %v1839
      %v2046 = vunpack.c.l.b16 %v1840
      %v2047 = vunpack.c.h.b16 %v1840
      %v2048 = vunpack.c.l.b16 %v1841
      %v2049 = vunpack.c.h.b16 %v1841
      %v2050 = vunpack.c.l.b16 %v1842
      %v2051 = vunpack.c.h.b16 %v1842
      %v2052 = vunpack.c.l.b16 %v1843
      %v2053 = vunpack.c.h.b16 %v1843
      %v2054 = vunpack.c.l.b16 %v1844
      %v2055 = vunpack.c.h.b16 %v1844
      %v2056 = vunpack.c.l.b16 %v1845
      %v2057 = vunpack.c.h.b16 %v1845
      %v2058 = vunpack.c.l.b16 %v1846
      %v2059 = vunpack.c.h.b16 %v1846
      %v2060 = vunpack.c.l.b16 %v1847
      %v2061 = vunpack.c.h.b16 %v1847
      %v2062 = vunpack.c.l.b16 %v1848
      %v2063 = vunpack.c.h.b16 %v1848
      %v2064 = vunpack.c.l.b16 %v1849
      %v2065 = vunpack.c.h.b16 %v1849
      %v2066 = vunpack.c.l.b16 %v1850
      %v2067 = vunpack.c.h.b16 %v1850
      %v2068 = vunpack.c.l.b16 %v1851
      %v2069 = vunpack.c.h.b16 %v1851
      %v2070 = vpack.c.b16 %v2008, %v2006
      %v2071 = vpack.c.b16 %v2009, %v2007
      %v2072 = vpack.c.b16 %v2012, %v2010
      %v2073 = vpack.c.b16 %v2013, %v2011
      %v2074 = vpack.c.b16 %v2016, %v2014
      %v2075 = vpack.c.b16 %v2017, %v2015
      %v2076 = vpack.c.b16 %v2020, %v2018
      %v2077 = vpack.c.b16 %v2021, %v2019
      %v2078 = vpack.c.b16 %v2024, %v2022
      %v2079 = vpack.c.b16 %v2025, %v2023
      %v2080 = vpack.c.b16 %v2028, %v2026
      %v2081 = vpack.c.b16 %v2029, %v2027
      %v2082 = vpack.c.b16 %v2032, %v2030
      %v2083 = vpack.c.b16 %v2033, %v2031
      %v2084 = vpack.c.b16 %v2036, %v2034
      %v2085 = vpack.c.b16 %v2037, %v2035
      %v2086 = vpack.c.b16 %v2040, %v2038
      %v2087 = vpack.c.b16 %v2041, %v2039
      %v2088 = vpack.c.b16 %v2044, %v2042
      %v2089 = vpack.c.b16 %v2045, %v2043
      %v2090 = vpack.c.b16 %v2048, %v2046
      %v2091 = vpack.c.b16 %v2049, %v2047
      %v2092 = vpack.c.b16 %v2052, %v2050
      %v2093 = vpack.c.b16 %v2053, %v2051
      %v2094 = vpack.c.b16 %v2056, %v2054
      %v2095 = vpack.c.b16 %v2057, %v2055
      %v2096 = vpack.c.b16 %v2060, %v2058
      %v2097 = vpack.c.b16 %v2061, %v2059
      %v2098 = vpack.c.b16 %v2064, %v2062
      %v2099 = vpack.c.b16 %v2065, %v2063
      %v2100 = vpack.c.b16 %v2068, %v2066
      %v2101 = vpack.c.b16 %v2069, %v2067
      %2134 = vmatpush.bf16.msra.mxu0 %v2084
      %2135 = vmatpush.bf16.msra.mxu0 %v2082
      %2136 = vmatpush.bf16.msra.mxu0 %v2080
      %2137 = vmatpush.bf16.msra.mxu0 %v2078
      %2138 = vmatpush.bf16.msra.mxu0 %v2076
      %2139 = vmatpush.bf16.msra.mxu0 %v2074
      %2140 = vmatpush.bf16.msra.mxu0 %v2072
      %2141 = vmatpush.bf16.msra.mxu0 %v2070
      %2142 = vmatmul.bf16.gmra.mxu0 %v1874
      %v2143 = vpop.f32.mrf.mxu0
      %v2144 = vadd.f32 0.0, %v2143
      %v2145 = vpop.f32.mrf.mxu0
      %v2146 = vadd.f32 0.0, %v2145
      %2147 = vmatmul.bf16.gmra.mxu0 %v1900
      %v2148 = vpop.f32.mrf.mxu0
      %v2149 = vadd.f32 0.0, %v2148
      %v2150 = vpop.f32.mrf.mxu0
      %v2151 = vadd.f32 0.0, %v2150
      %2152 = vmatmul.bf16.gmra.mxu0 %v1918
      %v2153 = vpop.f32.mrf.mxu0
      %v2154 = vadd.f32 0.0, %v2153
      %v2155 = vpop.f32.mrf.mxu0
      %v2156 = vadd.f32 0.0, %v2155
      %2157 = vmatmul.bf16.gmra.mxu0 %v1936
      %v2158 = vpop.f32.mrf.mxu0
      %v2159 = vadd.f32 0.0, %v2158
      %v2160 = vpop.f32.mrf.mxu0
      %v2161 = vadd.f32 0.0, %v2160
      %2162 = vmatmul.bf16.gmra.mxu0 %v1954
      %v2163 = vpop.f32.mrf.mxu0
      %v2164 = vadd.f32 0.0, %v2163
      %v2165 = vpop.f32.mrf.mxu0
      %v2166 = vadd.f32 0.0, %v2165
      %2167 = vdwg.mxu0
      %2168 = vmatpush.bf16.msra.mxu0 %v2100
      %2169 = vmatpush.bf16.msra.mxu0 %v2098
      %2170 = vmatpush.bf16.msra.mxu0 %v2096
      %2171 = vmatpush.bf16.msra.mxu0 %v2094
      %2172 = vmatpush.bf16.msra.mxu0 %v2092
      %2173 = vmatpush.bf16.msra.mxu0 %v2090
      %2174 = vmatpush.bf16.msra.mxu0 %v2088
      %2175 = vmatpush.bf16.msra.mxu0 %v2086
      %2176 = vmatmul.bf16.gmra.mxu0 %v1891
      %v2177 = vpop.f32.mrf.mxu0
      %v2178 = vadd.f32 %v2144, %v2177
      %v2179 = vpop.f32.mrf.mxu0
      %v2180 = vadd.f32 %v2146, %v2179
      %2181 = vmatmul.bf16.gmra.mxu0 %v1909
      %v2182 = vpop.f32.mrf.mxu0
      %v2183 = vadd.f32 %v2149, %v2182
      %v2184 = vpop.f32.mrf.mxu0
      %v2185 = vadd.f32 %v2151, %v2184
      %2186 = vmatmul.bf16.gmra.mxu0 %v1927
      %v2187 = vpop.f32.mrf.mxu0
      %v2188 = vadd.f32 %v2154, %v2187
      %v2189 = vpop.f32.mrf.mxu0
      %v2190 = vadd.f32 %v2156, %v2189
      %2191 = vmatmul.bf16.gmra.mxu0 %v1945
      %v2192 = vpop.f32.mrf.mxu0
      %v2193 = vadd.f32 %v2159, %v2192
      %v2194 = vpop.f32.mrf.mxu0
      %v2195 = vadd.f32 %v2161, %v2194
      %2196 = vmatmul.bf16.gmra.mxu0 %v1963
      %v2197 = vpop.f32.mrf.mxu0
      %v2198 = vadd.f32 %v2164, %v2197
      %v2199 = vpop.f32.mrf.mxu0
      %v2200 = vadd.f32 %v2166, %v2199
      %2201 = vdwg.mxu0
      %2202 = vmatpush.bf16.msra.mxu0 %v2085
      %2203 = vmatpush.bf16.msra.mxu0 %v2083
      %2204 = vmatpush.bf16.msra.mxu0 %v2081
      %2205 = vmatpush.bf16.msra.mxu0 %v2079
      %2206 = vmatpush.bf16.msra.mxu0 %v2077
      %2207 = vmatpush.bf16.msra.mxu0 %v2075
      %2208 = vmatpush.bf16.msra.mxu0 %v2073
      %2209 = vmatpush.bf16.msra.mxu0 %v2071
      %2210 = vmatmul.bf16.gmra.mxu0 %v1874
      %v2211 = vpop.f32.mrf.mxu0
      %v2212 = vadd.f32 0.0, %v2211
      %v2213 = vpop.f32.mrf.mxu0
      %v2214 = vadd.f32 0.0, %v2213
      %2215 = vmatmul.bf16.gmra.mxu0 %v1900
      %v2216 = vpop.f32.mrf.mxu0
      %v2217 = vadd.f32 0.0, %v2216
      %v2218 = vpop.f32.mrf.mxu0
      %v2219 = vadd.f32 0.0, %v2218
      %2220 = vmatmul.bf16.gmra.mxu0 %v1918
      %v2221 = vpop.f32.mrf.mxu0
      %v2222 = vadd.f32 0.0, %v2221
      %v2223 = vpop.f32.mrf.mxu0
      %v2224 = vadd.f32 0.0, %v2223
      %2225 = vmatmul.bf16.gmra.mxu0 %v1936
      %v2226 = vpop.f32.mrf.mxu0
      %v2227 = vadd.f32 0.0, %v2226
      %v2228 = vpop.f32.mrf.mxu0
      %v2229 = vadd.f32 0.0, %v2228
      %2230 = vmatmul.bf16.gmra.mxu0 %v1954
      %v2231 = vpop.f32.mrf.mxu0
      %v2232 = vadd.f32 0.0, %v2231
      %v2233 = vpop.f32.mrf.mxu0
      %v2234 = vadd.f32 0.0, %v2233
      %2235 = vdwg.mxu0
      %2236 = vmatpush.bf16.msra.mxu0 %v2101
      %2237 = vmatpush.bf16.msra.mxu0 %v2099
      %2238 = vmatpush.bf16.msra.mxu0 %v2097
      %2239 = vmatpush.bf16.msra.mxu0 %v2095
      %2240 = vmatpush.bf16.msra.mxu0 %v2093
      %2241 = vmatpush.bf16.msra.mxu0 %v2091
      %2242 = vmatpush.bf16.msra.mxu0 %v2089
      %2243 = vmatpush.bf16.msra.mxu0 %v2087
      %2244 = vmatmul.bf16.gmra.mxu0 %v1891
      %v2245 = vpop.f32.mrf.mxu0
      %v2246 = vadd.f32 %v2212, %v2245
      %v2247 = vpop.f32.mrf.mxu0
      %v2248 = vadd.f32 %v2214, %v2247
      %2249 = vmatmul.bf16.gmra.mxu0 %v1909
      %v2250 = vpop.f32.mrf.mxu0
      %v2251 = vadd.f32 %v2217, %v2250
      %v2252 = vpop.f32.mrf.mxu0
      %v2253 = vadd.f32 %v2219, %v2252
      %2254 = vmatmul.bf16.gmra.mxu0 %v1927
      %v2255 = vpop.f32.mrf.mxu0
      %v2256 = vadd.f32 %v2222, %v2255
      %v2257 = vpop.f32.mrf.mxu0
      %v2258 = vadd.f32 %v2224, %v2257
      %2259 = vmatmul.bf16.gmra.mxu0 %v1945
      %v2260 = vpop.f32.mrf.mxu0
      %v2261 = vadd.f32 %v2227, %v2260
      %v2262 = vpop.f32.mrf.mxu0
      %v2263 = vadd.f32 %v2229, %v2262
      %2264 = vmatmul.bf16.gmra.mxu0 %v1963
      %v2265 = vpop.f32.mrf.mxu0
      %v2266 = vadd.f32 %v2232, %v2265
      %v2267 = vpop.f32.mrf.mxu0
      %v2268 = vadd.f32 %v2234, %v2267
      %2269 = vdwg.mxu0
      %v2270 = vadd.f32 %v1798, %v2178
      %v2271 = vadd.f32 %v1799, %v2246
      %v2272 = vadd.f32 %v1800, %v2180
      %v2273 = vadd.f32 %v1801, %v2248
      %v2274 = vadd.f32 %v1802, %v2183
      %v2275 = vadd.f32 %v1803, %v2251
      %v2276 = vadd.f32 %v1804, %v2185
      %v2277 = vadd.f32 %v1805, %v2253
      %v2278 = vadd.f32 %v1806, %v2188
      %v2279 = vadd.f32 %v1807, %v2256
      %v2280 = vadd.f32 %v1808, %v2190
      %v2281 = vadd.f32 %v1809, %v2258
      %v2282 = vadd.f32 %v1810, %v2193
      %v2283 = vadd.f32 %v1811, %v2261
      %v2284 = vadd.f32 %v1812, %v2195
      %v2285 = vadd.f32 %v1813, %v2263
      %v2286 = vadd.f32 %v1814, %v2198
      %v2287 = vadd.f32 %v1815, %v2266
      %v2288 = vadd.f32 %v1816, %v2200
      %v2289 = vadd.f32 %v1817, %v2268
      %v2290 = vld [vmem:[%s165 + $0x8] sm:$0xcc]
      %s2291 = scalar_lea.vmem %s1, 1280
      %v2292 = vld [vmem:[%s2291] sm:$0xff]
      %v2293 = vld [vmem:[%s2291 + $0x8] sm:$0xff]
      %v2294 = vld [vmem:[%s2291 + $0x10] sm:$0xff]
      %v2295 = vld [vmem:[%s2291 + $0x18] sm:$0xff]
      %v2296 = vld [vmem:[%s2291 + $0x20] sm:$0xff]
      %v2297 = vld [vmem:[%s2291 + $0x28] sm:$0xff]
      %v2298 = vld [vmem:[%s2291 + $0x30] sm:$0xff]
      %v2299 = vld [vmem:[%s2291 + $0x38] sm:$0xff]
      %v2300 = vld [vmem:[%s2291 + $0x40] sm:$0xff]
      %v2301 = vld [vmem:[%s2291 + $0x48] sm:$0xff]
      %v2302 = vld [vmem:[%s2291 + $0x50] sm:$0xff]
      %v2303 = vld [vmem:[%s2291 + $0x58] sm:$0xff]
      %v2304 = vld [vmem:[%s2291 + $0x60] sm:$0xff]
      %v2305 = vld [vmem:[%s2291 + $0x68] sm:$0xff]
      %v2306 = vld [vmem:[%s2291 + $0x70] sm:$0xff]
      %v2307 = vld [vmem:[%s2291 + $0x78] sm:$0xff]
      %v2308 = vld [vmem:[%s2291 + $0x80] sm:$0xff]
      %v2309 = vld [vmem:[%s2291 + $0x88] sm:$0xff]
      %v2310 = vld [vmem:[%s2291 + $0x90] sm:$0xff]
      %v2311 = vld [vmem:[%s2291 + $0x98] sm:$0xff]
      %v2312 = vld [vmem:[%s2291 + $0xa0] sm:$0xff]
      %v2313 = vld [vmem:[%s2291 + $0xa8] sm:$0xff]
      %v2314 = vld [vmem:[%s2291 + $0xb0] sm:$0xff]
      %v2315 = vld [vmem:[%s2291 + $0xb8] sm:$0xff]
      %v2316 = vld [vmem:[%s2291 + $0xc0] sm:$0xff]
      %v2317 = vld [vmem:[%s2291 + $0xc8] sm:$0xff]
      %v2318 = vld [vmem:[%s2291 + $0xd0] sm:$0xff]
      %v2319 = vld [vmem:[%s2291 + $0xd8] sm:$0xff]
      %v2320 = vld [vmem:[%s2291 + $0xe0] sm:$0xff]
      %v2321 = vld [vmem:[%s2291 + $0xe8] sm:$0xff]
      %v2322 = vld [vmem:[%s2291 + $0xf0] sm:$0xff]
      %v2323 = vld [vmem:[%s2291 + $0xf8] sm:$0xff]
      %v2325 = vunpack.c.l.b16 %v2290
      %v2326 = vunpack.c.h.b16 %v2290
      %v2327 = vpack.c.b16 %v1438, %v2325
      %v2328 = vpack.c.b16 %v1439, %v2326
      %vm2329 = vcmask 1045504
      %v2330 = vrot.slane %v2327, 2
      %v2331 = vrot.slane %v1460, 2
      %v2332 = vsel %vm2329, %v2330, %v2331
      %v2333 = vrot.slane %v2328, 2
      %v2334 = vrot.slane %v1461, 2
      %v2335 = vsel %vm2329, %v2333, %v2334
      %v2336 = vrot.slane %v1462, 2
      %v2337 = vsel %vm2329, %v2331, %v2336
      %v2338 = vrot.slane %v1463, 2
      %v2339 = vsel %vm2329, %v2334, %v2338
      %v2340 = vrot.slane %v1464, 2
      %v2341 = vsel %vm2329, %v2336, %v2340
      %v2342 = vrot.slane %v1465, 2
      %v2343 = vsel %vm2329, %v2338, %v2342
      %v2344 = vrot.slane %v1466, 2
      %v2345 = vsel %vm2329, %v2340, %v2344
      %v2346 = vrot.slane %v1467, 2
      %v2347 = vsel %vm2329, %v2342, %v2346
      %v2348 = vrot.slane %v1855, 2
      %v2349 = vsel %vm2329, %v2344, %v2348
      %v2350 = vrot.slane %v1856, 2
      %v2351 = vsel %vm2329, %v2346, %v2350
      %v2394 = vunpack.c.l.b16 %v2292
      %v2395 = vunpack.c.h.b16 %v2292
      %v2396 = vunpack.c.l.b16 %v2293
      %v2397 = vunpack.c.h.b16 %v2293
      %v2398 = vunpack.c.l.b16 %v2294
      %v2399 = vunpack.c.h.b16 %v2294
      %v2400 = vunpack.c.l.b16 %v2295
      %v2401 = vunpack.c.h.b16 %v2295
      %v2402 = vunpack.c.l.b16 %v2296
      %v2403 = vunpack.c.h.b16 %v2296
      %v2404 = vunpack.c.l.b16 %v2297
      %v2405 = vunpack.c.h.b16 %v2297
      %v2406 = vunpack.c.l.b16 %v2298
      %v2407 = vunpack.c.h.b16 %v2298
      %v2408 = vunpack.c.l.b16 %v2299
      %v2409 = vunpack.c.h.b16 %v2299
      %v2410 = vunpack.c.l.b16 %v2300
      %v2411 = vunpack.c.h.b16 %v2300
      %v2412 = vunpack.c.l.b16 %v2301
      %v2413 = vunpack.c.h.b16 %v2301
      %v2414 = vunpack.c.l.b16 %v2302
      %v2415 = vunpack.c.h.b16 %v2302
      %v2416 = vunpack.c.l.b16 %v2303
      %v2417 = vunpack.c.h.b16 %v2303
      %v2418 = vunpack.c.l.b16 %v2304
      %v2419 = vunpack.c.h.b16 %v2304
      %v2420 = vunpack.c.l.b16 %v2305
      %v2421 = vunpack.c.h.b16 %v2305
      %v2422 = vunpack.c.l.b16 %v2306
      %v2423 = vunpack.c.h.b16 %v2306
      %v2424 = vunpack.c.l.b16 %v2307
      %v2425 = vunpack.c.h.b16 %v2307
      %v2426 = vunpack.c.l.b16 %v2308
      %v2427 = vunpack.c.h.b16 %v2308
      %v2428 = vunpack.c.l.b16 %v2309
      %v2429 = vunpack.c.h.b16 %v2309
      %v2430 = vunpack.c.l.b16 %v2310
      %v2431 = vunpack.c.h.b16 %v2310
      %v2432 = vunpack.c.l.b16 %v2311
      %v2433 = vunpack.c.h.b16 %v2311
      %v2434 = vunpack.c.l.b16 %v2312
      %v2435 = vunpack.c.h.b16 %v2312
      %v2436 = vunpack.c.l.b16 %v2313
      %v2437 = vunpack.c.h.b16 %v2313
      %v2438 = vunpack.c.l.b16 %v2314
      %v2439 = vunpack.c.h.b16 %v2314
      %v2440 = vunpack.c.l.b16 %v2315
      %v2441 = vunpack.c.h.b16 %v2315
      %v2442 = vunpack.c.l.b16 %v2316
      %v2443 = vunpack.c.h.b16 %v2316
      %v2444 = vunpack.c.l.b16 %v2317
      %v2445 = vunpack.c.h.b16 %v2317
      %v2446 = vunpack.c.l.b16 %v2318
      %v2447 = vunpack.c.h.b16 %v2318
      %v2448 = vunpack.c.l.b16 %v2319
      %v2449 = vunpack.c.h.b16 %v2319
      %v2450 = vunpack.c.l.b16 %v2320
      %v2451 = vunpack.c.h.b16 %v2320
      %v2452 = vunpack.c.l.b16 %v2321
      %v2453 = vunpack.c.h.b16 %v2321
      %v2454 = vunpack.c.l.b16 %v2322
      %v2455 = vunpack.c.h.b16 %v2322
      %v2456 = vunpack.c.l.b16 %v2323
      %v2457 = vunpack.c.h.b16 %v2323
      %v2458 = vpack.c.b16 %v2396, %v2394
      %v2459 = vpack.c.b16 %v2397, %v2395
      %v2460 = vpack.c.b16 %v2400, %v2398
      %v2461 = vpack.c.b16 %v2401, %v2399
      %v2462 = vpack.c.b16 %v2404, %v2402
      %v2463 = vpack.c.b16 %v2405, %v2403
      %v2464 = vpack.c.b16 %v2408, %v2406
      %v2465 = vpack.c.b16 %v2409, %v2407
      %v2466 = vpack.c.b16 %v2412, %v2410
      %v2467 = vpack.c.b16 %v2413, %v2411
      %v2468 = vpack.c.b16 %v2416, %v2414
      %v2469 = vpack.c.b16 %v2417, %v2415
      %v2470 = vpack.c.b16 %v2420, %v2418
      %v2471 = vpack.c.b16 %v2421, %v2419
      %v2472 = vpack.c.b16 %v2424, %v2422
      %v2473 = vpack.c.b16 %v2425, %v2423
      %v2474 = vpack.c.b16 %v2428, %v2426
      %v2475 = vpack.c.b16 %v2429, %v2427
      %v2476 = vpack.c.b16 %v2432, %v2430
      %v2477 = vpack.c.b16 %v2433, %v2431
      %v2478 = vpack.c.b16 %v2436, %v2434
      %v2479 = vpack.c.b16 %v2437, %v2435
      %v2480 = vpack.c.b16 %v2440, %v2438
      %v2481 = vpack.c.b16 %v2441, %v2439
      %v2482 = vpack.c.b16 %v2444, %v2442
      %v2483 = vpack.c.b16 %v2445, %v2443
      %v2484 = vpack.c.b16 %v2448, %v2446
      %v2485 = vpack.c.b16 %v2449, %v2447
      %v2486 = vpack.c.b16 %v2452, %v2450
      %v2487 = vpack.c.b16 %v2453, %v2451
      %v2488 = vpack.c.b16 %v2456, %v2454
      %v2489 = vpack.c.b16 %v2457, %v2455
      %2522 = vmatpush.bf16.msra.mxu0 %v2472
      %2523 = vmatpush.bf16.msra.mxu0 %v2470
      %2524 = vmatpush.bf16.msra.mxu0 %v2468
      %2525 = vmatpush.bf16.msra.mxu0 %v2466
      %2526 = vmatpush.bf16.msra.mxu0 %v2464
      %2527 = vmatpush.bf16.msra.mxu0 %v2462
      %2528 = vmatpush.bf16.msra.mxu0 %v2460
      %2529 = vmatpush.bf16.msra.mxu0 %v2458
      %2530 = vmatmul.bf16.gmra.mxu0 %v2332
      %v2531 = vpop.f32.mrf.mxu0
      %v2532 = vadd.f32 0.0, %v2531
      %v2533 = vpop.f32.mrf.mxu0
      %v2534 = vadd.f32 0.0, %v2533
      %2535 = vmatmul.bf16.gmra.mxu0 %v2337
      %v2536 = vpop.f32.mrf.mxu0
      %v2537 = vadd.f32 0.0, %v2536
      %v2538 = vpop.f32.mrf.mxu0
      %v2539 = vadd.f32 0.0, %v2538
      %2540 = vmatmul.bf16.gmra.mxu0 %v2341
      %v2541 = vpop.f32.mrf.mxu0
      %v2542 = vadd.f32 0.0, %v2541
      %v2543 = vpop.f32.mrf.mxu0
      %v2544 = vadd.f32 0.0, %v2543
      %2545 = vmatmul.bf16.gmra.mxu0 %v2345
      %v2546 = vpop.f32.mrf.mxu0
      %v2547 = vadd.f32 0.0, %v2546
      %v2548 = vpop.f32.mrf.mxu0
      %v2549 = vadd.f32 0.0, %v2548
      %2550 = vmatmul.bf16.gmra.mxu0 %v2349
      %v2551 = vpop.f32.mrf.mxu0
      %v2552 = vadd.f32 0.0, %v2551
      %v2553 = vpop.f32.mrf.mxu0
      %v2554 = vadd.f32 0.0, %v2553
      %2555 = vdwg.mxu0
      %2556 = vmatpush.bf16.msra.mxu0 %v2488
      %2557 = vmatpush.bf16.msra.mxu0 %v2486
      %2558 = vmatpush.bf16.msra.mxu0 %v2484
      %2559 = vmatpush.bf16.msra.mxu0 %v2482
      %2560 = vmatpush.bf16.msra.mxu0 %v2480
      %2561 = vmatpush.bf16.msra.mxu0 %v2478
      %2562 = vmatpush.bf16.msra.mxu0 %v2476
      %2563 = vmatpush.bf16.msra.mxu0 %v2474
      %2564 = vmatmul.bf16.gmra.mxu0 %v2335
      %v2565 = vpop.f32.mrf.mxu0
      %v2566 = vadd.f32 %v2532, %v2565
      %v2567 = vpop.f32.mrf.mxu0
      %v2568 = vadd.f32 %v2534, %v2567
      %2569 = vmatmul.bf16.gmra.mxu0 %v2339
      %v2570 = vpop.f32.mrf.mxu0
      %v2571 = vadd.f32 %v2537, %v2570
      %v2572 = vpop.f32.mrf.mxu0
      %v2573 = vadd.f32 %v2539, %v2572
      %2574 = vmatmul.bf16.gmra.mxu0 %v2343
      %v2575 = vpop.f32.mrf.mxu0
      %v2576 = vadd.f32 %v2542, %v2575
      %v2577 = vpop.f32.mrf.mxu0
      %v2578 = vadd.f32 %v2544, %v2577
      %2579 = vmatmul.bf16.gmra.mxu0 %v2347
      %v2580 = vpop.f32.mrf.mxu0
      %v2581 = vadd.f32 %v2547, %v2580
      %v2582 = vpop.f32.mrf.mxu0
      %v2583 = vadd.f32 %v2549, %v2582
      %2584 = vmatmul.bf16.gmra.mxu0 %v2351
      %v2585 = vpop.f32.mrf.mxu0
      %v2586 = vadd.f32 %v2552, %v2585
      %v2587 = vpop.f32.mrf.mxu0
      %v2588 = vadd.f32 %v2554, %v2587
      %2589 = vdwg.mxu0
      %2590 = vmatpush.bf16.msra.mxu0 %v2473
      %2591 = vmatpush.bf16.msra.mxu0 %v2471
      %2592 = vmatpush.bf16.msra.mxu0 %v2469
      %2593 = vmatpush.bf16.msra.mxu0 %v2467
      %2594 = vmatpush.bf16.msra.mxu0 %v2465
      %2595 = vmatpush.bf16.msra.mxu0 %v2463
      %2596 = vmatpush.bf16.msra.mxu0 %v2461
      %2597 = vmatpush.bf16.msra.mxu0 %v2459
      %2598 = vmatmul.bf16.gmra.mxu0 %v2332
      %v2599 = vpop.f32.mrf.mxu0
      %v2600 = vadd.f32 0.0, %v2599
      %v2601 = vpop.f32.mrf.mxu0
      %v2602 = vadd.f32 0.0, %v2601
      %2603 = vmatmul.bf16.gmra.mxu0 %v2337
      %v2604 = vpop.f32.mrf.mxu0
      %v2605 = vadd.f32 0.0, %v2604
      %v2606 = vpop.f32.mrf.mxu0
      %v2607 = vadd.f32 0.0, %v2606
      %2608 = vmatmul.bf16.gmra.mxu0 %v2341
      %v2609 = vpop.f32.mrf.mxu0
      %v2610 = vadd.f32 0.0, %v2609
      %v2611 = vpop.f32.mrf.mxu0
      %v2612 = vadd.f32 0.0, %v2611
      %2613 = vmatmul.bf16.gmra.mxu0 %v2345
      %v2614 = vpop.f32.mrf.mxu0
      %v2615 = vadd.f32 0.0, %v2614
      %v2616 = vpop.f32.mrf.mxu0
      %v2617 = vadd.f32 0.0, %v2616
      %2618 = vmatmul.bf16.gmra.mxu0 %v2349
      %v2619 = vpop.f32.mrf.mxu0
      %v2620 = vadd.f32 0.0, %v2619
      %v2621 = vpop.f32.mrf.mxu0
      %v2622 = vadd.f32 0.0, %v2621
      %2623 = vdwg.mxu0
      %2624 = vmatpush.bf16.msra.mxu0 %v2489
      %2625 = vmatpush.bf16.msra.mxu0 %v2487
      %2626 = vmatpush.bf16.msra.mxu0 %v2485
      %2627 = vmatpush.bf16.msra.mxu0 %v2483
      %2628 = vmatpush.bf16.msra.mxu0 %v2481
      %2629 = vmatpush.bf16.msra.mxu0 %v2479
      %2630 = vmatpush.bf16.msra.mxu0 %v2477
      %2631 = vmatpush.bf16.msra.mxu0 %v2475
      %2632 = vmatmul.bf16.gmra.mxu0 %v2335
      %v2633 = vpop.f32.mrf.mxu0
      %v2634 = vadd.f32 %v2600, %v2633
      %v2635 = vpop.f32.mrf.mxu0
      %v2636 = vadd.f32 %v2602, %v2635
      %2637 = vmatmul.bf16.gmra.mxu0 %v2339
      %v2638 = vpop.f32.mrf.mxu0
      %v2639 = vadd.f32 %v2605, %v2638
      %v2640 = vpop.f32.mrf.mxu0
      %v2641 = vadd.f32 %v2607, %v2640
      %2642 = vmatmul.bf16.gmra.mxu0 %v2343
      %v2643 = vpop.f32.mrf.mxu0
      %v2644 = vadd.f32 %v2610, %v2643
      %v2645 = vpop.f32.mrf.mxu0
      %v2646 = vadd.f32 %v2612, %v2645
      %2647 = vmatmul.bf16.gmra.mxu0 %v2347
      %v2648 = vpop.f32.mrf.mxu0
      %v2649 = vadd.f32 %v2615, %v2648
      %v2650 = vpop.f32.mrf.mxu0
      %v2651 = vadd.f32 %v2617, %v2650
      %2652 = vmatmul.bf16.gmra.mxu0 %v2351
      %v2653 = vpop.f32.mrf.mxu0
      %v2654 = vadd.f32 %v2620, %v2653
      %v2655 = vpop.f32.mrf.mxu0
      %v2656 = vadd.f32 %v2622, %v2655
      %2657 = vdwg.mxu0
      %v2658 = vadd.f32 %v2270, %v2566
      %v2659 = vadd.f32 %v2271, %v2634
      %v2660 = vadd.f32 %v2272, %v2568
      %v2661 = vadd.f32 %v2273, %v2636
      %v2662 = vadd.f32 %v2274, %v2571
      %v2663 = vadd.f32 %v2275, %v2639
      %v2664 = vadd.f32 %v2276, %v2573
      %v2665 = vadd.f32 %v2277, %v2641
      %v2666 = vadd.f32 %v2278, %v2576
      %v2667 = vadd.f32 %v2279, %v2644
      %v2668 = vadd.f32 %v2280, %v2578
      %v2669 = vadd.f32 %v2281, %v2646
      %v2670 = vadd.f32 %v2282, %v2581
      %v2671 = vadd.f32 %v2283, %v2649
      %v2672 = vadd.f32 %v2284, %v2583
      %v2673 = vadd.f32 %v2285, %v2651
      %v2674 = vadd.f32 %v2286, %v2586
      %v2675 = vadd.f32 %v2287, %v2654
      %v2676 = vadd.f32 %v2288, %v2588
      %v2677 = vadd.f32 %v2289, %v2656
      %v2678 = vld [vmem:[%s165 + $0x10] sm:$0xcc]
      %v2679 = vld [vmem:[%s165 + $0x18] sm:$0xff]
      %v2680 = vld [vmem:[%s165 + $0x20] sm:$0xff]
      %v2681 = vld [vmem:[%s165 + $0x28] sm:$0xff]
      %v2682 = vld [vmem:[%s165 + $0x30] sm:$0xff]
      %v2683 = vld [vmem:[%s165 + $0x38] sm:$0xff]
      %v2684 = vld [vmem:[%s165 + $0x40] sm:$0xff]
      %v2685 = vld [vmem:[%s165 + $0x48] sm:$0xff]
      %v2686 = vld [vmem:[%s165 + $0x50] sm:$0xff]
      %v2687 = vld [vmem:[%s165 + $0x58] sm:$0xff]
      %v2688 = vld [vmem:[%s165 + $0x60] sm:$0x33]
      %s2689 = scalar_lea.vmem %s1, 1536
      %v2690 = vld [vmem:[%s2689] sm:$0xff]
      %v2691 = vld [vmem:[%s2689 + $0x8] sm:$0xff]
      %v2692 = vld [vmem:[%s2689 + $0x10] sm:$0xff]
      %v2693 = vld [vmem:[%s2689 + $0x18] sm:$0xff]
      %v2694 = vld [vmem:[%s2689 + $0x20] sm:$0xff]
      %v2695 = vld [vmem:[%s2689 + $0x28] sm:$0xff]
      %v2696 = vld [vmem:[%s2689 + $0x30] sm:$0xff]
      %v2697 = vld [vmem:[%s2689 + $0x38] sm:$0xff]
      %v2698 = vld [vmem:[%s2689 + $0x40] sm:$0xff]
      %v2699 = vld [vmem:[%s2689 + $0x48] sm:$0xff]
      %v2700 = vld [vmem:[%s2689 + $0x50] sm:$0xff]
      %v2701 = vld [vmem:[%s2689 + $0x58] sm:$0xff]
      %v2702 = vld [vmem:[%s2689 + $0x60] sm:$0xff]
      %v2703 = vld [vmem:[%s2689 + $0x68] sm:$0xff]
      %v2704 = vld [vmem:[%s2689 + $0x70] sm:$0xff]
      %v2705 = vld [vmem:[%s2689 + $0x78] sm:$0xff]
      %v2706 = vld [vmem:[%s2689 + $0x80] sm:$0xff]
      %v2707 = vld [vmem:[%s2689 + $0x88] sm:$0xff]
      %v2708 = vld [vmem:[%s2689 + $0x90] sm:$0xff]
      %v2709 = vld [vmem:[%s2689 + $0x98] sm:$0xff]
      %v2710 = vld [vmem:[%s2689 + $0xa0] sm:$0xff]
      %v2711 = vld [vmem:[%s2689 + $0xa8] sm:$0xff]
      %v2712 = vld [vmem:[%s2689 + $0xb0] sm:$0xff]
      %v2713 = vld [vmem:[%s2689 + $0xb8] sm:$0xff]
      %v2714 = vld [vmem:[%s2689 + $0xc0] sm:$0xff]
      %v2715 = vld [vmem:[%s2689 + $0xc8] sm:$0xff]
      %v2716 = vld [vmem:[%s2689 + $0xd0] sm:$0xff]
      %v2717 = vld [vmem:[%s2689 + $0xd8] sm:$0xff]
      %v2718 = vld [vmem:[%s2689 + $0xe0] sm:$0xff]
      %v2719 = vld [vmem:[%s2689 + $0xe8] sm:$0xff]
      %v2720 = vld [vmem:[%s2689 + $0xf0] sm:$0xff]
      %v2721 = vld [vmem:[%s2689 + $0xf8] sm:$0xff]
      %v2733 = vunpack.c.l.b16 %v2678
      %v2734 = vunpack.c.h.b16 %v2678
      %v2735 = vunpack.c.l.b16 %v2679
      %v2736 = vunpack.c.h.b16 %v2679
      %v2737 = vunpack.c.l.b16 %v2680
      %v2738 = vunpack.c.h.b16 %v2680
      %v2739 = vunpack.c.l.b16 %v2681
      %v2740 = vunpack.c.h.b16 %v2681
      %v2741 = vunpack.c.l.b16 %v2682
      %v2742 = vunpack.c.h.b16 %v2682
      %v2743 = vunpack.c.l.b16 %v2683
      %v2744 = vunpack.c.h.b16 %v2683
      %v2745 = vunpack.c.l.b16 %v2684
      %v2746 = vunpack.c.h.b16 %v2684
      %v2747 = vunpack.c.l.b16 %v2685
      %v2748 = vunpack.c.h.b16 %v2685
      %v2749 = vunpack.c.l.b16 %v2686
      %v2750 = vunpack.c.h.b16 %v2686
      %v2751 = vunpack.c.l.b16 %v2687
      %v2752 = vunpack.c.h.b16 %v2687
      %v2753 = vunpack.c.l.b16 %v2688
      %v2754 = vunpack.c.h.b16 %v2688
      %v2755 = vpack.c.b16 %v2735, %v2733
      %v2756 = vpack.c.b16 %v2736, %v2734
      %v2757 = vpack.c.b16 %v2739, %v2737
      %v2758 = vpack.c.b16 %v2740, %v2738
      %v2759 = vpack.c.b16 %v2743, %v2741
      %v2760 = vpack.c.b16 %v2744, %v2742
      %v2761 = vpack.c.b16 %v2747, %v2745
      %v2762 = vpack.c.b16 %v2748, %v2746
      %v2763 = vpack.c.b16 %v2751, %v2749
      %v2764 = vpack.c.b16 %v2752, %v2750
      %v2765 = vpack.c.b16 %v2753, %v2753
      %v2766 = vpack.c.b16 %v2754, %v2754
      %v2767 = vrot.slane %v2755, 2
      %v2768 = vrot.slane %v2757, 2
      %v2769 = vsel %vm2329, %v2767, %v2768
      %v2770 = vrot.slane %v2756, 2
      %v2771 = vrot.slane %v2758, 2
      %v2772 = vsel %vm2329, %v2770, %v2771
      %v2773 = vrot.slane %v2759, 2
      %v2774 = vsel %vm2329, %v2768, %v2773
      %v2775 = vrot.slane %v2760, 2
      %v2776 = vsel %vm2329, %v2771, %v2775
      %v2777 = vrot.slane %v2761, 2
      %v2778 = vsel %vm2329, %v2773, %v2777
      %v2779 = vrot.slane %v2762, 2
      %v2780 = vsel %vm2329, %v2775, %v2779
      %v2781 = vrot.slane %v2763, 2
      %v2782 = vsel %vm2329, %v2777, %v2781
      %v2783 = vrot.slane %v2764, 2
      %v2784 = vsel %vm2329, %v2779, %v2783
      %v2785 = vrot.slane %v2765, 2
      %v2786 = vsel %vm2329, %v2781, %v2785
      %v2787 = vrot.slane %v2766, 2
      %v2788 = vsel %vm2329, %v2783, %v2787
      %v2831 = vunpack.c.l.b16 %v2690
      %v2832 = vunpack.c.h.b16 %v2690
      %v2833 = vunpack.c.l.b16 %v2691
      %v2834 = vunpack.c.h.b16 %v2691
      %v2835 = vunpack.c.l.b16 %v2692
      %v2836 = vunpack.c.h.b16 %v2692
      %v2837 = vunpack.c.l.b16 %v2693
      %v2838 = vunpack.c.h.b16 %v2693
      %v2839 = vunpack.c.l.b16 %v2694
      %v2840 = vunpack.c.h.b16 %v2694
      %v2841 = vunpack.c.l.b16 %v2695
      %v2842 = vunpack.c.h.b16 %v2695
      %v2843 = vunpack.c.l.b16 %v2696
      %v2844 = vunpack.c.h.b16 %v2696
      %v2845 = vunpack.c.l.b16 %v2697
      %v2846 = vunpack.c.h.b16 %v2697
      %v2847 = vunpack.c.l.b16 %v2698
      %v2848 = vunpack.c.h.b16 %v2698
      %v2849 = vunpack.c.l.b16 %v2699
      %v2850 = vunpack.c.h.b16 %v2699
      %v2851 = vunpack.c.l.b16 %v2700
      %v2852 = vunpack.c.h.b16 %v2700
      %v2853 = vunpack.c.l.b16 %v2701
      %v2854 = vunpack.c.h.b16 %v2701
      %v2855 = vunpack.c.l.b16 %v2702
      %v2856 = vunpack.c.h.b16 %v2702
      %v2857 = vunpack.c.l.b16 %v2703
      %v2858 = vunpack.c.h.b16 %v2703
      %v2859 = vunpack.c.l.b16 %v2704
      %v2860 = vunpack.c.h.b16 %v2704
      %v2861 = vunpack.c.l.b16 %v2705
      %v2862 = vunpack.c.h.b16 %v2705
      %v2863 = vunpack.c.l.b16 %v2706
      %v2864 = vunpack.c.h.b16 %v2706
      %v2865 = vunpack.c.l.b16 %v2707
      %v2866 = vunpack.c.h.b16 %v2707
      %v2867 = vunpack.c.l.b16 %v2708
      %v2868 = vunpack.c.h.b16 %v2708
      %v2869 = vunpack.c.l.b16 %v2709
      %v2870 = vunpack.c.h.b16 %v2709
      %v2871 = vunpack.c.l.b16 %v2710
      %v2872 = vunpack.c.h.b16 %v2710
      %v2873 = vunpack.c.l.b16 %v2711
      %v2874 = vunpack.c.h.b16 %v2711
      %v2875 = vunpack.c.l.b16 %v2712
      %v2876 = vunpack.c.h.b16 %v2712
      %v2877 = vunpack.c.l.b16 %v2713
      %v2878 = vunpack.c.h.b16 %v2713
      %v2879 = vunpack.c.l.b16 %v2714
      %v2880 = vunpack.c.h.b16 %v2714
      %v2881 = vunpack.c.l.b16 %v2715
      %v2882 = vunpack.c.h.b16 %v2715
      %v2883 = vunpack.c.l.b16 %v2716
      %v2884 = vunpack.c.h.b16 %v2716
      %v2885 = vunpack.c.l.b16 %v2717
      %v2886 = vunpack.c.h.b16 %v2717
      %v2887 = vunpack.c.l.b16 %v2718
      %v2888 = vunpack.c.h.b16 %v2718
      %v2889 = vunpack.c.l.b16 %v2719
      %v2890 = vunpack.c.h.b16 %v2719
      %v2891 = vunpack.c.l.b16 %v2720
      %v2892 = vunpack.c.h.b16 %v2720
      %v2893 = vunpack.c.l.b16 %v2721
      %v2894 = vunpack.c.h.b16 %v2721
      %v2895 = vpack.c.b16 %v2833, %v2831
      %v2896 = vpack.c.b16 %v2834, %v2832
      %v2897 = vpack.c.b16 %v2837, %v2835
      %v2898 = vpack.c.b16 %v2838, %v2836
      %v2899 = vpack.c.b16 %v2841, %v2839
      %v2900 = vpack.c.b16 %v2842, %v2840
      %v2901 = vpack.c.b16 %v2845, %v2843
      %v2902 = vpack.c.b16 %v2846, %v2844
      %v2903 = vpack.c.b16 %v2849, %v2847
      %v2904 = vpack.c.b16 %v2850, %v2848
      %v2905 = vpack.c.b16 %v2853, %v2851
      %v2906 = vpack.c.b16 %v2854, %v2852
      %v2907 = vpack.c.b16 %v2857, %v2855
      %v2908 = vpack.c.b16 %v2858, %v2856
      %v2909 = vpack.c.b16 %v2861, %v2859
      %v2910 = vpack.c.b16 %v2862, %v2860
      %v2911 = vpack.c.b16 %v2865, %v2863
      %v2912 = vpack.c.b16 %v2866, %v2864
      %v2913 = vpack.c.b16 %v2869, %v2867
      %v2914 = vpack.c.b16 %v2870, %v2868
      %v2915 = vpack.c.b16 %v2873, %v2871
      %v2916 = vpack.c.b16 %v2874, %v2872
      %v2917 = vpack.c.b16 %v2877, %v2875
      %v2918 = vpack.c.b16 %v2878, %v2876
      %v2919 = vpack.c.b16 %v2881, %v2879
      %v2920 = vpack.c.b16 %v2882, %v2880
      %v2921 = vpack.c.b16 %v2885, %v2883
      %v2922 = vpack.c.b16 %v2886, %v2884
      %v2923 = vpack.c.b16 %v2889, %v2887
      %v2924 = vpack.c.b16 %v2890, %v2888
      %v2925 = vpack.c.b16 %v2893, %v2891
      %v2926 = vpack.c.b16 %v2894, %v2892
      %2959 = vmatpush.bf16.msra.mxu0 %v2909
      %2960 = vmatpush.bf16.msra.mxu0 %v2907
      %2961 = vmatpush.bf16.msra.mxu0 %v2905
      %2962 = vmatpush.bf16.msra.mxu0 %v2903
      %2963 = vmatpush.bf16.msra.mxu0 %v2901
      %2964 = vmatpush.bf16.msra.mxu0 %v2899
      %2965 = vmatpush.bf16.msra.mxu0 %v2897
      %2966 = vmatpush.bf16.msra.mxu0 %v2895
      %2967 = vmatmul.bf16.gmra.mxu0 %v2769
      %v2968 = vpop.f32.mrf.mxu0
      %v2969 = vadd.f32 0.0, %v2968
      %v2970 = vpop.f32.mrf.mxu0
      %v2971 = vadd.f32 0.0, %v2970
      %2972 = vmatmul.bf16.gmra.mxu0 %v2774
      %v2973 = vpop.f32.mrf.mxu0
      %v2974 = vadd.f32 0.0, %v2973
      %v2975 = vpop.f32.mrf.mxu0
      %v2976 = vadd.f32 0.0, %v2975
      %2977 = vmatmul.bf16.gmra.mxu0 %v2778
      %v2978 = vpop.f32.mrf.mxu0
      %v2979 = vadd.f32 0.0, %v2978
      %v2980 = vpop.f32.mrf.mxu0
      %v2981 = vadd.f32 0.0, %v2980
      %2982 = vmatmul.bf16.gmra.mxu0 %v2782
      %v2983 = vpop.f32.mrf.mxu0
      %v2984 = vadd.f32 0.0, %v2983
      %v2985 = vpop.f32.mrf.mxu0
      %v2986 = vadd.f32 0.0, %v2985
      %2987 = vmatmul.bf16.gmra.mxu0 %v2786
      %v2988 = vpop.f32.mrf.mxu0
      %v2989 = vadd.f32 0.0, %v2988
      %v2990 = vpop.f32.mrf.mxu0
      %v2991 = vadd.f32 0.0, %v2990
      %2992 = vdwg.mxu0
      %2993 = vmatpush.bf16.msra.mxu0 %v2925
      %2994 = vmatpush.bf16.msra.mxu0 %v2923
      %2995 = vmatpush.bf16.msra.mxu0 %v2921
      %2996 = vmatpush.bf16.msra.mxu0 %v2919
      %2997 = vmatpush.bf16.msra.mxu0 %v2917
      %2998 = vmatpush.bf16.msra.mxu0 %v2915
      %2999 = vmatpush.bf16.msra.mxu0 %v2913
      %3000 = vmatpush.bf16.msra.mxu0 %v2911
      %3001 = vmatmul.bf16.gmra.mxu0 %v2772
      %v3002 = vpop.f32.mrf.mxu0
      %v3003 = vadd.f32 %v2969, %v3002
      %v3004 = vpop.f32.mrf.mxu0
      %v3005 = vadd.f32 %v2971, %v3004
      %3006 = vmatmul.bf16.gmra.mxu0 %v2776
      %v3007 = vpop.f32.mrf.mxu0
      %v3008 = vadd.f32 %v2974, %v3007
      %v3009 = vpop.f32.mrf.mxu0
      %v3010 = vadd.f32 %v2976, %v3009
      %3011 = vmatmul.bf16.gmra.mxu0 %v2780
      %v3012 = vpop.f32.mrf.mxu0
      %v3013 = vadd.f32 %v2979, %v3012
      %v3014 = vpop.f32.mrf.mxu0
      %v3015 = vadd.f32 %v2981, %v3014
      %3016 = vmatmul.bf16.gmra.mxu0 %v2784
      %v3017 = vpop.f32.mrf.mxu0
      %v3018 = vadd.f32 %v2984, %v3017
      %v3019 = vpop.f32.mrf.mxu0
      %v3020 = vadd.f32 %v2986, %v3019
      %3021 = vmatmul.bf16.gmra.mxu0 %v2788
      %v3022 = vpop.f32.mrf.mxu0
      %v3023 = vadd.f32 %v2989, %v3022
      %v3024 = vpop.f32.mrf.mxu0
      %v3025 = vadd.f32 %v2991, %v3024
      %3026 = vdwg.mxu0
      %3027 = vmatpush.bf16.msra.mxu0 %v2910
      %3028 = vmatpush.bf16.msra.mxu0 %v2908
      %3029 = vmatpush.bf16.msra.mxu0 %v2906
      %3030 = vmatpush.bf16.msra.mxu0 %v2904
      %3031 = vmatpush.bf16.msra.mxu0 %v2902
      %3032 = vmatpush.bf16.msra.mxu0 %v2900
      %3033 = vmatpush.bf16.msra.mxu0 %v2898
      %3034 = vmatpush.bf16.msra.mxu0 %v2896
      %3035 = vmatmul.bf16.gmra.mxu0 %v2769
      %v3036 = vpop.f32.mrf.mxu0
      %v3037 = vadd.f32 0.0, %v3036
      %v3038 = vpop.f32.mrf.mxu0
      %v3039 = vadd.f32 0.0, %v3038
      %3040 = vmatmul.bf16.gmra.mxu0 %v2774
      %v3041 = vpop.f32.mrf.mxu0
      %v3042 = vadd.f32 0.0, %v3041
      %v3043 = vpop.f32.mrf.mxu0
      %v3044 = vadd.f32 0.0, %v3043
      %3045 = vmatmul.bf16.gmra.mxu0 %v2778
      %v3046 = vpop.f32.mrf.mxu0
      %v3047 = vadd.f32 0.0, %v3046
      %v3048 = vpop.f32.mrf.mxu0
      %v3049 = vadd.f32 0.0, %v3048
      %3050 = vmatmul.bf16.gmra.mxu0 %v2782
      %v3051 = vpop.f32.mrf.mxu0
      %v3052 = vadd.f32 0.0, %v3051
      %v3053 = vpop.f32.mrf.mxu0
      %v3054 = vadd.f32 0.0, %v3053
      %3055 = vmatmul.bf16.gmra.mxu0 %v2786
      %v3056 = vpop.f32.mrf.mxu0
      %v3057 = vadd.f32 0.0, %v3056
      %v3058 = vpop.f32.mrf.mxu0
      %v3059 = vadd.f32 0.0, %v3058
      %3060 = vdwg.mxu0
      %3061 = vmatpush.bf16.msra.mxu0 %v2926
      %3062 = vmatpush.bf16.msra.mxu0 %v2924
      %3063 = vmatpush.bf16.msra.mxu0 %v2922
      %3064 = vmatpush.bf16.msra.mxu0 %v2920
      %3065 = vmatpush.bf16.msra.mxu0 %v2918
      %3066 = vmatpush.bf16.msra.mxu0 %v2916
      %3067 = vmatpush.bf16.msra.mxu0 %v2914
      %3068 = vmatpush.bf16.msra.mxu0 %v2912
      %3069 = vmatmul.bf16.gmra.mxu0 %v2772
      %v3070 = vpop.f32.mrf.mxu0
      %v3071 = vadd.f32 %v3037, %v3070
      %v3072 = vpop.f32.mrf.mxu0
      %v3073 = vadd.f32 %v3039, %v3072
      %3074 = vmatmul.bf16.gmra.mxu0 %v2776
      %v3075 = vpop.f32.mrf.mxu0
      %v3076 = vadd.f32 %v3042, %v3075
      %v3077 = vpop.f32.mrf.mxu0
      %v3078 = vadd.f32 %v3044, %v3077
      %3079 = vmatmul.bf16.gmra.mxu0 %v2780
      %v3080 = vpop.f32.mrf.mxu0
      %v3081 = vadd.f32 %v3047, %v3080
      %v3082 = vpop.f32.mrf.mxu0
      %v3083 = vadd.f32 %v3049, %v3082
      %3084 = vmatmul.bf16.gmra.mxu0 %v2784
      %v3085 = vpop.f32.mrf.mxu0
      %v3086 = vadd.f32 %v3052, %v3085
      %v3087 = vpop.f32.mrf.mxu0
      %v3088 = vadd.f32 %v3054, %v3087
      %3089 = vmatmul.bf16.gmra.mxu0 %v2788
      %v3090 = vpop.f32.mrf.mxu0
      %v3091 = vadd.f32 %v3057, %v3090
      %v3092 = vpop.f32.mrf.mxu0
      %v3093 = vadd.f32 %v3059, %v3092
      %3094 = vdwg.mxu0
      %v3095 = vadd.f32 %v2658, %v3003
      %v3096 = vadd.f32 %v2659, %v3071
      %v3097 = vadd.f32 %v2660, %v3005
      %v3098 = vadd.f32 %v2661, %v3073
      %v3099 = vadd.f32 %v2662, %v3008
      %v3100 = vadd.f32 %v2663, %v3076
      %v3101 = vadd.f32 %v2664, %v3010
      %v3102 = vadd.f32 %v2665, %v3078
      %v3103 = vadd.f32 %v2666, %v3013
      %v3104 = vadd.f32 %v2667, %v3081
      %v3105 = vadd.f32 %v2668, %v3015
      %v3106 = vadd.f32 %v2669, %v3083
      %v3107 = vadd.f32 %v2670, %v3018
      %v3108 = vadd.f32 %v2671, %v3086
      %v3109 = vadd.f32 %v2672, %v3020
      %v3110 = vadd.f32 %v2673, %v3088
      %v3111 = vadd.f32 %v2674, %v3023
      %v3112 = vadd.f32 %v2675, %v3091
      %v3113 = vadd.f32 %v2676, %v3025
      %v3114 = vadd.f32 %v2677, %v3093
      %v3115 = vld [vmem:[%s165 + $0x60] sm:$0x77]
      %s3116 = scalar_lea.vmem %s1, 1792
      %v3117 = vld [vmem:[%s3116] sm:$0xff]
      %v3118 = vld [vmem:[%s3116 + $0x8] sm:$0xff]
      %v3119 = vld [vmem:[%s3116 + $0x10] sm:$0xff]
      %v3120 = vld [vmem:[%s3116 + $0x18] sm:$0xff]
      %v3121 = vld [vmem:[%s3116 + $0x20] sm:$0xff]
      %v3122 = vld [vmem:[%s3116 + $0x28] sm:$0xff]
      %v3123 = vld [vmem:[%s3116 + $0x30] sm:$0xff]
      %v3124 = vld [vmem:[%s3116 + $0x38] sm:$0xff]
      %v3125 = vld [vmem:[%s3116 + $0x40] sm:$0xff]
      %v3126 = vld [vmem:[%s3116 + $0x48] sm:$0xff]
      %v3127 = vld [vmem:[%s3116 + $0x50] sm:$0xff]
      %v3128 = vld [vmem:[%s3116 + $0x58] sm:$0xff]
      %v3129 = vld [vmem:[%s3116 + $0x60] sm:$0xff]
      %v3130 = vld [vmem:[%s3116 + $0x68] sm:$0xff]
      %v3131 = vld [vmem:[%s3116 + $0x70] sm:$0xff]
      %v3132 = vld [vmem:[%s3116 + $0x78] sm:$0xff]
      %v3133 = vld [vmem:[%s3116 + $0x80] sm:$0xff]
      %v3134 = vld [vmem:[%s3116 + $0x88] sm:$0xff]
      %v3135 = vld [vmem:[%s3116 + $0x90] sm:$0xff]
      %v3136 = vld [vmem:[%s3116 + $0x98] sm:$0xff]
      %v3137 = vld [vmem:[%s3116 + $0xa0] sm:$0xff]
      %v3138 = vld [vmem:[%s3116 + $0xa8] sm:$0xff]
      %v3139 = vld [vmem:[%s3116 + $0xb0] sm:$0xff]
      %v3140 = vld [vmem:[%s3116 + $0xb8] sm:$0xff]
      %v3141 = vld [vmem:[%s3116 + $0xc0] sm:$0xff]
      %v3142 = vld [vmem:[%s3116 + $0xc8] sm:$0xff]
      %v3143 = vld [vmem:[%s3116 + $0xd0] sm:$0xff]
      %v3144 = vld [vmem:[%s3116 + $0xd8] sm:$0xff]
      %v3145 = vld [vmem:[%s3116 + $0xe0] sm:$0xff]
      %v3146 = vld [vmem:[%s3116 + $0xe8] sm:$0xff]
      %v3147 = vld [vmem:[%s3116 + $0xf0] sm:$0xff]
      %v3148 = vld [vmem:[%s3116 + $0xf8] sm:$0xff]
      %v3150 = vunpack.c.l.b16 %v3115
      %v3151 = vunpack.c.h.b16 %v3115
      %v3152 = vpack.c.b16 %v3150, %v3150
      %v3153 = vpack.c.b16 %v3151, %v3151
      %vm3154 = vsmask.f32 5376
      %v3156 = vshrl.u32 %v2755, 16
      %v3158 = vrot.slane %v3156, 2
      %v3159 = vshll.u32 %v2755, 16
      %v3161 = vrot.slane %v3159, 3
      %v3162 = vor.u32 %v3158, %v3161
      %v3164 = vshrl.u32 %v2757, 16
      %v3166 = vrot.slane %v3164, 2
      %v3167 = vshll.u32 %v2757, 16
      %v3169 = vrot.slane %v3167, 3
      %v3170 = vor.u32 %v3166, %v3169
      %v3171 = vsel %vm3154, %v3162, %v3170
      %v3173 = vshrl.u32 %v2756, 16
      %v3175 = vrot.slane %v3173, 2
      %v3176 = vshll.u32 %v2756, 16
      %v3178 = vrot.slane %v3176, 3
      %v3179 = vor.u32 %v3175, %v3178
      %v3181 = vshrl.u32 %v2758, 16
      %v3183 = vrot.slane %v3181, 2
      %v3184 = vshll.u32 %v2758, 16
      %v3186 = vrot.slane %v3184, 3
      %v3187 = vor.u32 %v3183, %v3186
      %v3188 = vsel %vm3154, %v3179, %v3187
      %v3190 = vshrl.u32 %v2759, 16
      %v3192 = vrot.slane %v3190, 2
      %v3193 = vshll.u32 %v2759, 16
      %v3195 = vrot.slane %v3193, 3
      %v3196 = vor.u32 %v3192, %v3195
      %v3197 = vsel %vm3154, %v3170, %v3196
      %v3199 = vshrl.u32 %v2760, 16
      %v3201 = vrot.slane %v3199, 2
      %v3202 = vshll.u32 %v2760, 16
      %v3204 = vrot.slane %v3202, 3
      %v3205 = vor.u32 %v3201, %v3204
      %v3206 = vsel %vm3154, %v3187, %v3205
      %v3208 = vshrl.u32 %v2761, 16
      %v3210 = vrot.slane %v3208, 2
      %v3211 = vshll.u32 %v2761, 16
      %v3213 = vrot.slane %v3211, 3
      %v3214 = vor.u32 %v3210, %v3213
      %v3215 = vsel %vm3154, %v3196, %v3214
      %v3217 = vshrl.u32 %v2762, 16
      %v3219 = vrot.slane %v3217, 2
      %v3220 = vshll.u32 %v2762, 16
      %v3222 = vrot.slane %v3220, 3
      %v3223 = vor.u32 %v3219, %v3222
      %v3224 = vsel %vm3154, %v3205, %v3223
      %v3226 = vshrl.u32 %v2763, 16
      %v3228 = vrot.slane %v3226, 2
      %v3229 = vshll.u32 %v2763, 16
      %v3231 = vrot.slane %v3229, 3
      %v3232 = vor.u32 %v3228, %v3231
      %v3233 = vsel %vm3154, %v3214, %v3232
      %v3235 = vshrl.u32 %v2764, 16
      %v3237 = vrot.slane %v3235, 2
      %v3238 = vshll.u32 %v2764, 16
      %v3240 = vrot.slane %v3238, 3
      %v3241 = vor.u32 %v3237, %v3240
      %v3242 = vsel %vm3154, %v3223, %v3241
      %v3244 = vshrl.u32 %v3152, 16
      %v3246 = vrot.slane %v3244, 2
      %v3247 = vshll.u32 %v3152, 16
      %v3249 = vrot.slane %v3247, 3
      %v3250 = vor.u32 %v3246, %v3249
      %v3251 = vsel %vm3154, %v3232, %v3250
      %v3253 = vshrl.u32 %v3153, 16
      %v3255 = vrot.slane %v3253, 2
      %v3256 = vshll.u32 %v3153, 16
      %v3258 = vrot.slane %v3256, 3
      %v3259 = vor.u32 %v3255, %v3258
      %v3260 = vsel %vm3154, %v3241, %v3259
      %v3303 = vunpack.c.l.b16 %v3117
      %v3304 = vunpack.c.h.b16 %v3117
      %v3305 = vunpack.c.l.b16 %v3118
      %v3306 = vunpack.c.h.b16 %v3118
      %v3307 = vunpack.c.l.b16 %v3119
      %v3308 = vunpack.c.h.b16 %v3119
      %v3309 = vunpack.c.l.b16 %v3120
      %v3310 = vunpack.c.h.b16 %v3120
      %v3311 = vunpack.c.l.b16 %v3121
      %v3312 = vunpack.c.h.b16 %v3121
      %v3313 = vunpack.c.l.b16 %v3122
      %v3314 = vunpack.c.h.b16 %v3122
      %v3315 = vunpack.c.l.b16 %v3123
      %v3316 = vunpack.c.h.b16 %v3123
      %v3317 = vunpack.c.l.b16 %v3124
      %v3318 = vunpack.c.h.b16 %v3124
      %v3319 = vunpack.c.l.b16 %v3125
      %v3320 = vunpack.c.h.b16 %v3125
      %v3321 = vunpack.c.l.b16 %v3126
      %v3322 = vunpack.c.h.b16 %v3126
      %v3323 = vunpack.c.l.b16 %v3127
      %v3324 = vunpack.c.h.b16 %v3127
      %v3325 = vunpack.c.l.b16 %v3128
      %v3326 = vunpack.c.h.b16 %v3128
      %v3327 = vunpack.c.l.b16 %v3129
      %v3328 = vunpack.c.h.b16 %v3129
      %v3329 = vunpack.c.l.b16 %v3130
      %v3330 = vunpack.c.h.b16 %v3130
      %v3331 = vunpack.c.l.b16 %v3131
      %v3332 = vunpack.c.h.b16 %v3131
      %v3333 = vunpack.c.l.b16 %v3132
      %v3334 = vunpack.c.h.b16 %v3132
      %v3335 = vunpack.c.l.b16 %v3133
      %v3336 = vunpack.c.h.b16 %v3133
      %v3337 = vunpack.c.l.b16 %v3134
      %v3338 = vunpack.c.h.b16 %v3134
      %v3339 = vunpack.c.l.b16 %v3135
      %v3340 = vunpack.c.h.b16 %v3135
      %v3341 = vunpack.c.l.b16 %v3136
      %v3342 = vunpack.c.h.b16 %v3136
      %v3343 = vunpack.c.l.b16 %v3137
      %v3344 = vunpack.c.h.b16 %v3137
      %v3345 = vunpack.c.l.b16 %v3138
      %v3346 = vunpack.c.h.b16 %v3138
      %v3347 = vunpack.c.l.b16 %v3139
      %v3348 = vunpack.c.h.b16 %v3139
      %v3349 = vunpack.c.l.b16 %v3140
      %v3350 = vunpack.c.h.b16 %v3140
      %v3351 = vunpack.c.l.b16 %v3141
      %v3352 = vunpack.c.h.b16 %v3141
      %v3353 = vunpack.c.l.b16 %v3142
      %v3354 = vunpack.c.h.b16 %v3142
      %v3355 = vunpack.c.l.b16 %v3143
      %v3356 = vunpack.c.h.b16 %v3143
      %v3357 = vunpack.c.l.b16 %v3144
      %v3358 = vunpack.c.h.b16 %v3144
      %v3359 = vunpack.c.l.b16 %v3145
      %v3360 = vunpack.c.h.b16 %v3145
      %v3361 = vunpack.c.l.b16 %v3146
      %v3362 = vunpack.c.h.b16 %v3146
      %v3363 = vunpack.c.l.b16 %v3147
      %v3364 = vunpack.c.h.b16 %v3147
      %v3365 = vunpack.c.l.b16 %v3148
      %v3366 = vunpack.c.h.b16 %v3148
      %v3367 = vpack.c.b16 %v3305, %v3303
      %v3368 = vpack.c.b16 %v3306, %v3304
      %v3369 = vpack.c.b16 %v3309, %v3307
      %v3370 = vpack.c.b16 %v3310, %v3308
      %v3371 = vpack.c.b16 %v3313, %v3311
      %v3372 = vpack.c.b16 %v3314, %v3312
      %v3373 = vpack.c.b16 %v3317, %v3315
      %v3374 = vpack.c.b16 %v3318, %v3316
      %v3375 = vpack.c.b16 %v3321, %v3319
      %v3376 = vpack.c.b16 %v3322, %v3320
      %v3377 = vpack.c.b16 %v3325, %v3323
      %v3378 = vpack.c.b16 %v3326, %v3324
      %v3379 = vpack.c.b16 %v3329, %v3327
      %v3380 = vpack.c.b16 %v3330, %v3328
      %v3381 = vpack.c.b16 %v3333, %v3331
      %v3382 = vpack.c.b16 %v3334, %v3332
      %v3383 = vpack.c.b16 %v3337, %v3335
      %v3384 = vpack.c.b16 %v3338, %v3336
      %v3385 = vpack.c.b16 %v3341, %v3339
      %v3386 = vpack.c.b16 %v3342, %v3340
      %v3387 = vpack.c.b16 %v3345, %v3343
      %v3388 = vpack.c.b16 %v3346, %v3344
      %v3389 = vpack.c.b16 %v3349, %v3347
      %v3390 = vpack.c.b16 %v3350, %v3348
      %v3391 = vpack.c.b16 %v3353, %v3351
      %v3392 = vpack.c.b16 %v3354, %v3352
      %v3393 = vpack.c.b16 %v3357, %v3355
      %v3394 = vpack.c.b16 %v3358, %v3356
      %v3395 = vpack.c.b16 %v3361, %v3359
      %v3396 = vpack.c.b16 %v3362, %v3360
      %v3397 = vpack.c.b16 %v3365, %v3363
      %v3398 = vpack.c.b16 %v3366, %v3364
      %3431 = vmatpush.bf16.msra.mxu0 %v3381
      %3432 = vmatpush.bf16.msra.mxu0 %v3379
      %3433 = vmatpush.bf16.msra.mxu0 %v3377
      %3434 = vmatpush.bf16.msra.mxu0 %v3375
      %3435 = vmatpush.bf16.msra.mxu0 %v3373
      %3436 = vmatpush.bf16.msra.mxu0 %v3371
      %3437 = vmatpush.bf16.msra.mxu0 %v3369
      %3438 = vmatpush.bf16.msra.mxu0 %v3367
      %3439 = vmatmul.bf16.gmra.mxu0 %v3171
      %v3440 = vpop.f32.mrf.mxu0
      %v3441 = vadd.f32 0.0, %v3440
      %v3442 = vpop.f32.mrf.mxu0
      %v3443 = vadd.f32 0.0, %v3442
      %3444 = vmatmul.bf16.gmra.mxu0 %v3197
      %v3445 = vpop.f32.mrf.mxu0
      %v3446 = vadd.f32 0.0, %v3445
      %v3447 = vpop.f32.mrf.mxu0
      %v3448 = vadd.f32 0.0, %v3447
      %3449 = vmatmul.bf16.gmra.mxu0 %v3215
      %v3450 = vpop.f32.mrf.mxu0
      %v3451 = vadd.f32 0.0, %v3450
      %v3452 = vpop.f32.mrf.mxu0
      %v3453 = vadd.f32 0.0, %v3452
      %3454 = vmatmul.bf16.gmra.mxu0 %v3233
      %v3455 = vpop.f32.mrf.mxu0
      %v3456 = vadd.f32 0.0, %v3455
      %v3457 = vpop.f32.mrf.mxu0
      %v3458 = vadd.f32 0.0, %v3457
      %3459 = vmatmul.bf16.gmra.mxu0 %v3251
      %v3460 = vpop.f32.mrf.mxu0
      %v3461 = vadd.f32 0.0, %v3460
      %v3462 = vpop.f32.mrf.mxu0
      %v3463 = vadd.f32 0.0, %v3462
      %3464 = vdwg.mxu0
      %3465 = vmatpush.bf16.msra.mxu0 %v3397
      %3466 = vmatpush.bf16.msra.mxu0 %v3395
      %3467 = vmatpush.bf16.msra.mxu0 %v3393
      %3468 = vmatpush.bf16.msra.mxu0 %v3391
      %3469 = vmatpush.bf16.msra.mxu0 %v3389
      %3470 = vmatpush.bf16.msra.mxu0 %v3387
      %3471 = vmatpush.bf16.msra.mxu0 %v3385
      %3472 = vmatpush.bf16.msra.mxu0 %v3383
      %3473 = vmatmul.bf16.gmra.mxu0 %v3188
      %v3474 = vpop.f32.mrf.mxu0
      %v3475 = vadd.f32 %v3441, %v3474
      %v3476 = vpop.f32.mrf.mxu0
      %v3477 = vadd.f32 %v3443, %v3476
      %3478 = vmatmul.bf16.gmra.mxu0 %v3206
      %v3479 = vpop.f32.mrf.mxu0
      %v3480 = vadd.f32 %v3446, %v3479
      %v3481 = vpop.f32.mrf.mxu0
      %v3482 = vadd.f32 %v3448, %v3481
      %3483 = vmatmul.bf16.gmra.mxu0 %v3224
      %v3484 = vpop.f32.mrf.mxu0
      %v3485 = vadd.f32 %v3451, %v3484
      %v3486 = vpop.f32.mrf.mxu0
      %v3487 = vadd.f32 %v3453, %v3486
      %3488 = vmatmul.bf16.gmra.mxu0 %v3242
      %v3489 = vpop.f32.mrf.mxu0
      %v3490 = vadd.f32 %v3456, %v3489
      %v3491 = vpop.f32.mrf.mxu0
      %v3492 = vadd.f32 %v3458, %v3491
      %3493 = vmatmul.bf16.gmra.mxu0 %v3260
      %v3494 = vpop.f32.mrf.mxu0
      %v3495 = vadd.f32 %v3461, %v3494
      %v3496 = vpop.f32.mrf.mxu0
      %v3497 = vadd.f32 %v3463, %v3496
      %3498 = vdwg.mxu0
      %3499 = vmatpush.bf16.msra.mxu0 %v3382
      %3500 = vmatpush.bf16.msra.mxu0 %v3380
      %3501 = vmatpush.bf16.msra.mxu0 %v3378
      %3502 = vmatpush.bf16.msra.mxu0 %v3376
      %3503 = vmatpush.bf16.msra.mxu0 %v3374
      %3504 = vmatpush.bf16.msra.mxu0 %v3372
      %3505 = vmatpush.bf16.msra.mxu0 %v3370
      %3506 = vmatpush.bf16.msra.mxu0 %v3368
      %3507 = vmatmul.bf16.gmra.mxu0 %v3171
      %v3508 = vpop.f32.mrf.mxu0
      %v3509 = vadd.f32 0.0, %v3508
      %v3510 = vpop.f32.mrf.mxu0
      %v3511 = vadd.f32 0.0, %v3510
      %3512 = vmatmul.bf16.gmra.mxu0 %v3197
      %v3513 = vpop.f32.mrf.mxu0
      %v3514 = vadd.f32 0.0, %v3513
      %v3515 = vpop.f32.mrf.mxu0
      %v3516 = vadd.f32 0.0, %v3515
      %3517 = vmatmul.bf16.gmra.mxu0 %v3215
      %v3518 = vpop.f32.mrf.mxu0
      %v3519 = vadd.f32 0.0, %v3518
      %v3520 = vpop.f32.mrf.mxu0
      %v3521 = vadd.f32 0.0, %v3520
      %3522 = vmatmul.bf16.gmra.mxu0 %v3233
      %v3523 = vpop.f32.mrf.mxu0
      %v3524 = vadd.f32 0.0, %v3523
      %v3525 = vpop.f32.mrf.mxu0
      %v3526 = vadd.f32 0.0, %v3525
      %3527 = vmatmul.bf16.gmra.mxu0 %v3251
      %v3528 = vpop.f32.mrf.mxu0
      %v3529 = vadd.f32 0.0, %v3528
      %v3530 = vpop.f32.mrf.mxu0
      %v3531 = vadd.f32 0.0, %v3530
      %3532 = vdwg.mxu0
      %3533 = vmatpush.bf16.msra.mxu0 %v3398
      %3534 = vmatpush.bf16.msra.mxu0 %v3396
      %3535 = vmatpush.bf16.msra.mxu0 %v3394
      %3536 = vmatpush.bf16.msra.mxu0 %v3392
      %3537 = vmatpush.bf16.msra.mxu0 %v3390
      %3538 = vmatpush.bf16.msra.mxu0 %v3388
      %3539 = vmatpush.bf16.msra.mxu0 %v3386
      %3540 = vmatpush.bf16.msra.mxu0 %v3384
      %3541 = vmatmul.bf16.gmra.mxu0 %v3188
      %v3542 = vpop.f32.mrf.mxu0
      %v3543 = vadd.f32 %v3509, %v3542
      %v3544 = vpop.f32.mrf.mxu0
      %v3545 = vadd.f32 %v3511, %v3544
      %3546 = vmatmul.bf16.gmra.mxu0 %v3206
      %v3547 = vpop.f32.mrf.mxu0
      %v3548 = vadd.f32 %v3514, %v3547
      %v3549 = vpop.f32.mrf.mxu0
      %v3550 = vadd.f32 %v3516, %v3549
      %3551 = vmatmul.bf16.gmra.mxu0 %v3224
      %v3552 = vpop.f32.mrf.mxu0
      %v3553 = vadd.f32 %v3519, %v3552
      %v3554 = vpop.f32.mrf.mxu0
      %v3555 = vadd.f32 %v3521, %v3554
      %3556 = vmatmul.bf16.gmra.mxu0 %v3242
      %v3557 = vpop.f32.mrf.mxu0
      %v3558 = vadd.f32 %v3524, %v3557
      %v3559 = vpop.f32.mrf.mxu0
      %v3560 = vadd.f32 %v3526, %v3559
      %3561 = vmatmul.bf16.gmra.mxu0 %v3260
      %v3562 = vpop.f32.mrf.mxu0
      %v3563 = vadd.f32 %v3529, %v3562
      %v3564 = vpop.f32.mrf.mxu0
      %v3565 = vadd.f32 %v3531, %v3564
      %3566 = vdwg.mxu0
      %v3567 = vadd.f32 %v3095, %v3475
      %v3568 = vadd.f32 %v3096, %v3543
      %v3569 = vadd.f32 %v3097, %v3477
      %v3570 = vadd.f32 %v3098, %v3545
      %v3571 = vadd.f32 %v3099, %v3480
      %v3572 = vadd.f32 %v3100, %v3548
      %v3573 = vadd.f32 %v3101, %v3482
      %v3574 = vadd.f32 %v3102, %v3550
      %v3575 = vadd.f32 %v3103, %v3485
      %v3576 = vadd.f32 %v3104, %v3553
      %v3577 = vadd.f32 %v3105, %v3487
      %v3578 = vadd.f32 %v3106, %v3555
      %v3579 = vadd.f32 %v3107, %v3490
      %v3580 = vadd.f32 %v3108, %v3558
      %v3581 = vadd.f32 %v3109, %v3492
      %v3582 = vadd.f32 %v3110, %v3560
      %v3583 = vadd.f32 %v3111, %v3495
      %v3584 = vadd.f32 %v3112, %v3563
      %v3585 = vadd.f32 %v3113, %v3497
      %v3586 = vadd.f32 %v3114, %v3565
      %v3587 = vld [vmem:[%s165 + $0x10] sm:$0x88]
      %s3588 = scalar_lea.vmem %s1, 2048
      %v3589 = vld [vmem:[%s3588] sm:$0xff]
      %v3590 = vld [vmem:[%s3588 + $0x8] sm:$0xff]
      %v3591 = vld [vmem:[%s3588 + $0x10] sm:$0xff]
      %v3592 = vld [vmem:[%s3588 + $0x18] sm:$0xff]
      %v3593 = vld [vmem:[%s3588 + $0x20] sm:$0xff]
      %v3594 = vld [vmem:[%s3588 + $0x28] sm:$0xff]
      %v3595 = vld [vmem:[%s3588 + $0x30] sm:$0xff]
      %v3596 = vld [vmem:[%s3588 + $0x38] sm:$0xff]
      %v3597 = vld [vmem:[%s3588 + $0x40] sm:$0xff]
      %v3598 = vld [vmem:[%s3588 + $0x48] sm:$0xff]
      %v3599 = vld [vmem:[%s3588 + $0x50] sm:$0xff]
      %v3600 = vld [vmem:[%s3588 + $0x58] sm:$0xff]
      %v3601 = vld [vmem:[%s3588 + $0x60] sm:$0xff]
      %v3602 = vld [vmem:[%s3588 + $0x68] sm:$0xff]
      %v3603 = vld [vmem:[%s3588 + $0x70] sm:$0xff]
      %v3604 = vld [vmem:[%s3588 + $0x78] sm:$0xff]
      %v3605 = vld [vmem:[%s3588 + $0x80] sm:$0xff]
      %v3606 = vld [vmem:[%s3588 + $0x88] sm:$0xff]
      %v3607 = vld [vmem:[%s3588 + $0x90] sm:$0xff]
      %v3608 = vld [vmem:[%s3588 + $0x98] sm:$0xff]
      %v3609 = vld [vmem:[%s3588 + $0xa0] sm:$0xff]
      %v3610 = vld [vmem:[%s3588 + $0xa8] sm:$0xff]
      %v3611 = vld [vmem:[%s3588 + $0xb0] sm:$0xff]
      %v3612 = vld [vmem:[%s3588 + $0xb8] sm:$0xff]
      %v3613 = vld [vmem:[%s3588 + $0xc0] sm:$0xff]
      %v3614 = vld [vmem:[%s3588 + $0xc8] sm:$0xff]
      %v3615 = vld [vmem:[%s3588 + $0xd0] sm:$0xff]
      %v3616 = vld [vmem:[%s3588 + $0xd8] sm:$0xff]
      %v3617 = vld [vmem:[%s3588 + $0xe0] sm:$0xff]
      %v3618 = vld [vmem:[%s3588 + $0xe8] sm:$0xff]
      %v3619 = vld [vmem:[%s3588 + $0xf0] sm:$0xff]
      %v3620 = vld [vmem:[%s3588 + $0xf8] sm:$0xff]
      %v3622 = vunpack.c.l.b16 %v3587
      %v3623 = vunpack.c.h.b16 %v3587
      %v3624 = vpack.c.b16 %v2735, %v3622
      %v3625 = vpack.c.b16 %v2736, %v3623
      %vm3626 = vcmask 1044480
      %v3627 = vrot.slane %v3624, 3
      %v3628 = vrot.slane %v2757, 3
      %v3629 = vsel %vm3626, %v3627, %v3628
      %v3630 = vrot.slane %v3625, 3
      %v3631 = vrot.slane %v2758, 3
      %v3632 = vsel %vm3626, %v3630, %v3631
      %v3633 = vrot.slane %v2759, 3
      %v3634 = vsel %vm3626, %v3628, %v3633
      %v3635 = vrot.slane %v2760, 3
      %v3636 = vsel %vm3626, %v3631, %v3635
      %v3637 = vrot.slane %v2761, 3
      %v3638 = vsel %vm3626, %v3633, %v3637
      %v3639 = vrot.slane %v2762, 3
      %v3640 = vsel %vm3626, %v3635, %v3639
      %v3641 = vrot.slane %v2763, 3
      %v3642 = vsel %vm3626, %v3637, %v3641
      %v3643 = vrot.slane %v2764, 3
      %v3644 = vsel %vm3626, %v3639, %v3643
      %v3645 = vrot.slane %v3152, 3
      %v3646 = vsel %vm3626, %v3641, %v3645
      %v3647 = vrot.slane %v3153, 3
      %v3648 = vsel %vm3626, %v3643, %v3647
      %v3691 = vunpack.c.l.b16 %v3589
      %v3692 = vunpack.c.h.b16 %v3589
      %v3693 = vunpack.c.l.b16 %v3590
      %v3694 = vunpack.c.h.b16 %v3590
      %v3695 = vunpack.c.l.b16 %v3591
      %v3696 = vunpack.c.h.b16 %v3591
      %v3697 = vunpack.c.l.b16 %v3592
      %v3698 = vunpack.c.h.b16 %v3592
      %v3699 = vunpack.c.l.b16 %v3593
      %v3700 = vunpack.c.h.b16 %v3593
      %v3701 = vunpack.c.l.b16 %v3594
      %v3702 = vunpack.c.h.b16 %v3594
      %v3703 = vunpack.c.l.b16 %v3595
      %v3704 = vunpack.c.h.b16 %v3595
      %v3705 = vunpack.c.l.b16 %v3596
      %v3706 = vunpack.c.h.b16 %v3596
      %v3707 = vunpack.c.l.b16 %v3597
      %v3708 = vunpack.c.h.b16 %v3597
      %v3709 = vunpack.c.l.b16 %v3598
      %v3710 = vunpack.c.h.b16 %v3598
      %v3711 = vunpack.c.l.b16 %v3599
      %v3712 = vunpack.c.h.b16 %v3599
      %v3713 = vunpack.c.l.b16 %v3600
      %v3714 = vunpack.c.h.b16 %v3600
      %v3715 = vunpack.c.l.b16 %v3601
      %v3716 = vunpack.c.h.b16 %v3601
      %v3717 = vunpack.c.l.b16 %v3602
      %v3718 = vunpack.c.h.b16 %v3602
      %v3719 = vunpack.c.l.b16 %v3603
      %v3720 = vunpack.c.h.b16 %v3603
      %v3721 = vunpack.c.l.b16 %v3604
      %v3722 = vunpack.c.h.b16 %v3604
      %v3723 = vunpack.c.l.b16 %v3605
      %v3724 = vunpack.c.h.b16 %v3605
      %v3725 = vunpack.c.l.b16 %v3606
      %v3726 = vunpack.c.h.b16 %v3606
      %v3727 = vunpack.c.l.b16 %v3607
      %v3728 = vunpack.c.h.b16 %v3607
      %v3729 = vunpack.c.l.b16 %v3608
      %v3730 = vunpack.c.h.b16 %v3608
      %v3731 = vunpack.c.l.b16 %v3609
      %v3732 = vunpack.c.h.b16 %v3609
      %v3733 = vunpack.c.l.b16 %v3610
      %v3734 = vunpack.c.h.b16 %v3610
      %v3735 = vunpack.c.l.b16 %v3611
      %v3736 = vunpack.c.h.b16 %v3611
      %v3737 = vunpack.c.l.b16 %v3612
      %v3738 = vunpack.c.h.b16 %v3612
      %v3739 = vunpack.c.l.b16 %v3613
      %v3740 = vunpack.c.h.b16 %v3613
      %v3741 = vunpack.c.l.b16 %v3614
      %v3742 = vunpack.c.h.b16 %v3614
      %v3743 = vunpack.c.l.b16 %v3615
      %v3744 = vunpack.c.h.b16 %v3615
      %v3745 = vunpack.c.l.b16 %v3616
      %v3746 = vunpack.c.h.b16 %v3616
      %v3747 = vunpack.c.l.b16 %v3617
      %v3748 = vunpack.c.h.b16 %v3617
      %v3749 = vunpack.c.l.b16 %v3618
      %v3750 = vunpack.c.h.b16 %v3618
      %v3751 = vunpack.c.l.b16 %v3619
      %v3752 = vunpack.c.h.b16 %v3619
      %v3753 = vunpack.c.l.b16 %v3620
      %v3754 = vunpack.c.h.b16 %v3620
      %v3755 = vpack.c.b16 %v3693, %v3691
      %v3756 = vpack.c.b16 %v3694, %v3692
      %v3757 = vpack.c.b16 %v3697, %v3695
      %v3758 = vpack.c.b16 %v3698, %v3696
      %v3759 = vpack.c.b16 %v3701, %v3699
      %v3760 = vpack.c.b16 %v3702, %v3700
      %v3761 = vpack.c.b16 %v3705, %v3703
      %v3762 = vpack.c.b16 %v3706, %v3704
      %v3763 = vpack.c.b16 %v3709, %v3707
      %v3764 = vpack.c.b16 %v3710, %v3708
      %v3765 = vpack.c.b16 %v3713, %v3711
      %v3766 = vpack.c.b16 %v3714, %v3712
      %v3767 = vpack.c.b16 %v3717, %v3715
      %v3768 = vpack.c.b16 %v3718, %v3716
      %v3769 = vpack.c.b16 %v3721, %v3719
      %v3770 = vpack.c.b16 %v3722, %v3720
      %v3771 = vpack.c.b16 %v3725, %v3723
      %v3772 = vpack.c.b16 %v3726, %v3724
      %v3773 = vpack.c.b16 %v3729, %v3727
      %v3774 = vpack.c.b16 %v3730, %v3728
      %v3775 = vpack.c.b16 %v3733, %v3731
      %v3776 = vpack.c.b16 %v3734, %v3732
      %v3777 = vpack.c.b16 %v3737, %v3735
      %v3778 = vpack.c.b16 %v3738, %v3736
      %v3779 = vpack.c.b16 %v3741, %v3739
      %v3780 = vpack.c.b16 %v3742, %v3740
      %v3781 = vpack.c.b16 %v3745, %v3743
      %v3782 = vpack.c.b16 %v3746, %v3744
      %v3783 = vpack.c.b16 %v3749, %v3747
      %v3784 = vpack.c.b16 %v3750, %v3748
      %v3785 = vpack.c.b16 %v3753, %v3751
      %v3786 = vpack.c.b16 %v3754, %v3752
      %3819 = vmatpush.bf16.msra.mxu0 %v3769
      %3820 = vmatpush.bf16.msra.mxu0 %v3767
      %3821 = vmatpush.bf16.msra.mxu0 %v3765
      %3822 = vmatpush.bf16.msra.mxu0 %v3763
      %3823 = vmatpush.bf16.msra.mxu0 %v3761
      %3824 = vmatpush.bf16.msra.mxu0 %v3759
      %3825 = vmatpush.bf16.msra.mxu0 %v3757
      %3826 = vmatpush.bf16.msra.mxu0 %v3755
      %3827 = vmatmul.bf16.gmra.mxu0 %v3629
      %v3828 = vpop.f32.mrf.mxu0
      %v3829 = vadd.f32 0.0, %v3828
      %v3830 = vpop.f32.mrf.mxu0
      %v3831 = vadd.f32 0.0, %v3830
      %3832 = vmatmul.bf16.gmra.mxu0 %v3634
      %v3833 = vpop.f32.mrf.mxu0
      %v3834 = vadd.f32 0.0, %v3833
      %v3835 = vpop.f32.mrf.mxu0
      %v3836 = vadd.f32 0.0, %v3835
      %3837 = vmatmul.bf16.gmra.mxu0 %v3638
      %v3838 = vpop.f32.mrf.mxu0
      %v3839 = vadd.f32 0.0, %v3838
      %v3840 = vpop.f32.mrf.mxu0
      %v3841 = vadd.f32 0.0, %v3840
      %3842 = vmatmul.bf16.gmra.mxu0 %v3642
      %v3843 = vpop.f32.mrf.mxu0
      %v3844 = vadd.f32 0.0, %v3843
      %v3845 = vpop.f32.mrf.mxu0
      %v3846 = vadd.f32 0.0, %v3845
      %3847 = vmatmul.bf16.gmra.mxu0 %v3646
      %v3848 = vpop.f32.mrf.mxu0
      %v3849 = vadd.f32 0.0, %v3848
      %v3850 = vpop.f32.mrf.mxu0
      %v3851 = vadd.f32 0.0, %v3850
      %3852 = vdwg.mxu0
      %3853 = vmatpush.bf16.msra.mxu0 %v3785
      %3854 = vmatpush.bf16.msra.mxu0 %v3783
      %3855 = vmatpush.bf16.msra.mxu0 %v3781
      %3856 = vmatpush.bf16.msra.mxu0 %v3779
      %3857 = vmatpush.bf16.msra.mxu0 %v3777
      %3858 = vmatpush.bf16.msra.mxu0 %v3775
      %3859 = vmatpush.bf16.msra.mxu0 %v3773
      %3860 = vmatpush.bf16.msra.mxu0 %v3771
      %3861 = vmatmul.bf16.gmra.mxu0 %v3632
      %v3862 = vpop.f32.mrf.mxu0
      %v3863 = vadd.f32 %v3829, %v3862
      %v3864 = vpop.f32.mrf.mxu0
      %v3865 = vadd.f32 %v3831, %v3864
      %3866 = vmatmul.bf16.gmra.mxu0 %v3636
      %v3867 = vpop.f32.mrf.mxu0
      %v3868 = vadd.f32 %v3834, %v3867
      %v3869 = vpop.f32.mrf.mxu0
      %v3870 = vadd.f32 %v3836, %v3869
      %3871 = vmatmul.bf16.gmra.mxu0 %v3640
      %v3872 = vpop.f32.mrf.mxu0
      %v3873 = vadd.f32 %v3839, %v3872
      %v3874 = vpop.f32.mrf.mxu0
      %v3875 = vadd.f32 %v3841, %v3874
      %3876 = vmatmul.bf16.gmra.mxu0 %v3644
      %v3877 = vpop.f32.mrf.mxu0
      %v3878 = vadd.f32 %v3844, %v3877
      %v3879 = vpop.f32.mrf.mxu0
      %v3880 = vadd.f32 %v3846, %v3879
      %3881 = vmatmul.bf16.gmra.mxu0 %v3648
      %v3882 = vpop.f32.mrf.mxu0
      %v3883 = vadd.f32 %v3849, %v3882
      %v3884 = vpop.f32.mrf.mxu0
      %v3885 = vadd.f32 %v3851, %v3884
      %3886 = vdwg.mxu0
      %3887 = vmatpush.bf16.msra.mxu0 %v3770
      %3888 = vmatpush.bf16.msra.mxu0 %v3768
      %3889 = vmatpush.bf16.msra.mxu0 %v3766
      %3890 = vmatpush.bf16.msra.mxu0 %v3764
      %3891 = vmatpush.bf16.msra.mxu0 %v3762
      %3892 = vmatpush.bf16.msra.mxu0 %v3760
      %3893 = vmatpush.bf16.msra.mxu0 %v3758
      %3894 = vmatpush.bf16.msra.mxu0 %v3756
      %3895 = vmatmul.bf16.gmra.mxu0 %v3629
      %v3896 = vpop.f32.mrf.mxu0
      %v3897 = vadd.f32 0.0, %v3896
      %v3898 = vpop.f32.mrf.mxu0
      %v3899 = vadd.f32 0.0, %v3898
      %3900 = vmatmul.bf16.gmra.mxu0 %v3634
      %v3901 = vpop.f32.mrf.mxu0
      %v3902 = vadd.f32 0.0, %v3901
      %v3903 = vpop.f32.mrf.mxu0
      %v3904 = vadd.f32 0.0, %v3903
      %3905 = vmatmul.bf16.gmra.mxu0 %v3638
      %v3906 = vpop.f32.mrf.mxu0
      %v3907 = vadd.f32 0.0, %v3906
      %v3908 = vpop.f32.mrf.mxu0
      %v3909 = vadd.f32 0.0, %v3908
      %3910 = vmatmul.bf16.gmra.mxu0 %v3642
      %v3911 = vpop.f32.mrf.mxu0
      %v3912 = vadd.f32 0.0, %v3911
      %v3913 = vpop.f32.mrf.mxu0
      %v3914 = vadd.f32 0.0, %v3913
      %3915 = vmatmul.bf16.gmra.mxu0 %v3646
      %v3916 = vpop.f32.mrf.mxu0
      %v3917 = vadd.f32 0.0, %v3916
      %v3918 = vpop.f32.mrf.mxu0
      %v3919 = vadd.f32 0.0, %v3918
      %3920 = vdwg.mxu0
      %3921 = vmatpush.bf16.msra.mxu0 %v3786
      %3922 = vmatpush.bf16.msra.mxu0 %v3784
      %3923 = vmatpush.bf16.msra.mxu0 %v3782
      %3924 = vmatpush.bf16.msra.mxu0 %v3780
      %3925 = vmatpush.bf16.msra.mxu0 %v3778
      %3926 = vmatpush.bf16.msra.mxu0 %v3776
      %3927 = vmatpush.bf16.msra.mxu0 %v3774
      %3928 = vmatpush.bf16.msra.mxu0 %v3772
      %3929 = vmatmul.bf16.gmra.mxu0 %v3632
      %v3930 = vpop.f32.mrf.mxu0
      %v3931 = vadd.f32 %v3897, %v3930
      %v3932 = vpop.f32.mrf.mxu0
      %v3933 = vadd.f32 %v3899, %v3932
      %3934 = vmatmul.bf16.gmra.mxu0 %v3636
      %v3935 = vpop.f32.mrf.mxu0
      %v3936 = vadd.f32 %v3902, %v3935
      %v3937 = vpop.f32.mrf.mxu0
      %v3938 = vadd.f32 %v3904, %v3937
      %3939 = vmatmul.bf16.gmra.mxu0 %v3640
      %v3940 = vpop.f32.mrf.mxu0
      %v3941 = vadd.f32 %v3907, %v3940
      %v3942 = vpop.f32.mrf.mxu0
      %v3943 = vadd.f32 %v3909, %v3942
      %3944 = vmatmul.bf16.gmra.mxu0 %v3644
      %v3945 = vpop.f32.mrf.mxu0
      %v3946 = vadd.f32 %v3912, %v3945
      %v3947 = vpop.f32.mrf.mxu0
      %v3948 = vadd.f32 %v3914, %v3947
      %3949 = vmatmul.bf16.gmra.mxu0 %v3648
      %v3950 = vpop.f32.mrf.mxu0
      %v3951 = vadd.f32 %v3917, %v3950
      %v3952 = vpop.f32.mrf.mxu0
      %v3953 = vadd.f32 %v3919, %v3952
      %3954 = vdwg.mxu0
      %v3955 = vadd.f32 %v3567, %v3863
      %v3956 = vadd.f32 %v3568, %v3931
      %v3957 = vadd.f32 %v3569, %v3865
      %v3958 = vadd.f32 %v3570, %v3933
      %v3959 = vadd.f32 %v3571, %v3868
      %v3960 = vadd.f32 %v3572, %v3936
      %v3961 = vadd.f32 %v3573, %v3870
      %v3962 = vadd.f32 %v3574, %v3938
      %v3963 = vadd.f32 %v3575, %v3873
      %v3964 = vadd.f32 %v3576, %v3941
      %v3965 = vadd.f32 %v3577, %v3875
      %v3966 = vadd.f32 %v3578, %v3943
      %v3967 = vadd.f32 %v3579, %v3878
      %v3968 = vadd.f32 %v3580, %v3946
      %v3969 = vadd.f32 %v3581, %v3880
      %v3970 = vadd.f32 %v3582, %v3948
      %v3971 = vadd.f32 %v3583, %v3883
      %v3972 = vadd.f32 %v3584, %v3951
      %v3973 = vadd.f32 %v3585, %v3885
      %v3974 = vadd.f32 %v3586, %v3953
      %v3975 = vld [vmem:[%s2] sm:$0x3]
      %v3977 = vperm.slane %v3975, 0
      %v3978 = vperm.slane %v3975, 1
      %v3981 = vadd.f32 %v3955, %v3977
      %v3982 = vadd.f32 %v3956, %v3978
      %v3983 = vadd.f32 %v3957, %v3977
      %v3984 = vadd.f32 %v3958, %v3978
      %v3985 = vadd.f32 %v3959, %v3977
      %v3986 = vadd.f32 %v3960, %v3978
      %v3987 = vadd.f32 %v3961, %v3977
      %v3988 = vadd.f32 %v3962, %v3978
      %v3989 = vadd.f32 %v3963, %v3977
      %v3990 = vadd.f32 %v3964, %v3978
      %v3991 = vadd.f32 %v3965, %v3977
      %v3992 = vadd.f32 %v3966, %v3978
      %v3993 = vadd.f32 %v3967, %v3977
      %v3994 = vadd.f32 %v3968, %v3978
      %v3995 = vadd.f32 %v3969, %v3977
      %v3996 = vadd.f32 %v3970, %v3978
      %v3997 = vadd.f32 %v3971, %v3977
      %v3998 = vadd.f32 %v3972, %v3978
      %v3999 = vadd.f32 %v3973, %v3977
      %v4000 = vadd.f32 %v3974, %v3978
      %v4001 = vpack.c.bf16 %v3982, %v3981
      %v4002 = vpack.c.bf16 %v3984, %v3983
      %v4003 = vpack.c.bf16 %v3986, %v3985
      %v4004 = vpack.c.bf16 %v3988, %v3987
      %v4005 = vpack.c.bf16 %v3990, %v3989
      %v4006 = vpack.c.bf16 %v3992, %v3991
      %v4007 = vpack.c.bf16 %v3994, %v3993
      %v4008 = vpack.c.bf16 %v3996, %v3995
      %v4009 = vpack.c.bf16 %v3998, %v3997
      %v4010 = vpack.c.bf16 %v4000, %v3999
      %4011 = vst [vmem:[%s170] sm:$0xff] %v4001
      %4012 = vst [vmem:[%s170 + $0x8] sm:$0xff] %v4002
      %4013 = vst [vmem:[%s170 + $0x10] sm:$0xff] %v4003
      %4014 = vst [vmem:[%s170 + $0x18] sm:$0xff] %v4004
      %4015 = vst [vmem:[%s170 + $0x20] sm:$0xff] %v4005
      %4016 = vst [vmem:[%s170 + $0x28] sm:$0xff] %v4006
      %4017 = vst [vmem:[%s170 + $0x30] sm:$0xff] %v4007
      %4018 = vst [vmem:[%s170 + $0x38] sm:$0xff] %v4008
      %4019 = vst [vmem:[%s170 + $0x40] sm:$0xff] %v4009
      %4020 = vst [vmem:[%s170 + $0x48] sm:$0xff] %v4010
      %p4021 = scmp.lt.s32.totalorder %s14, 1
      %s4022 = scalar_select %p4021, %s14, 1
      %s4023 = smul.addr %s4022, 20
      %s4024 = smul.addr %s4023, 4
      %s4025 = scalar_lea.vmem %s3, %s4024
      // Predicated region
      $region33: #{frequency_transfer_forward.5} parent=31 // pred_check
        %p4026 = pneg %p100
      $region34: #{frequency_transfer_forward.5} parent=31 // pred_check_branch
        %4028 = sbr.rel (%p4026) target = $region36
      $region35: #{frequency_transfer_forward.5} parent=31 // pred_region
        _
      $region36: #{frequency_transfer_forward.5} parent=31 // pred_fallthru
        _
    $region32: #{frequency_transfer_forward.5} parent=5 // pred_fallthru
      _
    %p4029 = scmp.le.s32.totalorder 2, %s9
    // Predicated region
    $region37: #{frequency_transfer_forward.5} parent=5 // pred_check
      %p4030 = pneg %p4029
    $region38: #{frequency_transfer_forward.5} parent=5 // pred_check_branch
      %4032 = sbr.rel (%p4030) target = $region40
    $region39: #{frequency_transfer_forward.5} parent=5 // pred_region
      %s4033 = ssub.s32 %s9, 2
      // Predicated region
      $region41: #{frequency_transfer_forward.5} parent=39 // pred_check
        %p4034 = pneg %p106
      $region42: #{frequency_transfer_forward.5} parent=39 // pred_check_branch
        %4036 = sbr.rel (%p4034) target = $region44
      $region43: #{frequency_transfer_forward.5} parent=39 // pred_region
        %p4037 = scmp.lt.s32.totalorder %s15, 1
        %s4038 = scalar_select %p4037, %s15, 1
        %s4039 = smul.addr %s4038, 20
        %s4040 = smul.addr %s4039, 4
        %s4041 = scalar_lea.vmem %s3, %s4040
      $region44: #{frequency_transfer_forward.5} parent=39 // pred_fallthru
        _
    $region40: #{frequency_transfer_forward.5} parent=5 // pred_fallthru
      _
  $region6: #{frequency_transfer_forward.5} parent=0 // loop_footer
    %s13 = sadd.s32 1, %s9
  $region7: #{frequency_transfer_forward.5} parent=0 // loop_footer_branch
    %8 = sbr.rel target = $region3
  $region8: #{frequency_transfer_forward.5} parent=0 // loop_exit
    _

</llo_original>
